<compile_context>
chip_gen: v7x
topology: tpu7x:2x2x1
jax: 0.10.0
libtpu: 0.0.40
codegen_flags: <defaults>
</compile_context>

<pallas_src>
import jax
import jax.numpy as jnp
import numpy as np
from jax.experimental import pallas as pl
from jax.experimental.pallas import tpu as pltpu

HIDDEN = 256  # fixed by the PyTorch module


def _sigmoid(x):
    # tanh-form sigmoid: lands on the EUP, no divide, no exp overflow.
    return 0.5 * (jnp.tanh(0.5 * x) + 1.0)


def _lstm_chunk(x_ref, wih_ref, whh_ref, b_ref, h_sc, c_sc, emit):
    """Run Tc recurrent steps on one (Tc, tb, Din) block.

    Hoisted prologue: gates_x = x_chunk @ W_ih + b as one bf16 MXU matmul
    (f32 accumulation).  The per-timestep body is only h @ W_hh + f32 gate
    math.  `emit(t, h)` is called with the f32 hidden state of each step;
    h/c persist in VMEM scratch across time chunks.
    """
    Tc, tb, Din = x_ref.shape
    H = h_sc.shape[-1]

    xb = x_ref[...].astype(jnp.bfloat16).reshape(Tc * tb, Din)
    gates_x = (jnp.dot(xb, wih_ref[...], preferred_element_type=jnp.float32)
               + b_ref[...])                                # (Tc*tb, 4H) f32

    h = h_sc[...]
    c = c_sc[...]
    for t in range(Tc):  # static, fully unrolled (Tc <= 8)
        gates = (gates_x[t * tb:(t + 1) * tb]
                 + jnp.dot(h.astype(jnp.bfloat16), whh_ref[...],
                           preferred_element_type=jnp.float32))  # (tb, 4H) f32
        i = _sigmoid(gates[:, 0 * H:1 * H])
        f = _sigmoid(gates[:, 1 * H:2 * H])
        g = jnp.tanh(gates[:, 2 * H:3 * H])
        o = _sigmoid(gates[:, 3 * H:4 * H])
        c = f * c + i * g                 # cell state stays f32
        h = o * jnp.tanh(c)
        emit(t, h)
    h_sc[...] = h
    c_sc[...] = c


def lstm_layer_kernel(x_ref, wih_ref, whh_ref, b_ref, out_ref, h_sc, c_sc):
    # Time (program_id(1)) is the last, "arbitrary" grid axis -> h/c recurrence
    # is valid; re-zero state at the first time chunk of every batch tile.
    @pl.when(pl.program_id(1) == 0)
    def _():
        h_sc[...] = jnp.zeros_like(h_sc)
        c_sc[...] = jnp.zeros_like(c_sc)

    def emit(t, h):
        out_ref[t] = h.astype(out_ref.dtype)     # (tb, 256) lane-dense store

    _lstm_chunk(x_ref, wih_ref, whh_ref, b_ref, h_sc, c_sc, emit)


def lstm_linear_tanh_kernel(x_ref, wih_ref, whh_ref, b_ref, wl_ref, bl_ref,
                            out_ref, h_sc, c_sc):
    @pl.when(pl.program_id(1) == 0)
    def _():
        h_sc[...] = jnp.zeros_like(h_sc)
        c_sc[...] = jnp.zeros_like(c_sc)

    def emit(t, h):
        # Fused Linear(H, padded 128k) + Tanh epilogue: bf16 MXU dot, f32 acc,
        # unmasked full-lane store (padded columns are sliced off on the host).
        y = (jnp.dot(h.astype(jnp.bfloat16), wl_ref[...],
                     preferred_element_type=jnp.float32) + bl_ref[...])
        out_ref[t] = jnp.tanh(y).astype(out_ref.dtype)

    _lstm_chunk(x_ref, wih_ref, whh_ref, b_ref, h_sc, c_sc, emit)


def _pick_batch_tile(B):
    """Fill MXU rows (256 on v6e/v7x, 128 on v5e) and, when B >= 16, keep
    n_b = B // tb >= 2 so the 'parallel' batch axis shards across v7x's two
    TensorCores.  Small batches fall back to the full batch dim (legal)."""
    want_split = B >= 16
    for tb in (256, 128):
        if B % tb == 0 and (not want_split or B // tb >= 2):
            return tb
    start = min(B, 128) - (min(B, 128) % 8)
    for tb in range(start, 0, -8):
        if B % tb == 0 and (not want_split or B // tb >= 2):
            return tb
    return B


def _pick_time_chunk(T, tb):
    """Timesteps per kernel invocation: amortize the ~600-cycle per-grid-step
    overhead while keeping the chunk's (Tc*tb, 4H) f32 gates_x buffer small."""
    cap = max(1, min(8, 2048 // max(tb, 1)))
    for tc in range(min(T, cap), 0, -1):
        if T % tc == 0:
            return tc
    return 1


def _lstm_pallas_call(x_tm, w_ih, w_hh, b, extra=None):
    """x_tm: (T, B, Din) time-major f32.  Returns (T, B, H) f32, or
    (T, B, padded_out) f32 when extra=(w_l_padded, b_l_padded)."""
    T, B, Din = x_tm.shape
    H = w_hh.shape[0]
    tb = _pick_batch_tile(B)
    n_b = B // tb
    tc = _pick_time_chunk(T, tb)
    n_t = T // tc

    def w_spec(shape):
        # Constant index_map -> weight block stays resident in VMEM.
        return pl.BlockSpec(shape, lambda bi, ti: (0, 0))

    in_specs = [
        pl.BlockSpec((tc, tb, Din), lambda bi, ti: (ti, bi, 0)),
        w_spec((Din, 4 * H)),
        w_spec((H, 4 * H)),
        w_spec((1, 4 * H)),
    ]
    args = [x_tm, w_ih, w_hh, b]
    if extra is None:
        kernel, d_out = lstm_layer_kernel, H
    else:
        w_l, b_l = extra
        d_out = w_l.shape[1]
        in_specs += [w_spec((H, d_out)), w_spec((1, d_out))]
        args += [w_l, b_l]
        kernel = lstm_linear_tanh_kernel

    return pl.pallas_call(
        kernel,
        out_shape=jax.ShapeDtypeStruct((T, B, d_out), jnp.float32),
        grid_spec=pltpu.PrefetchScalarGridSpec(
            num_scalar_prefetch=0,
            grid=(n_b, n_t),                    # time LAST: recurrence axis
            in_specs=in_specs,
            out_specs=pl.BlockSpec((tc, tb, d_out), lambda bi, ti: (ti, bi, 0)),
            scratch_shapes=[pltpu.VMEM((tb, H), jnp.float32),
                            pltpu.VMEM((tb, H), jnp.float32)],
        ),
        compiler_params=pltpu.CompilerParams(
            dimension_semantics=("parallel", "arbitrary"),
            vmem_limit_bytes=48 * 1024 * 1024),
    )(*args)


def generator_forward(x, kp):
    """x: (B, T, latent_dim) batch-first, like the PyTorch module (eval mode)."""
    x_tm = jnp.transpose(x, (1, 0, 2))          # time-major (T, B, latent)
    h = _lstm_pallas_call(x_tm, kp['w_ih0'], kp['w_hh0'], kp['b0'])
    # Dropout(0.3): identity in eval/inference mode.
    h = _lstm_pallas_call(h, kp['w_ih1'], kp['w_hh1'], kp['b1'])
    # Dropout(0.3): identity in eval/inference mode.
    y = _lstm_pallas_call(h, kp['w_ih2'], kp['w_hh2'], kp['b2'],
                          extra=(kp['w_l'], kp['b_l']))
    y = y[..., :kp['out_dim']]                  # drop lane padding
    return jnp.transpose(y, (1, 0, 2))          # back to (B, T, out_dim)


# ---------------- parameters ------------------------------------------------

def init_params(key, latent_dim, output_dim, hidden=HIDDEN):
    """Canonical f32 parameters: PyTorch LSTM weights pre-transposed to
    (in, 4H) with b_ih + b_hh fused; gate order (i, f, g, o) preserved."""
    keys = jax.random.split(key, 14)
    k = iter(keys)
    bound = 1.0 / np.sqrt(hidden)

    def u(kk, shape):
        return jax.random.uniform(kk, shape, jnp.float32, -bound, bound)

    params = {}
    for layer, din in enumerate([latent_dim, hidden, hidden]):
        params[f'w_ih{layer}'] = u(next(k), (din, 4 * hidden))
        params[f'w_hh{layer}'] = u(next(k), (hidden, 4 * hidden))
        params[f'b{layer}'] = (u(next(k), (1, 4 * hidden))
                               + u(next(k), (1, 4 * hidden)))
    params['w_l'] = u(next(k), (hidden, output_dim))
    params['b_l'] = u(next(k), (1, output_dim))
    return params


def prepare_kernel_params(params):
    """Kernel-side params: bf16 matmul weights (MXU-native on v5e/v6e/v7x),
    f32 biases, final Linear zero-padded to a lane-dense multiple of 128."""
    kp = {}
    for l in range(3):
        kp[f'w_ih{l}'] = params[f'w_ih{l}'].astype(jnp.bfloat16)
        kp[f'w_hh{l}'] = params[f'w_hh{l}'].astype(jnp.bfloat16)
        kp[f'b{l}'] = params[f'b{l}']
    out_dim = params['w_l'].shape[1]
    padded = ((out_dim + 127) // 128) * 128
    kp['w_l'] = jnp.pad(params['w_l'],
                        ((0, 0), (0, padded - out_dim))).astype(jnp.bfloat16)
    kp['b_l'] = jnp.pad(params['b_l'], ((0, 0), (0, padded - out_dim)))
    kp['out_dim'] = out_dim           # python int, used only for final slicing
    return kp


# ---------------- pure-JAX references ---------------------------------------

def _lstm_ref(x_tm, w_ih, w_hh, b, cast=None):
    T, B, _ = x_tm.shape
    H = w_hh.shape[0]
    cast_fn = (lambda a: a) if cast is None else (lambda a: a.astype(cast))
    wi, wh = cast_fn(w_ih), cast_fn(w_hh)

    def step(carry, x_t):
        h, c = carry
        gates = (jnp.dot(cast_fn(x_t), wi, preferred_element_type=jnp.float32)
                 + jnp.dot(cast_fn(h), wh, preferred_element_type=jnp.float32)
                 + b)
        i = _sigmoid(gates[:, 0 * H:1 * H])
        f = _sigmoid(gates[:, 1 * H:2 * H])
        g = jnp.tanh(gates[:, 2 * H:3 * H])
        o = _sigmoid(gates[:, 3 * H:4 * H])
        c = f * c + i * g
        h = o * jnp.tanh(c)
        return (h, c), h

    init = (jnp.zeros((B, H), jnp.float32), jnp.zeros((B, H), jnp.float32))
    _, hs = jax.lax.scan(step, init, x_tm)
    return hs


def ref_forward(x, params, cast=None):
    """cast=None: full-f32 module semantics.  cast=bf16: mirrors the kernel's
    mixed precision (bf16 dot operands, f32 accumulation/state)."""
    cast_fn = (lambda a: a) if cast is None else (lambda a: a.astype(cast))
    x_tm = jnp.transpose(x, (1, 0, 2))
    h = _lstm_ref(x_tm, params['w_ih0'], params['w_hh0'], params['b0'], cast)
    h = _lstm_ref(h, params['w_ih1'], params['w_hh1'], params['b1'], cast)
    h = _lstm_ref(h, params['w_ih2'], params['w_hh2'], params['b2'], cast)
    y = jnp.tanh(jnp.dot(cast_fn(h), cast_fn(params['w_l']),
                         preferred_element_type=jnp.float32) + params['b_l'])
    return jnp.transpose(y, (1, 0, 2))


if __name__ == "__main__":
    B, T = 4, 8                      # batch, sequence length
    latent_dim, output_dim = 16, 8   # hidden size 256 fixed by the module

    key = jax.random.PRNGKey(0)
    kx, kp_key = jax.random.split(key)
    x = jax.random.normal(kx, (B, T, latent_dim), dtype=jnp.float32)
    params = init_params(kp_key, latent_dim, output_dim)
    kparams = prepare_kernel_params(params)

    out = jax.block_until_ready(generator_forward(x, kparams))

    # Matched-precision reference (bf16 MXU operands, f32 acc/state): tight.
    ref_mixed = jax.block_until_ready(ref_forward(x, params, cast=jnp.bfloat16))
    np.testing.assert_allclose(np.asarray(out), np.asarray(ref_mixed),
                               rtol=2e-3, atol=2e-3)
    # Full-f32 reference (true module semantics): loose tol covers bf16 operands.
    ref_f32 = jax.block_until_ready(ref_forward(x, params))
    np.testing.assert_allclose(np.asarray(out), np.asarray(ref_f32),
                               rtol=2e-2, atol=2e-2)
    print("KERNEL_OK")
</pallas_src>

<mosaic_0001>
module attributes {stable_mosaic.version = 11 : i64} {
  func.func @lstm_layer_kernel(%arg0: i32, %arg1: i32, %arg2: memref<8x4x16xf32, #tpu.memory_space<vmem>>, %arg3: memref<16x1024xbf16, #tpu.memory_space<vmem>>, %arg4: memref<256x1024xbf16, #tpu.memory_space<vmem>>, %arg5: memref<1x1024xf32, #tpu.memory_space<vmem>>, %arg6: memref<8x4x256xf32, #tpu.memory_space<vmem>>, %arg7: memref<4x256xf32, #tpu.memory_space<vmem>>, %arg8: memref<4x256xf32, #tpu.memory_space<vmem>>) attributes {dimension_semantics = [#tpu.dimension_semantics<parallel>, #tpu.dimension_semantics<arbitrary>], iteration_bounds = array<i64: 1, 1>, scalar_prefetch = 0 : i64, scratch_operands = 2 : i64, tpu.core_type = #tpu.core_type<tc>, window_params = [{transform_indices = @transform_0, window_bounds = array<i64: 8, 4, 16>}, {pipeline_mode = #tpu.pipeline_mode<synchronous>, transform_indices = @transform_1, window_bounds = array<i64: 16, 1024>}, {pipeline_mode = #tpu.pipeline_mode<synchronous>, transform_indices = @transform_2, window_bounds = array<i64: 256, 1024>}, {pipeline_mode = #tpu.pipeline_mode<synchronous>, transform_indices = @transform_3, window_bounds = array<i64: 1, 1024>}, {transform_indices = @transform_4, window_bounds = array<i64: 8, 4, 256>}]} {
    %c0_i32 = arith.constant 0 : i32
    %0 = arith.cmpi eq, %arg1, %c0_i32 : i32
    %1 = arith.extui %0 : i1 to i32
    %c0_i32_0 = arith.constant 0 : i32
    %2 = arith.cmpi ne, %1, %c0_i32_0 : i32
    scf.if %2 {
      %cst_128 = arith.constant 0.000000e+00 : f32
      %327 = vector.broadcast %cst_128 : f32 to vector<4x256xf32>
      %c0_129 = arith.constant 0 : index
      %c0_130 = arith.constant 0 : index
      %328 = vector.load %arg7[%c0_129, %c0_130] : memref<4x256xf32, #tpu.memory_space<vmem>>, vector<4x256xf32>
      tpu.vector_store %arg7[%c0_129, %c0_130], %327 {strides = array<i32>} : memref<4x256xf32, #tpu.memory_space<vmem>>, vector<4x256xf32>,
      %cst_131 = arith.constant 0.000000e+00 : f32
      %329 = vector.broadcast %cst_131 : f32 to vector<4x256xf32>
      %c0_132 = arith.constant 0 : index
      %c0_133 = arith.constant 0 : index
      %330 = vector.load %arg8[%c0_132, %c0_133] : memref<4x256xf32, #tpu.memory_space<vmem>>, vector<4x256xf32>
      tpu.vector_store %arg8[%c0_132, %c0_133], %329 {strides = array<i32>} : memref<4x256xf32, #tpu.memory_space<vmem>>, vector<4x256xf32>,
    } else {
    }
    %c0 = arith.constant 0 : index
    %c0_1 = arith.constant 0 : index
    %c0_2 = arith.constant 0 : index
    %3 = vector.load %arg2[%c0, %c0_1, %c0_2] : memref<8x4x16xf32, #tpu.memory_space<vmem>>, vector<8x4x16xf32>
    %4 = arith.truncf %3 : vector<8x4x16xf32> to vector<8x4x16xbf16>
    %5 = vector.shape_cast %4 : vector<8x4x16xbf16> to vector<32x16xbf16>
    %c0_3 = arith.constant 0 : index
    %c0_4 = arith.constant 0 : index
    %6 = vector.load %arg3[%c0_3, %c0_4] : memref<16x1024xbf16, #tpu.memory_space<vmem>>, vector<16x1024xbf16>
    %cst = arith.constant dense<0.000000e+00> : vector<32x1024xf32>
    %7 = tpu.matmul %5, %6, %cst {dimension_numbers = #tpu.dot_dimension_numbers<[1], [0], [0], [1], [0, 0, 1, 1], [], []>} : vector<32x16xbf16>, vector<16x1024xbf16>, vector<32x1024xf32> -> vector<32x1024xf32>
    %c0_5 = arith.constant 0 : index
    %c0_6 = arith.constant 0 : index
    %8 = vector.load %arg5[%c0_5, %c0_6] : memref<1x1024xf32, #tpu.memory_space<vmem>>, vector<1x1024xf32>
    %9 = vector.broadcast %8 : vector<1x1024xf32> to vector<32x1024xf32>
    %10 = arith.addf %7, %9 : vector<32x1024xf32>
    %c0_7 = arith.constant 0 : index
    %c0_8 = arith.constant 0 : index
    %11 = vector.load %arg7[%c0_7, %c0_8] : memref<4x256xf32, #tpu.memory_space<vmem>>, vector<4x256xf32>
    %c0_9 = arith.constant 0 : index
    %c0_10 = arith.constant 0 : index
    %12 = vector.load %arg8[%c0_9, %c0_10] : memref<4x256xf32, #tpu.memory_space<vmem>>, vector<4x256xf32>
    %13 = vector.extract_strided_slice %10 {offsets = [0, 0], sizes = [4, 1024], strides = [1, 1]} : vector<32x1024xf32> to vector<4x1024xf32>
    %14 = arith.truncf %11 : vector<4x256xf32> to vector<4x256xbf16>
    %c0_11 = arith.constant 0 : index
    %c0_12 = arith.constant 0 : index
    %15 = vector.load %arg4[%c0_11, %c0_12] : memref<256x1024xbf16, #tpu.memory_space<vmem>>, vector<256x1024xbf16>
    %cst_13 = arith.constant dense<0.000000e+00> : vector<4x1024xf32>
    %16 = tpu.matmul %14, %15, %cst_13 {dimension_numbers = #tpu.dot_dimension_numbers<[1], [0], [0], [1], [0, 0, 1, 1], [], []>} : vector<4x256xbf16>, vector<256x1024xbf16>, vector<4x1024xf32> -> vector<4x1024xf32>
    %17 = arith.addf %13, %16 : vector<4x1024xf32>
    %18 = vector.extract_strided_slice %17 {offsets = [0, 0], sizes = [4, 256], strides = [1, 1]} : vector<4x1024xf32> to vector<4x256xf32>
    %cst_14 = arith.constant 5.000000e-01 : f32
    %19 = vector.broadcast %cst_14 : f32 to vector<4x256xf32>
    %20 = arith.mulf %19, %18 : vector<4x256xf32>
    %21 = math.tanh %20 : vector<4x256xf32>
    %cst_15 = arith.constant 1.000000e+00 : f32
    %22 = vector.broadcast %cst_15 : f32 to vector<4x256xf32>
    %23 = arith.addf %21, %22 : vector<4x256xf32>
    %cst_16 = arith.constant 5.000000e-01 : f32
    %24 = vector.broadcast %cst_16 : f32 to vector<4x256xf32>
    %25 = arith.mulf %24, %23 : vector<4x256xf32>
    %26 = vector.extract_strided_slice %17 {offsets = [0, 256], sizes = [4, 256], strides = [1, 1]} : vector<4x1024xf32> to vector<4x256xf32>
    %cst_17 = arith.constant 5.000000e-01 : f32
    %27 = vector.broadcast %cst_17 : f32 to vector<4x256xf32>
    %28 = arith.mulf %27, %26 : vector<4x256xf32>
    %29 = math.tanh %28 : vector<4x256xf32>
    %cst_18 = arith.constant 1.000000e+00 : f32
    %30 = vector.broadcast %cst_18 : f32 to vector<4x256xf32>
    %31 = arith.addf %29, %30 : vector<4x256xf32>
    %cst_19 = arith.constant 5.000000e-01 : f32
    %32 = vector.broadcast %cst_19 : f32 to vector<4x256xf32>
    %33 = arith.mulf %32, %31 : vector<4x256xf32>
    %34 = vector.extract_strided_slice %17 {offsets = [0, 512], sizes = [4, 256], strides = [1, 1]} : vector<4x1024xf32> to vector<4x256xf32>
    %35 = math.tanh %34 : vector<4x256xf32>
    %36 = vector.extract_strided_slice %17 {offsets = [0, 768], sizes = [4, 256], strides = [1, 1]} : vector<4x1024xf32> to vector<4x256xf32>
    %cst_20 = arith.constant 5.000000e-01 : f32
    %37 = vector.broadcast %cst_20 : f32 to vector<4x256xf32>
    %38 = arith.mulf %37, %36 : vector<4x256xf32>
    %39 = math.tanh %38 : vector<4x256xf32>
    %cst_21 = arith.constant 1.000000e+00 : f32
    %40 = vector.broadcast %cst_21 : f32 to vector<4x256xf32>
    %41 = arith.addf %39, %40 : vector<4x256xf32>
    %cst_22 = arith.constant 5.000000e-01 : f32
    %42 = vector.broadcast %cst_22 : f32 to vector<4x256xf32>
    %43 = arith.mulf %42, %41 : vector<4x256xf32>
    %44 = arith.mulf %33, %12 : vector<4x256xf32>
    %45 = arith.mulf %25, %35 : vector<4x256xf32>
    %46 = arith.addf %44, %45 : vector<4x256xf32>
    %47 = math.tanh %46 : vector<4x256xf32>
    %48 = arith.mulf %43, %47 : vector<4x256xf32>
    %c0_23 = arith.constant 0 : index
    %c0_24 = arith.constant 0 : index
    %c0_25 = arith.constant 0 : index
    %49 = vector.load %arg6[%c0_23, %c0_24, %c0_25] : memref<8x4x256xf32, #tpu.memory_space<vmem>>, vector<1x4x256xf32>
    %50 = vector.shape_cast %49 : vector<1x4x256xf32> to vector<4x256xf32>
    %51 = vector.shape_cast %48 : vector<4x256xf32> to vector<1x4x256xf32>
    tpu.vector_store %arg6[%c0_23, %c0_24, %c0_25], %51 {strides = array<i32>} : memref<8x4x256xf32, #tpu.memory_space<vmem>>, vector<1x4x256xf32>,
    %52 = vector.extract_strided_slice %10 {offsets = [4, 0], sizes = [4, 1024], strides = [1, 1]} : vector<32x1024xf32> to vector<4x1024xf32>
    %53 = arith.truncf %48 : vector<4x256xf32> to vector<4x256xbf16>
    %c0_26 = arith.constant 0 : index
    %c0_27 = arith.constant 0 : index
    %54 = vector.load %arg4[%c0_26, %c0_27] : memref<256x1024xbf16, #tpu.memory_space<vmem>>, vector<256x1024xbf16>
    %cst_28 = arith.constant dense<0.000000e+00> : vector<4x1024xf32>
    %55 = tpu.matmul %53, %54, %cst_28 {dimension_numbers = #tpu.dot_dimension_numbers<[1], [0], [0], [1], [0, 0, 1, 1], [], []>} : vector<4x256xbf16>, vector<256x1024xbf16>, vector<4x1024xf32> -> vector<4x1024xf32>
    %56 = arith.addf %52, %55 : vector<4x1024xf32>
    %57 = vector.extract_strided_slice %56 {offsets = [0, 0], sizes = [4, 256], strides = [1, 1]} : vector<4x1024xf32> to vector<4x256xf32>
    %cst_29 = arith.constant 5.000000e-01 : f32
    %58 = vector.broadcast %cst_29 : f32 to vector<4x256xf32>
    %59 = arith.mulf %58, %57 : vector<4x256xf32>
    %60 = math.tanh %59 : vector<4x256xf32>
    %cst_30 = arith.constant 1.000000e+00 : f32
    %61 = vector.broadcast %cst_30 : f32 to vector<4x256xf32>
    %62 = arith.addf %60, %61 : vector<4x256xf32>
    %cst_31 = arith.constant 5.000000e-01 : f32
    %63 = vector.broadcast %cst_31 : f32 to vector<4x256xf32>
    %64 = arith.mulf %63, %62 : vector<4x256xf32>
    %65 = vector.extract_strided_slice %56 {offsets = [0, 256], sizes = [4, 256], strides = [1, 1]} : vector<4x1024xf32> to vector<4x256xf32>
    %cst_32 = arith.constant 5.000000e-01 : f32
    %66 = vector.broadcast %cst_32 : f32 to vector<4x256xf32>
    %67 = arith.mulf %66, %65 : vector<4x256xf32>
    %68 = math.tanh %67 : vector<4x256xf32>
    %cst_33 = arith.constant 1.000000e+00 : f32
    %69 = vector.broadcast %cst_33 : f32 to vector<4x256xf32>
    %70 = arith.addf %68, %69 : vector<4x256xf32>
    %cst_34 = arith.constant 5.000000e-01 : f32
    %71 = vector.broadcast %cst_34 : f32 to vector<4x256xf32>
    %72 = arith.mulf %71, %70 : vector<4x256xf32>
    %73 = vector.extract_strided_slice %56 {offsets = [0, 512], sizes = [4, 256], strides = [1, 1]} : vector<4x1024xf32> to vector<4x256xf32>
    %74 = math.tanh %73 : vector<4x256xf32>
    %75 = vector.extract_strided_slice %56 {offsets = [0, 768], sizes = [4, 256], strides = [1, 1]} : vector<4x1024xf32> to vector<4x256xf32>
    %cst_35 = arith.constant 5.000000e-01 : f32
    %76 = vector.broadcast %cst_35 : f32 to vector<4x256xf32>
    %77 = arith.mulf %76, %75 : vector<4x256xf32>
    %78 = math.tanh %77 : vector<4x256xf32>
    %cst_36 = arith.constant 1.000000e+00 : f32
    %79 = vector.broadcast %cst_36 : f32 to vector<4x256xf32>
    %80 = arith.addf %78, %79 : vector<4x256xf32>
    %cst_37 = arith.constant 5.000000e-01 : f32
    %81 = vector.broadcast %cst_37 : f32 to vector<4x256xf32>
    %82 = arith.mulf %81, %80 : vector<4x256xf32>
    %83 = arith.mulf %72, %46 : vector<4x256xf32>
    %84 = arith.mulf %64, %74 : vector<4x256xf32>
    %85 = arith.addf %83, %84 : vector<4x256xf32>
    %86 = math.tanh %85 : vector<4x256xf32>
    %87 = arith.mulf %82, %86 : vector<4x256xf32>
    %c1 = arith.constant 1 : index
    %c0_38 = arith.constant 0 : index
    %c0_39 = arith.constant 0 : index
    %88 = vector.load %arg6[%c1, %c0_38, %c0_39] : memref<8x4x256xf32, #tpu.memory_space<vmem>>, vector<1x4x256xf32>
    %89 = vector.shape_cast %88 : vector<1x4x256xf32> to vector<4x256xf32>
    %90 = vector.shape_cast %87 : vector<4x256xf32> to vector<1x4x256xf32>
    tpu.vector_store %arg6[%c1, %c0_38, %c0_39], %90 {strides = array<i32>} : memref<8x4x256xf32, #tpu.memory_space<vmem>>, vector<1x4x256xf32>,
    %91 = vector.extract_strided_slice %10 {offsets = [8, 0], sizes = [4, 1024], strides = [1, 1]} : vector<32x1024xf32> to vector<4x1024xf32>
    %92 = arith.truncf %87 : vector<4x256xf32> to vector<4x256xbf16>
    %c0_40 = arith.constant 0 : index
    %c0_41 = arith.constant 0 : index
    %93 = vector.load %arg4[%c0_40, %c0_41] : memref<256x1024xbf16, #tpu.memory_space<vmem>>, vector<256x1024xbf16>
    %cst_42 = arith.constant dense<0.000000e+00> : vector<4x1024xf32>
    %94 = tpu.matmul %92, %93, %cst_42 {dimension_numbers = #tpu.dot_dimension_numbers<[1], [0], [0], [1], [0, 0, 1, 1], [], []>} : vector<4x256xbf16>, vector<256x1024xbf16>, vector<4x1024xf32> -> vector<4x1024xf32>
    %95 = arith.addf %91, %94 : vector<4x1024xf32>
    %96 = vector.extract_strided_slice %95 {offsets = [0, 0], sizes = [4, 256], strides = [1, 1]} : vector<4x1024xf32> to vector<4x256xf32>
    %cst_43 = arith.constant 5.000000e-01 : f32
    %97 = vector.broadcast %cst_43 : f32 to vector<4x256xf32>
    %98 = arith.mulf %97, %96 : vector<4x256xf32>
    %99 = math.tanh %98 : vector<4x256xf32>
    %cst_44 = arith.constant 1.000000e+00 : f32
    %100 = vector.broadcast %cst_44 : f32 to vector<4x256xf32>
    %101 = arith.addf %99, %100 : vector<4x256xf32>
    %cst_45 = arith.constant 5.000000e-01 : f32
    %102 = vector.broadcast %cst_45 : f32 to vector<4x256xf32>
    %103 = arith.mulf %102, %101 : vector<4x256xf32>
    %104 = vector.extract_strided_slice %95 {offsets = [0, 256], sizes = [4, 256], strides = [1, 1]} : vector<4x1024xf32> to vector<4x256xf32>
    %cst_46 = arith.constant 5.000000e-01 : f32
    %105 = vector.broadcast %cst_46 : f32 to vector<4x256xf32>
    %106 = arith.mulf %105, %104 : vector<4x256xf32>
    %107 = math.tanh %106 : vector<4x256xf32>
    %cst_47 = arith.constant 1.000000e+00 : f32
    %108 = vector.broadcast %cst_47 : f32 to vector<4x256xf32>
    %109 = arith.addf %107, %108 : vector<4x256xf32>
    %cst_48 = arith.constant 5.000000e-01 : f32
    %110 = vector.broadcast %cst_48 : f32 to vector<4x256xf32>
    %111 = arith.mulf %110, %109 : vector<4x256xf32>
    %112 = vector.extract_strided_slice %95 {offsets = [0, 512], sizes = [4, 256], strides = [1, 1]} : vector<4x1024xf32> to vector<4x256xf32>
    %113 = math.tanh %112 : vector<4x256xf32>
    %114 = vector.extract_strided_slice %95 {offsets = [0, 768], sizes = [4, 256], strides = [1, 1]} : vector<4x1024xf32> to vector<4x256xf32>
    %cst_49 = arith.constant 5.000000e-01 : f32
    %115 = vector.broadcast %cst_49 : f32 to vector<4x256xf32>
    %116 = arith.mulf %115, %114 : vector<4x256xf32>
    %117 = math.tanh %116 : vector<4x256xf32>
    %cst_50 = arith.constant 1.000000e+00 : f32
    %118 = vector.broadcast %cst_50 : f32 to vector<4x256xf32>
    %119 = arith.addf %117, %118 : vector<4x256xf32>
    %cst_51 = arith.constant 5.000000e-01 : f32
    %120 = vector.broadcast %cst_51 : f32 to vector<4x256xf32>
    %121 = arith.mulf %120, %119 : vector<4x256xf32>
    %122 = arith.mulf %111, %85 : vector<4x256xf32>
    %123 = arith.mulf %103, %113 : vector<4x256xf32>
    %124 = arith.addf %122, %123 : vector<4x256xf32>
    %125 = math.tanh %124 : vector<4x256xf32>
    %126 = arith.mulf %121, %125 : vector<4x256xf32>
    %c2 = arith.constant 2 : index
    %c0_52 = arith.constant 0 : index
    %c0_53 = arith.constant 0 : index
    %127 = vector.load %arg6[%c2, %c0_52, %c0_53] : memref<8x4x256xf32, #tpu.memory_space<vmem>>, vector<1x4x256xf32>
    %128 = vector.shape_cast %127 : vector<1x4x256xf32> to vector<4x256xf32>
    %129 = vector.shape_cast %126 : vector<4x256xf32> to vector<1x4x256xf32>
    tpu.vector_store %arg6[%c2, %c0_52, %c0_53], %129 {strides = array<i32>} : memref<8x4x256xf32, #tpu.memory_space<vmem>>, vector<1x4x256xf32>,
    %130 = vector.extract_strided_slice %10 {offsets = [12, 0], sizes = [4, 1024], strides = [1, 1]} : vector<32x1024xf32> to vector<4x1024xf32>
    %131 = arith.truncf %126 : vector<4x256xf32> to vector<4x256xbf16>
    %c0_54 = arith.constant 0 : index
    %c0_55 = arith.constant 0 : index
    %132 = vector.load %arg4[%c0_54, %c0_55] : memref<256x1024xbf16, #tpu.memory_space<vmem>>, vector<256x1024xbf16>
    %cst_56 = arith.constant dense<0.000000e+00> : vector<4x1024xf32>
    %133 = tpu.matmul %131, %132, %cst_56 {dimension_numbers = #tpu.dot_dimension_numbers<[1], [0], [0], [1], [0, 0, 1, 1], [], []>} : vector<4x256xbf16>, vector<256x1024xbf16>, vector<4x1024xf32> -> vector<4x1024xf32>
    %134 = arith.addf %130, %133 : vector<4x1024xf32>
    %135 = vector.extract_strided_slice %134 {offsets = [0, 0], sizes = [4, 256], strides = [1, 1]} : vector<4x1024xf32> to vector<4x256xf32>
    %cst_57 = arith.constant 5.000000e-01 : f32
    %136 = vector.broadcast %cst_57 : f32 to vector<4x256xf32>
    %137 = arith.mulf %136, %135 : vector<4x256xf32>
    %138 = math.tanh %137 : vector<4x256xf32>
    %cst_58 = arith.constant 1.000000e+00 : f32
    %139 = vector.broadcast %cst_58 : f32 to vector<4x256xf32>
    %140 = arith.addf %138, %139 : vector<4x256xf32>
    %cst_59 = arith.constant 5.000000e-01 : f32
    %141 = vector.broadcast %cst_59 : f32 to vector<4x256xf32>
    %142 = arith.mulf %141, %140 : vector<4x256xf32>
    %143 = vector.extract_strided_slice %134 {offsets = [0, 256], sizes = [4, 256], strides = [1, 1]} : vector<4x1024xf32> to vector<4x256xf32>
    %cst_60 = arith.constant 5.000000e-01 : f32
    %144 = vector.broadcast %cst_60 : f32 to vector<4x256xf32>
    %145 = arith.mulf %144, %143 : vector<4x256xf32>
    %146 = math.tanh %145 : vector<4x256xf32>
    %cst_61 = arith.constant 1.000000e+00 : f32
    %147 = vector.broadcast %cst_61 : f32 to vector<4x256xf32>
    %148 = arith.addf %146, %147 : vector<4x256xf32>
    %cst_62 = arith.constant 5.000000e-01 : f32
    %149 = vector.broadcast %cst_62 : f32 to vector<4x256xf32>
    %150 = arith.mulf %149, %148 : vector<4x256xf32>
    %151 = vector.extract_strided_slice %134 {offsets = [0, 512], sizes = [4, 256], strides = [1, 1]} : vector<4x1024xf32> to vector<4x256xf32>
    %152 = math.tanh %151 : vector<4x256xf32>
    %153 = vector.extract_strided_slice %134 {offsets = [0, 768], sizes = [4, 256], strides = [1, 1]} : vector<4x1024xf32> to vector<4x256xf32>
    %cst_63 = arith.constant 5.000000e-01 : f32
    %154 = vector.broadcast %cst_63 : f32 to vector<4x256xf32>
    %155 = arith.mulf %154, %153 : vector<4x256xf32>
    %156 = math.tanh %155 : vector<4x256xf32>
    %cst_64 = arith.constant 1.000000e+00 : f32
    %157 = vector.broadcast %cst_64 : f32 to vector<4x256xf32>
    %158 = arith.addf %156, %157 : vector<4x256xf32>
    %cst_65 = arith.constant 5.000000e-01 : f32
    %159 = vector.broadcast %cst_65 : f32 to vector<4x256xf32>
    %160 = arith.mulf %159, %158 : vector<4x256xf32>
    %161 = arith.mulf %150, %124 : vector<4x256xf32>
    %162 = arith.mulf %142, %152 : vector<4x256xf32>
    %163 = arith.addf %161, %162 : vector<4x256xf32>
    %164 = math.tanh %163 : vector<4x256xf32>
    %165 = arith.mulf %160, %164 : vector<4x256xf32>
    %c3 = arith.constant 3 : index
    %c0_66 = arith.constant 0 : index
    %c0_67 = arith.constant 0 : index
    %166 = vector.load %arg6[%c3, %c0_66, %c0_67] : memref<8x4x256xf32, #tpu.memory_space<vmem>>, vector<1x4x256xf32>
    %167 = vector.shape_cast %166 : vector<1x4x256xf32> to vector<4x256xf32>
    %168 = vector.shape_cast %165 : vector<4x256xf32> to vector<1x4x256xf32>
    tpu.vector_store %arg6[%c3, %c0_66, %c0_67], %168 {strides = array<i32>} : memref<8x4x256xf32, #tpu.memory_space<vmem>>, vector<1x4x256xf32>,
    %169 = vector.extract_strided_slice %10 {offsets = [16, 0], sizes = [4, 1024], strides = [1, 1]} : vector<32x1024xf32> to vector<4x1024xf32>
    %170 = arith.truncf %165 : vector<4x256xf32> to vector<4x256xbf16>
    %c0_68 = arith.constant 0 : index
    %c0_69 = arith.constant 0 : index
    %171 = vector.load %arg4[%c0_68, %c0_69] : memref<256x1024xbf16, #tpu.memory_space<vmem>>, vector<256x1024xbf16>
    %cst_70 = arith.constant dense<0.000000e+00> : vector<4x1024xf32>
    %172 = tpu.matmul %170, %171, %cst_70 {dimension_numbers = #tpu.dot_dimension_numbers<[1], [0], [0], [1], [0, 0, 1, 1], [], []>} : vector<4x256xbf16>, vector<256x1024xbf16>, vector<4x1024xf32> -> vector<4x1024xf32>
    %173 = arith.addf %169, %172 : vector<4x1024xf32>
    %174 = vector.extract_strided_slice %173 {offsets = [0, 0], sizes = [4, 256], strides = [1, 1]} : vector<4x1024xf32> to vector<4x256xf32>
    %cst_71 = arith.constant 5.000000e-01 : f32
    %175 = vector.broadcast %cst_71 : f32 to vector<4x256xf32>
    %176 = arith.mulf %175, %174 : vector<4x256xf32>
    %177 = math.tanh %176 : vector<4x256xf32>
    %cst_72 = arith.constant 1.000000e+00 : f32
    %178 = vector.broadcast %cst_72 : f32 to vector<4x256xf32>
    %179 = arith.addf %177, %178 : vector<4x256xf32>
    %cst_73 = arith.constant 5.000000e-01 : f32
    %180 = vector.broadcast %cst_73 : f32 to vector<4x256xf32>
    %181 = arith.mulf %180, %179 : vector<4x256xf32>
    %182 = vector.extract_strided_slice %173 {offsets = [0, 256], sizes = [4, 256], strides = [1, 1]} : vector<4x1024xf32> to vector<4x256xf32>
    %cst_74 = arith.constant 5.000000e-01 : f32
    %183 = vector.broadcast %cst_74 : f32 to vector<4x256xf32>
    %184 = arith.mulf %183, %182 : vector<4x256xf32>
    %185 = math.tanh %184 : vector<4x256xf32>
    %cst_75 = arith.constant 1.000000e+00 : f32
    %186 = vector.broadcast %cst_75 : f32 to vector<4x256xf32>
    %187 = arith.addf %185, %186 : vector<4x256xf32>
    %cst_76 = arith.constant 5.000000e-01 : f32
    %188 = vector.broadcast %cst_76 : f32 to vector<4x256xf32>
    %189 = arith.mulf %188, %187 : vector<4x256xf32>
    %190 = vector.extract_strided_slice %173 {offsets = [0, 512], sizes = [4, 256], strides = [1, 1]} : vector<4x1024xf32> to vector<4x256xf32>
    %191 = math.tanh %190 : vector<4x256xf32>
    %192 = vector.extract_strided_slice %173 {offsets = [0, 768], sizes = [4, 256], strides = [1, 1]} : vector<4x1024xf32> to vector<4x256xf32>
    %cst_77 = arith.constant 5.000000e-01 : f32
    %193 = vector.broadcast %cst_77 : f32 to vector<4x256xf32>
    %194 = arith.mulf %193, %192 : vector<4x256xf32>
    %195 = math.tanh %194 : vector<4x256xf32>
    %cst_78 = arith.constant 1.000000e+00 : f32
    %196 = vector.broadcast %cst_78 : f32 to vector<4x256xf32>
    %197 = arith.addf %195, %196 : vector<4x256xf32>
    %cst_79 = arith.constant 5.000000e-01 : f32
    %198 = vector.broadcast %cst_79 : f32 to vector<4x256xf32>
    %199 = arith.mulf %198, %197 : vector<4x256xf32>
    %200 = arith.mulf %189, %163 : vector<4x256xf32>
    %201 = arith.mulf %181, %191 : vector<4x256xf32>
    %202 = arith.addf %200, %201 : vector<4x256xf32>
    %203 = math.tanh %202 : vector<4x256xf32>
    %204 = arith.mulf %199, %203 : vector<4x256xf32>
    %c4 = arith.constant 4 : index
    %c0_80 = arith.constant 0 : index
    %c0_81 = arith.constant 0 : index
    %205 = vector.load %arg6[%c4, %c0_80, %c0_81] : memref<8x4x256xf32, #tpu.memory_space<vmem>>, vector<1x4x256xf32>
    %206 = vector.shape_cast %205 : vector<1x4x256xf32> to vector<4x256xf32>
    %207 = vector.shape_cast %204 : vector<4x256xf32> to vector<1x4x256xf32>
    tpu.vector_store %arg6[%c4, %c0_80, %c0_81], %207 {strides = array<i32>} : memref<8x4x256xf32, #tpu.memory_space<vmem>>, vector<1x4x256xf32>,
    %208 = vector.extract_strided_slice %10 {offsets = [20, 0], sizes = [4, 1024], strides = [1, 1]} : vector<32x1024xf32> to vector<4x1024xf32>
    %209 = arith.truncf %204 : vector<4x256xf32> to vector<4x256xbf16>
    %c0_82 = arith.constant 0 : index
    %c0_83 = arith.constant 0 : index
    %210 = vector.load %arg4[%c0_82, %c0_83] : memref<256x1024xbf16, #tpu.memory_space<vmem>>, vector<256x1024xbf16>
    %cst_84 = arith.constant dense<0.000000e+00> : vector<4x1024xf32>
    %211 = tpu.matmul %209, %210, %cst_84 {dimension_numbers = #tpu.dot_dimension_numbers<[1], [0], [0], [1], [0, 0, 1, 1], [], []>} : vector<4x256xbf16>, vector<256x1024xbf16>, vector<4x1024xf32> -> vector<4x1024xf32>
    %212 = arith.addf %208, %211 : vector<4x1024xf32>
    %213 = vector.extract_strided_slice %212 {offsets = [0, 0], sizes = [4, 256], strides = [1, 1]} : vector<4x1024xf32> to vector<4x256xf32>
    %cst_85 = arith.constant 5.000000e-01 : f32
    %214 = vector.broadcast %cst_85 : f32 to vector<4x256xf32>
    %215 = arith.mulf %214, %213 : vector<4x256xf32>
    %216 = math.tanh %215 : vector<4x256xf32>
    %cst_86 = arith.constant 1.000000e+00 : f32
    %217 = vector.broadcast %cst_86 : f32 to vector<4x256xf32>
    %218 = arith.addf %216, %217 : vector<4x256xf32>
    %cst_87 = arith.constant 5.000000e-01 : f32
    %219 = vector.broadcast %cst_87 : f32 to vector<4x256xf32>
    %220 = arith.mulf %219, %218 : vector<4x256xf32>
    %221 = vector.extract_strided_slice %212 {offsets = [0, 256], sizes = [4, 256], strides = [1, 1]} : vector<4x1024xf32> to vector<4x256xf32>
    %cst_88 = arith.constant 5.000000e-01 : f32
    %222 = vector.broadcast %cst_88 : f32 to vector<4x256xf32>
    %223 = arith.mulf %222, %221 : vector<4x256xf32>
    %224 = math.tanh %223 : vector<4x256xf32>
    %cst_89 = arith.constant 1.000000e+00 : f32
    %225 = vector.broadcast %cst_89 : f32 to vector<4x256xf32>
    %226 = arith.addf %224, %225 : vector<4x256xf32>
    %cst_90 = arith.constant 5.000000e-01 : f32
    %227 = vector.broadcast %cst_90 : f32 to vector<4x256xf32>
    %228 = arith.mulf %227, %226 : vector<4x256xf32>
    %229 = vector.extract_strided_slice %212 {offsets = [0, 512], sizes = [4, 256], strides = [1, 1]} : vector<4x1024xf32> to vector<4x256xf32>
    %230 = math.tanh %229 : vector<4x256xf32>
    %231 = vector.extract_strided_slice %212 {offsets = [0, 768], sizes = [4, 256], strides = [1, 1]} : vector<4x1024xf32> to vector<4x256xf32>
    %cst_91 = arith.constant 5.000000e-01 : f32
    %232 = vector.broadcast %cst_91 : f32 to vector<4x256xf32>
    %233 = arith.mulf %232, %231 : vector<4x256xf32>
    %234 = math.tanh %233 : vector<4x256xf32>
    %cst_92 = arith.constant 1.000000e+00 : f32
    %235 = vector.broadcast %cst_92 : f32 to vector<4x256xf32>
    %236 = arith.addf %234, %235 : vector<4x256xf32>
    %cst_93 = arith.constant 5.000000e-01 : f32
    %237 = vector.broadcast %cst_93 : f32 to vector<4x256xf32>
    %238 = arith.mulf %237, %236 : vector<4x256xf32>
    %239 = arith.mulf %228, %202 : vector<4x256xf32>
    %240 = arith.mulf %220, %230 : vector<4x256xf32>
    %241 = arith.addf %239, %240 : vector<4x256xf32>
    %242 = math.tanh %241 : vector<4x256xf32>
    %243 = arith.mulf %238, %242 : vector<4x256xf32>
    %c5 = arith.constant 5 : index
    %c0_94 = arith.constant 0 : index
    %c0_95 = arith.constant 0 : index
    %244 = vector.load %arg6[%c5, %c0_94, %c0_95] : memref<8x4x256xf32, #tpu.memory_space<vmem>>, vector<1x4x256xf32>
    %245 = vector.shape_cast %244 : vector<1x4x256xf32> to vector<4x256xf32>
    %246 = vector.shape_cast %243 : vector<4x256xf32> to vector<1x4x256xf32>
    tpu.vector_store %arg6[%c5, %c0_94, %c0_95], %246 {strides = array<i32>} : memref<8x4x256xf32, #tpu.memory_space<vmem>>, vector<1x4x256xf32>,
    %247 = vector.extract_strided_slice %10 {offsets = [24, 0], sizes = [4, 1024], strides = [1, 1]} : vector<32x1024xf32> to vector<4x1024xf32>
    %248 = arith.truncf %243 : vector<4x256xf32> to vector<4x256xbf16>
    %c0_96 = arith.constant 0 : index
    %c0_97 = arith.constant 0 : index
    %249 = vector.load %arg4[%c0_96, %c0_97] : memref<256x1024xbf16, #tpu.memory_space<vmem>>, vector<256x1024xbf16>
    %cst_98 = arith.constant dense<0.000000e+00> : vector<4x1024xf32>
    %250 = tpu.matmul %248, %249, %cst_98 {dimension_numbers = #tpu.dot_dimension_numbers<[1], [0], [0], [1], [0, 0, 1, 1], [], []>} : vector<4x256xbf16>, vector<256x1024xbf16>, vector<4x1024xf32> -> vector<4x1024xf32>
    %251 = arith.addf %247, %250 : vector<4x1024xf32>
    %252 = vector.extract_strided_slice %251 {offsets = [0, 0], sizes = [4, 256], strides = [1, 1]} : vector<4x1024xf32> to vector<4x256xf32>
    %cst_99 = arith.constant 5.000000e-01 : f32
    %253 = vector.broadcast %cst_99 : f32 to vector<4x256xf32>
    %254 = arith.mulf %253, %252 : vector<4x256xf32>
    %255 = math.tanh %254 : vector<4x256xf32>
    %cst_100 = arith.constant 1.000000e+00 : f32
    %256 = vector.broadcast %cst_100 : f32 to vector<4x256xf32>
    %257 = arith.addf %255, %256 : vector<4x256xf32>
    %cst_101 = arith.constant 5.000000e-01 : f32
    %258 = vector.broadcast %cst_101 : f32 to vector<4x256xf32>
    %259 = arith.mulf %258, %257 : vector<4x256xf32>
    %260 = vector.extract_strided_slice %251 {offsets = [0, 256], sizes = [4, 256], strides = [1, 1]} : vector<4x1024xf32> to vector<4x256xf32>
    %cst_102 = arith.constant 5.000000e-01 : f32
    %261 = vector.broadcast %cst_102 : f32 to vector<4x256xf32>
    %262 = arith.mulf %261, %260 : vector<4x256xf32>
    %263 = math.tanh %262 : vector<4x256xf32>
    %cst_103 = arith.constant 1.000000e+00 : f32
    %264 = vector.broadcast %cst_103 : f32 to vector<4x256xf32>
    %265 = arith.addf %263, %264 : vector<4x256xf32>
    %cst_104 = arith.constant 5.000000e-01 : f32
    %266 = vector.broadcast %cst_104 : f32 to vector<4x256xf32>
    %267 = arith.mulf %266, %265 : vector<4x256xf32>
    %268 = vector.extract_strided_slice %251 {offsets = [0, 512], sizes = [4, 256], strides = [1, 1]} : vector<4x1024xf32> to vector<4x256xf32>
    %269 = math.tanh %268 : vector<4x256xf32>
    %270 = vector.extract_strided_slice %251 {offsets = [0, 768], sizes = [4, 256], strides = [1, 1]} : vector<4x1024xf32> to vector<4x256xf32>
    %cst_105 = arith.constant 5.000000e-01 : f32
    %271 = vector.broadcast %cst_105 : f32 to vector<4x256xf32>
    %272 = arith.mulf %271, %270 : vector<4x256xf32>
    %273 = math.tanh %272 : vector<4x256xf32>
    %cst_106 = arith.constant 1.000000e+00 : f32
    %274 = vector.broadcast %cst_106 : f32 to vector<4x256xf32>
    %275 = arith.addf %273, %274 : vector<4x256xf32>
    %cst_107 = arith.constant 5.000000e-01 : f32
    %276 = vector.broadcast %cst_107 : f32 to vector<4x256xf32>
    %277 = arith.mulf %276, %275 : vector<4x256xf32>
    %278 = arith.mulf %267, %241 : vector<4x256xf32>
    %279 = arith.mulf %259, %269 : vector<4x256xf32>
    %280 = arith.addf %278, %279 : vector<4x256xf32>
    %281 = math.tanh %280 : vector<4x256xf32>
    %282 = arith.mulf %277, %281 : vector<4x256xf32>
    %c6 = arith.constant 6 : index
    %c0_108 = arith.constant 0 : index
    %c0_109 = arith.constant 0 : index
    %283 = vector.load %arg6[%c6, %c0_108, %c0_109] : memref<8x4x256xf32, #tpu.memory_space<vmem>>, vector<1x4x256xf32>
    %284 = vector.shape_cast %283 : vector<1x4x256xf32> to vector<4x256xf32>
    %285 = vector.shape_cast %282 : vector<4x256xf32> to vector<1x4x256xf32>
    tpu.vector_store %arg6[%c6, %c0_108, %c0_109], %285 {strides = array<i32>} : memref<8x4x256xf32, #tpu.memory_space<vmem>>, vector<1x4x256xf32>,
    %286 = vector.extract_strided_slice %10 {offsets = [28, 0], sizes = [4, 1024], strides = [1, 1]} : vector<32x1024xf32> to vector<4x1024xf32>
    %287 = arith.truncf %282 : vector<4x256xf32> to vector<4x256xbf16>
    %c0_110 = arith.constant 0 : index
    %c0_111 = arith.constant 0 : index
    %288 = vector.load %arg4[%c0_110, %c0_111] : memref<256x1024xbf16, #tpu.memory_space<vmem>>, vector<256x1024xbf16>
    %cst_112 = arith.constant dense<0.000000e+00> : vector<4x1024xf32>
    %289 = tpu.matmul %287, %288, %cst_112 {dimension_numbers = #tpu.dot_dimension_numbers<[1], [0], [0], [1], [0, 0, 1, 1], [], []>} : vector<4x256xbf16>, vector<256x1024xbf16>, vector<4x1024xf32> -> vector<4x1024xf32>
    %290 = arith.addf %286, %289 : vector<4x1024xf32>
    %291 = vector.extract_strided_slice %290 {offsets = [0, 0], sizes = [4, 256], strides = [1, 1]} : vector<4x1024xf32> to vector<4x256xf32>
    %cst_113 = arith.constant 5.000000e-01 : f32
    %292 = vector.broadcast %cst_113 : f32 to vector<4x256xf32>
    %293 = arith.mulf %292, %291 : vector<4x256xf32>
    %294 = math.tanh %293 : vector<4x256xf32>
    %cst_114 = arith.constant 1.000000e+00 : f32
    %295 = vector.broadcast %cst_114 : f32 to vector<4x256xf32>
    %296 = arith.addf %294, %295 : vector<4x256xf32>
    %cst_115 = arith.constant 5.000000e-01 : f32
    %297 = vector.broadcast %cst_115 : f32 to vector<4x256xf32>
    %298 = arith.mulf %297, %296 : vector<4x256xf32>
    %299 = vector.extract_strided_slice %290 {offsets = [0, 256], sizes = [4, 256], strides = [1, 1]} : vector<4x1024xf32> to vector<4x256xf32>
    %cst_116 = arith.constant 5.000000e-01 : f32
    %300 = vector.broadcast %cst_116 : f32 to vector<4x256xf32>
    %301 = arith.mulf %300, %299 : vector<4x256xf32>
    %302 = math.tanh %301 : vector<4x256xf32>
    %cst_117 = arith.constant 1.000000e+00 : f32
    %303 = vector.broadcast %cst_117 : f32 to vector<4x256xf32>
    %304 = arith.addf %302, %303 : vector<4x256xf32>
    %cst_118 = arith.constant 5.000000e-01 : f32
    %305 = vector.broadcast %cst_118 : f32 to vector<4x256xf32>
    %306 = arith.mulf %305, %304 : vector<4x256xf32>
    %307 = vector.extract_strided_slice %290 {offsets = [0, 512], sizes = [4, 256], strides = [1, 1]} : vector<4x1024xf32> to vector<4x256xf32>
    %308 = math.tanh %307 : vector<4x256xf32>
    %309 = vector.extract_strided_slice %290 {offsets = [0, 768], sizes = [4, 256], strides = [1, 1]} : vector<4x1024xf32> to vector<4x256xf32>
    %cst_119 = arith.constant 5.000000e-01 : f32
    %310 = vector.broadcast %cst_119 : f32 to vector<4x256xf32>
    %311 = arith.mulf %310, %309 : vector<4x256xf32>
    %312 = math.tanh %311 : vector<4x256xf32>
    %cst_120 = arith.constant 1.000000e+00 : f32
    %313 = vector.broadcast %cst_120 : f32 to vector<4x256xf32>
    %314 = arith.addf %312, %313 : vector<4x256xf32>
    %cst_121 = arith.constant 5.000000e-01 : f32
    %315 = vector.broadcast %cst_121 : f32 to vector<4x256xf32>
    %316 = arith.mulf %315, %314 : vector<4x256xf32>
    %317 = arith.mulf %306, %280 : vector<4x256xf32>
    %318 = arith.mulf %298, %308 : vector<4x256xf32>
    %319 = arith.addf %317, %318 : vector<4x256xf32>
    %320 = math.tanh %319 : vector<4x256xf32>
    %321 = arith.mulf %316, %320 : vector<4x256xf32>
    %c7 = arith.constant 7 : index
    %c0_122 = arith.constant 0 : index
    %c0_123 = arith.constant 0 : index
    %322 = vector.load %arg6[%c7, %c0_122, %c0_123] : memref<8x4x256xf32, #tpu.memory_space<vmem>>, vector<1x4x256xf32>
    %323 = vector.shape_cast %322 : vector<1x4x256xf32> to vector<4x256xf32>
    %324 = vector.shape_cast %321 : vector<4x256xf32> to vector<1x4x256xf32>
    tpu.vector_store %arg6[%c7, %c0_122, %c0_123], %324 {strides = array<i32>} : memref<8x4x256xf32, #tpu.memory_space<vmem>>, vector<1x4x256xf32>,
    %c0_124 = arith.constant 0 : index
    %c0_125 = arith.constant 0 : index
    %325 = vector.load %arg7[%c0_124, %c0_125] : memref<4x256xf32, #tpu.memory_space<vmem>>, vector<4x256xf32>
    tpu.vector_store %arg7[%c0_124, %c0_125], %321 {strides = array<i32>} : memref<4x256xf32, #tpu.memory_space<vmem>>, vector<4x256xf32>,
    %c0_126 = arith.constant 0 : index
    %c0_127 = arith.constant 0 : index
    %326 = vector.load %arg8[%c0_126, %c0_127] : memref<4x256xf32, #tpu.memory_space<vmem>>, vector<4x256xf32>
    tpu.vector_store %arg8[%c0_126, %c0_127], %319 {strides = array<i32>} : memref<4x256xf32, #tpu.memory_space<vmem>>, vector<4x256xf32>,
    return
  }
  func.func @transform_0(%arg0: i32, %arg1: i32) -> (i32, i32, i32) {
    %c0_i32 = arith.constant 0 : i32
    %c0_i32_0 = arith.constant 0 : i32
    return %arg1, %arg0, %c0_i32 : i32, i32, i32
  }
  func.func @transform_1(%arg0: i32, %arg1: i32) -> (i32, i32) {
    %c0_i32 = arith.constant 0 : i32
    %c0_i32_0 = arith.constant 0 : i32
    %c0_i32_1 = arith.constant 0 : i32
    return %c0_i32, %c0_i32_0 : i32, i32
  }
  func.func @transform_2(%arg0: i32, %arg1: i32) -> (i32, i32) {
    %c0_i32 = arith.constant 0 : i32
    %c0_i32_0 = arith.constant 0 : i32
    %c0_i32_1 = arith.constant 0 : i32
    return %c0_i32, %c0_i32_0 : i32, i32
  }
  func.func @transform_3(%arg0: i32, %arg1: i32) -> (i32, i32) {
    %c0_i32 = arith.constant 0 : i32
    %c0_i32_0 = arith.constant 0 : i32
    %c0_i32_1 = arith.constant 0 : i32
    return %c0_i32, %c0_i32_0 : i32, i32
  }
  func.func @transform_4(%arg0: i32, %arg1: i32) -> (i32, i32, i32) {
    %c0_i32 = arith.constant 0 : i32
    %c0_i32_0 = arith.constant 0 : i32
    return %arg1, %arg0, %c0_i32 : i32, i32, i32
  }
}

</mosaic_0001>

<llo_original>
// kernel: tpu_custom_call.1
$region0: #{tpu_custom_call.1}
  #allocation0 [shape = 'u32[]', space=smem, size = 0x4, offset = 0x4, fixed_abs, tag = 'smem constant byte address 0x4 - core index']
  #allocation1 [shape = 'u32[144,128]{1,0:T(1,128)}', space=vmem, size = 0x12000, scoped, tag = 'internal scratch']
  #allocation2 [shape = 'f32[4,256]{1,0:T(4,128)}', space=vmem, size = 0x1000, scoped, tag = 'scratch operand']
  #allocation3 [shape = 'f32[4,256]{1,0:T(4,128)}', space=vmem, size = 0x1000, scoped, tag = 'scratch operand']
  %s0 = inlined_call_operand.hbm [shape: f32[8,4,16], index: 0, kind: input, shape index: {}]
  %s1 = inlined_call_operand.hbm [shape: bf16[16,1024], index: 1, kind: input, shape index: {}]
  %s2 = inlined_call_operand.hbm [shape: bf16[256,1024], index: 2, kind: input, shape index: {}]
  %s3 = inlined_call_operand.vmem [shape: f32[1,1024], index: 3, kind: input, shape index: {}]
  %s4 = inlined_call_operand.hbm [shape: f32[8,4,256], index: 4, kind: output, shape index: {}]
  %s5 = sld [smem:[#allocation0]]
  $region42: #{tpu_custom_call.1} parent=0
    _
  %s7 = ssub.s32 1, %s5
  %s8 = scalar_select 0, %s7, %s5
  $region1: #{tpu_custom_call.1} parent=0
    #allocation4 [shape = 'u8[16384]{0}', space=vmem, size = 0x4000, scoped, tag = 'input window, operand 0, single buffered']
    #allocation5 [shape = 's32[1]{0}', space=sflag, size = 0x4, scoped, tag = 'scoped memory for tpu_custom_call.1']
    #allocation6 [shape = 's32[1]{0}', space=sflag, size = 0x4, scoped, tag = 'scoped memory for tpu_custom_call.1']
    #allocation7 [shape = 'u8[32768]{0}', space=vmem, size = 0x8000, scoped, tag = 'input window, operand 1, single buffered']
    #allocation8 [shape = 's32[1]{0}', space=sflag, size = 0x4, scoped, tag = 'scoped memory for tpu_custom_call.1']
    #allocation9 [shape = 'u8[524288]{0}', space=vmem, size = 0x80000, scoped, tag = 'input window, operand 2, single buffered']
    #allocation10 [shape = 'u8[32768]{0}', space=vmem, size = 0x8000, scoped, tag = 'output window, operand 0, single buffered']
    %9 = vsyncpa [#allocation5], 0
    %10 = vsyncpa [#allocation8], 0
    %11 = vsyncpa [#allocation6], 0
    // Predicated region
    $region2: #{tpu_custom_call.1} parent=1 // pred_check
      _
    $region3: #{tpu_custom_call.1} parent=1 // pred_check_branch
      %13 = sbr.rel (0) target = $region5
    $region4: #{tpu_custom_call.1} parent=1 // pred_region
      %s15 = ssub.s32 512, 512
      %16 = vsyncadd [#allocation5], %s15
      %s17 = sshll.u32 [#allocation4], 4
      %s18 = int_to_ptr.vmem [resolvable:$true] %s17
      %23 = dma.hbm_to_vmem [thread:$0]  %s0, 512, %s18, [#allocation5], 64, 64, 4
    $region5: #{tpu_custom_call.1} parent=1 // pred_fallthru
      _
    // Predicated region
    $region6: #{tpu_custom_call.1} parent=1 // pred_check
      _
    $region7: #{tpu_custom_call.1} parent=1 // pred_check_branch
      %25 = sbr.rel (0) target = $region9
    $region8: #{tpu_custom_call.1} parent=1 // pred_region
      %s27 = ssub.s32 1024, 1024
      %28 = vsyncadd [#allocation8], %s27
      %s29 = sshll.u32 [#allocation7], 4
      %s30 = int_to_ptr.vmem [resolvable:$true] %s29
      %35 = dma.hbm_to_vmem [thread:$0]  %s1, 1024, %s30, [#allocation8], 512, 512, 32
    $region9: #{tpu_custom_call.1} parent=1 // pred_fallthru
      _
    // Predicated region
    $region10: #{tpu_custom_call.1} parent=1 // pred_check
      _
    $region11: #{tpu_custom_call.1} parent=1 // pred_check_branch
      %37 = sbr.rel (0) target = $region13
    $region12: #{tpu_custom_call.1} parent=1 // pred_region
      %s39 = ssub.s32 16384, 16384
      %40 = vsyncadd [#allocation8], %s39
      %s41 = sshll.u32 [#allocation9], 4
      %s42 = int_to_ptr.vmem [resolvable:$true] %s41
      %47 = dma.hbm_to_vmem [thread:$0]  %s2, 16384, %s42, [#allocation8], 512, 512, 32
    $region13: #{tpu_custom_call.1} parent=1 // pred_fallthru
      _
    // Predicated region
    $region14: #{tpu_custom_call.1} parent=1 // pred_check
      _
    $region15: #{tpu_custom_call.1} parent=1 // pred_check_branch
      %49 = sbr.rel (0) target = $region17
    $region16: #{tpu_custom_call.1} parent=1 // pred_region
      _
    $region17: #{tpu_custom_call.1} parent=1 // pred_fallthru
      _
    // Predicated region
    $region18: #{tpu_custom_call.1} parent=1 // pred_check
      _
    $region19: #{tpu_custom_call.1} parent=1 // pred_check_branch
      %51 = sbr.rel (0) target = $region21
    $region20: #{tpu_custom_call.1} parent=1 // pred_region
      %52 = dma.done [#allocation5], 512
    $region21: #{tpu_custom_call.1} parent=1 // pred_fallthru
      _
    // Predicated region
    $region22: #{tpu_custom_call.1} parent=1 // pred_check
      _
    $region23: #{tpu_custom_call.1} parent=1 // pred_check_branch
      %54 = sbr.rel (0) target = $region25
    $region24: #{tpu_custom_call.1} parent=1 // pred_region
      %55 = dma.done [#allocation8], 1024
    $region25: #{tpu_custom_call.1} parent=1 // pred_fallthru
      _
    // Predicated region
    $region26: #{tpu_custom_call.1} parent=1 // pred_check
      _
    $region27: #{tpu_custom_call.1} parent=1 // pred_check_branch
      %57 = sbr.rel (0) target = $region29
    $region28: #{tpu_custom_call.1} parent=1 // pred_region
      %58 = dma.done [#allocation8], 16384
    $region29: #{tpu_custom_call.1} parent=1 // pred_fallthru
      _
    %p60 = scmp.eq.s32.totalorder 0, 0
    // Predicated region
    $region30: #{tpu_custom_call.1} parent=1 // pred_check
      %p61 = pneg %p60
    $region31: #{tpu_custom_call.1} parent=1 // pred_check_branch
      %63 = sbr.rel (%p61) target = $region33
    $region32: #{tpu_custom_call.1} parent=1 // pred_region
      %64 = vst [vmem:[#allocation2] sm:$0xff] 0.0
      %65 = vst [vmem:[#allocation3] sm:$0xff] 0.0
    $region33: #{tpu_custom_call.1} parent=1 // pred_fallthru
      _
    %v66 = vld [vmem:[#allocation4] sm:$0xf]
    %v67 = vld [vmem:[#allocation4 + $0x4] sm:$0xf]
    %v68 = vld [vmem:[#allocation4 + $0x8] sm:$0xf]
    %v69 = vld [vmem:[#allocation4 + $0xc] sm:$0xf]
    %v70 = vld [vmem:[#allocation4 + $0x10] sm:$0xf]
    %v71 = vld [vmem:[#allocation4 + $0x14] sm:$0xf]
    %v72 = vld [vmem:[#allocation4 + $0x18] sm:$0xf]
    %v73 = vld [vmem:[#allocation4 + $0x1c] sm:$0xf]
    %v74 = vpack.c.bf16 %v66, %v66
    %v75 = vpack.c.bf16 %v67, %v67
    %v76 = vpack.c.bf16 %v68, %v68
    %v77 = vpack.c.bf16 %v69, %v69
    %v78 = vpack.c.bf16 %v70, %v70
    %v79 = vpack.c.bf16 %v71, %v71
    %v80 = vpack.c.bf16 %v72, %v72
    %v81 = vpack.c.bf16 %v73, %v73
    %v82 = vld [vmem:[#allocation7] sm:$0xff]
    %v83 = vld [vmem:[#allocation7 + $0x8] sm:$0xff]
    %v84 = vld [vmem:[#allocation7 + $0x10] sm:$0xff]
    %v85 = vld [vmem:[#allocation7 + $0x18] sm:$0xff]
    %v86 = vld [vmem:[#allocation7 + $0x20] sm:$0xff]
    %v87 = vld [vmem:[#allocation7 + $0x28] sm:$0xff]
    %v88 = vld [vmem:[#allocation7 + $0x30] sm:$0xff]
    %v89 = vld [vmem:[#allocation7 + $0x38] sm:$0xff]
    %v90 = vld [vmem:[%s3] sm:$0xff]
    %v92 = vlaneseq
    %v93 = vshrl.u32 %v92, 7
    %v94 = vsub.s32 0, %v93
    %v95 = vrot.slane %v90, %v94
    %v96 = vlaneseq
    %v97 = vshrl.u32 %v96, 7
    %v98 = vsub.s32 1, %v97
    %v99 = vrot.slane %v90, %v98
    %v100 = vlaneseq
    %v101 = vshrl.u32 %v100, 7
    %v102 = vsub.s32 2, %v101
    %v103 = vrot.slane %v90, %v102
    %v104 = vlaneseq
    %v105 = vshrl.u32 %v104, 7
    %v106 = vsub.s32 3, %v105
    %v107 = vrot.slane %v90, %v106
    %v108 = vlaneseq
    %v109 = vshrl.u32 %v108, 7
    %v110 = vsub.s32 4, %v109
    %v111 = vrot.slane %v90, %v110
    %v112 = vlaneseq
    %v113 = vshrl.u32 %v112, 7
    %v114 = vsub.s32 5, %v113
    %v115 = vrot.slane %v90, %v114
    %v116 = vlaneseq
    %v117 = vshrl.u32 %v116, 7
    %v118 = vsub.s32 6, %v117
    %v119 = vrot.slane %v90, %v118
    %v120 = vlaneseq
    %v121 = vshrl.u32 %v120, 7
    %v122 = vsub.s32 7, %v121
    %v123 = vrot.slane %v90, %v122
    %v140 = vcombine.low %v74, %v75
    %v141 = vcombine.low %v76, %v77
    %v143 = vunpack.c.l.s4 1983009808
    %v144 = vunpack.c.0.s8 %v143
    %v145 = vlaneseq
    %v146 = vshrl.u32 %v145, 7
    %v147 = vsub.s32 %v144, %v146
    %v148 = vrot.slane %v140, %v147
    %v150 = vunpack.c.l.s4 1983009808
    %v151 = vunpack.c.0.s8 %v150
    %v152 = vlaneseq
    %v153 = vshrl.u32 %v152, 7
    %v154 = vsub.s32 %v151, %v153
    %v155 = vrot.slane %v141, %v154
    %v156 = vcombine.low %v148, %v155
    %v157 = vcombine.low %v78, %v79
    %v158 = vcombine.low %v80, %v81
    %v160 = vunpack.c.l.s4 1983009808
    %v161 = vunpack.c.0.s8 %v160
    %v162 = vlaneseq
    %v163 = vshrl.u32 %v162, 7
    %v164 = vsub.s32 %v161, %v163
    %v165 = vrot.slane %v157, %v164
    %v167 = vunpack.c.l.s4 1983009808
    %v168 = vunpack.c.0.s8 %v167
    %v169 = vlaneseq
    %v170 = vshrl.u32 %v169, 7
    %v171 = vsub.s32 %v168, %v170
    %v172 = vrot.slane %v158, %v171
    %v173 = vcombine.low %v165, %v172
    %v182 = vunpack.c.l.b16 %v82
    %v183 = vunpack.c.h.b16 %v82
    %v184 = vunpack.c.l.b16 %v83
    %v185 = vunpack.c.h.b16 %v83
    %v186 = vunpack.c.l.b16 %v84
    %v187 = vunpack.c.h.b16 %v84
    %v188 = vunpack.c.l.b16 %v85
    %v189 = vunpack.c.h.b16 %v85
    %v190 = vunpack.c.l.b16 %v86
    %v191 = vunpack.c.h.b16 %v86
    %v192 = vunpack.c.l.b16 %v87
    %v193 = vunpack.c.h.b16 %v87
    %v194 = vunpack.c.l.b16 %v88
    %v195 = vunpack.c.h.b16 %v88
    %v196 = vunpack.c.l.b16 %v89
    %v197 = vunpack.c.h.b16 %v89
    %v198 = vpack.c.b16 %v190, %v182
    %v199 = vpack.c.b16 %v191, %v183
    %v200 = vpack.c.b16 %v192, %v184
    %v201 = vpack.c.b16 %v193, %v185
    %v202 = vpack.c.b16 %v194, %v186
    %v203 = vpack.c.b16 %v195, %v187
    %v204 = vpack.c.b16 %v196, %v188
    %v205 = vpack.c.b16 %v197, %v189
    %vm214 = vcmask 130048
    %v216 = vsel %vm214, %v156, 0
    %v219 = vsel %vm214, %v173, 0
    %221 = vmatprep.subr.bf16.mxu0 %v199
    %222 = vmatpush1.bf16.msra.mxu0 %v198
    %223 = vmatprep.subr.bf16.mxu0 0
    %224 = vmatpush1.bf16.msra.mxu0 0
    %225 = vmatprep.subr.bf16.mxu0 0
    %226 = vmatpush1.bf16.msra.mxu0 0
    %227 = vmatprep.subr.bf16.mxu0 0
    %228 = vmatpush1.bf16.msra.mxu0 0
    %229 = vmatprep.subr.bf16.mxu0 0
    %230 = vmatpush1.bf16.msra.mxu0 0
    %231 = vmatprep.subr.bf16.mxu0 0
    %232 = vmatpush1.bf16.msra.mxu0 0
    %233 = vmatprep.subr.bf16.mxu0 0
    %234 = vmatpush1.bf16.msra.mxu0 0
    %235 = vmatprep.subr.bf16.mxu0 0
    %236 = vmatpush1.bf16.msra.mxu0 0
    %237 = vmatprep.subr.bf16.mxu0 0
    %238 = vmatpush1.bf16.msra.mxu0 0
    %239 = vmatprep.subr.bf16.mxu0 0
    %240 = vmatpush1.bf16.msra.mxu0 0
    %241 = vmatprep.subr.bf16.mxu0 0
    %242 = vmatpush1.bf16.msra.mxu0 0
    %243 = vmatprep.subr.bf16.mxu0 0
    %244 = vmatpush1.bf16.msra.mxu0 0
    %245 = vmatprep.subr.bf16.mxu0 0
    %246 = vmatpush1.bf16.msra.mxu0 0
    %247 = vmatprep.subr.bf16.mxu0 0
    %248 = vmatpush1.bf16.msra.mxu0 0
    %249 = vmatprep.subr.bf16.mxu0 0
    %250 = vmatpush1.bf16.msra.mxu0 0
    %251 = vmatprep.subr.bf16.mxu0 0
    %252 = vmatpush1.bf16.msra.mxu0 0
    %253 = vmatprep.mubr.bf16.mxu0 0
    %254 = vmatmul.mubr.bf16.gmra.mrb[0].mxu0 %v216
    %v255 = vpop.f32.mrb[0].mxu0
    %v256 = vadd.f32 %v95, %v255
    %v257 = vpop.f32.mrb[0].mxu0
    %v258 = vadd.f32 %v99, %v257
    %v259 = vpop.f32.mrb[0].mxu0
    %v260 = vadd.f32 %v95, %v259
    %v261 = vpop.f32.mrb[0].mxu0
    %v262 = vadd.f32 %v99, %v261
    %263 = vmatprep.mubr.bf16.mxu0 0
    %264 = vmatmul.mubr.bf16.gmra.mrb[0].mxu0 %v219
    %v265 = vpop.f32.mrb[0].mxu0
    %v266 = vadd.f32 %v95, %v265
    %v267 = vpop.f32.mrb[0].mxu0
    %v268 = vadd.f32 %v99, %v267
    %v269 = vpop.f32.mrb[0].mxu0
    %v270 = vadd.f32 %v95, %v269
    %v271 = vpop.f32.mrb[0].mxu0
    %v272 = vadd.f32 %v99, %v271
    %273 = vdwg.mxu0
    %274 = vmatprep.subr.bf16.mxu0 %v201
    %275 = vmatpush1.bf16.msra.mxu0 %v200
    %276 = vmatprep.subr.bf16.mxu0 0
    %277 = vmatpush1.bf16.msra.mxu0 0
    %278 = vmatprep.subr.bf16.mxu0 0
    %279 = vmatpush1.bf16.msra.mxu0 0
    %280 = vmatprep.subr.bf16.mxu0 0
    %281 = vmatpush1.bf16.msra.mxu0 0
    %282 = vmatprep.subr.bf16.mxu0 0
    %283 = vmatpush1.bf16.msra.mxu0 0
    %284 = vmatprep.subr.bf16.mxu0 0
    %285 = vmatpush1.bf16.msra.mxu0 0
    %286 = vmatprep.subr.bf16.mxu0 0
    %287 = vmatpush1.bf16.msra.mxu0 0
    %288 = vmatprep.subr.bf16.mxu0 0
    %289 = vmatpush1.bf16.msra.mxu0 0
    %290 = vmatprep.subr.bf16.mxu0 0
    %291 = vmatpush1.bf16.msra.mxu0 0
    %292 = vmatprep.subr.bf16.mxu0 0
    %293 = vmatpush1.bf16.msra.mxu0 0
    %294 = vmatprep.subr.bf16.mxu0 0
    %295 = vmatpush1.bf16.msra.mxu0 0
    %296 = vmatprep.subr.bf16.mxu0 0
    %297 = vmatpush1.bf16.msra.mxu0 0
    %298 = vmatprep.subr.bf16.mxu0 0
    %299 = vmatpush1.bf16.msra.mxu0 0
    %300 = vmatprep.subr.bf16.mxu0 0
    %301 = vmatpush1.bf16.msra.mxu0 0
    %302 = vmatprep.subr.bf16.mxu0 0
    %303 = vmatpush1.bf16.msra.mxu0 0
    %304 = vmatprep.subr.bf16.mxu0 0
    %305 = vmatpush1.bf16.msra.mxu0 0
    %306 = vmatprep.mubr.bf16.mxu0 0
    %307 = vmatmul.mubr.bf16.gmra.mrb[0].mxu0 %v216
    %v308 = vpop.f32.mrb[0].mxu0
    %v309 = vadd.f32 %v103, %v308
    %v310 = vpop.f32.mrb[0].mxu0
    %v311 = vadd.f32 %v107, %v310
    %v312 = vpop.f32.mrb[0].mxu0
    %v313 = vadd.f32 %v103, %v312
    %v314 = vpop.f32.mrb[0].mxu0
    %v315 = vadd.f32 %v107, %v314
    %316 = vmatprep.mubr.bf16.mxu0 0
    %317 = vmatmul.mubr.bf16.gmra.mrb[0].mxu0 %v219
    %v318 = vpop.f32.mrb[0].mxu0
    %v319 = vadd.f32 %v103, %v318
    %v320 = vpop.f32.mrb[0].mxu0
    %v321 = vadd.f32 %v107, %v320
    %v322 = vpop.f32.mrb[0].mxu0
    %v323 = vadd.f32 %v103, %v322
    %v324 = vpop.f32.mrb[0].mxu0
    %v325 = vadd.f32 %v107, %v324
    %326 = vdwg.mxu0
    %327 = vmatprep.subr.bf16.mxu0 %v203
    %328 = vmatpush1.bf16.msra.mxu0 %v202
    %329 = vmatprep.subr.bf16.mxu0 0
    %330 = vmatpush1.bf16.msra.mxu0 0
    %331 = vmatprep.subr.bf16.mxu0 0
    %332 = vmatpush1.bf16.msra.mxu0 0
    %333 = vmatprep.subr.bf16.mxu0 0
    %334 = vmatpush1.bf16.msra.mxu0 0
    %335 = vmatprep.subr.bf16.mxu0 0
    %336 = vmatpush1.bf16.msra.mxu0 0
    %337 = vmatprep.subr.bf16.mxu0 0
    %338 = vmatpush1.bf16.msra.mxu0 0
    %339 = vmatprep.subr.bf16.mxu0 0
    %340 = vmatpush1.bf16.msra.mxu0 0
    %341 = vmatprep.subr.bf16.mxu0 0
    %342 = vmatpush1.bf16.msra.mxu0 0
    %343 = vmatprep.subr.bf16.mxu0 0
    %344 = vmatpush1.bf16.msra.mxu0 0
    %345 = vmatprep.subr.bf16.mxu0 0
    %346 = vmatpush1.bf16.msra.mxu0 0
    %347 = vmatprep.subr.bf16.mxu0 0
    %348 = vmatpush1.bf16.msra.mxu0 0
    %349 = vmatprep.subr.bf16.mxu0 0
    %350 = vmatpush1.bf16.msra.mxu0 0
    %351 = vmatprep.subr.bf16.mxu0 0
    %352 = vmatpush1.bf16.msra.mxu0 0
    %353 = vmatprep.subr.bf16.mxu0 0
    %354 = vmatpush1.bf16.msra.mxu0 0
    %355 = vmatprep.subr.bf16.mxu0 0
    %356 = vmatpush1.bf16.msra.mxu0 0
    %357 = vmatprep.subr.bf16.mxu0 0
    %358 = vmatpush1.bf16.msra.mxu0 0
    %359 = vmatprep.mubr.bf16.mxu0 0
    %360 = vmatmul.mubr.bf16.gmra.mrb[0].mxu0 %v216
    %v361 = vpop.f32.mrb[0].mxu0
    %v362 = vadd.f32 %v111, %v361
    %v363 = vpop.f32.mrb[0].mxu0
    %v364 = vadd.f32 %v115, %v363
    %v365 = vpop.f32.mrb[0].mxu0
    %v366 = vadd.f32 %v111, %v365
    %v367 = vpop.f32.mrb[0].mxu0
    %v368 = vadd.f32 %v115, %v367
    %369 = vmatprep.mubr.bf16.mxu0 0
    %370 = vmatmul.mubr.bf16.gmra.mrb[0].mxu0 %v219
    %v371 = vpop.f32.mrb[0].mxu0
    %v372 = vadd.f32 %v111, %v371
    %v373 = vpop.f32.mrb[0].mxu0
    %v374 = vadd.f32 %v115, %v373
    %v375 = vpop.f32.mrb[0].mxu0
    %v376 = vadd.f32 %v111, %v375
    %v377 = vpop.f32.mrb[0].mxu0
    %v378 = vadd.f32 %v115, %v377
    %379 = vdwg.mxu0
    %380 = vmatprep.subr.bf16.mxu0 %v205
    %381 = vmatpush1.bf16.msra.mxu0 %v204
    %382 = vmatprep.subr.bf16.mxu0 0
    %383 = vmatpush1.bf16.msra.mxu0 0
    %384 = vmatprep.subr.bf16.mxu0 0
    %385 = vmatpush1.bf16.msra.mxu0 0
    %386 = vmatprep.subr.bf16.mxu0 0
    %387 = vmatpush1.bf16.msra.mxu0 0
    %388 = vmatprep.subr.bf16.mxu0 0
    %389 = vmatpush1.bf16.msra.mxu0 0
    %390 = vmatprep.subr.bf16.mxu0 0
    %391 = vmatpush1.bf16.msra.mxu0 0
    %392 = vmatprep.subr.bf16.mxu0 0
    %393 = vmatpush1.bf16.msra.mxu0 0
    %394 = vmatprep.subr.bf16.mxu0 0
    %395 = vmatpush1.bf16.msra.mxu0 0
    %396 = vmatprep.subr.bf16.mxu0 0
    %397 = vmatpush1.bf16.msra.mxu0 0
    %398 = vmatprep.subr.bf16.mxu0 0
    %399 = vmatpush1.bf16.msra.mxu0 0
    %400 = vmatprep.subr.bf16.mxu0 0
    %401 = vmatpush1.bf16.msra.mxu0 0
    %402 = vmatprep.subr.bf16.mxu0 0
    %403 = vmatpush1.bf16.msra.mxu0 0
    %404 = vmatprep.subr.bf16.mxu0 0
    %405 = vmatpush1.bf16.msra.mxu0 0
    %406 = vmatprep.subr.bf16.mxu0 0
    %407 = vmatpush1.bf16.msra.mxu0 0
    %408 = vmatprep.subr.bf16.mxu0 0
    %409 = vmatpush1.bf16.msra.mxu0 0
    %410 = vmatprep.subr.bf16.mxu0 0
    %411 = vmatpush1.bf16.msra.mxu0 0
    %412 = vmatprep.mubr.bf16.mxu0 0
    %413 = vmatmul.mubr.bf16.gmra.mrb[0].mxu0 %v216
    %v414 = vpop.f32.mrb[0].mxu0
    %v415 = vadd.f32 %v119, %v414
    %v416 = vpop.f32.mrb[0].mxu0
    %v417 = vadd.f32 %v123, %v416
    %v418 = vpop.f32.mrb[0].mxu0
    %v419 = vadd.f32 %v119, %v418
    %v420 = vpop.f32.mrb[0].mxu0
    %v421 = vadd.f32 %v123, %v420
    %422 = vmatprep.mubr.bf16.mxu0 0
    %423 = vmatmul.mubr.bf16.gmra.mrb[0].mxu0 %v219
    %v424 = vpop.f32.mrb[0].mxu0
    %v425 = vadd.f32 %v119, %v424
    %v426 = vpop.f32.mrb[0].mxu0
    %v427 = vadd.f32 %v123, %v426
    %v428 = vpop.f32.mrb[0].mxu0
    %v429 = vadd.f32 %v119, %v428
    %v430 = vpop.f32.mrb[0].mxu0
    %v431 = vadd.f32 %v123, %v430
    %432 = vdwg.mxu0
    %v433 = vld [vmem:[#allocation2] sm:$0xff]
    %v434 = vld [vmem:[#allocation3] sm:$0xff]
    %v436 = vcombine.high %v433, %v433
    %v438 = vpack.c.bf16 %v433, %v433
    %v439 = vpack.c.bf16 %v436, %v436
    %v440 = vld [vmem:[#allocation9] sm:$0xff]
    %v441 = vld [vmem:[#allocation9 + $0x8] sm:$0xff]
    %v442 = vld [vmem:[#allocation9 + $0x10] sm:$0xff]
    %v443 = vld [vmem:[#allocation9 + $0x18] sm:$0xff]
    %v444 = vld [vmem:[#allocation9 + $0x20] sm:$0xff]
    %v445 = vld [vmem:[#allocation9 + $0x28] sm:$0xff]
    %v446 = vld [vmem:[#allocation9 + $0x30] sm:$0xff]
    %v447 = vld [vmem:[#allocation9 + $0x38] sm:$0xff]
    %v448 = vld [vmem:[#allocation9 + $0x40] sm:$0xff]
    %v449 = vld [vmem:[#allocation9 + $0x48] sm:$0xff]
    %v450 = vld [vmem:[#allocation9 + $0x50] sm:$0xff]
    %v451 = vld [vmem:[#allocation9 + $0x58] sm:$0xff]
    %v452 = vld [vmem:[#allocation9 + $0x60] sm:$0xff]
    %v453 = vld [vmem:[#allocation9 + $0x68] sm:$0xff]
    %v454 = vld [vmem:[#allocation9 + $0x70] sm:$0xff]
    %v455 = vld [vmem:[#allocation9 + $0x78] sm:$0xff]
    %v456 = vld [vmem:[#allocation9 + $0x80] sm:$0xff]
    %v457 = vld [vmem:[#allocation9 + $0x88] sm:$0xff]
    %v458 = vld [vmem:[#allocation9 + $0x90] sm:$0xff]
    %v459 = vld [vmem:[#allocation9 + $0x98] sm:$0xff]
    %v460 = vld [vmem:[#allocation9 + $0xa0] sm:$0xff]
    %v461 = vld [vmem:[#allocation9 + $0xa8] sm:$0xff]
    %v462 = vld [vmem:[#allocation9 + $0xb0] sm:$0xff]
    %v463 = vld [vmem:[#allocation9 + $0xb8] sm:$0xff]
    %v464 = vld [vmem:[#allocation9 + $0xc0] sm:$0xff]
    %v465 = vld [vmem:[#allocation9 + $0xc8] sm:$0xff]
    %v466 = vld [vmem:[#allocation9 + $0xd0] sm:$0xff]
    %v467 = vld [vmem:[#allocation9 + $0xd8] sm:$0xff]
    %v468 = vld [vmem:[#allocation9 + $0xe0] sm:$0xff]
    %v469 = vld [vmem:[#allocation9 + $0xe8] sm:$0xff]
    %v470 = vld [vmem:[#allocation9 + $0xf0] sm:$0xff]
    %v471 = vld [vmem:[#allocation9 + $0xf8] sm:$0xff]
    %v472 = vld [vmem:[#allocation9 + $0x100] sm:$0xff]
    %v473 = vld [vmem:[#allocation9 + $0x108] sm:$0xff]
    %v474 = vld [vmem:[#allocation9 + $0x110] sm:$0xff]
    %v475 = vld [vmem:[#allocation9 + $0x118] sm:$0xff]
    %v476 = vld [vmem:[#allocation9 + $0x120] sm:$0xff]
    %v477 = vld [vmem:[#allocation9 + $0x128] sm:$0xff]
    %v478 = vld [vmem:[#allocation9 + $0x130] sm:$0xff]
    %v479 = vld [vmem:[#allocation9 + $0x138] sm:$0xff]
    %v480 = vld [vmem:[#allocation9 + $0x140] sm:$0xff]
    %v481 = vld [vmem:[#allocation9 + $0x148] sm:$0xff]
    %v482 = vld [vmem:[#allocation9 + $0x150] sm:$0xff]
    %v483 = vld [vmem:[#allocation9 + $0x158] sm:$0xff]
    %v484 = vld [vmem:[#allocation9 + $0x160] sm:$0xff]
    %v485 = vld [vmem:[#allocation9 + $0x168] sm:$0xff]
    %v486 = vld [vmem:[#allocation9 + $0x170] sm:$0xff]
    %v487 = vld [vmem:[#allocation9 + $0x178] sm:$0xff]
    %v488 = vld [vmem:[#allocation9 + $0x180] sm:$0xff]
    %v489 = vld [vmem:[#allocation9 + $0x188] sm:$0xff]
    %v490 = vld [vmem:[#allocation9 + $0x190] sm:$0xff]
    %v491 = vld [vmem:[#allocation9 + $0x198] sm:$0xff]
    %v492 = vld [vmem:[#allocation9 + $0x1a0] sm:$0xff]
    %v493 = vld [vmem:[#allocation9 + $0x1a8] sm:$0xff]
    %v494 = vld [vmem:[#allocation9 + $0x1b0] sm:$0xff]
    %v495 = vld [vmem:[#allocation9 + $0x1b8] sm:$0xff]
    %v496 = vld [vmem:[#allocation9 + $0x1c0] sm:$0xff]
    %v497 = vld [vmem:[#allocation9 + $0x1c8] sm:$0xff]
    %v498 = vld [vmem:[#allocation9 + $0x1d0] sm:$0xff]
    %v499 = vld [vmem:[#allocation9 + $0x1d8] sm:$0xff]
    %v500 = vld [vmem:[#allocation9 + $0x1e0] sm:$0xff]
    %v501 = vld [vmem:[#allocation9 + $0x1e8] sm:$0xff]
    %v502 = vld [vmem:[#allocation9 + $0x1f0] sm:$0xff]
    %v503 = vld [vmem:[#allocation9 + $0x1f8] sm:$0xff]
    %v504 = vld [vmem:[#allocation9 + $0x200] sm:$0xff]
    %v505 = vld [vmem:[#allocation9 + $0x208] sm:$0xff]
    %v506 = vld [vmem:[#allocation9 + $0x210] sm:$0xff]
    %v507 = vld [vmem:[#allocation9 + $0x218] sm:$0xff]
    %v508 = vld [vmem:[#allocation9 + $0x220] sm:$0xff]
    %v509 = vld [vmem:[#allocation9 + $0x228] sm:$0xff]
    %v510 = vld [vmem:[#allocation9 + $0x230] sm:$0xff]
    %v511 = vld [vmem:[#allocation9 + $0x238] sm:$0xff]
    %v512 = vld [vmem:[#allocation9 + $0x240] sm:$0xff]
    %v513 = vld [vmem:[#allocation9 + $0x248] sm:$0xff]
    %v514 = vld [vmem:[#allocation9 + $0x250] sm:$0xff]
    %v515 = vld [vmem:[#allocation9 + $0x258] sm:$0xff]
    %v516 = vld [vmem:[#allocation9 + $0x260] sm:$0xff]
    %v517 = vld [vmem:[#allocation9 + $0x268] sm:$0xff]
    %v518 = vld [vmem:[#allocation9 + $0x270] sm:$0xff]
    %v519 = vld [vmem:[#allocation9 + $0x278] sm:$0xff]
    %v520 = vld [vmem:[#allocation9 + $0x280] sm:$0xff]
    %v521 = vld [vmem:[#allocation9 + $0x288] sm:$0xff]
    %v522 = vld [vmem:[#allocation9 + $0x290] sm:$0xff]
    %v523 = vld [vmem:[#allocation9 + $0x298] sm:$0xff]
    %v524 = vld [vmem:[#allocation9 + $0x2a0] sm:$0xff]
    %v525 = vld [vmem:[#allocation9 + $0x2a8] sm:$0xff]
    %v526 = vld [vmem:[#allocation9 + $0x2b0] sm:$0xff]
    %v527 = vld [vmem:[#allocation9 + $0x2b8] sm:$0xff]
    %v528 = vld [vmem:[#allocation9 + $0x2c0] sm:$0xff]
    %v529 = vld [vmem:[#allocation9 + $0x2c8] sm:$0xff]
    %v530 = vld [vmem:[#allocation9 + $0x2d0] sm:$0xff]
    %v531 = vld [vmem:[#allocation9 + $0x2d8] sm:$0xff]
    %v532 = vld [vmem:[#allocation9 + $0x2e0] sm:$0xff]
    %v533 = vld [vmem:[#allocation9 + $0x2e8] sm:$0xff]
    %v534 = vld [vmem:[#allocation9 + $0x2f0] sm:$0xff]
    %v535 = vld [vmem:[#allocation9 + $0x2f8] sm:$0xff]
    %v536 = vld [vmem:[#allocation9 + $0x300] sm:$0xff]
    %v537 = vld [vmem:[#allocation9 + $0x308] sm:$0xff]
    %v538 = vld [vmem:[#allocation9 + $0x310] sm:$0xff]
    %v539 = vld [vmem:[#allocation9 + $0x318] sm:$0xff]
    %v540 = vld [vmem:[#allocation9 + $0x320] sm:$0xff]
    %v541 = vld [vmem:[#allocation9 + $0x328] sm:$0xff]
    %v542 = vld [vmem:[#allocation9 + $0x330] sm:$0xff]
    %v543 = vld [vmem:[#allocation9 + $0x338] sm:$0xff]
    %v544 = vld [vmem:[#allocation9 + $0x340] sm:$0xff]
    %v545 = vld [vmem:[#allocation9 + $0x348] sm:$0xff]
    %v546 = vld [vmem:[#allocation9 + $0x350] sm:$0xff]
    %v547 = vld [vmem:[#allocation9 + $0x358] sm:$0xff]
    %v548 = vld [vmem:[#allocation9 + $0x360] sm:$0xff]
    %v549 = vld [vmem:[#allocation9 + $0x368] sm:$0xff]
    %v550 = vld [vmem:[#allocation9 + $0x370] sm:$0xff]
    %v551 = vld [vmem:[#allocation9 + $0x378] sm:$0xff]
    %v552 = vld [vmem:[#allocation9 + $0x380] sm:$0xff]
    %v553 = vld [vmem:[#allocation9 + $0x388] sm:$0xff]
    %v554 = vld [vmem:[#allocation9 + $0x390] sm:$0xff]
    %v555 = vld [vmem:[#allocation9 + $0x398] sm:$0xff]
    %v556 = vld [vmem:[#allocation9 + $0x3a0] sm:$0xff]
    %v557 = vld [vmem:[#allocation9 + $0x3a8] sm:$0xff]
    %v558 = vld [vmem:[#allocation9 + $0x3b0] sm:$0xff]
    %v559 = vld [vmem:[#allocation9 + $0x3b8] sm:$0xff]
    %v560 = vld [vmem:[#allocation9 + $0x3c0] sm:$0xff]
    %v561 = vld [vmem:[#allocation9 + $0x3c8] sm:$0xff]
    %v562 = vld [vmem:[#allocation9 + $0x3d0] sm:$0xff]
    %v563 = vld [vmem:[#allocation9 + $0x3d8] sm:$0xff]
    %v564 = vld [vmem:[#allocation9 + $0x3e0] sm:$0xff]
    %v565 = vld [vmem:[#allocation9 + $0x3e8] sm:$0xff]
    %v566 = vld [vmem:[#allocation9 + $0x3f0] sm:$0xff]
    %v567 = vld [vmem:[#allocation9 + $0x3f8] sm:$0xff]
    %v696 = vunpack.c.l.b16 %v440
    %v697 = vunpack.c.h.b16 %v440
    %v698 = vunpack.c.l.b16 %v441
    %v699 = vunpack.c.h.b16 %v441
    %v700 = vunpack.c.l.b16 %v442
    %v701 = vunpack.c.h.b16 %v442
    %v702 = vunpack.c.l.b16 %v443
    %v703 = vunpack.c.h.b16 %v443
    %v704 = vunpack.c.l.b16 %v444
    %v705 = vunpack.c.h.b16 %v444
    %v706 = vunpack.c.l.b16 %v445
    %v707 = vunpack.c.h.b16 %v445
    %v708 = vunpack.c.l.b16 %v446
    %v709 = vunpack.c.h.b16 %v446
    %v710 = vunpack.c.l.b16 %v447
    %v711 = vunpack.c.h.b16 %v447
    %v712 = vunpack.c.l.b16 %v448
    %v713 = vunpack.c.h.b16 %v448
    %v714 = vunpack.c.l.b16 %v449
    %v715 = vunpack.c.h.b16 %v449
    %v716 = vunpack.c.l.b16 %v450
    %v717 = vunpack.c.h.b16 %v450
    %v718 = vunpack.c.l.b16 %v451
    %v719 = vunpack.c.h.b16 %v451
    %v720 = vunpack.c.l.b16 %v452
    %v721 = vunpack.c.h.b16 %v452
    %v722 = vunpack.c.l.b16 %v453
    %v723 = vunpack.c.h.b16 %v453
    %v724 = vunpack.c.l.b16 %v454
    %v725 = vunpack.c.h.b16 %v454
    %v726 = vunpack.c.l.b16 %v455
    %v727 = vunpack.c.h.b16 %v455
    %v728 = vunpack.c.l.b16 %v456
    %v729 = vunpack.c.h.b16 %v456
    %v730 = vunpack.c.l.b16 %v457
    %v731 = vunpack.c.h.b16 %v457
    %v732 = vunpack.c.l.b16 %v458
    %v733 = vunpack.c.h.b16 %v458
    %v734 = vunpack.c.l.b16 %v459
    %v735 = vunpack.c.h.b16 %v459
    %v736 = vunpack.c.l.b16 %v460
    %v737 = vunpack.c.h.b16 %v460
    %v738 = vunpack.c.l.b16 %v461
    %v739 = vunpack.c.h.b16 %v461
    %v740 = vunpack.c.l.b16 %v462
    %v741 = vunpack.c.h.b16 %v462
    %v742 = vunpack.c.l.b16 %v463
    %v743 = vunpack.c.h.b16 %v463
    %v744 = vunpack.c.l.b16 %v464
    %v745 = vunpack.c.h.b16 %v464
    %v746 = vunpack.c.l.b16 %v465
    %v747 = vunpack.c.h.b16 %v465
    %v748 = vunpack.c.l.b16 %v466
    %v749 = vunpack.c.h.b16 %v466
    %v750 = vunpack.c.l.b16 %v467
    %v751 = vunpack.c.h.b16 %v467
    %v752 = vunpack.c.l.b16 %v468
    %v753 = vunpack.c.h.b16 %v468
    %v754 = vunpack.c.l.b16 %v469
    %v755 = vunpack.c.h.b16 %v469
    %v756 = vunpack.c.l.b16 %v470
    %v757 = vunpack.c.h.b16 %v470
    %v758 = vunpack.c.l.b16 %v471
    %v759 = vunpack.c.h.b16 %v471
    %v760 = vunpack.c.l.b16 %v472
    %v761 = vunpack.c.h.b16 %v472
    %v762 = vunpack.c.l.b16 %v473
    %v763 = vunpack.c.h.b16 %v473
    %v764 = vunpack.c.l.b16 %v474
    %v765 = vunpack.c.h.b16 %v474
    %v766 = vunpack.c.l.b16 %v475
    %v767 = vunpack.c.h.b16 %v475
    %v768 = vunpack.c.l.b16 %v476
    %v769 = vunpack.c.h.b16 %v476
    %v770 = vunpack.c.l.b16 %v477
    %v771 = vunpack.c.h.b16 %v477
    %v772 = vunpack.c.l.b16 %v478
    %v773 = vunpack.c.h.b16 %v478
    %v774 = vunpack.c.l.b16 %v479
    %v775 = vunpack.c.h.b16 %v479
    %v776 = vunpack.c.l.b16 %v480
    %v777 = vunpack.c.h.b16 %v480
    %v778 = vunpack.c.l.b16 %v481
    %v779 = vunpack.c.h.b16 %v481
    %v780 = vunpack.c.l.b16 %v482
    %v781 = vunpack.c.h.b16 %v482
    %v782 = vunpack.c.l.b16 %v483
    %v783 = vunpack.c.h.b16 %v483
    %v784 = vunpack.c.l.b16 %v484
    %v785 = vunpack.c.h.b16 %v484
    %v786 = vunpack.c.l.b16 %v485
    %v787 = vunpack.c.h.b16 %v485
    %v788 = vunpack.c.l.b16 %v486
    %v789 = vunpack.c.h.b16 %v486
    %v790 = vunpack.c.l.b16 %v487
    %v791 = vunpack.c.h.b16 %v487
    %v792 = vunpack.c.l.b16 %v488
    %v793 = vunpack.c.h.b16 %v488
    %v794 = vunpack.c.l.b16 %v489
    %v795 = vunpack.c.h.b16 %v489
    %v796 = vunpack.c.l.b16 %v490
    %v797 = vunpack.c.h.b16 %v490
    %v798 = vunpack.c.l.b16 %v491
    %v799 = vunpack.c.h.b16 %v491
    %v800 = vunpack.c.l.b16 %v492
    %v801 = vunpack.c.h.b16 %v492
    %v802 = vunpack.c.l.b16 %v493
    %v803 = vunpack.c.h.b16 %v493
    %v804 = vunpack.c.l.b16 %v494
    %v805 = vunpack.c.h.b16 %v494
    %v806 = vunpack.c.l.b16 %v495
    %v807 = vunpack.c.h.b16 %v495
    %v808 = vunpack.c.l.b16 %v496
    %v809 = vunpack.c.h.b16 %v496
    %v810 = vunpack.c.l.b16 %v497
    %v811 = vunpack.c.h.b16 %v497
    %v812 = vunpack.c.l.b16 %v498
    %v813 = vunpack.c.h.b16 %v498
    %v814 = vunpack.c.l.b16 %v499
    %v815 = vunpack.c.h.b16 %v499
    %v816 = vunpack.c.l.b16 %v500
    %v817 = vunpack.c.h.b16 %v500
    %v818 = vunpack.c.l.b16 %v501
    %v819 = vunpack.c.h.b16 %v501
    %v820 = vunpack.c.l.b16 %v502
    %v821 = vunpack.c.h.b16 %v502
    %v822 = vunpack.c.l.b16 %v503
    %v823 = vunpack.c.h.b16 %v503
    %v824 = vunpack.c.l.b16 %v504
    %v825 = vunpack.c.h.b16 %v504
    %v826 = vunpack.c.l.b16 %v505
    %v827 = vunpack.c.h.b16 %v505
    %v828 = vunpack.c.l.b16 %v506
    %v829 = vunpack.c.h.b16 %v506
    %v830 = vunpack.c.l.b16 %v507
    %v831 = vunpack.c.h.b16 %v507
    %v832 = vunpack.c.l.b16 %v508
    %v833 = vunpack.c.h.b16 %v508
    %v834 = vunpack.c.l.b16 %v509
    %v835 = vunpack.c.h.b16 %v509
    %v836 = vunpack.c.l.b16 %v510
    %v837 = vunpack.c.h.b16 %v510
    %v838 = vunpack.c.l.b16 %v511
    %v839 = vunpack.c.h.b16 %v511
    %v840 = vunpack.c.l.b16 %v512
    %v841 = vunpack.c.h.b16 %v512
    %v842 = vunpack.c.l.b16 %v513
    %v843 = vunpack.c.h.b16 %v513
    %v844 = vunpack.c.l.b16 %v514
    %v845 = vunpack.c.h.b16 %v514
    %v846 = vunpack.c.l.b16 %v515
    %v847 = vunpack.c.h.b16 %v515
    %v848 = vunpack.c.l.b16 %v516
    %v849 = vunpack.c.h.b16 %v516
    %v850 = vunpack.c.l.b16 %v517
    %v851 = vunpack.c.h.b16 %v517
    %v852 = vunpack.c.l.b16 %v518
    %v853 = vunpack.c.h.b16 %v518
    %v854 = vunpack.c.l.b16 %v519
    %v855 = vunpack.c.h.b16 %v519
    %v856 = vunpack.c.l.b16 %v520
    %v857 = vunpack.c.h.b16 %v520
    %v858 = vunpack.c.l.b16 %v521
    %v859 = vunpack.c.h.b16 %v521
    %v860 = vunpack.c.l.b16 %v522
    %v861 = vunpack.c.h.b16 %v522
    %v862 = vunpack.c.l.b16 %v523
    %v863 = vunpack.c.h.b16 %v523
    %v864 = vunpack.c.l.b16 %v524
    %v865 = vunpack.c.h.b16 %v524
    %v866 = vunpack.c.l.b16 %v525
    %v867 = vunpack.c.h.b16 %v525
    %v868 = vunpack.c.l.b16 %v526
    %v869 = vunpack.c.h.b16 %v526
    %v870 = vunpack.c.l.b16 %v527
    %v871 = vunpack.c.h.b16 %v527
    %v872 = vunpack.c.l.b16 %v528
    %v873 = vunpack.c.h.b16 %v528
    %v874 = vunpack.c.l.b16 %v529
    %v875 = vunpack.c.h.b16 %v529
    %v876 = vunpack.c.l.b16 %v530
    %v877 = vunpack.c.h.b16 %v530
    %v878 = vunpack.c.l.b16 %v531
    %v879 = vunpack.c.h.b16 %v531
    %v880 = vunpack.c.l.b16 %v532
    %v881 = vunpack.c.h.b16 %v532
    %v882 = vunpack.c.l.b16 %v533
    %v883 = vunpack.c.h.b16 %v533
    %v884 = vunpack.c.l.b16 %v534
    %v885 = vunpack.c.h.b16 %v534
    %v886 = vunpack.c.l.b16 %v535
    %v887 = vunpack.c.h.b16 %v535
    %v888 = vunpack.c.l.b16 %v536
    %v889 = vunpack.c.h.b16 %v536
    %v890 = vunpack.c.l.b16 %v537
    %v891 = vunpack.c.h.b16 %v537
    %v892 = vunpack.c.l.b16 %v538
    %v893 = vunpack.c.h.b16 %v538
    %v894 = vunpack.c.l.b16 %v539
    %v895 = vunpack.c.h.b16 %v539
    %v896 = vunpack.c.l.b16 %v540
    %v897 = vunpack.c.h.b16 %v540
    %v898 = vunpack.c.l.b16 %v541
    %v899 = vunpack.c.h.b16 %v541
    %v900 = vunpack.c.l.b16 %v542
    %v901 = vunpack.c.h.b16 %v542
    %v902 = vunpack.c.l.b16 %v543
    %v903 = vunpack.c.h.b16 %v543
    %v904 = vunpack.c.l.b16 %v544
    %v905 = vunpack.c.h.b16 %v544
    %v906 = vunpack.c.l.b16 %v545
    %v907 = vunpack.c.h.b16 %v545
    %v908 = vunpack.c.l.b16 %v546
    %v909 = vunpack.c.h.b16 %v546
    %v910 = vunpack.c.l.b16 %v547
    %v911 = vunpack.c.h.b16 %v547
    %v912 = vunpack.c.l.b16 %v548
    %v913 = vunpack.c.h.b16 %v548
    %v914 = vunpack.c.l.b16 %v549
    %v915 = vunpack.c.h.b16 %v549
    %v916 = vunpack.c.l.b16 %v550
    %v917 = vunpack.c.h.b16 %v550
    %v918 = vunpack.c.l.b16 %v551
    %v919 = vunpack.c.h.b16 %v551
    %v920 = vunpack.c.l.b16 %v552
    %v921 = vunpack.c.h.b16 %v552
    %v922 = vunpack.c.l.b16 %v553
    %v923 = vunpack.c.h.b16 %v553
    %v924 = vunpack.c.l.b16 %v554
    %v925 = vunpack.c.h.b16 %v554
    %v926 = vunpack.c.l.b16 %v555
    %v927 = vunpack.c.h.b16 %v555
    %v928 = vunpack.c.l.b16 %v556
    %v929 = vunpack.c.h.b16 %v556
    %v930 = vunpack.c.l.b16 %v557
    %v931 = vunpack.c.h.b16 %v557
    %v932 = vunpack.c.l.b16 %v558
    %v933 = vunpack.c.h.b16 %v558
    %v934 = vunpack.c.l.b16 %v559
    %v935 = vunpack.c.h.b16 %v559
    %v936 = vunpack.c.l.b16 %v560
    %v937 = vunpack.c.h.b16 %v560
    %v938 = vunpack.c.l.b16 %v561
    %v939 = vunpack.c.h.b16 %v561
    %v940 = vunpack.c.l.b16 %v562
    %v941 = vunpack.c.h.b16 %v562
    %v942 = vunpack.c.l.b16 %v563
    %v943 = vunpack.c.h.b16 %v563
    %v944 = vunpack.c.l.b16 %v564
    %v945 = vunpack.c.h.b16 %v564
    %v946 = vunpack.c.l.b16 %v565
    %v947 = vunpack.c.h.b16 %v565
    %v948 = vunpack.c.l.b16 %v566
    %v949 = vunpack.c.h.b16 %v566
    %v950 = vunpack.c.l.b16 %v567
    %v951 = vunpack.c.h.b16 %v567
    %v952 = vpack.c.b16 %v704, %v696
    %v953 = vpack.c.b16 %v705, %v697
    %v954 = vpack.c.b16 %v706, %v698
    %v955 = vpack.c.b16 %v707, %v699
    %v956 = vpack.c.b16 %v708, %v700
    %v957 = vpack.c.b16 %v709, %v701
    %v958 = vpack.c.b16 %v710, %v702
    %v959 = vpack.c.b16 %v711, %v703
    %v960 = vpack.c.b16 %v720, %v712
    %v961 = vpack.c.b16 %v721, %v713
    %v962 = vpack.c.b16 %v722, %v714
    %v963 = vpack.c.b16 %v723, %v715
    %v964 = vpack.c.b16 %v724, %v716
    %v965 = vpack.c.b16 %v725, %v717
    %v966 = vpack.c.b16 %v726, %v718
    %v967 = vpack.c.b16 %v727, %v719
    %v968 = vpack.c.b16 %v736, %v728
    %v969 = vpack.c.b16 %v737, %v729
    %v970 = vpack.c.b16 %v738, %v730
    %v971 = vpack.c.b16 %v739, %v731
    %v972 = vpack.c.b16 %v740, %v732
    %v973 = vpack.c.b16 %v741, %v733
    %v974 = vpack.c.b16 %v742, %v734
    %v975 = vpack.c.b16 %v743, %v735
    %v976 = vpack.c.b16 %v752, %v744
    %v977 = vpack.c.b16 %v753, %v745
    %v978 = vpack.c.b16 %v754, %v746
    %v979 = vpack.c.b16 %v755, %v747
    %v980 = vpack.c.b16 %v756, %v748
    %v981 = vpack.c.b16 %v757, %v749
    %v982 = vpack.c.b16 %v758, %v750
    %v983 = vpack.c.b16 %v759, %v751
    %v984 = vpack.c.b16 %v768, %v760
    %v985 = vpack.c.b16 %v769, %v761
    %v986 = vpack.c.b16 %v770, %v762
    %v987 = vpack.c.b16 %v771, %v763
    %v988 = vpack.c.b16 %v772, %v764
    %v989 = vpack.c.b16 %v773, %v765
    %v990 = vpack.c.b16 %v774, %v766
    %v991 = vpack.c.b16 %v775, %v767
    %v992 = vpack.c.b16 %v784, %v776
    %v993 = vpack.c.b16 %v785, %v777
    %v994 = vpack.c.b16 %v786, %v778
    %v995 = vpack.c.b16 %v787, %v779
    %v996 = vpack.c.b16 %v788, %v780
    %v997 = vpack.c.b16 %v789, %v781
    %v998 = vpack.c.b16 %v790, %v782
    %v999 = vpack.c.b16 %v791, %v783
    %v1000 = vpack.c.b16 %v800, %v792
    %v1001 = vpack.c.b16 %v801, %v793
    %v1002 = vpack.c.b16 %v802, %v794
    %v1003 = vpack.c.b16 %v803, %v795
    %v1004 = vpack.c.b16 %v804, %v796
    %v1005 = vpack.c.b16 %v805, %v797
    %v1006 = vpack.c.b16 %v806, %v798
    %v1007 = vpack.c.b16 %v807, %v799
    %v1008 = vpack.c.b16 %v816, %v808
    %v1009 = vpack.c.b16 %v817, %v809
    %v1010 = vpack.c.b16 %v818, %v810
    %v1011 = vpack.c.b16 %v819, %v811
    %v1012 = vpack.c.b16 %v820, %v812
    %v1013 = vpack.c.b16 %v821, %v813
    %v1014 = vpack.c.b16 %v822, %v814
    %v1015 = vpack.c.b16 %v823, %v815
    %v1016 = vpack.c.b16 %v832, %v824
    %v1017 = vpack.c.b16 %v833, %v825
    %v1018 = vpack.c.b16 %v834, %v826
    %v1019 = vpack.c.b16 %v835, %v827
    %v1020 = vpack.c.b16 %v836, %v828
    %v1021 = vpack.c.b16 %v837, %v829
    %v1022 = vpack.c.b16 %v838, %v830
    %v1023 = vpack.c.b16 %v839, %v831
    %v1024 = vpack.c.b16 %v848, %v840
    %v1025 = vpack.c.b16 %v849, %v841
    %v1026 = vpack.c.b16 %v850, %v842
    %v1027 = vpack.c.b16 %v851, %v843
    %v1028 = vpack.c.b16 %v852, %v844
    %v1029 = vpack.c.b16 %v853, %v845
    %v1030 = vpack.c.b16 %v854, %v846
    %v1031 = vpack.c.b16 %v855, %v847
    %v1032 = vpack.c.b16 %v864, %v856
    %v1033 = vpack.c.b16 %v865, %v857
    %v1034 = vpack.c.b16 %v866, %v858
    %v1035 = vpack.c.b16 %v867, %v859
    %v1036 = vpack.c.b16 %v868, %v860
    %v1037 = vpack.c.b16 %v869, %v861
    %v1038 = vpack.c.b16 %v870, %v862
    %v1039 = vpack.c.b16 %v871, %v863
    %v1040 = vpack.c.b16 %v880, %v872
    %v1041 = vpack.c.b16 %v881, %v873
    %v1042 = vpack.c.b16 %v882, %v874
    %v1043 = vpack.c.b16 %v883, %v875
    %v1044 = vpack.c.b16 %v884, %v876
    %v1045 = vpack.c.b16 %v885, %v877
    %v1046 = vpack.c.b16 %v886, %v878
    %v1047 = vpack.c.b16 %v887, %v879
    %v1048 = vpack.c.b16 %v896, %v888
    %v1049 = vpack.c.b16 %v897, %v889
    %v1050 = vpack.c.b16 %v898, %v890
    %v1051 = vpack.c.b16 %v899, %v891
    %v1052 = vpack.c.b16 %v900, %v892
    %v1053 = vpack.c.b16 %v901, %v893
    %v1054 = vpack.c.b16 %v902, %v894
    %v1055 = vpack.c.b16 %v903, %v895
    %v1056 = vpack.c.b16 %v912, %v904
    %v1057 = vpack.c.b16 %v913, %v905
    %v1058 = vpack.c.b16 %v914, %v906
    %v1059 = vpack.c.b16 %v915, %v907
    %v1060 = vpack.c.b16 %v916, %v908
    %v1061 = vpack.c.b16 %v917, %v909
    %v1062 = vpack.c.b16 %v918, %v910
    %v1063 = vpack.c.b16 %v919, %v911
    %v1064 = vpack.c.b16 %v928, %v920
    %v1065 = vpack.c.b16 %v929, %v921
    %v1066 = vpack.c.b16 %v930, %v922
    %v1067 = vpack.c.b16 %v931, %v923
    %v1068 = vpack.c.b16 %v932, %v924
    %v1069 = vpack.c.b16 %v933, %v925
    %v1070 = vpack.c.b16 %v934, %v926
    %v1071 = vpack.c.b16 %v935, %v927
    %v1072 = vpack.c.b16 %v944, %v936
    %v1073 = vpack.c.b16 %v945, %v937
    %v1074 = vpack.c.b16 %v946, %v938
    %v1075 = vpack.c.b16 %v947, %v939
    %v1076 = vpack.c.b16 %v948, %v940
    %v1077 = vpack.c.b16 %v949, %v941
    %v1078 = vpack.c.b16 %v950, %v942
    %v1079 = vpack.c.b16 %v951, %v943
    %1208 = vmatprep.subr.bf16.mxu0 %v953
    %1209 = vmatpush1.bf16.msra.mxu0 %v952
    %1210 = vmatprep.subr.bf16.mxu0 %v961
    %1211 = vmatpush1.bf16.msra.mxu0 %v960
    %1212 = vmatprep.subr.bf16.mxu0 %v969
    %1213 = vmatpush1.bf16.msra.mxu0 %v968
    %1214 = vmatprep.subr.bf16.mxu0 %v977
    %1215 = vmatpush1.bf16.msra.mxu0 %v976
    %1216 = vmatprep.subr.bf16.mxu0 %v985
    %1217 = vmatpush1.bf16.msra.mxu0 %v984
    %1218 = vmatprep.subr.bf16.mxu0 %v993
    %1219 = vmatpush1.bf16.msra.mxu0 %v992
    %1220 = vmatprep.subr.bf16.mxu0 %v1001
    %1221 = vmatpush1.bf16.msra.mxu0 %v1000
    %1222 = vmatprep.subr.bf16.mxu0 %v1009
    %1223 = vmatpush1.bf16.msra.mxu0 %v1008
    %1224 = vmatprep.subr.bf16.mxu0 %v1017
    %1225 = vmatpush1.bf16.msra.mxu0 %v1016
    %1226 = vmatprep.subr.bf16.mxu0 %v1025
    %1227 = vmatpush1.bf16.msra.mxu0 %v1024
    %1228 = vmatprep.subr.bf16.mxu0 %v1033
    %1229 = vmatpush1.bf16.msra.mxu0 %v1032
    %1230 = vmatprep.subr.bf16.mxu0 %v1041
    %1231 = vmatpush1.bf16.msra.mxu0 %v1040
    %1232 = vmatprep.subr.bf16.mxu0 %v1049
    %1233 = vmatpush1.bf16.msra.mxu0 %v1048
    %1234 = vmatprep.subr.bf16.mxu0 %v1057
    %1235 = vmatpush1.bf16.msra.mxu0 %v1056
    %1236 = vmatprep.subr.bf16.mxu0 %v1065
    %1237 = vmatpush1.bf16.msra.mxu0 %v1064
    %1238 = vmatprep.subr.bf16.mxu0 %v1073
    %1239 = vmatpush1.bf16.msra.mxu0 %v1072
    %1240 = vmatprep.mubr.bf16.mxu0 %v439
    %1241 = vmatmul.mubr.bf16.gmra.mrb[0].mxu0 %v438
    %v1242 = vpop.f32.mrb[0].mxu0
    %v1243 = vadd.f32 0.0, %v1242
    %v1244 = vpop.f32.mrb[0].mxu0
    %v1245 = vadd.f32 0.0, %v1244
    %v1246 = vpop.f32.mrb[0].mxu0
    %v1247 = vpop.f32.mrb[0].mxu0
    %1248 = vdwg.mxu0
    %1249 = vmatprep.subr.bf16.mxu0 %v955
    %1250 = vmatpush1.bf16.msra.mxu0 %v954
    %1251 = vmatprep.subr.bf16.mxu0 %v963
    %1252 = vmatpush1.bf16.msra.mxu0 %v962
    %1253 = vmatprep.subr.bf16.mxu0 %v971
    %1254 = vmatpush1.bf16.msra.mxu0 %v970
    %1255 = vmatprep.subr.bf16.mxu0 %v979
    %1256 = vmatpush1.bf16.msra.mxu0 %v978
    %1257 = vmatprep.subr.bf16.mxu0 %v987
    %1258 = vmatpush1.bf16.msra.mxu0 %v986
    %1259 = vmatprep.subr.bf16.mxu0 %v995
    %1260 = vmatpush1.bf16.msra.mxu0 %v994
    %1261 = vmatprep.subr.bf16.mxu0 %v1003
    %1262 = vmatpush1.bf16.msra.mxu0 %v1002
    %1263 = vmatprep.subr.bf16.mxu0 %v1011
    %1264 = vmatpush1.bf16.msra.mxu0 %v1010
    %1265 = vmatprep.subr.bf16.mxu0 %v1019
    %1266 = vmatpush1.bf16.msra.mxu0 %v1018
    %1267 = vmatprep.subr.bf16.mxu0 %v1027
    %1268 = vmatpush1.bf16.msra.mxu0 %v1026
    %1269 = vmatprep.subr.bf16.mxu0 %v1035
    %1270 = vmatpush1.bf16.msra.mxu0 %v1034
    %1271 = vmatprep.subr.bf16.mxu0 %v1043
    %1272 = vmatpush1.bf16.msra.mxu0 %v1042
    %1273 = vmatprep.subr.bf16.mxu0 %v1051
    %1274 = vmatpush1.bf16.msra.mxu0 %v1050
    %1275 = vmatprep.subr.bf16.mxu0 %v1059
    %1276 = vmatpush1.bf16.msra.mxu0 %v1058
    %1277 = vmatprep.subr.bf16.mxu0 %v1067
    %1278 = vmatpush1.bf16.msra.mxu0 %v1066
    %1279 = vmatprep.subr.bf16.mxu0 %v1075
    %1280 = vmatpush1.bf16.msra.mxu0 %v1074
    %1281 = vmatprep.mubr.bf16.mxu0 %v439
    %1282 = vmatmul.mubr.bf16.gmra.mrb[0].mxu0 %v438
    %v1283 = vpop.f32.mrb[0].mxu0
    %v1284 = vadd.f32 0.0, %v1283
    %v1285 = vpop.f32.mrb[0].mxu0
    %v1286 = vadd.f32 0.0, %v1285
    %v1287 = vpop.f32.mrb[0].mxu0
    %v1288 = vpop.f32.mrb[0].mxu0
    %1289 = vdwg.mxu0
    %1290 = vmatprep.subr.bf16.mxu0 %v957
    %1291 = vmatpush1.bf16.msra.mxu0 %v956
    %1292 = vmatprep.subr.bf16.mxu0 %v965
    %1293 = vmatpush1.bf16.msra.mxu0 %v964
    %1294 = vmatprep.subr.bf16.mxu0 %v973
    %1295 = vmatpush1.bf16.msra.mxu0 %v972
    %1296 = vmatprep.subr.bf16.mxu0 %v981
    %1297 = vmatpush1.bf16.msra.mxu0 %v980
    %1298 = vmatprep.subr.bf16.mxu0 %v989
    %1299 = vmatpush1.bf16.msra.mxu0 %v988
    %1300 = vmatprep.subr.bf16.mxu0 %v997
    %1301 = vmatpush1.bf16.msra.mxu0 %v996
    %1302 = vmatprep.subr.bf16.mxu0 %v1005
    %1303 = vmatpush1.bf16.msra.mxu0 %v1004
    %1304 = vmatprep.subr.bf16.mxu0 %v1013
    %1305 = vmatpush1.bf16.msra.mxu0 %v1012
    %1306 = vmatprep.subr.bf16.mxu0 %v1021
    %1307 = vmatpush1.bf16.msra.mxu0 %v1020
    %1308 = vmatprep.subr.bf16.mxu0 %v1029
    %1309 = vmatpush1.bf16.msra.mxu0 %v1028
    %1310 = vmatprep.subr.bf16.mxu0 %v1037
    %1311 = vmatpush1.bf16.msra.mxu0 %v1036
    %1312 = vmatprep.subr.bf16.mxu0 %v1045
    %1313 = vmatpush1.bf16.msra.mxu0 %v1044
    %1314 = vmatprep.subr.bf16.mxu0 %v1053
    %1315 = vmatpush1.bf16.msra.mxu0 %v1052
    %1316 = vmatprep.subr.bf16.mxu0 %v1061
    %1317 = vmatpush1.bf16.msra.mxu0 %v1060
    %1318 = vmatprep.subr.bf16.mxu0 %v1069
    %1319 = vmatpush1.bf16.msra.mxu0 %v1068
    %1320 = vmatprep.subr.bf16.mxu0 %v1077
    %1321 = vmatpush1.bf16.msra.mxu0 %v1076
    %1322 = vmatprep.mubr.bf16.mxu0 %v439
    %1323 = vmatmul.mubr.bf16.gmra.mrb[0].mxu0 %v438
    %v1324 = vpop.f32.mrb[0].mxu0
    %v1325 = vadd.f32 0.0, %v1324
    %v1326 = vpop.f32.mrb[0].mxu0
    %v1327 = vadd.f32 0.0, %v1326
    %v1328 = vpop.f32.mrb[0].mxu0
    %v1329 = vpop.f32.mrb[0].mxu0
    %1330 = vdwg.mxu0
    %1331 = vmatprep.subr.bf16.mxu0 %v959
    %1332 = vmatpush1.bf16.msra.mxu0 %v958
    %1333 = vmatprep.subr.bf16.mxu0 %v967
    %1334 = vmatpush1.bf16.msra.mxu0 %v966
    %1335 = vmatprep.subr.bf16.mxu0 %v975
    %1336 = vmatpush1.bf16.msra.mxu0 %v974
    %1337 = vmatprep.subr.bf16.mxu0 %v983
    %1338 = vmatpush1.bf16.msra.mxu0 %v982
    %1339 = vmatprep.subr.bf16.mxu0 %v991
    %1340 = vmatpush1.bf16.msra.mxu0 %v990
    %1341 = vmatprep.subr.bf16.mxu0 %v999
    %1342 = vmatpush1.bf16.msra.mxu0 %v998
    %1343 = vmatprep.subr.bf16.mxu0 %v1007
    %1344 = vmatpush1.bf16.msra.mxu0 %v1006
    %1345 = vmatprep.subr.bf16.mxu0 %v1015
    %1346 = vmatpush1.bf16.msra.mxu0 %v1014
    %1347 = vmatprep.subr.bf16.mxu0 %v1023
    %1348 = vmatpush1.bf16.msra.mxu0 %v1022
    %1349 = vmatprep.subr.bf16.mxu0 %v1031
    %1350 = vmatpush1.bf16.msra.mxu0 %v1030
    %1351 = vmatprep.subr.bf16.mxu0 %v1039
    %1352 = vmatpush1.bf16.msra.mxu0 %v1038
    %1353 = vmatprep.subr.bf16.mxu0 %v1047
    %1354 = vmatpush1.bf16.msra.mxu0 %v1046
    %1355 = vmatprep.subr.bf16.mxu0 %v1055
    %1356 = vmatpush1.bf16.msra.mxu0 %v1054
    %1357 = vmatprep.subr.bf16.mxu0 %v1063
    %1358 = vmatpush1.bf16.msra.mxu0 %v1062
    %1359 = vmatprep.subr.bf16.mxu0 %v1071
    %1360 = vmatpush1.bf16.msra.mxu0 %v1070
    %1361 = vmatprep.subr.bf16.mxu0 %v1079
    %1362 = vmatpush1.bf16.msra.mxu0 %v1078
    %1363 = vmatprep.mubr.bf16.mxu0 %v439
    %1364 = vmatmul.mubr.bf16.gmra.mrb[0].mxu0 %v438
    %v1365 = vpop.f32.mrb[0].mxu0
    %v1366 = vadd.f32 0.0, %v1365
    %v1367 = vpop.f32.mrb[0].mxu0
    %v1368 = vadd.f32 0.0, %v1367
    %v1369 = vpop.f32.mrb[0].mxu0
    %v1370 = vpop.f32.mrb[0].mxu0
    %1371 = vdwg.mxu0
    %v1372 = vadd.f32 %v256, %v1243
    %v1373 = vadd.f32 %v258, %v1245
    %v1374 = vadd.f32 %v309, %v1284
    %v1375 = vadd.f32 %v311, %v1286
    %v1376 = vadd.f32 %v362, %v1325
    %v1377 = vadd.f32 %v364, %v1327
    %v1378 = vadd.f32 %v415, %v1366
    %v1379 = vadd.f32 %v417, %v1368
    %v1380 = vmul.f32 %v1372, 0.5
    %v1381 = vmul.f32 %v1373, 0.5
    %v1382 = vtanh.pop %v1380
    %v1383 = vtanh.pop %v1381
    %v1384 = vadd.f32 %v1382, 1.0
    %v1385 = vadd.f32 %v1383, 1.0
    %v1386 = vmul.f32 %v1384, 0.5
    %v1387 = vmul.f32 %v1385, 0.5
    %v1388 = vmul.f32 %v1374, 0.5
    %v1389 = vmul.f32 %v1375, 0.5
    %v1390 = vtanh.pop %v1388
    %v1391 = vtanh.pop %v1389
    %v1392 = vadd.f32 %v1390, 1.0
    %v1393 = vadd.f32 %v1391, 1.0
    %v1394 = vmul.f32 %v1392, 0.5
    %v1395 = vmul.f32 %v1393, 0.5
    %v1396 = vtanh.pop %v1376
    %v1397 = vtanh.pop %v1377
    %v1398 = vmul.f32 %v1378, 0.5
    %v1399 = vmul.f32 %v1379, 0.5
    %v1400 = vtanh.pop %v1398
    %v1401 = vtanh.pop %v1399
    %v1402 = vadd.f32 %v1400, 1.0
    %v1403 = vadd.f32 %v1401, 1.0
    %v1404 = vmul.f32 %v1402, 0.5
    %v1405 = vmul.f32 %v1403, 0.5
    %v1407 = vcombine.high %v434, %v434
    %v1409 = vmul.f32 %v1394, %v434
    %v1410 = vmul.f32 %v1395, %v1407
    %v1411 = vmul.f32 %v1386, %v1396
    %v1412 = vmul.f32 %v1387, %v1397
    %v1413 = vadd.f32 %v1409, %v1411
    %v1414 = vadd.f32 %v1410, %v1412
    %v1415 = vtanh.pop %v1413
    %v1416 = vtanh.pop %v1414
    %v1417 = vmul.f32 %v1404, %v1415
    %v1418 = vmul.f32 %v1405, %v1416
    %v1421 = vcombine.low %v1417, %v1418
    %1423 = vst [vmem:[#allocation10] sm:$0xff] %v1421
    %v1424 = vpack.c.bf16 %v1417, %v1417
    %v1425 = vpack.c.bf16 %v1418, %v1418
    %v1426 = vld [vmem:[#allocation9] sm:$0xff]
    %v1427 = vld [vmem:[#allocation9 + $0x8] sm:$0xff]
    %v1428 = vld [vmem:[#allocation9 + $0x10] sm:$0xff]
    %v1429 = vld [vmem:[#allocation9 + $0x18] sm:$0xff]
    %v1430 = vld [vmem:[#allocation9 + $0x20] sm:$0xff]
    %v1431 = vld [vmem:[#allocation9 + $0x28] sm:$0xff]
    %v1432 = vld [vmem:[#allocation9 + $0x30] sm:$0xff]
    %v1433 = vld [vmem:[#allocation9 + $0x38] sm:$0xff]
    %v1434 = vld [vmem:[#allocation9 + $0x40] sm:$0xff]
    %v1435 = vld [vmem:[#allocation9 + $0x48] sm:$0xff]
    %v1436 = vld [vmem:[#allocation9 + $0x50] sm:$0xff]
    %v1437 = vld [vmem:[#allocation9 + $0x58] sm:$0xff]
    %v1438 = vld [vmem:[#allocation9 + $0x60] sm:$0xff]
    %v1439 = vld [vmem:[#allocation9 + $0x68] sm:$0xff]
    %v1440 = vld [vmem:[#allocation9 + $0x70] sm:$0xff]
    %v1441 = vld [vmem:[#allocation9 + $0x78] sm:$0xff]
    %v1442 = vld [vmem:[#allocation9 + $0x80] sm:$0xff]
    %v1443 = vld [vmem:[#allocation9 + $0x88] sm:$0xff]
    %v1444 = vld [vmem:[#allocation9 + $0x90] sm:$0xff]
    %v1445 = vld [vmem:[#allocation9 + $0x98] sm:$0xff]
    %v1446 = vld [vmem:[#allocation9 + $0xa0] sm:$0xff]
    %v1447 = vld [vmem:[#allocation9 + $0xa8] sm:$0xff]
    %v1448 = vld [vmem:[#allocation9 + $0xb0] sm:$0xff]
    %v1449 = vld [vmem:[#allocation9 + $0xb8] sm:$0xff]
    %v1450 = vld [vmem:[#allocation9 + $0xc0] sm:$0xff]
    %v1451 = vld [vmem:[#allocation9 + $0xc8] sm:$0xff]
    %v1452 = vld [vmem:[#allocation9 + $0xd0] sm:$0xff]
    %v1453 = vld [vmem:[#allocation9 + $0xd8] sm:$0xff]
    %v1454 = vld [vmem:[#allocation9 + $0xe0] sm:$0xff]
    %v1455 = vld [vmem:[#allocation9 + $0xe8] sm:$0xff]
    %v1456 = vld [vmem:[#allocation9 + $0xf0] sm:$0xff]
    %v1457 = vld [vmem:[#allocation9 + $0xf8] sm:$0xff]
    %v1458 = vld [vmem:[#allocation9 + $0x100] sm:$0xff]
    %v1459 = vld [vmem:[#allocation9 + $0x108] sm:$0xff]
    %v1460 = vld [vmem:[#allocation9 + $0x110] sm:$0xff]
    %v1461 = vld [vmem:[#allocation9 + $0x118] sm:$0xff]
    %v1462 = vld [vmem:[#allocation9 + $0x120] sm:$0xff]
    %v1463 = vld [vmem:[#allocation9 + $0x128] sm:$0xff]
    %v1464 = vld [vmem:[#allocation9 + $0x130] sm:$0xff]
    %v1465 = vld [vmem:[#allocation9 + $0x138] sm:$0xff]
    %v1466 = vld [vmem:[#allocation9 + $0x140] sm:$0xff]
    %v1467 = vld [vmem:[#allocation9 + $0x148] sm:$0xff]
    %v1468 = vld [vmem:[#allocation9 + $0x150] sm:$0xff]
    %v1469 = vld [vmem:[#allocation9 + $0x158] sm:$0xff]
    %v1470 = vld [vmem:[#allocation9 + $0x160] sm:$0xff]
    %v1471 = vld [vmem:[#allocation9 + $0x168] sm:$0xff]
    %v1472 = vld [vmem:[#allocation9 + $0x170] sm:$0xff]
    %v1473 = vld [vmem:[#allocation9 + $0x178] sm:$0xff]
    %v1474 = vld [vmem:[#allocation9 + $0x180] sm:$0xff]
    %v1475 = vld [vmem:[#allocation9 + $0x188] sm:$0xff]
    %v1476 = vld [vmem:[#allocation9 + $0x190] sm:$0xff]
    %v1477 = vld [vmem:[#allocation9 + $0x198] sm:$0xff]
    %v1478 = vld [vmem:[#allocation9 + $0x1a0] sm:$0xff]
    %v1479 = vld [vmem:[#allocation9 + $0x1a8] sm:$0xff]
    %v1480 = vld [vmem:[#allocation9 + $0x1b0] sm:$0xff]
    %v1481 = vld [vmem:[#allocation9 + $0x1b8] sm:$0xff]
    %v1482 = vld [vmem:[#allocation9 + $0x1c0] sm:$0xff]
    %v1483 = vld [vmem:[#allocation9 + $0x1c8] sm:$0xff]
    %v1484 = vld [vmem:[#allocation9 + $0x1d0] sm:$0xff]
    %v1485 = vld [vmem:[#allocation9 + $0x1d8] sm:$0xff]
    %v1486 = vld [vmem:[#allocation9 + $0x1e0] sm:$0xff]
    %v1487 = vld [vmem:[#allocation9 + $0x1e8] sm:$0xff]
    %v1488 = vld [vmem:[#allocation9 + $0x1f0] sm:$0xff]
    %v1489 = vld [vmem:[#allocation9 + $0x1f8] sm:$0xff]
    %v1490 = vld [vmem:[#allocation9 + $0x200] sm:$0xff]
    %v1491 = vld [vmem:[#allocation9 + $0x208] sm:$0xff]
    %v1492 = vld [vmem:[#allocation9 + $0x210] sm:$0xff]
    %v1493 = vld [vmem:[#allocation9 + $0x218] sm:$0xff]
    %v1494 = vld [vmem:[#allocation9 + $0x220] sm:$0xff]
    %v1495 = vld [vmem:[#allocation9 + $0x228] sm:$0xff]
    %v1496 = vld [vmem:[#allocation9 + $0x230] sm:$0xff]
    %v1497 = vld [vmem:[#allocation9 + $0x238] sm:$0xff]
    %v1498 = vld [vmem:[#allocation9 + $0x240] sm:$0xff]
    %v1499 = vld [vmem:[#allocation9 + $0x248] sm:$0xff]
    %v1500 = vld [vmem:[#allocation9 + $0x250] sm:$0xff]
    %v1501 = vld [vmem:[#allocation9 + $0x258] sm:$0xff]
    %v1502 = vld [vmem:[#allocation9 + $0x260] sm:$0xff]
    %v1503 = vld [vmem:[#allocation9 + $0x268] sm:$0xff]
    %v1504 = vld [vmem:[#allocation9 + $0x270] sm:$0xff]
    %v1505 = vld [vmem:[#allocation9 + $0x278] sm:$0xff]
    %v1506 = vld [vmem:[#allocation9 + $0x280] sm:$0xff]
    %v1507 = vld [vmem:[#allocation9 + $0x288] sm:$0xff]
    %v1508 = vld [vmem:[#allocation9 + $0x290] sm:$0xff]
    %v1509 = vld [vmem:[#allocation9 + $0x298] sm:$0xff]
    %v1510 = vld [vmem:[#allocation9 + $0x2a0] sm:$0xff]
    %v1511 = vld [vmem:[#allocation9 + $0x2a8] sm:$0xff]
    %v1512 = vld [vmem:[#allocation9 + $0x2b0] sm:$0xff]
    %v1513 = vld [vmem:[#allocation9 + $0x2b8] sm:$0xff]
    %v1514 = vld [vmem:[#allocation9 + $0x2c0] sm:$0xff]
    %v1515 = vld [vmem:[#allocation9 + $0x2c8] sm:$0xff]
    %v1516 = vld [vmem:[#allocation9 + $0x2d0] sm:$0xff]
    %v1517 = vld [vmem:[#allocation9 + $0x2d8] sm:$0xff]
    %v1518 = vld [vmem:[#allocation9 + $0x2e0] sm:$0xff]
    %v1519 = vld [vmem:[#allocation9 + $0x2e8] sm:$0xff]
    %v1520 = vld [vmem:[#allocation9 + $0x2f0] sm:$0xff]
    %v1521 = vld [vmem:[#allocation9 + $0x2f8] sm:$0xff]
    %v1522 = vld [vmem:[#allocation9 + $0x300] sm:$0xff]
    %v1523 = vld [vmem:[#allocation9 + $0x308] sm:$0xff]
    %v1524 = vld [vmem:[#allocation9 + $0x310] sm:$0xff]
    %v1525 = vld [vmem:[#allocation9 + $0x318] sm:$0xff]
    %v1526 = vld [vmem:[#allocation9 + $0x320] sm:$0xff]
    %v1527 = vld [vmem:[#allocation9 + $0x328] sm:$0xff]
    %v1528 = vld [vmem:[#allocation9 + $0x330] sm:$0xff]
    %v1529 = vld [vmem:[#allocation9 + $0x338] sm:$0xff]
    %v1530 = vld [vmem:[#allocation9 + $0x340] sm:$0xff]
    %v1531 = vld [vmem:[#allocation9 + $0x348] sm:$0xff]
    %v1532 = vld [vmem:[#allocation9 + $0x350] sm:$0xff]
    %v1533 = vld [vmem:[#allocation9 + $0x358] sm:$0xff]
    %v1534 = vld [vmem:[#allocation9 + $0x360] sm:$0xff]
    %v1535 = vld [vmem:[#allocation9 + $0x368] sm:$0xff]
    %v1536 = vld [vmem:[#allocation9 + $0x370] sm:$0xff]
    %v1537 = vld [vmem:[#allocation9 + $0x378] sm:$0xff]
    %v1538 = vld [vmem:[#allocation9 + $0x380] sm:$0xff]
    %v1539 = vld [vmem:[#allocation9 + $0x388] sm:$0xff]
    %v1540 = vld [vmem:[#allocation9 + $0x390] sm:$0xff]
    %v1541 = vld [vmem:[#allocation9 + $0x398] sm:$0xff]
    %v1542 = vld [vmem:[#allocation9 + $0x3a0] sm:$0xff]
    %v1543 = vld [vmem:[#allocation9 + $0x3a8] sm:$0xff]
    %v1544 = vld [vmem:[#allocation9 + $0x3b0] sm:$0xff]
    %v1545 = vld [vmem:[#allocation9 + $0x3b8] sm:$0xff]
    %v1546 = vld [vmem:[#allocation9 + $0x3c0] sm:$0xff]
    %v1547 = vld [vmem:[#allocation9 + $0x3c8] sm:$0xff]
    %v1548 = vld [vmem:[#allocation9 + $0x3d0] sm:$0xff]
    %v1549 = vld [vmem:[#allocation9 + $0x3d8] sm:$0xff]
    %v1550 = vld [vmem:[#allocation9 + $0x3e0] sm:$0xff]
    %v1551 = vld [vmem:[#allocation9 + $0x3e8] sm:$0xff]
    %v1552 = vld [vmem:[#allocation9 + $0x3f0] sm:$0xff]
    %v1553 = vld [vmem:[#allocation9 + $0x3f8] sm:$0xff]
    %v1682 = vunpack.c.l.b16 %v1426
    %v1683 = vunpack.c.h.b16 %v1426
    %v1684 = vunpack.c.l.b16 %v1427
    %v1685 = vunpack.c.h.b16 %v1427
    %v1686 = vunpack.c.l.b16 %v1428
    %v1687 = vunpack.c.h.b16 %v1428
    %v1688 = vunpack.c.l.b16 %v1429
    %v1689 = vunpack.c.h.b16 %v1429
    %v1690 = vunpack.c.l.b16 %v1430
    %v1691 = vunpack.c.h.b16 %v1430
    %v1692 = vunpack.c.l.b16 %v1431
    %v1693 = vunpack.c.h.b16 %v1431
    %v1694 = vunpack.c.l.b16 %v1432
    %v1695 = vunpack.c.h.b16 %v1432
    %v1696 = vunpack.c.l.b16 %v1433
    %v1697 = vunpack.c.h.b16 %v1433
    %v1698 = vunpack.c.l.b16 %v1434
    %v1699 = vunpack.c.h.b16 %v1434
    %v1700 = vunpack.c.l.b16 %v1435
    %v1701 = vunpack.c.h.b16 %v1435
    %v1702 = vunpack.c.l.b16 %v1436
    %v1703 = vunpack.c.h.b16 %v1436
    %v1704 = vunpack.c.l.b16 %v1437
    %v1705 = vunpack.c.h.b16 %v1437
    %v1706 = vunpack.c.l.b16 %v1438
    %v1707 = vunpack.c.h.b16 %v1438
    %v1708 = vunpack.c.l.b16 %v1439
    %v1709 = vunpack.c.h.b16 %v1439
    %v1710 = vunpack.c.l.b16 %v1440
    %v1711 = vunpack.c.h.b16 %v1440
    %v1712 = vunpack.c.l.b16 %v1441
    %v1713 = vunpack.c.h.b16 %v1441
    %v1714 = vunpack.c.l.b16 %v1442
    %v1715 = vunpack.c.h.b16 %v1442
    %v1716 = vunpack.c.l.b16 %v1443
    %v1717 = vunpack.c.h.b16 %v1443
    %v1718 = vunpack.c.l.b16 %v1444
    %v1719 = vunpack.c.h.b16 %v1444
    %v1720 = vunpack.c.l.b16 %v1445
    %v1721 = vunpack.c.h.b16 %v1445
    %v1722 = vunpack.c.l.b16 %v1446
    %v1723 = vunpack.c.h.b16 %v1446
    %v1724 = vunpack.c.l.b16 %v1447
    %v1725 = vunpack.c.h.b16 %v1447
    %v1726 = vunpack.c.l.b16 %v1448
    %v1727 = vunpack.c.h.b16 %v1448
    %v1728 = vunpack.c.l.b16 %v1449
    %v1729 = vunpack.c.h.b16 %v1449
    %v1730 = vunpack.c.l.b16 %v1450
    %v1731 = vunpack.c.h.b16 %v1450
    %v1732 = vunpack.c.l.b16 %v1451
    %v1733 = vunpack.c.h.b16 %v1451
    %v1734 = vunpack.c.l.b16 %v1452
    %v1735 = vunpack.c.h.b16 %v1452
    %v1736 = vunpack.c.l.b16 %v1453
    %v1737 = vunpack.c.h.b16 %v1453
    %v1738 = vunpack.c.l.b16 %v1454
    %v1739 = vunpack.c.h.b16 %v1454
    %v1740 = vunpack.c.l.b16 %v1455
    %v1741 = vunpack.c.h.b16 %v1455
    %v1742 = vunpack.c.l.b16 %v1456
    %v1743 = vunpack.c.h.b16 %v1456
    %v1744 = vunpack.c.l.b16 %v1457
    %v1745 = vunpack.c.h.b16 %v1457
    %v1746 = vunpack.c.l.b16 %v1458
    %v1747 = vunpack.c.h.b16 %v1458
    %v1748 = vunpack.c.l.b16 %v1459
    %v1749 = vunpack.c.h.b16 %v1459
    %v1750 = vunpack.c.l.b16 %v1460
    %v1751 = vunpack.c.h.b16 %v1460
    %v1752 = vunpack.c.l.b16 %v1461
    %v1753 = vunpack.c.h.b16 %v1461
    %v1754 = vunpack.c.l.b16 %v1462
    %v1755 = vunpack.c.h.b16 %v1462
    %v1756 = vunpack.c.l.b16 %v1463
    %v1757 = vunpack.c.h.b16 %v1463
    %v1758 = vunpack.c.l.b16 %v1464
    %v1759 = vunpack.c.h.b16 %v1464
    %v1760 = vunpack.c.l.b16 %v1465
    %v1761 = vunpack.c.h.b16 %v1465
    %v1762 = vunpack.c.l.b16 %v1466
    %v1763 = vunpack.c.h.b16 %v1466
    %v1764 = vunpack.c.l.b16 %v1467
    %v1765 = vunpack.c.h.b16 %v1467
    %v1766 = vunpack.c.l.b16 %v1468
    %v1767 = vunpack.c.h.b16 %v1468
    %v1768 = vunpack.c.l.b16 %v1469
    %v1769 = vunpack.c.h.b16 %v1469
    %v1770 = vunpack.c.l.b16 %v1470
    %v1771 = vunpack.c.h.b16 %v1470
    %v1772 = vunpack.c.l.b16 %v1471
    %v1773 = vunpack.c.h.b16 %v1471
    %v1774 = vunpack.c.l.b16 %v1472
    %v1775 = vunpack.c.h.b16 %v1472
    %v1776 = vunpack.c.l.b16 %v1473
    %v1777 = vunpack.c.h.b16 %v1473
    %v1778 = vunpack.c.l.b16 %v1474
    %v1779 = vunpack.c.h.b16 %v1474
    %v1780 = vunpack.c.l.b16 %v1475
    %v1781 = vunpack.c.h.b16 %v1475
    %v1782 = vunpack.c.l.b16 %v1476
    %v1783 = vunpack.c.h.b16 %v1476
    %v1784 = vunpack.c.l.b16 %v1477
    %v1785 = vunpack.c.h.b16 %v1477
    %v1786 = vunpack.c.l.b16 %v1478
    %v1787 = vunpack.c.h.b16 %v1478
    %v1788 = vunpack.c.l.b16 %v1479
    %v1789 = vunpack.c.h.b16 %v1479
    %v1790 = vunpack.c.l.b16 %v1480
    %v1791 = vunpack.c.h.b16 %v1480
    %v1792 = vunpack.c.l.b16 %v1481
    %v1793 = vunpack.c.h.b16 %v1481
    %v1794 = vunpack.c.l.b16 %v1482
    %v1795 = vunpack.c.h.b16 %v1482
    %v1796 = vunpack.c.l.b16 %v1483
    %v1797 = vunpack.c.h.b16 %v1483
    %v1798 = vunpack.c.l.b16 %v1484
    %v1799 = vunpack.c.h.b16 %v1484
    %v1800 = vunpack.c.l.b16 %v1485
    %v1801 = vunpack.c.h.b16 %v1485
    %v1802 = vunpack.c.l.b16 %v1486
    %v1803 = vunpack.c.h.b16 %v1486
    %v1804 = vunpack.c.l.b16 %v1487
    %v1805 = vunpack.c.h.b16 %v1487
    %v1806 = vunpack.c.l.b16 %v1488
    %v1807 = vunpack.c.h.b16 %v1488
    %v1808 = vunpack.c.l.b16 %v1489
    %v1809 = vunpack.c.h.b16 %v1489
    %v1810 = vunpack.c.l.b16 %v1490
    %v1811 = vunpack.c.h.b16 %v1490
    %v1812 = vunpack.c.l.b16 %v1491
    %v1813 = vunpack.c.h.b16 %v1491
    %v1814 = vunpack.c.l.b16 %v1492
    %v1815 = vunpack.c.h.b16 %v1492
    %v1816 = vunpack.c.l.b16 %v1493
    %v1817 = vunpack.c.h.b16 %v1493
    %v1818 = vunpack.c.l.b16 %v1494
    %v1819 = vunpack.c.h.b16 %v1494
    %v1820 = vunpack.c.l.b16 %v1495
    %v1821 = vunpack.c.h.b16 %v1495
    %v1822 = vunpack.c.l.b16 %v1496
    %v1823 = vunpack.c.h.b16 %v1496
    %v1824 = vunpack.c.l.b16 %v1497
    %v1825 = vunpack.c.h.b16 %v1497
    %v1826 = vunpack.c.l.b16 %v1498
    %v1827 = vunpack.c.h.b16 %v1498
    %v1828 = vunpack.c.l.b16 %v1499
    %v1829 = vunpack.c.h.b16 %v1499
    %v1830 = vunpack.c.l.b16 %v1500
    %v1831 = vunpack.c.h.b16 %v1500
    %v1832 = vunpack.c.l.b16 %v1501
    %v1833 = vunpack.c.h.b16 %v1501
    %v1834 = vunpack.c.l.b16 %v1502
    %v1835 = vunpack.c.h.b16 %v1502
    %v1836 = vunpack.c.l.b16 %v1503
    %v1837 = vunpack.c.h.b16 %v1503
    %v1838 = vunpack.c.l.b16 %v1504
    %v1839 = vunpack.c.h.b16 %v1504
    %v1840 = vunpack.c.l.b16 %v1505
    %v1841 = vunpack.c.h.b16 %v1505
    %v1842 = vunpack.c.l.b16 %v1506
    %v1843 = vunpack.c.h.b16 %v1506
    %v1844 = vunpack.c.l.b16 %v1507
    %v1845 = vunpack.c.h.b16 %v1507
    %v1846 = vunpack.c.l.b16 %v1508
    %v1847 = vunpack.c.h.b16 %v1508
    %v1848 = vunpack.c.l.b16 %v1509
    %v1849 = vunpack.c.h.b16 %v1509
    %v1850 = vunpack.c.l.b16 %v1510
    %v1851 = vunpack.c.h.b16 %v1510
    %v1852 = vunpack.c.l.b16 %v1511
    %v1853 = vunpack.c.h.b16 %v1511
    %v1854 = vunpack.c.l.b16 %v1512
    %v1855 = vunpack.c.h.b16 %v1512
    %v1856 = vunpack.c.l.b16 %v1513
    %v1857 = vunpack.c.h.b16 %v1513
    %v1858 = vunpack.c.l.b16 %v1514
    %v1859 = vunpack.c.h.b16 %v1514
    %v1860 = vunpack.c.l.b16 %v1515
    %v1861 = vunpack.c.h.b16 %v1515
    %v1862 = vunpack.c.l.b16 %v1516
    %v1863 = vunpack.c.h.b16 %v1516
    %v1864 = vunpack.c.l.b16 %v1517
    %v1865 = vunpack.c.h.b16 %v1517
    %v1866 = vunpack.c.l.b16 %v1518
    %v1867 = vunpack.c.h.b16 %v1518
    %v1868 = vunpack.c.l.b16 %v1519
    %v1869 = vunpack.c.h.b16 %v1519
    %v1870 = vunpack.c.l.b16 %v1520
    %v1871 = vunpack.c.h.b16 %v1520
    %v1872 = vunpack.c.l.b16 %v1521
    %v1873 = vunpack.c.h.b16 %v1521
    %v1874 = vunpack.c.l.b16 %v1522
    %v1875 = vunpack.c.h.b16 %v1522
    %v1876 = vunpack.c.l.b16 %v1523
    %v1877 = vunpack.c.h.b16 %v1523
    %v1878 = vunpack.c.l.b16 %v1524
    %v1879 = vunpack.c.h.b16 %v1524
    %v1880 = vunpack.c.l.b16 %v1525
    %v1881 = vunpack.c.h.b16 %v1525
    %v1882 = vunpack.c.l.b16 %v1526
    %v1883 = vunpack.c.h.b16 %v1526
    %v1884 = vunpack.c.l.b16 %v1527
    %v1885 = vunpack.c.h.b16 %v1527
    %v1886 = vunpack.c.l.b16 %v1528
    %v1887 = vunpack.c.h.b16 %v1528
    %v1888 = vunpack.c.l.b16 %v1529
    %v1889 = vunpack.c.h.b16 %v1529
    %v1890 = vunpack.c.l.b16 %v1530
    %v1891 = vunpack.c.h.b16 %v1530
    %v1892 = vunpack.c.l.b16 %v1531
    %v1893 = vunpack.c.h.b16 %v1531
    %v1894 = vunpack.c.l.b16 %v1532
    %v1895 = vunpack.c.h.b16 %v1532
    %v1896 = vunpack.c.l.b16 %v1533
    %v1897 = vunpack.c.h.b16 %v1533
    %v1898 = vunpack.c.l.b16 %v1534
    %v1899 = vunpack.c.h.b16 %v1534
    %v1900 = vunpack.c.l.b16 %v1535
    %v1901 = vunpack.c.h.b16 %v1535
    %v1902 = vunpack.c.l.b16 %v1536
    %v1903 = vunpack.c.h.b16 %v1536
    %v1904 = vunpack.c.l.b16 %v1537
    %v1905 = vunpack.c.h.b16 %v1537
    %v1906 = vunpack.c.l.b16 %v1538
    %v1907 = vunpack.c.h.b16 %v1538
    %v1908 = vunpack.c.l.b16 %v1539
    %v1909 = vunpack.c.h.b16 %v1539
    %v1910 = vunpack.c.l.b16 %v1540
    %v1911 = vunpack.c.h.b16 %v1540
    %v1912 = vunpack.c.l.b16 %v1541
    %v1913 = vunpack.c.h.b16 %v1541
    %v1914 = vunpack.c.l.b16 %v1542
    %v1915 = vunpack.c.h.b16 %v1542
    %v1916 = vunpack.c.l.b16 %v1543
    %v1917 = vunpack.c.h.b16 %v1543
    %v1918 = vunpack.c.l.b16 %v1544
    %v1919 = vunpack.c.h.b16 %v1544
    %v1920 = vunpack.c.l.b16 %v1545
    %v1921 = vunpack.c.h.b16 %v1545
    %v1922 = vunpack.c.l.b16 %v1546
    %v1923 = vunpack.c.h.b16 %v1546
    %v1924 = vunpack.c.l.b16 %v1547
    %v1925 = vunpack.c.h.b16 %v1547
    %v1926 = vunpack.c.l.b16 %v1548
    %v1927 = vunpack.c.h.b16 %v1548
    %v1928 = vunpack.c.l.b16 %v1549
    %v1929 = vunpack.c.h.b16 %v1549
    %v1930 = vunpack.c.l.b16 %v1550
    %v1931 = vunpack.c.h.b16 %v1550
    %v1932 = vunpack.c.l.b16 %v1551
    %v1933 = vunpack.c.h.b16 %v1551
    %v1934 = vunpack.c.l.b16 %v1552
    %v1935 = vunpack.c.h.b16 %v1552
    %v1936 = vunpack.c.l.b16 %v1553
    %v1937 = vunpack.c.h.b16 %v1553
    %v1938 = vpack.c.b16 %v1690, %v1682
    %v1939 = vpack.c.b16 %v1691, %v1683
    %v1940 = vpack.c.b16 %v1692, %v1684
    %v1941 = vpack.c.b16 %v1693, %v1685
    %v1942 = vpack.c.b16 %v1694, %v1686
    %v1943 = vpack.c.b16 %v1695, %v1687
    %v1944 = vpack.c.b16 %v1696, %v1688
    %v1945 = vpack.c.b16 %v1697, %v1689
    %v1946 = vpack.c.b16 %v1706, %v1698
    %v1947 = vpack.c.b16 %v1707, %v1699
    %v1948 = vpack.c.b16 %v1708, %v1700
    %v1949 = vpack.c.b16 %v1709, %v1701
    %v1950 = vpack.c.b16 %v1710, %v1702
    %v1951 = vpack.c.b16 %v1711, %v1703
    %v1952 = vpack.c.b16 %v1712, %v1704
    %v1953 = vpack.c.b16 %v1713, %v1705
    %v1954 = vpack.c.b16 %v1722, %v1714
    %v1955 = vpack.c.b16 %v1723, %v1715
    %v1956 = vpack.c.b16 %v1724, %v1716
    %v1957 = vpack.c.b16 %v1725, %v1717
    %v1958 = vpack.c.b16 %v1726, %v1718
    %v1959 = vpack.c.b16 %v1727, %v1719
    %v1960 = vpack.c.b16 %v1728, %v1720
    %v1961 = vpack.c.b16 %v1729, %v1721
    %v1962 = vpack.c.b16 %v1738, %v1730
    %v1963 = vpack.c.b16 %v1739, %v1731
    %v1964 = vpack.c.b16 %v1740, %v1732
    %v1965 = vpack.c.b16 %v1741, %v1733
    %v1966 = vpack.c.b16 %v1742, %v1734
    %v1967 = vpack.c.b16 %v1743, %v1735
    %v1968 = vpack.c.b16 %v1744, %v1736
    %v1969 = vpack.c.b16 %v1745, %v1737
    %v1970 = vpack.c.b16 %v1754, %v1746
    %v1971 = vpack.c.b16 %v1755, %v1747
    %v1972 = vpack.c.b16 %v1756, %v1748
    %v1973 = vpack.c.b16 %v1757, %v1749
    %v1974 = vpack.c.b16 %v1758, %v1750
    %v1975 = vpack.c.b16 %v1759, %v1751
    %v1976 = vpack.c.b16 %v1760, %v1752
    %v1977 = vpack.c.b16 %v1761, %v1753
    %v1978 = vpack.c.b16 %v1770, %v1762
    %v1979 = vpack.c.b16 %v1771, %v1763
    %v1980 = vpack.c.b16 %v1772, %v1764
    %v1981 = vpack.c.b16 %v1773, %v1765
    %v1982 = vpack.c.b16 %v1774, %v1766
    %v1983 = vpack.c.b16 %v1775, %v1767
    %v1984 = vpack.c.b16 %v1776, %v1768
    %v1985 = vpack.c.b16 %v1777, %v1769
    %v1986 = vpack.c.b16 %v1786, %v1778
    %v1987 = vpack.c.b16 %v1787, %v1779
    %v1988 = vpack.c.b16 %v1788, %v1780
    %v1989 = vpack.c.b16 %v1789, %v1781
    %v1990 = vpack.c.b16 %v1790, %v1782
    %v1991 = vpack.c.b16 %v1791, %v1783
    %v1992 = vpack.c.b16 %v1792, %v1784
    %v1993 = vpack.c.b16 %v1793, %v1785
    %v1994 = vpack.c.b16 %v1802, %v1794
    %v1995 = vpack.c.b16 %v1803, %v1795
    %v1996 = vpack.c.b16 %v1804, %v1796
    %v1997 = vpack.c.b16 %v1805, %v1797
    %v1998 = vpack.c.b16 %v1806, %v1798
    %v1999 = vpack.c.b16 %v1807, %v1799
    %v2000 = vpack.c.b16 %v1808, %v1800
    %v2001 = vpack.c.b16 %v1809, %v1801
    %v2002 = vpack.c.b16 %v1818, %v1810
    %v2003 = vpack.c.b16 %v1819, %v1811
    %v2004 = vpack.c.b16 %v1820, %v1812
    %v2005 = vpack.c.b16 %v1821, %v1813
    %v2006 = vpack.c.b16 %v1822, %v1814
    %v2007 = vpack.c.b16 %v1823, %v1815
    %v2008 = vpack.c.b16 %v1824, %v1816
    %v2009 = vpack.c.b16 %v1825, %v1817
    %v2010 = vpack.c.b16 %v1834, %v1826
    %v2011 = vpack.c.b16 %v1835, %v1827
    %v2012 = vpack.c.b16 %v1836, %v1828
    %v2013 = vpack.c.b16 %v1837, %v1829
    %v2014 = vpack.c.b16 %v1838, %v1830
    %v2015 = vpack.c.b16 %v1839, %v1831
    %v2016 = vpack.c.b16 %v1840, %v1832
    %v2017 = vpack.c.b16 %v1841, %v1833
    %v2018 = vpack.c.b16 %v1850, %v1842
    %v2019 = vpack.c.b16 %v1851, %v1843
    %v2020 = vpack.c.b16 %v1852, %v1844
    %v2021 = vpack.c.b16 %v1853, %v1845
    %v2022 = vpack.c.b16 %v1854, %v1846
    %v2023 = vpack.c.b16 %v1855, %v1847
    %v2024 = vpack.c.b16 %v1856, %v1848
    %v2025 = vpack.c.b16 %v1857, %v1849
    %v2026 = vpack.c.b16 %v1866, %v1858
    %v2027 = vpack.c.b16 %v1867, %v1859
    %v2028 = vpack.c.b16 %v1868, %v1860
    %v2029 = vpack.c.b16 %v1869, %v1861
    %v2030 = vpack.c.b16 %v1870, %v1862
    %v2031 = vpack.c.b16 %v1871, %v1863
    %v2032 = vpack.c.b16 %v1872, %v1864
    %v2033 = vpack.c.b16 %v1873, %v1865
    %v2034 = vpack.c.b16 %v1882, %v1874
    %v2035 = vpack.c.b16 %v1883, %v1875
    %v2036 = vpack.c.b16 %v1884, %v1876
    %v2037 = vpack.c.b16 %v1885, %v1877
    %v2038 = vpack.c.b16 %v1886, %v1878
    %v2039 = vpack.c.b16 %v1887, %v1879
    %v2040 = vpack.c.b16 %v1888, %v1880
    %v2041 = vpack.c.b16 %v1889, %v1881
    %v2042 = vpack.c.b16 %v1898, %v1890
    %v2043 = vpack.c.b16 %v1899, %v1891
    %v2044 = vpack.c.b16 %v1900, %v1892
    %v2045 = vpack.c.b16 %v1901, %v1893
    %v2046 = vpack.c.b16 %v1902, %v1894
    %v2047 = vpack.c.b16 %v1903, %v1895
    %v2048 = vpack.c.b16 %v1904, %v1896
    %v2049 = vpack.c.b16 %v1905, %v1897
    %v2050 = vpack.c.b16 %v1914, %v1906
    %v2051 = vpack.c.b16 %v1915, %v1907
    %v2052 = vpack.c.b16 %v1916, %v1908
    %v2053 = vpack.c.b16 %v1917, %v1909
    %v2054 = vpack.c.b16 %v1918, %v1910
    %v2055 = vpack.c.b16 %v1919, %v1911
    %v2056 = vpack.c.b16 %v1920, %v1912
    %v2057 = vpack.c.b16 %v1921, %v1913
    %v2058 = vpack.c.b16 %v1930, %v1922
    %v2059 = vpack.c.b16 %v1931, %v1923
    %v2060 = vpack.c.b16 %v1932, %v1924
    %v2061 = vpack.c.b16 %v1933, %v1925
    %v2062 = vpack.c.b16 %v1934, %v1926
    %v2063 = vpack.c.b16 %v1935, %v1927
    %v2064 = vpack.c.b16 %v1936, %v1928
    %v2065 = vpack.c.b16 %v1937, %v1929
    %2194 = vmatprep.subr.bf16.mxu0 %v1939
    %2195 = vmatpush1.bf16.msra.mxu0 %v1938
    %2196 = vmatprep.subr.bf16.mxu0 %v1947
    %2197 = vmatpush1.bf16.msra.mxu0 %v1946
    %2198 = vmatprep.subr.bf16.mxu0 %v1955
    %2199 = vmatpush1.bf16.msra.mxu0 %v1954
    %2200 = vmatprep.subr.bf16.mxu0 %v1963
    %2201 = vmatpush1.bf16.msra.mxu0 %v1962
    %2202 = vmatprep.subr.bf16.mxu0 %v1971
    %2203 = vmatpush1.bf16.msra.mxu0 %v1970
    %2204 = vmatprep.subr.bf16.mxu0 %v1979
    %2205 = vmatpush1.bf16.msra.mxu0 %v1978
    %2206 = vmatprep.subr.bf16.mxu0 %v1987
    %2207 = vmatpush1.bf16.msra.mxu0 %v1986
    %2208 = vmatprep.subr.bf16.mxu0 %v1995
    %2209 = vmatpush1.bf16.msra.mxu0 %v1994
    %2210 = vmatprep.subr.bf16.mxu0 %v2003
    %2211 = vmatpush1.bf16.msra.mxu0 %v2002
    %2212 = vmatprep.subr.bf16.mxu0 %v2011
    %2213 = vmatpush1.bf16.msra.mxu0 %v2010
    %2214 = vmatprep.subr.bf16.mxu0 %v2019
    %2215 = vmatpush1.bf16.msra.mxu0 %v2018
    %2216 = vmatprep.subr.bf16.mxu0 %v2027
    %2217 = vmatpush1.bf16.msra.mxu0 %v2026
    %2218 = vmatprep.subr.bf16.mxu0 %v2035
    %2219 = vmatpush1.bf16.msra.mxu0 %v2034
    %2220 = vmatprep.subr.bf16.mxu0 %v2043
    %2221 = vmatpush1.bf16.msra.mxu0 %v2042
    %2222 = vmatprep.subr.bf16.mxu0 %v2051
    %2223 = vmatpush1.bf16.msra.mxu0 %v2050
    %2224 = vmatprep.subr.bf16.mxu0 %v2059
    %2225 = vmatpush1.bf16.msra.mxu0 %v2058
    %2226 = vmatprep.mubr.bf16.mxu0 %v1425
    %2227 = vmatmul.mubr.bf16.gmra.mrb[0].mxu0 %v1424
    %v2228 = vpop.f32.mrb[0].mxu0
    %v2229 = vadd.f32 0.0, %v2228
    %v2230 = vpop.f32.mrb[0].mxu0
    %v2231 = vadd.f32 0.0, %v2230
    %v2232 = vpop.f32.mrb[0].mxu0
    %v2233 = vpop.f32.mrb[0].mxu0
    %2234 = vdwg.mxu0
    %2235 = vmatprep.subr.bf16.mxu0 %v1941
    %2236 = vmatpush1.bf16.msra.mxu0 %v1940
    %2237 = vmatprep.subr.bf16.mxu0 %v1949
    %2238 = vmatpush1.bf16.msra.mxu0 %v1948
    %2239 = vmatprep.subr.bf16.mxu0 %v1957
    %2240 = vmatpush1.bf16.msra.mxu0 %v1956
    %2241 = vmatprep.subr.bf16.mxu0 %v1965
    %2242 = vmatpush1.bf16.msra.mxu0 %v1964
    %2243 = vmatprep.subr.bf16.mxu0 %v1973
    %2244 = vmatpush1.bf16.msra.mxu0 %v1972
    %2245 = vmatprep.subr.bf16.mxu0 %v1981
    %2246 = vmatpush1.bf16.msra.mxu0 %v1980
    %2247 = vmatprep.subr.bf16.mxu0 %v1989
    %2248 = vmatpush1.bf16.msra.mxu0 %v1988
    %2249 = vmatprep.subr.bf16.mxu0 %v1997
    %2250 = vmatpush1.bf16.msra.mxu0 %v1996
    %2251 = vmatprep.subr.bf16.mxu0 %v2005
    %2252 = vmatpush1.bf16.msra.mxu0 %v2004
    %2253 = vmatprep.subr.bf16.mxu0 %v2013
    %2254 = vmatpush1.bf16.msra.mxu0 %v2012
    %2255 = vmatprep.subr.bf16.mxu0 %v2021
    %2256 = vmatpush1.bf16.msra.mxu0 %v2020
    %2257 = vmatprep.subr.bf16.mxu0 %v2029
    %2258 = vmatpush1.bf16.msra.mxu0 %v2028
    %2259 = vmatprep.subr.bf16.mxu0 %v2037
    %2260 = vmatpush1.bf16.msra.mxu0 %v2036
    %2261 = vmatprep.subr.bf16.mxu0 %v2045
    %2262 = vmatpush1.bf16.msra.mxu0 %v2044
    %2263 = vmatprep.subr.bf16.mxu0 %v2053
    %2264 = vmatpush1.bf16.msra.mxu0 %v2052
    %2265 = vmatprep.subr.bf16.mxu0 %v2061
    %2266 = vmatpush1.bf16.msra.mxu0 %v2060
    %2267 = vmatprep.mubr.bf16.mxu0 %v1425
    %2268 = vmatmul.mubr.bf16.gmra.mrb[0].mxu0 %v1424
    %v2269 = vpop.f32.mrb[0].mxu0
    %v2270 = vadd.f32 0.0, %v2269
    %v2271 = vpop.f32.mrb[0].mxu0
    %v2272 = vadd.f32 0.0, %v2271
    %v2273 = vpop.f32.mrb[0].mxu0
    %v2274 = vpop.f32.mrb[0].mxu0
    %2275 = vdwg.mxu0
    %2276 = vmatprep.subr.bf16.mxu0 %v1943
    %2277 = vmatpush1.bf16.msra.mxu0 %v1942
    %2278 = vmatprep.subr.bf16.mxu0 %v1951
    %2279 = vmatpush1.bf16.msra.mxu0 %v1950
    %2280 = vmatprep.subr.bf16.mxu0 %v1959
    %2281 = vmatpush1.bf16.msra.mxu0 %v1958
    %2282 = vmatprep.subr.bf16.mxu0 %v1967
    %2283 = vmatpush1.bf16.msra.mxu0 %v1966
    %2284 = vmatprep.subr.bf16.mxu0 %v1975
    %2285 = vmatpush1.bf16.msra.mxu0 %v1974
    %2286 = vmatprep.subr.bf16.mxu0 %v1983
    %2287 = vmatpush1.bf16.msra.mxu0 %v1982
    %2288 = vmatprep.subr.bf16.mxu0 %v1991
    %2289 = vmatpush1.bf16.msra.mxu0 %v1990
    %2290 = vmatprep.subr.bf16.mxu0 %v1999
    %2291 = vmatpush1.bf16.msra.mxu0 %v1998
    %2292 = vmatprep.subr.bf16.mxu0 %v2007
    %2293 = vmatpush1.bf16.msra.mxu0 %v2006
    %2294 = vmatprep.subr.bf16.mxu0 %v2015
    %2295 = vmatpush1.bf16.msra.mxu0 %v2014
    %2296 = vmatprep.subr.bf16.mxu0 %v2023
    %2297 = vmatpush1.bf16.msra.mxu0 %v2022
    %2298 = vmatprep.subr.bf16.mxu0 %v2031
    %2299 = vmatpush1.bf16.msra.mxu0 %v2030
    %2300 = vmatprep.subr.bf16.mxu0 %v2039
    %2301 = vmatpush1.bf16.msra.mxu0 %v2038
    %2302 = vmatprep.subr.bf16.mxu0 %v2047
    %2303 = vmatpush1.bf16.msra.mxu0 %v2046
    %2304 = vmatprep.subr.bf16.mxu0 %v2055
    %2305 = vmatpush1.bf16.msra.mxu0 %v2054
    %2306 = vmatprep.subr.bf16.mxu0 %v2063
    %2307 = vmatpush1.bf16.msra.mxu0 %v2062
    %2308 = vmatprep.mubr.bf16.mxu0 %v1425
    %2309 = vmatmul.mubr.bf16.gmra.mrb[0].mxu0 %v1424
    %v2310 = vpop.f32.mrb[0].mxu0
    %v2311 = vadd.f32 0.0, %v2310
    %v2312 = vpop.f32.mrb[0].mxu0
    %v2313 = vadd.f32 0.0, %v2312
    %v2314 = vpop.f32.mrb[0].mxu0
    %v2315 = vpop.f32.mrb[0].mxu0
    %2316 = vdwg.mxu0
    %2317 = vmatprep.subr.bf16.mxu0 %v1945
    %2318 = vmatpush1.bf16.msra.mxu0 %v1944
    %2319 = vmatprep.subr.bf16.mxu0 %v1953
    %2320 = vmatpush1.bf16.msra.mxu0 %v1952
    %2321 = vmatprep.subr.bf16.mxu0 %v1961
    %2322 = vmatpush1.bf16.msra.mxu0 %v1960
    %2323 = vmatprep.subr.bf16.mxu0 %v1969
    %2324 = vmatpush1.bf16.msra.mxu0 %v1968
    %2325 = vmatprep.subr.bf16.mxu0 %v1977
    %2326 = vmatpush1.bf16.msra.mxu0 %v1976
    %2327 = vmatprep.subr.bf16.mxu0 %v1985
    %2328 = vmatpush1.bf16.msra.mxu0 %v1984
    %2329 = vmatprep.subr.bf16.mxu0 %v1993
    %2330 = vmatpush1.bf16.msra.mxu0 %v1992
    %2331 = vmatprep.subr.bf16.mxu0 %v2001
    %2332 = vmatpush1.bf16.msra.mxu0 %v2000
    %2333 = vmatprep.subr.bf16.mxu0 %v2009
    %2334 = vmatpush1.bf16.msra.mxu0 %v2008
    %2335 = vmatprep.subr.bf16.mxu0 %v2017
    %2336 = vmatpush1.bf16.msra.mxu0 %v2016
    %2337 = vmatprep.subr.bf16.mxu0 %v2025
    %2338 = vmatpush1.bf16.msra.mxu0 %v2024
    %2339 = vmatprep.subr.bf16.mxu0 %v2033
    %2340 = vmatpush1.bf16.msra.mxu0 %v2032
    %2341 = vmatprep.subr.bf16.mxu0 %v2041
    %2342 = vmatpush1.bf16.msra.mxu0 %v2040
    %2343 = vmatprep.subr.bf16.mxu0 %v2049
    %2344 = vmatpush1.bf16.msra.mxu0 %v2048
    %2345 = vmatprep.subr.bf16.mxu0 %v2057
    %2346 = vmatpush1.bf16.msra.mxu0 %v2056
    %2347 = vmatprep.subr.bf16.mxu0 %v2065
    %2348 = vmatpush1.bf16.msra.mxu0 %v2064
    %2349 = vmatprep.mubr.bf16.mxu0 %v1425
    %2350 = vmatmul.mubr.bf16.gmra.mrb[0].mxu0 %v1424
    %v2351 = vpop.f32.mrb[0].mxu0
    %v2352 = vadd.f32 0.0, %v2351
    %v2353 = vpop.f32.mrb[0].mxu0
    %v2354 = vadd.f32 0.0, %v2353
    %v2355 = vpop.f32.mrb[0].mxu0
    %v2356 = vpop.f32.mrb[0].mxu0
    %2357 = vdwg.mxu0
    %v2366 = vrot.slane %v2229, 4
    %v2367 = vrot.slane %v2231, 4
    %v2368 = vrot.slane %v2270, 4
    %v2369 = vrot.slane %v2272, 4
    %v2370 = vrot.slane %v2311, 4
    %v2371 = vrot.slane %v2313, 4
    %v2372 = vrot.slane %v2352, 4
    %v2373 = vrot.slane %v2354, 4
    %v2382 = vadd.f32 %v256, %v2366
    %v2383 = vadd.f32 %v258, %v2367
    %v2384 = vadd.f32 %v309, %v2368
    %v2385 = vadd.f32 %v311, %v2369
    %v2386 = vadd.f32 %v362, %v2370
    %v2387 = vadd.f32 %v364, %v2371
    %v2388 = vadd.f32 %v415, %v2372
    %v2389 = vadd.f32 %v417, %v2373
    %v2390 = vmul.f32 %v2382, 0.5
    %v2391 = vmul.f32 %v2383, 0.5
    %v2392 = vtanh.pop %v2390
    %v2393 = vtanh.pop %v2391
    %v2394 = vadd.f32 %v2392, 1.0
    %v2395 = vadd.f32 %v2393, 1.0
    %v2396 = vmul.f32 %v2394, 0.5
    %v2397 = vmul.f32 %v2395, 0.5
    %v2398 = vmul.f32 %v2384, 0.5
    %v2399 = vmul.f32 %v2385, 0.5
    %v2400 = vtanh.pop %v2398
    %v2401 = vtanh.pop %v2399
    %v2402 = vadd.f32 %v2400, 1.0
    %v2403 = vadd.f32 %v2401, 1.0
    %v2404 = vmul.f32 %v2402, 0.5
    %v2405 = vmul.f32 %v2403, 0.5
    %v2406 = vtanh.pop %v2386
    %v2407 = vtanh.pop %v2387
    %v2408 = vmul.f32 %v2388, 0.5
    %v2409 = vmul.f32 %v2389, 0.5
    %v2410 = vtanh.pop %v2408
    %v2411 = vtanh.pop %v2409
    %v2412 = vadd.f32 %v2410, 1.0
    %v2413 = vadd.f32 %v2411, 1.0
    %v2414 = vmul.f32 %v2412, 0.5
    %v2415 = vmul.f32 %v2413, 0.5
    %v2418 = vrot.slane %v1413, 4
    %v2419 = vrot.slane %v1414, 4
    %v2422 = vmul.f32 %v2404, %v2418
    %v2423 = vmul.f32 %v2405, %v2419
    %v2424 = vmul.f32 %v2396, %v2406
    %v2425 = vmul.f32 %v2397, %v2407
    %v2426 = vadd.f32 %v2422, %v2424
    %v2427 = vadd.f32 %v2423, %v2425
    %v2428 = vtanh.pop %v2426
    %v2429 = vtanh.pop %v2427
    %v2430 = vmul.f32 %v2414, %v2428
    %v2431 = vmul.f32 %v2415, %v2429
    %v2434 = vcombine.high %v2430, %v2431
    %s2436 = scalar_lea.vmem [#allocation10], 8
    %2437 = vst [vmem:[%s2436] sm:$0xff] %v2434
    %v2438 = vpack.c.bf16 %v2430, %v2430
    %v2439 = vpack.c.bf16 %v2431, %v2431
    %v2440 = vld [vmem:[#allocation9] sm:$0xff]
    %v2441 = vld [vmem:[#allocation9 + $0x8] sm:$0xff]
    %v2442 = vld [vmem:[#allocation9 + $0x10] sm:$0xff]
    %v2443 = vld [vmem:[#allocation9 + $0x18] sm:$0xff]
    %v2444 = vld [vmem:[#allocation9 + $0x20] sm:$0xff]
    %v2445 = vld [vmem:[#allocation9 + $0x28] sm:$0xff]
    %v2446 = vld [vmem:[#allocation9 + $0x30] sm:$0xff]
    %v2447 = vld [vmem:[#allocation9 + $0x38] sm:$0xff]
    %v2448 = vld [vmem:[#allocation9 + $0x40] sm:$0xff]
    %v2449 = vld [vmem:[#allocation9 + $0x48] sm:$0xff]
    %v2450 = vld [vmem:[#allocation9 + $0x50] sm:$0xff]
    %v2451 = vld [vmem:[#allocation9 + $0x58] sm:$0xff]
    %v2452 = vld [vmem:[#allocation9 + $0x60] sm:$0xff]
    %v2453 = vld [vmem:[#allocation9 + $0x68] sm:$0xff]
    %v2454 = vld [vmem:[#allocation9 + $0x70] sm:$0xff]
    %v2455 = vld [vmem:[#allocation9 + $0x78] sm:$0xff]
    %v2456 = vld [vmem:[#allocation9 + $0x80] sm:$0xff]
    %v2457 = vld [vmem:[#allocation9 + $0x88] sm:$0xff]
    %v2458 = vld [vmem:[#allocation9 + $0x90] sm:$0xff]
    %v2459 = vld [vmem:[#allocation9 + $0x98] sm:$0xff]
    %v2460 = vld [vmem:[#allocation9 + $0xa0] sm:$0xff]
    %v2461 = vld [vmem:[#allocation9 + $0xa8] sm:$0xff]
    %v2462 = vld [vmem:[#allocation9 + $0xb0] sm:$0xff]
    %v2463 = vld [vmem:[#allocation9 + $0xb8] sm:$0xff]
    %v2464 = vld [vmem:[#allocation9 + $0xc0] sm:$0xff]
    %v2465 = vld [vmem:[#allocation9 + $0xc8] sm:$0xff]
    %v2466 = vld [vmem:[#allocation9 + $0xd0] sm:$0xff]
    %v2467 = vld [vmem:[#allocation9 + $0xd8] sm:$0xff]
    %v2468 = vld [vmem:[#allocation9 + $0xe0] sm:$0xff]
    %v2469 = vld [vmem:[#allocation9 + $0xe8] sm:$0xff]
    %v2470 = vld [vmem:[#allocation9 + $0xf0] sm:$0xff]
    %v2471 = vld [vmem:[#allocation9 + $0xf8] sm:$0xff]
    %v2472 = vld [vmem:[#allocation9 + $0x100] sm:$0xff]
    %v2473 = vld [vmem:[#allocation9 + $0x108] sm:$0xff]
    %v2474 = vld [vmem:[#allocation9 + $0x110] sm:$0xff]
    %v2475 = vld [vmem:[#allocation9 + $0x118] sm:$0xff]
    %v2476 = vld [vmem:[#allocation9 + $0x120] sm:$0xff]
    %v2477 = vld [vmem:[#allocation9 + $0x128] sm:$0xff]
    %v2478 = vld [vmem:[#allocation9 + $0x130] sm:$0xff]
    %v2479 = vld [vmem:[#allocation9 + $0x138] sm:$0xff]
    %v2480 = vld [vmem:[#allocation9 + $0x140] sm:$0xff]
    %v2481 = vld [vmem:[#allocation9 + $0x148] sm:$0xff]
    %v2482 = vld [vmem:[#allocation9 + $0x150] sm:$0xff]
    %v2483 = vld [vmem:[#allocation9 + $0x158] sm:$0xff]
    %v2484 = vld [vmem:[#allocation9 + $0x160] sm:$0xff]
    %v2485 = vld [vmem:[#allocation9 + $0x168] sm:$0xff]
    %v2486 = vld [vmem:[#allocation9 + $0x170] sm:$0xff]
    %v2487 = vld [vmem:[#allocation9 + $0x178] sm:$0xff]
    %v2488 = vld [vmem:[#allocation9 + $0x180] sm:$0xff]
    %v2489 = vld [vmem:[#allocation9 + $0x188] sm:$0xff]
    %v2490 = vld [vmem:[#allocation9 + $0x190] sm:$0xff]
    %v2491 = vld [vmem:[#allocation9 + $0x198] sm:$0xff]
    %v2492 = vld [vmem:[#allocation9 + $0x1a0] sm:$0xff]
    %v2493 = vld [vmem:[#allocation9 + $0x1a8] sm:$0xff]
    %v2494 = vld [vmem:[#allocation9 + $0x1b0] sm:$0xff]
    %v2495 = vld [vmem:[#allocation9 + $0x1b8] sm:$0xff]
    %v2496 = vld [vmem:[#allocation9 + $0x1c0] sm:$0xff]
    %v2497 = vld [vmem:[#allocation9 + $0x1c8] sm:$0xff]
    %v2498 = vld [vmem:[#allocation9 + $0x1d0] sm:$0xff]
    %v2499 = vld [vmem:[#allocation9 + $0x1d8] sm:$0xff]
    %v2500 = vld [vmem:[#allocation9 + $0x1e0] sm:$0xff]
    %v2501 = vld [vmem:[#allocation9 + $0x1e8] sm:$0xff]
    %v2502 = vld [vmem:[#allocation9 + $0x1f0] sm:$0xff]
    %v2503 = vld [vmem:[#allocation9 + $0x1f8] sm:$0xff]
    %v2504 = vld [vmem:[#allocation9 + $0x200] sm:$0xff]
    %v2505 = vld [vmem:[#allocation9 + $0x208] sm:$0xff]
    %v2506 = vld [vmem:[#allocation9 + $0x210] sm:$0xff]
    %v2507 = vld [vmem:[#allocation9 + $0x218] sm:$0xff]
    %v2508 = vld [vmem:[#allocation9 + $0x220] sm:$0xff]
    %v2509 = vld [vmem:[#allocation9 + $0x228] sm:$0xff]
    %v2510 = vld [vmem:[#allocation9 + $0x230] sm:$0xff]
    %v2511 = vld [vmem:[#allocation9 + $0x238] sm:$0xff]
    %v2512 = vld [vmem:[#allocation9 + $0x240] sm:$0xff]
    %v2513 = vld [vmem:[#allocation9 + $0x248] sm:$0xff]
    %v2514 = vld [vmem:[#allocation9 + $0x250] sm:$0xff]
    %v2515 = vld [vmem:[#allocation9 + $0x258] sm:$0xff]
    %v2516 = vld [vmem:[#allocation9 + $0x260] sm:$0xff]
    %v2517 = vld [vmem:[#allocation9 + $0x268] sm:$0xff]
    %v2518 = vld [vmem:[#allocation9 + $0x270] sm:$0xff]
    %v2519 = vld [vmem:[#allocation9 + $0x278] sm:$0xff]
    %v2520 = vld [vmem:[#allocation9 + $0x280] sm:$0xff]
    %v2521 = vld [vmem:[#allocation9 + $0x288] sm:$0xff]
    %v2522 = vld [vmem:[#allocation9 + $0x290] sm:$0xff]
    %v2523 = vld [vmem:[#allocation9 + $0x298] sm:$0xff]
    %v2524 = vld [vmem:[#allocation9 + $0x2a0] sm:$0xff]
    %v2525 = vld [vmem:[#allocation9 + $0x2a8] sm:$0xff]
    %v2526 = vld [vmem:[#allocation9 + $0x2b0] sm:$0xff]
    %v2527 = vld [vmem:[#allocation9 + $0x2b8] sm:$0xff]
    %v2528 = vld [vmem:[#allocation9 + $0x2c0] sm:$0xff]
    %v2529 = vld [vmem:[#allocation9 + $0x2c8] sm:$0xff]
    %v2530 = vld [vmem:[#allocation9 + $0x2d0] sm:$0xff]
    %v2531 = vld [vmem:[#allocation9 + $0x2d8] sm:$0xff]
    %v2532 = vld [vmem:[#allocation9 + $0x2e0] sm:$0xff]
    %v2533 = vld [vmem:[#allocation9 + $0x2e8] sm:$0xff]
    %v2534 = vld [vmem:[#allocation9 + $0x2f0] sm:$0xff]
    %v2535 = vld [vmem:[#allocation9 + $0x2f8] sm:$0xff]
    %v2536 = vld [vmem:[#allocation9 + $0x300] sm:$0xff]
    %v2537 = vld [vmem:[#allocation9 + $0x308] sm:$0xff]
    %v2538 = vld [vmem:[#allocation9 + $0x310] sm:$0xff]
    %v2539 = vld [vmem:[#allocation9 + $0x318] sm:$0xff]
    %v2540 = vld [vmem:[#allocation9 + $0x320] sm:$0xff]
    %v2541 = vld [vmem:[#allocation9 + $0x328] sm:$0xff]
    %v2542 = vld [vmem:[#allocation9 + $0x330] sm:$0xff]
    %v2543 = vld [vmem:[#allocation9 + $0x338] sm:$0xff]
    %v2544 = vld [vmem:[#allocation9 + $0x340] sm:$0xff]
    %v2545 = vld [vmem:[#allocation9 + $0x348] sm:$0xff]
    %v2546 = vld [vmem:[#allocation9 + $0x350] sm:$0xff]
    %v2547 = vld [vmem:[#allocation9 + $0x358] sm:$0xff]
    %v2548 = vld [vmem:[#allocation9 + $0x360] sm:$0xff]
    %v2549 = vld [vmem:[#allocation9 + $0x368] sm:$0xff]
    %v2550 = vld [vmem:[#allocation9 + $0x370] sm:$0xff]
    %v2551 = vld [vmem:[#allocation9 + $0x378] sm:$0xff]
    %v2552 = vld [vmem:[#allocation9 + $0x380] sm:$0xff]
    %v2553 = vld [vmem:[#allocation9 + $0x388] sm:$0xff]
    %v2554 = vld [vmem:[#allocation9 + $0x390] sm:$0xff]
    %v2555 = vld [vmem:[#allocation9 + $0x398] sm:$0xff]
    %v2556 = vld [vmem:[#allocation9 + $0x3a0] sm:$0xff]
    %v2557 = vld [vmem:[#allocation9 + $0x3a8] sm:$0xff]
    %v2558 = vld [vmem:[#allocation9 + $0x3b0] sm:$0xff]
    %v2559 = vld [vmem:[#allocation9 + $0x3b8] sm:$0xff]
    %v2560 = vld [vmem:[#allocation9 + $0x3c0] sm:$0xff]
    %v2561 = vld [vmem:[#allocation9 + $0x3c8] sm:$0xff]
    %v2562 = vld [vmem:[#allocation9 + $0x3d0] sm:$0xff]
    %v2563 = vld [vmem:[#allocation9 + $0x3d8] sm:$0xff]
    %v2564 = vld [vmem:[#allocation9 + $0x3e0] sm:$0xff]
    %v2565 = vld [vmem:[#allocation9 + $0x3e8] sm:$0xff]
    %v2566 = vld [vmem:[#allocation9 + $0x3f0] sm:$0xff]
    %v2567 = vld [vmem:[#allocation9 + $0x3f8] sm:$0xff]
    %v2570 = vrot.slane %v2438, 2
    %v2571 = vrot.slane %v2439, 2
    %v2702 = vunpack.c.l.b16 %v2440
    %v2703 = vunpack.c.h.b16 %v2440
    %v2704 = vunpack.c.l.b16 %v2441
    %v2705 = vunpack.c.h.b16 %v2441
    %v2706 = vunpack.c.l.b16 %v2442
    %v2707 = vunpack.c.h.b16 %v2442
    %v2708 = vunpack.c.l.b16 %v2443
    %v2709 = vunpack.c.h.b16 %v2443
    %v2710 = vunpack.c.l.b16 %v2444
    %v2711 = vunpack.c.h.b16 %v2444
    %v2712 = vunpack.c.l.b16 %v2445
    %v2713 = vunpack.c.h.b16 %v2445
    %v2714 = vunpack.c.l.b16 %v2446
    %v2715 = vunpack.c.h.b16 %v2446
    %v2716 = vunpack.c.l.b16 %v2447
    %v2717 = vunpack.c.h.b16 %v2447
    %v2718 = vunpack.c.l.b16 %v2448
    %v2719 = vunpack.c.h.b16 %v2448
    %v2720 = vunpack.c.l.b16 %v2449
    %v2721 = vunpack.c.h.b16 %v2449
    %v2722 = vunpack.c.l.b16 %v2450
    %v2723 = vunpack.c.h.b16 %v2450
    %v2724 = vunpack.c.l.b16 %v2451
    %v2725 = vunpack.c.h.b16 %v2451
    %v2726 = vunpack.c.l.b16 %v2452
    %v2727 = vunpack.c.h.b16 %v2452
    %v2728 = vunpack.c.l.b16 %v2453
    %v2729 = vunpack.c.h.b16 %v2453
    %v2730 = vunpack.c.l.b16 %v2454
    %v2731 = vunpack.c.h.b16 %v2454
    %v2732 = vunpack.c.l.b16 %v2455
    %v2733 = vunpack.c.h.b16 %v2455
    %v2734 = vunpack.c.l.b16 %v2456
    %v2735 = vunpack.c.h.b16 %v2456
    %v2736 = vunpack.c.l.b16 %v2457
    %v2737 = vunpack.c.h.b16 %v2457
    %v2738 = vunpack.c.l.b16 %v2458
    %v2739 = vunpack.c.h.b16 %v2458
    %v2740 = vunpack.c.l.b16 %v2459
    %v2741 = vunpack.c.h.b16 %v2459
    %v2742 = vunpack.c.l.b16 %v2460
    %v2743 = vunpack.c.h.b16 %v2460
    %v2744 = vunpack.c.l.b16 %v2461
    %v2745 = vunpack.c.h.b16 %v2461
    %v2746 = vunpack.c.l.b16 %v2462
    %v2747 = vunpack.c.h.b16 %v2462
    %v2748 = vunpack.c.l.b16 %v2463
    %v2749 = vunpack.c.h.b16 %v2463
    %v2750 = vunpack.c.l.b16 %v2464
    %v2751 = vunpack.c.h.b16 %v2464
    %v2752 = vunpack.c.l.b16 %v2465
    %v2753 = vunpack.c.h.b16 %v2465
    %v2754 = vunpack.c.l.b16 %v2466
    %v2755 = vunpack.c.h.b16 %v2466
    %v2756 = vunpack.c.l.b16 %v2467
    %v2757 = vunpack.c.h.b16 %v2467
    %v2758 = vunpack.c.l.b16 %v2468
    %v2759 = vunpack.c.h.b16 %v2468
    %v2760 = vunpack.c.l.b16 %v2469
    %v2761 = vunpack.c.h.b16 %v2469
    %v2762 = vunpack.c.l.b16 %v2470
    %v2763 = vunpack.c.h.b16 %v2470
    %v2764 = vunpack.c.l.b16 %v2471
    %v2765 = vunpack.c.h.b16 %v2471
    %v2766 = vunpack.c.l.b16 %v2472
    %v2767 = vunpack.c.h.b16 %v2472
    %v2768 = vunpack.c.l.b16 %v2473
    %v2769 = vunpack.c.h.b16 %v2473
    %v2770 = vunpack.c.l.b16 %v2474
    %v2771 = vunpack.c.h.b16 %v2474
    %v2772 = vunpack.c.l.b16 %v2475
    %v2773 = vunpack.c.h.b16 %v2475
    %v2774 = vunpack.c.l.b16 %v2476
    %v2775 = vunpack.c.h.b16 %v2476
    %v2776 = vunpack.c.l.b16 %v2477
    %v2777 = vunpack.c.h.b16 %v2477
    %v2778 = vunpack.c.l.b16 %v2478
    %v2779 = vunpack.c.h.b16 %v2478
    %v2780 = vunpack.c.l.b16 %v2479
    %v2781 = vunpack.c.h.b16 %v2479
    %v2782 = vunpack.c.l.b16 %v2480
    %v2783 = vunpack.c.h.b16 %v2480
    %v2784 = vunpack.c.l.b16 %v2481
    %v2785 = vunpack.c.h.b16 %v2481
    %v2786 = vunpack.c.l.b16 %v2482
    %v2787 = vunpack.c.h.b16 %v2482
    %v2788 = vunpack.c.l.b16 %v2483
    %v2789 = vunpack.c.h.b16 %v2483
    %v2790 = vunpack.c.l.b16 %v2484
    %v2791 = vunpack.c.h.b16 %v2484
    %v2792 = vunpack.c.l.b16 %v2485
    %v2793 = vunpack.c.h.b16 %v2485
    %v2794 = vunpack.c.l.b16 %v2486
    %v2795 = vunpack.c.h.b16 %v2486
    %v2796 = vunpack.c.l.b16 %v2487
    %v2797 = vunpack.c.h.b16 %v2487
    %v2798 = vunpack.c.l.b16 %v2488
    %v2799 = vunpack.c.h.b16 %v2488
    %v2800 = vunpack.c.l.b16 %v2489
    %v2801 = vunpack.c.h.b16 %v2489
    %v2802 = vunpack.c.l.b16 %v2490
    %v2803 = vunpack.c.h.b16 %v2490
    %v2804 = vunpack.c.l.b16 %v2491
    %v2805 = vunpack.c.h.b16 %v2491
    %v2806 = vunpack.c.l.b16 %v2492
    %v2807 = vunpack.c.h.b16 %v2492
    %v2808 = vunpack.c.l.b16 %v2493
    %v2809 = vunpack.c.h.b16 %v2493
    %v2810 = vunpack.c.l.b16 %v2494
    %v2811 = vunpack.c.h.b16 %v2494
    %v2812 = vunpack.c.l.b16 %v2495
    %v2813 = vunpack.c.h.b16 %v2495
    %v2814 = vunpack.c.l.b16 %v2496
    %v2815 = vunpack.c.h.b16 %v2496
    %v2816 = vunpack.c.l.b16 %v2497
    %v2817 = vunpack.c.h.b16 %v2497
    %v2818 = vunpack.c.l.b16 %v2498
    %v2819 = vunpack.c.h.b16 %v2498
    %v2820 = vunpack.c.l.b16 %v2499
    %v2821 = vunpack.c.h.b16 %v2499
    %v2822 = vunpack.c.l.b16 %v2500
    %v2823 = vunpack.c.h.b16 %v2500
    %v2824 = vunpack.c.l.b16 %v2501
    %v2825 = vunpack.c.h.b16 %v2501
    %v2826 = vunpack.c.l.b16 %v2502
    %v2827 = vunpack.c.h.b16 %v2502
    %v2828 = vunpack.c.l.b16 %v2503
    %v2829 = vunpack.c.h.b16 %v2503
    %v2830 = vunpack.c.l.b16 %v2504
    %v2831 = vunpack.c.h.b16 %v2504
    %v2832 = vunpack.c.l.b16 %v2505
    %v2833 = vunpack.c.h.b16 %v2505
    %v2834 = vunpack.c.l.b16 %v2506
    %v2835 = vunpack.c.h.b16 %v2506
    %v2836 = vunpack.c.l.b16 %v2507
    %v2837 = vunpack.c.h.b16 %v2507
    %v2838 = vunpack.c.l.b16 %v2508
    %v2839 = vunpack.c.h.b16 %v2508
    %v2840 = vunpack.c.l.b16 %v2509
    %v2841 = vunpack.c.h.b16 %v2509
    %v2842 = vunpack.c.l.b16 %v2510
    %v2843 = vunpack.c.h.b16 %v2510
    %v2844 = vunpack.c.l.b16 %v2511
    %v2845 = vunpack.c.h.b16 %v2511
    %v2846 = vunpack.c.l.b16 %v2512
    %v2847 = vunpack.c.h.b16 %v2512
    %v2848 = vunpack.c.l.b16 %v2513
    %v2849 = vunpack.c.h.b16 %v2513
    %v2850 = vunpack.c.l.b16 %v2514
    %v2851 = vunpack.c.h.b16 %v2514
    %v2852 = vunpack.c.l.b16 %v2515
    %v2853 = vunpack.c.h.b16 %v2515
    %v2854 = vunpack.c.l.b16 %v2516
    %v2855 = vunpack.c.h.b16 %v2516
    %v2856 = vunpack.c.l.b16 %v2517
    %v2857 = vunpack.c.h.b16 %v2517
    %v2858 = vunpack.c.l.b16 %v2518
    %v2859 = vunpack.c.h.b16 %v2518
    %v2860 = vunpack.c.l.b16 %v2519
    %v2861 = vunpack.c.h.b16 %v2519
    %v2862 = vunpack.c.l.b16 %v2520
    %v2863 = vunpack.c.h.b16 %v2520
    %v2864 = vunpack.c.l.b16 %v2521
    %v2865 = vunpack.c.h.b16 %v2521
    %v2866 = vunpack.c.l.b16 %v2522
    %v2867 = vunpack.c.h.b16 %v2522
    %v2868 = vunpack.c.l.b16 %v2523
    %v2869 = vunpack.c.h.b16 %v2523
    %v2870 = vunpack.c.l.b16 %v2524
    %v2871 = vunpack.c.h.b16 %v2524
    %v2872 = vunpack.c.l.b16 %v2525
    %v2873 = vunpack.c.h.b16 %v2525
    %v2874 = vunpack.c.l.b16 %v2526
    %v2875 = vunpack.c.h.b16 %v2526
    %v2876 = vunpack.c.l.b16 %v2527
    %v2877 = vunpack.c.h.b16 %v2527
    %v2878 = vunpack.c.l.b16 %v2528
    %v2879 = vunpack.c.h.b16 %v2528
    %v2880 = vunpack.c.l.b16 %v2529
    %v2881 = vunpack.c.h.b16 %v2529
    %v2882 = vunpack.c.l.b16 %v2530
    %v2883 = vunpack.c.h.b16 %v2530
    %v2884 = vunpack.c.l.b16 %v2531
    %v2885 = vunpack.c.h.b16 %v2531
    %v2886 = vunpack.c.l.b16 %v2532
    %v2887 = vunpack.c.h.b16 %v2532
    %v2888 = vunpack.c.l.b16 %v2533
    %v2889 = vunpack.c.h.b16 %v2533
    %v2890 = vunpack.c.l.b16 %v2534
    %v2891 = vunpack.c.h.b16 %v2534
    %v2892 = vunpack.c.l.b16 %v2535
    %v2893 = vunpack.c.h.b16 %v2535
    %v2894 = vunpack.c.l.b16 %v2536
    %v2895 = vunpack.c.h.b16 %v2536
    %v2896 = vunpack.c.l.b16 %v2537
    %v2897 = vunpack.c.h.b16 %v2537
    %v2898 = vunpack.c.l.b16 %v2538
    %v2899 = vunpack.c.h.b16 %v2538
    %v2900 = vunpack.c.l.b16 %v2539
    %v2901 = vunpack.c.h.b16 %v2539
    %v2902 = vunpack.c.l.b16 %v2540
    %v2903 = vunpack.c.h.b16 %v2540
    %v2904 = vunpack.c.l.b16 %v2541
    %v2905 = vunpack.c.h.b16 %v2541
    %v2906 = vunpack.c.l.b16 %v2542
    %v2907 = vunpack.c.h.b16 %v2542
    %v2908 = vunpack.c.l.b16 %v2543
    %v2909 = vunpack.c.h.b16 %v2543
    %v2910 = vunpack.c.l.b16 %v2544
    %v2911 = vunpack.c.h.b16 %v2544
    %v2912 = vunpack.c.l.b16 %v2545
    %v2913 = vunpack.c.h.b16 %v2545
    %v2914 = vunpack.c.l.b16 %v2546
    %v2915 = vunpack.c.h.b16 %v2546
    %v2916 = vunpack.c.l.b16 %v2547
    %v2917 = vunpack.c.h.b16 %v2547
    %v2918 = vunpack.c.l.b16 %v2548
    %v2919 = vunpack.c.h.b16 %v2548
    %v2920 = vunpack.c.l.b16 %v2549
    %v2921 = vunpack.c.h.b16 %v2549
    %v2922 = vunpack.c.l.b16 %v2550
    %v2923 = vunpack.c.h.b16 %v2550
    %v2924 = vunpack.c.l.b16 %v2551
    %v2925 = vunpack.c.h.b16 %v2551
    %v2926 = vunpack.c.l.b16 %v2552
    %v2927 = vunpack.c.h.b16 %v2552
    %v2928 = vunpack.c.l.b16 %v2553
    %v2929 = vunpack.c.h.b16 %v2553
    %v2930 = vunpack.c.l.b16 %v2554
    %v2931 = vunpack.c.h.b16 %v2554
    %v2932 = vunpack.c.l.b16 %v2555
    %v2933 = vunpack.c.h.b16 %v2555
    %v2934 = vunpack.c.l.b16 %v2556
    %v2935 = vunpack.c.h.b16 %v2556
    %v2936 = vunpack.c.l.b16 %v2557
    %v2937 = vunpack.c.h.b16 %v2557
    %v2938 = vunpack.c.l.b16 %v2558
    %v2939 = vunpack.c.h.b16 %v2558
    %v2940 = vunpack.c.l.b16 %v2559
    %v2941 = vunpack.c.h.b16 %v2559
    %v2942 = vunpack.c.l.b16 %v2560
    %v2943 = vunpack.c.h.b16 %v2560
    %v2944 = vunpack.c.l.b16 %v2561
    %v2945 = vunpack.c.h.b16 %v2561
    %v2946 = vunpack.c.l.b16 %v2562
    %v2947 = vunpack.c.h.b16 %v2562
    %v2948 = vunpack.c.l.b16 %v2563
    %v2949 = vunpack.c.h.b16 %v2563
    %v2950 = vunpack.c.l.b16 %v2564
    %v2951 = vunpack.c.h.b16 %v2564
    %v2952 = vunpack.c.l.b16 %v2565
    %v2953 = vunpack.c.h.b16 %v2565
    %v2954 = vunpack.c.l.b16 %v2566
    %v2955 = vunpack.c.h.b16 %v2566
    %v2956 = vunpack.c.l.b16 %v2567
    %v2957 = vunpack.c.h.b16 %v2567
    %v2958 = vpack.c.b16 %v2710, %v2702
    %v2959 = vpack.c.b16 %v2711, %v2703
    %v2960 = vpack.c.b16 %v2712, %v2704
    %v2961 = vpack.c.b16 %v2713, %v2705
    %v2962 = vpack.c.b16 %v2714, %v2706
    %v2963 = vpack.c.b16 %v2715, %v2707
    %v2964 = vpack.c.b16 %v2716, %v2708
    %v2965 = vpack.c.b16 %v2717, %v2709
    %v2966 = vpack.c.b16 %v2726, %v2718
    %v2967 = vpack.c.b16 %v2727, %v2719
    %v2968 = vpack.c.b16 %v2728, %v2720
    %v2969 = vpack.c.b16 %v2729, %v2721
    %v2970 = vpack.c.b16 %v2730, %v2722
    %v2971 = vpack.c.b16 %v2731, %v2723
    %v2972 = vpack.c.b16 %v2732, %v2724
    %v2973 = vpack.c.b16 %v2733, %v2725
    %v2974 = vpack.c.b16 %v2742, %v2734
    %v2975 = vpack.c.b16 %v2743, %v2735
    %v2976 = vpack.c.b16 %v2744, %v2736
    %v2977 = vpack.c.b16 %v2745, %v2737
    %v2978 = vpack.c.b16 %v2746, %v2738
    %v2979 = vpack.c.b16 %v2747, %v2739
    %v2980 = vpack.c.b16 %v2748, %v2740
    %v2981 = vpack.c.b16 %v2749, %v2741
    %v2982 = vpack.c.b16 %v2758, %v2750
    %v2983 = vpack.c.b16 %v2759, %v2751
    %v2984 = vpack.c.b16 %v2760, %v2752
    %v2985 = vpack.c.b16 %v2761, %v2753
    %v2986 = vpack.c.b16 %v2762, %v2754
    %v2987 = vpack.c.b16 %v2763, %v2755
    %v2988 = vpack.c.b16 %v2764, %v2756
    %v2989 = vpack.c.b16 %v2765, %v2757
    %v2990 = vpack.c.b16 %v2774, %v2766
    %v2991 = vpack.c.b16 %v2775, %v2767
    %v2992 = vpack.c.b16 %v2776, %v2768
    %v2993 = vpack.c.b16 %v2777, %v2769
    %v2994 = vpack.c.b16 %v2778, %v2770
    %v2995 = vpack.c.b16 %v2779, %v2771
    %v2996 = vpack.c.b16 %v2780, %v2772
    %v2997 = vpack.c.b16 %v2781, %v2773
    %v2998 = vpack.c.b16 %v2790, %v2782
    %v2999 = vpack.c.b16 %v2791, %v2783
    %v3000 = vpack.c.b16 %v2792, %v2784
    %v3001 = vpack.c.b16 %v2793, %v2785
    %v3002 = vpack.c.b16 %v2794, %v2786
    %v3003 = vpack.c.b16 %v2795, %v2787
    %v3004 = vpack.c.b16 %v2796, %v2788
    %v3005 = vpack.c.b16 %v2797, %v2789
    %v3006 = vpack.c.b16 %v2806, %v2798
    %v3007 = vpack.c.b16 %v2807, %v2799
    %v3008 = vpack.c.b16 %v2808, %v2800
    %v3009 = vpack.c.b16 %v2809, %v2801
    %v3010 = vpack.c.b16 %v2810, %v2802
    %v3011 = vpack.c.b16 %v2811, %v2803
    %v3012 = vpack.c.b16 %v2812, %v2804
    %v3013 = vpack.c.b16 %v2813, %v2805
    %v3014 = vpack.c.b16 %v2822, %v2814
    %v3015 = vpack.c.b16 %v2823, %v2815
    %v3016 = vpack.c.b16 %v2824, %v2816
    %v3017 = vpack.c.b16 %v2825, %v2817
    %v3018 = vpack.c.b16 %v2826, %v2818
    %v3019 = vpack.c.b16 %v2827, %v2819
    %v3020 = vpack.c.b16 %v2828, %v2820
    %v3021 = vpack.c.b16 %v2829, %v2821
    %v3022 = vpack.c.b16 %v2838, %v2830
    %v3023 = vpack.c.b16 %v2839, %v2831
    %v3024 = vpack.c.b16 %v2840, %v2832
    %v3025 = vpack.c.b16 %v2841, %v2833
    %v3026 = vpack.c.b16 %v2842, %v2834
    %v3027 = vpack.c.b16 %v2843, %v2835
    %v3028 = vpack.c.b16 %v2844, %v2836
    %v3029 = vpack.c.b16 %v2845, %v2837
    %v3030 = vpack.c.b16 %v2854, %v2846
    %v3031 = vpack.c.b16 %v2855, %v2847
    %v3032 = vpack.c.b16 %v2856, %v2848
    %v3033 = vpack.c.b16 %v2857, %v2849
    %v3034 = vpack.c.b16 %v2858, %v2850
    %v3035 = vpack.c.b16 %v2859, %v2851
    %v3036 = vpack.c.b16 %v2860, %v2852
    %v3037 = vpack.c.b16 %v2861, %v2853
    %v3038 = vpack.c.b16 %v2870, %v2862
    %v3039 = vpack.c.b16 %v2871, %v2863
    %v3040 = vpack.c.b16 %v2872, %v2864
    %v3041 = vpack.c.b16 %v2873, %v2865
    %v3042 = vpack.c.b16 %v2874, %v2866
    %v3043 = vpack.c.b16 %v2875, %v2867
    %v3044 = vpack.c.b16 %v2876, %v2868
    %v3045 = vpack.c.b16 %v2877, %v2869
    %v3046 = vpack.c.b16 %v2886, %v2878
    %v3047 = vpack.c.b16 %v2887, %v2879
    %v3048 = vpack.c.b16 %v2888, %v2880
    %v3049 = vpack.c.b16 %v2889, %v2881
    %v3050 = vpack.c.b16 %v2890, %v2882
    %v3051 = vpack.c.b16 %v2891, %v2883
    %v3052 = vpack.c.b16 %v2892, %v2884
    %v3053 = vpack.c.b16 %v2893, %v2885
    %v3054 = vpack.c.b16 %v2902, %v2894
    %v3055 = vpack.c.b16 %v2903, %v2895
    %v3056 = vpack.c.b16 %v2904, %v2896
    %v3057 = vpack.c.b16 %v2905, %v2897
    %v3058 = vpack.c.b16 %v2906, %v2898
    %v3059 = vpack.c.b16 %v2907, %v2899
    %v3060 = vpack.c.b16 %v2908, %v2900
    %v3061 = vpack.c.b16 %v2909, %v2901
    %v3062 = vpack.c.b16 %v2918, %v2910
    %v3063 = vpack.c.b16 %v2919, %v2911
    %v3064 = vpack.c.b16 %v2920, %v2912
    %v3065 = vpack.c.b16 %v2921, %v2913
    %v3066 = vpack.c.b16 %v2922, %v2914
    %v3067 = vpack.c.b16 %v2923, %v2915
    %v3068 = vpack.c.b16 %v2924, %v2916
    %v3069 = vpack.c.b16 %v2925, %v2917
    %v3070 = vpack.c.b16 %v2934, %v2926
    %v3071 = vpack.c.b16 %v2935, %v2927
    %v3072 = vpack.c.b16 %v2936, %v2928
    %v3073 = vpack.c.b16 %v2937, %v2929
    %v3074 = vpack.c.b16 %v2938, %v2930
    %v3075 = vpack.c.b16 %v2939, %v2931
    %v3076 = vpack.c.b16 %v2940, %v2932
    %v3077 = vpack.c.b16 %v2941, %v2933
    %v3078 = vpack.c.b16 %v2950, %v2942
    %v3079 = vpack.c.b16 %v2951, %v2943
    %v3080 = vpack.c.b16 %v2952, %v2944
    %v3081 = vpack.c.b16 %v2953, %v2945
    %v3082 = vpack.c.b16 %v2954, %v2946
    %v3083 = vpack.c.b16 %v2955, %v2947
    %v3084 = vpack.c.b16 %v2956, %v2948
    %v3085 = vpack.c.b16 %v2957, %v2949
    %3214 = vmatprep.subr.bf16.mxu0 %v2959
    %3215 = vmatpush1.bf16.msra.mxu0 %v2958
    %3216 = vmatprep.subr.bf16.mxu0 %v2967
    %3217 = vmatpush1.bf16.msra.mxu0 %v2966
    %3218 = vmatprep.subr.bf16.mxu0 %v2975
    %3219 = vmatpush1.bf16.msra.mxu0 %v2974
    %3220 = vmatprep.subr.bf16.mxu0 %v2983
    %3221 = vmatpush1.bf16.msra.mxu0 %v2982
    %3222 = vmatprep.subr.bf16.mxu0 %v2991
    %3223 = vmatpush1.bf16.msra.mxu0 %v2990
    %3224 = vmatprep.subr.bf16.mxu0 %v2999
    %3225 = vmatpush1.bf16.msra.mxu0 %v2998
    %3226 = vmatprep.subr.bf16.mxu0 %v3007
    %3227 = vmatpush1.bf16.msra.mxu0 %v3006
    %3228 = vmatprep.subr.bf16.mxu0 %v3015
    %3229 = vmatpush1.bf16.msra.mxu0 %v3014
    %3230 = vmatprep.subr.bf16.mxu0 %v3023
    %3231 = vmatpush1.bf16.msra.mxu0 %v3022
    %3232 = vmatprep.subr.bf16.mxu0 %v3031
    %3233 = vmatpush1.bf16.msra.mxu0 %v3030
    %3234 = vmatprep.subr.bf16.mxu0 %v3039
    %3235 = vmatpush1.bf16.msra.mxu0 %v3038
    %3236 = vmatprep.subr.bf16.mxu0 %v3047
    %3237 = vmatpush1.bf16.msra.mxu0 %v3046
    %3238 = vmatprep.subr.bf16.mxu0 %v3055
    %3239 = vmatpush1.bf16.msra.mxu0 %v3054
    %3240 = vmatprep.subr.bf16.mxu0 %v3063
    %3241 = vmatpush1.bf16.msra.mxu0 %v3062
    %3242 = vmatprep.subr.bf16.mxu0 %v3071
    %3243 = vmatpush1.bf16.msra.mxu0 %v3070
    %3244 = vmatprep.subr.bf16.mxu0 %v3079
    %3245 = vmatpush1.bf16.msra.mxu0 %v3078
    %3246 = vmatprep.mubr.bf16.mxu0 %v2571
    %3247 = vmatmul.mubr.bf16.gmra.mrb[0].mxu0 %v2570
    %v3248 = vpop.f32.mrb[0].mxu0
    %v3249 = vadd.f32 0.0, %v3248
    %v3250 = vpop.f32.mrb[0].mxu0
    %v3251 = vadd.f32 0.0, %v3250
    %v3252 = vpop.f32.mrb[0].mxu0
    %v3253 = vpop.f32.mrb[0].mxu0
    %3254 = vdwg.mxu0
    %3255 = vmatprep.subr.bf16.mxu0 %v2961
    %3256 = vmatpush1.bf16.msra.mxu0 %v2960
    %3257 = vmatprep.subr.bf16.mxu0 %v2969
    %3258 = vmatpush1.bf16.msra.mxu0 %v2968
    %3259 = vmatprep.subr.bf16.mxu0 %v2977
    %3260 = vmatpush1.bf16.msra.mxu0 %v2976
    %3261 = vmatprep.subr.bf16.mxu0 %v2985
    %3262 = vmatpush1.bf16.msra.mxu0 %v2984
    %3263 = vmatprep.subr.bf16.mxu0 %v2993
    %3264 = vmatpush1.bf16.msra.mxu0 %v2992
    %3265 = vmatprep.subr.bf16.mxu0 %v3001
    %3266 = vmatpush1.bf16.msra.mxu0 %v3000
    %3267 = vmatprep.subr.bf16.mxu0 %v3009
    %3268 = vmatpush1.bf16.msra.mxu0 %v3008
    %3269 = vmatprep.subr.bf16.mxu0 %v3017
    %3270 = vmatpush1.bf16.msra.mxu0 %v3016
    %3271 = vmatprep.subr.bf16.mxu0 %v3025
    %3272 = vmatpush1.bf16.msra.mxu0 %v3024
    %3273 = vmatprep.subr.bf16.mxu0 %v3033
    %3274 = vmatpush1.bf16.msra.mxu0 %v3032
    %3275 = vmatprep.subr.bf16.mxu0 %v3041
    %3276 = vmatpush1.bf16.msra.mxu0 %v3040
    %3277 = vmatprep.subr.bf16.mxu0 %v3049
    %3278 = vmatpush1.bf16.msra.mxu0 %v3048
    %3279 = vmatprep.subr.bf16.mxu0 %v3057
    %3280 = vmatpush1.bf16.msra.mxu0 %v3056
    %3281 = vmatprep.subr.bf16.mxu0 %v3065
    %3282 = vmatpush1.bf16.msra.mxu0 %v3064
    %3283 = vmatprep.subr.bf16.mxu0 %v3073
    %3284 = vmatpush1.bf16.msra.mxu0 %v3072
    %3285 = vmatprep.subr.bf16.mxu0 %v3081
    %3286 = vmatpush1.bf16.msra.mxu0 %v3080
    %3287 = vmatprep.mubr.bf16.mxu0 %v2571
    %3288 = vmatmul.mubr.bf16.gmra.mrb[0].mxu0 %v2570
    %v3289 = vpop.f32.mrb[0].mxu0
    %v3290 = vadd.f32 0.0, %v3289
    %v3291 = vpop.f32.mrb[0].mxu0
    %v3292 = vadd.f32 0.0, %v3291
    %v3293 = vpop.f32.mrb[0].mxu0
    %v3294 = vpop.f32.mrb[0].mxu0
    %3295 = vdwg.mxu0
    %3296 = vmatprep.subr.bf16.mxu0 %v2963
    %3297 = vmatpush1.bf16.msra.mxu0 %v2962
    %3298 = vmatprep.subr.bf16.mxu0 %v2971
    %3299 = vmatpush1.bf16.msra.mxu0 %v2970
    %3300 = vmatprep.subr.bf16.mxu0 %v2979
    %3301 = vmatpush1.bf16.msra.mxu0 %v2978
    %3302 = vmatprep.subr.bf16.mxu0 %v2987
    %3303 = vmatpush1.bf16.msra.mxu0 %v2986
    %3304 = vmatprep.subr.bf16.mxu0 %v2995
    %3305 = vmatpush1.bf16.msra.mxu0 %v2994
    %3306 = vmatprep.subr.bf16.mxu0 %v3003
    %3307 = vmatpush1.bf16.msra.mxu0 %v3002
    %3308 = vmatprep.subr.bf16.mxu0 %v3011
    %3309 = vmatpush1.bf16.msra.mxu0 %v3010
    %3310 = vmatprep.subr.bf16.mxu0 %v3019
    %3311 = vmatpush1.bf16.msra.mxu0 %v3018
    %3312 = vmatprep.subr.bf16.mxu0 %v3027
    %3313 = vmatpush1.bf16.msra.mxu0 %v3026
    %3314 = vmatprep.subr.bf16.mxu0 %v3035
    %3315 = vmatpush1.bf16.msra.mxu0 %v3034
    %3316 = vmatprep.subr.bf16.mxu0 %v3043
    %3317 = vmatpush1.bf16.msra.mxu0 %v3042
    %3318 = vmatprep.subr.bf16.mxu0 %v3051
    %3319 = vmatpush1.bf16.msra.mxu0 %v3050
    %3320 = vmatprep.subr.bf16.mxu0 %v3059
    %3321 = vmatpush1.bf16.msra.mxu0 %v3058
    %3322 = vmatprep.subr.bf16.mxu0 %v3067
    %3323 = vmatpush1.bf16.msra.mxu0 %v3066
    %3324 = vmatprep.subr.bf16.mxu0 %v3075
    %3325 = vmatpush1.bf16.msra.mxu0 %v3074
    %3326 = vmatprep.subr.bf16.mxu0 %v3083
    %3327 = vmatpush1.bf16.msra.mxu0 %v3082
    %3328 = vmatprep.mubr.bf16.mxu0 %v2571
    %3329 = vmatmul.mubr.bf16.gmra.mrb[0].mxu0 %v2570
    %v3330 = vpop.f32.mrb[0].mxu0
    %v3331 = vadd.f32 0.0, %v3330
    %v3332 = vpop.f32.mrb[0].mxu0
    %v3333 = vadd.f32 0.0, %v3332
    %v3334 = vpop.f32.mrb[0].mxu0
    %v3335 = vpop.f32.mrb[0].mxu0
    %3336 = vdwg.mxu0
    %3337 = vmatprep.subr.bf16.mxu0 %v2965
    %3338 = vmatpush1.bf16.msra.mxu0 %v2964
    %3339 = vmatprep.subr.bf16.mxu0 %v2973
    %3340 = vmatpush1.bf16.msra.mxu0 %v2972
    %3341 = vmatprep.subr.bf16.mxu0 %v2981
    %3342 = vmatpush1.bf16.msra.mxu0 %v2980
    %3343 = vmatprep.subr.bf16.mxu0 %v2989
    %3344 = vmatpush1.bf16.msra.mxu0 %v2988
    %3345 = vmatprep.subr.bf16.mxu0 %v2997
    %3346 = vmatpush1.bf16.msra.mxu0 %v2996
    %3347 = vmatprep.subr.bf16.mxu0 %v3005
    %3348 = vmatpush1.bf16.msra.mxu0 %v3004
    %3349 = vmatprep.subr.bf16.mxu0 %v3013
    %3350 = vmatpush1.bf16.msra.mxu0 %v3012
    %3351 = vmatprep.subr.bf16.mxu0 %v3021
    %3352 = vmatpush1.bf16.msra.mxu0 %v3020
    %3353 = vmatprep.subr.bf16.mxu0 %v3029
    %3354 = vmatpush1.bf16.msra.mxu0 %v3028
    %3355 = vmatprep.subr.bf16.mxu0 %v3037
    %3356 = vmatpush1.bf16.msra.mxu0 %v3036
    %3357 = vmatprep.subr.bf16.mxu0 %v3045
    %3358 = vmatpush1.bf16.msra.mxu0 %v3044
    %3359 = vmatprep.subr.bf16.mxu0 %v3053
    %3360 = vmatpush1.bf16.msra.mxu0 %v3052
    %3361 = vmatprep.subr.bf16.mxu0 %v3061
    %3362 = vmatpush1.bf16.msra.mxu0 %v3060
    %3363 = vmatprep.subr.bf16.mxu0 %v3069
    %3364 = vmatpush1.bf16.msra.mxu0 %v3068
    %3365 = vmatprep.subr.bf16.mxu0 %v3077
    %3366 = vmatpush1.bf16.msra.mxu0 %v3076
    %3367 = vmatprep.subr.bf16.mxu0 %v3085
    %3368 = vmatpush1.bf16.msra.mxu0 %v3084
    %3369 = vmatprep.mubr.bf16.mxu0 %v2571
    %3370 = vmatmul.mubr.bf16.gmra.mrb[0].mxu0 %v2570
    %v3371 = vpop.f32.mrb[0].mxu0
    %v3372 = vadd.f32 0.0, %v3371
    %v3373 = vpop.f32.mrb[0].mxu0
    %v3374 = vadd.f32 0.0, %v3373
    %v3375 = vpop.f32.mrb[0].mxu0
    %v3376 = vpop.f32.mrb[0].mxu0
    %3377 = vdwg.mxu0
    %v3378 = vadd.f32 %v260, %v3249
    %v3379 = vadd.f32 %v262, %v3251
    %v3380 = vadd.f32 %v313, %v3290
    %v3381 = vadd.f32 %v315, %v3292
    %v3382 = vadd.f32 %v366, %v3331
    %v3383 = vadd.f32 %v368, %v3333
    %v3384 = vadd.f32 %v419, %v3372
    %v3385 = vadd.f32 %v421, %v3374
    %v3386 = vmul.f32 %v3378, 0.5
    %v3387 = vmul.f32 %v3379, 0.5
    %v3388 = vtanh.pop %v3386
    %v3389 = vtanh.pop %v3387
    %v3390 = vadd.f32 %v3388, 1.0
    %v3391 = vadd.f32 %v3389, 1.0
    %v3392 = vmul.f32 %v3390, 0.5
    %v3393 = vmul.f32 %v3391, 0.5
    %v3394 = vmul.f32 %v3380, 0.5
    %v3395 = vmul.f32 %v3381, 0.5
    %v3396 = vtanh.pop %v3394
    %v3397 = vtanh.pop %v3395
    %v3398 = vadd.f32 %v3396, 1.0
    %v3399 = vadd.f32 %v3397, 1.0
    %v3400 = vmul.f32 %v3398, 0.5
    %v3401 = vmul.f32 %v3399, 0.5
    %v3402 = vtanh.pop %v3382
    %v3403 = vtanh.pop %v3383
    %v3404 = vmul.f32 %v3384, 0.5
    %v3405 = vmul.f32 %v3385, 0.5
    %v3406 = vtanh.pop %v3404
    %v3407 = vtanh.pop %v3405
    %v3408 = vadd.f32 %v3406, 1.0
    %v3409 = vadd.f32 %v3407, 1.0
    %v3410 = vmul.f32 %v3408, 0.5
    %v3411 = vmul.f32 %v3409, 0.5
    %v3414 = vrot.slane %v2426, 4
    %v3415 = vrot.slane %v2427, 4
    %v3418 = vmul.f32 %v3400, %v3414
    %v3419 = vmul.f32 %v3401, %v3415
    %v3420 = vmul.f32 %v3392, %v3402
    %v3421 = vmul.f32 %v3393, %v3403
    %v3422 = vadd.f32 %v3418, %v3420
    %v3423 = vadd.f32 %v3419, %v3421
    %v3424 = vtanh.pop %v3422
    %v3425 = vtanh.pop %v3423
    %v3426 = vmul.f32 %v3410, %v3424
    %v3427 = vmul.f32 %v3411, %v3425
    %v3430 = vcombine.low %v3426, %v3427
    %s3432 = scalar_lea.vmem [#allocation10], 16
    %3433 = vst [vmem:[%s3432] sm:$0xff] %v3430
    %v3434 = vpack.c.bf16 %v3426, %v3426
    %v3435 = vpack.c.bf16 %v3427, %v3427
    %v3436 = vld [vmem:[#allocation9] sm:$0xff]
    %v3437 = vld [vmem:[#allocation9 + $0x8] sm:$0xff]
    %v3438 = vld [vmem:[#allocation9 + $0x10] sm:$0xff]
    %v3439 = vld [vmem:[#allocation9 + $0x18] sm:$0xff]
    %v3440 = vld [vmem:[#allocation9 + $0x20] sm:$0xff]
    %v3441 = vld [vmem:[#allocation9 + $0x28] sm:$0xff]
    %v3442 = vld [vmem:[#allocation9 + $0x30] sm:$0xff]
    %v3443 = vld [vmem:[#allocation9 + $0x38] sm:$0xff]
    %v3444 = vld [vmem:[#allocation9 + $0x40] sm:$0xff]
    %v3445 = vld [vmem:[#allocation9 + $0x48] sm:$0xff]
    %v3446 = vld [vmem:[#allocation9 + $0x50] sm:$0xff]
    %v3447 = vld [vmem:[#allocation9 + $0x58] sm:$0xff]
    %v3448 = vld [vmem:[#allocation9 + $0x60] sm:$0xff]
    %v3449 = vld [vmem:[#allocation9 + $0x68] sm:$0xff]
    %v3450 = vld [vmem:[#allocation9 + $0x70] sm:$0xff]
    %v3451 = vld [vmem:[#allocation9 + $0x78] sm:$0xff]
    %v3452 = vld [vmem:[#allocation9 + $0x80] sm:$0xff]
    %v3453 = vld [vmem:[#allocation9 + $0x88] sm:$0xff]
    %v3454 = vld [vmem:[#allocation9 + $0x90] sm:$0xff]
    %v3455 = vld [vmem:[#allocation9 + $0x98] sm:$0xff]
    %v3456 = vld [vmem:[#allocation9 + $0xa0] sm:$0xff]
    %v3457 = vld [vmem:[#allocation9 + $0xa8] sm:$0xff]
    %v3458 = vld [vmem:[#allocation9 + $0xb0] sm:$0xff]
    %v3459 = vld [vmem:[#allocation9 + $0xb8] sm:$0xff]
    %v3460 = vld [vmem:[#allocation9 + $0xc0] sm:$0xff]
    %v3461 = vld [vmem:[#allocation9 + $0xc8] sm:$0xff]
    %v3462 = vld [vmem:[#allocation9 + $0xd0] sm:$0xff]
    %v3463 = vld [vmem:[#allocation9 + $0xd8] sm:$0xff]
    %v3464 = vld [vmem:[#allocation9 + $0xe0] sm:$0xff]
    %v3465 = vld [vmem:[#allocation9 + $0xe8] sm:$0xff]
    %v3466 = vld [vmem:[#allocation9 + $0xf0] sm:$0xff]
    %v3467 = vld [vmem:[#allocation9 + $0xf8] sm:$0xff]
    %v3468 = vld [vmem:[#allocation9 + $0x100] sm:$0xff]
    %v3469 = vld [vmem:[#allocation9 + $0x108] sm:$0xff]
    %v3470 = vld [vmem:[#allocation9 + $0x110] sm:$0xff]
    %v3471 = vld [vmem:[#allocation9 + $0x118] sm:$0xff]
    %v3472 = vld [vmem:[#allocation9 + $0x120] sm:$0xff]
    %v3473 = vld [vmem:[#allocation9 + $0x128] sm:$0xff]
    %v3474 = vld [vmem:[#allocation9 + $0x130] sm:$0xff]
    %v3475 = vld [vmem:[#allocation9 + $0x138] sm:$0xff]
    %v3476 = vld [vmem:[#allocation9 + $0x140] sm:$0xff]
    %v3477 = vld [vmem:[#allocation9 + $0x148] sm:$0xff]
    %v3478 = vld [vmem:[#allocation9 + $0x150] sm:$0xff]
    %v3479 = vld [vmem:[#allocation9 + $0x158] sm:$0xff]
    %v3480 = vld [vmem:[#allocation9 + $0x160] sm:$0xff]
    %v3481 = vld [vmem:[#allocation9 + $0x168] sm:$0xff]
    %v3482 = vld [vmem:[#allocation9 + $0x170] sm:$0xff]
    %v3483 = vld [vmem:[#allocation9 + $0x178] sm:$0xff]
    %v3484 = vld [vmem:[#allocation9 + $0x180] sm:$0xff]
    %v3485 = vld [vmem:[#allocation9 + $0x188] sm:$0xff]
    %v3486 = vld [vmem:[#allocation9 + $0x190] sm:$0xff]
    %v3487 = vld [vmem:[#allocation9 + $0x198] sm:$0xff]
    %v3488 = vld [vmem:[#allocation9 + $0x1a0] sm:$0xff]
    %v3489 = vld [vmem:[#allocation9 + $0x1a8] sm:$0xff]
    %v3490 = vld [vmem:[#allocation9 + $0x1b0] sm:$0xff]
    %v3491 = vld [vmem:[#allocation9 + $0x1b8] sm:$0xff]
    %v3492 = vld [vmem:[#allocation9 + $0x1c0] sm:$0xff]
    %v3493 = vld [vmem:[#allocation9 + $0x1c8] sm:$0xff]
    %v3494 = vld [vmem:[#allocation9 + $0x1d0] sm:$0xff]
    %v3495 = vld [vmem:[#allocation9 + $0x1d8] sm:$0xff]
    %v3496 = vld [vmem:[#allocation9 + $0x1e0] sm:$0xff]
    %v3497 = vld [vmem:[#allocation9 + $0x1e8] sm:$0xff]
    %v3498 = vld [vmem:[#allocation9 + $0x1f0] sm:$0xff]
    %v3499 = vld [vmem:[#allocation9 + $0x1f8] sm:$0xff]
    %v3500 = vld [vmem:[#allocation9 + $0x200] sm:$0xff]
    %v3501 = vld [vmem:[#allocation9 + $0x208] sm:$0xff]
    %v3502 = vld [vmem:[#allocation9 + $0x210] sm:$0xff]
    %v3503 = vld [vmem:[#allocation9 + $0x218] sm:$0xff]
    %v3504 = vld [vmem:[#allocation9 + $0x220] sm:$0xff]
    %v3505 = vld [vmem:[#allocation9 + $0x228] sm:$0xff]
    %v3506 = vld [vmem:[#allocation9 + $0x230] sm:$0xff]
    %v3507 = vld [vmem:[#allocation9 + $0x238] sm:$0xff]
    %v3508 = vld [vmem:[#allocation9 + $0x240] sm:$0xff]
    %v3509 = vld [vmem:[#allocation9 + $0x248] sm:$0xff]
    %v3510 = vld [vmem:[#allocation9 + $0x250] sm:$0xff]
    %v3511 = vld [vmem:[#allocation9 + $0x258] sm:$0xff]
    %v3512 = vld [vmem:[#allocation9 + $0x260] sm:$0xff]
    %v3513 = vld [vmem:[#allocation9 + $0x268] sm:$0xff]
    %v3514 = vld [vmem:[#allocation9 + $0x270] sm:$0xff]
    %v3515 = vld [vmem:[#allocation9 + $0x278] sm:$0xff]
    %v3516 = vld [vmem:[#allocation9 + $0x280] sm:$0xff]
    %v3517 = vld [vmem:[#allocation9 + $0x288] sm:$0xff]
    %v3518 = vld [vmem:[#allocation9 + $0x290] sm:$0xff]
    %v3519 = vld [vmem:[#allocation9 + $0x298] sm:$0xff]
    %v3520 = vld [vmem:[#allocation9 + $0x2a0] sm:$0xff]
    %v3521 = vld [vmem:[#allocation9 + $0x2a8] sm:$0xff]
    %v3522 = vld [vmem:[#allocation9 + $0x2b0] sm:$0xff]
    %v3523 = vld [vmem:[#allocation9 + $0x2b8] sm:$0xff]
    %v3524 = vld [vmem:[#allocation9 + $0x2c0] sm:$0xff]
    %v3525 = vld [vmem:[#allocation9 + $0x2c8] sm:$0xff]
    %v3526 = vld [vmem:[#allocation9 + $0x2d0] sm:$0xff]
    %v3527 = vld [vmem:[#allocation9 + $0x2d8] sm:$0xff]
    %v3528 = vld [vmem:[#allocation9 + $0x2e0] sm:$0xff]
    %v3529 = vld [vmem:[#allocation9 + $0x2e8] sm:$0xff]
    %v3530 = vld [vmem:[#allocation9 + $0x2f0] sm:$0xff]
    %v3531 = vld [vmem:[#allocation9 + $0x2f8] sm:$0xff]
    %v3532 = vld [vmem:[#allocation9 + $0x300] sm:$0xff]
    %v3533 = vld [vmem:[#allocation9 + $0x308] sm:$0xff]
    %v3534 = vld [vmem:[#allocation9 + $0x310] sm:$0xff]
    %v3535 = vld [vmem:[#allocation9 + $0x318] sm:$0xff]
    %v3536 = vld [vmem:[#allocation9 + $0x320] sm:$0xff]
    %v3537 = vld [vmem:[#allocation9 + $0x328] sm:$0xff]
    %v3538 = vld [vmem:[#allocation9 + $0x330] sm:$0xff]
    %v3539 = vld [vmem:[#allocation9 + $0x338] sm:$0xff]
    %v3540 = vld [vmem:[#allocation9 + $0x340] sm:$0xff]
    %v3541 = vld [vmem:[#allocation9 + $0x348] sm:$0xff]
    %v3542 = vld [vmem:[#allocation9 + $0x350] sm:$0xff]
    %v3543 = vld [vmem:[#allocation9 + $0x358] sm:$0xff]
    %v3544 = vld [vmem:[#allocation9 + $0x360] sm:$0xff]
    %v3545 = vld [vmem:[#allocation9 + $0x368] sm:$0xff]
    %v3546 = vld [vmem:[#allocation9 + $0x370] sm:$0xff]
    %v3547 = vld [vmem:[#allocation9 + $0x378] sm:$0xff]
    %v3548 = vld [vmem:[#allocation9 + $0x380] sm:$0xff]
    %v3549 = vld [vmem:[#allocation9 + $0x388] sm:$0xff]
    %v3550 = vld [vmem:[#allocation9 + $0x390] sm:$0xff]
    %v3551 = vld [vmem:[#allocation9 + $0x398] sm:$0xff]
    %v3552 = vld [vmem:[#allocation9 + $0x3a0] sm:$0xff]
    %v3553 = vld [vmem:[#allocation9 + $0x3a8] sm:$0xff]
    %v3554 = vld [vmem:[#allocation9 + $0x3b0] sm:$0xff]
    %v3555 = vld [vmem:[#allocation9 + $0x3b8] sm:$0xff]
    %v3556 = vld [vmem:[#allocation9 + $0x3c0] sm:$0xff]
    %v3557 = vld [vmem:[#allocation9 + $0x3c8] sm:$0xff]
    %v3558 = vld [vmem:[#allocation9 + $0x3d0] sm:$0xff]
    %v3559 = vld [vmem:[#allocation9 + $0x3d8] sm:$0xff]
    %v3560 = vld [vmem:[#allocation9 + $0x3e0] sm:$0xff]
    %v3561 = vld [vmem:[#allocation9 + $0x3e8] sm:$0xff]
    %v3562 = vld [vmem:[#allocation9 + $0x3f0] sm:$0xff]
    %v3563 = vld [vmem:[#allocation9 + $0x3f8] sm:$0xff]
    %v3692 = vunpack.c.l.b16 %v3436
    %v3693 = vunpack.c.h.b16 %v3436
    %v3694 = vunpack.c.l.b16 %v3437
    %v3695 = vunpack.c.h.b16 %v3437
    %v3696 = vunpack.c.l.b16 %v3438
    %v3697 = vunpack.c.h.b16 %v3438
    %v3698 = vunpack.c.l.b16 %v3439
    %v3699 = vunpack.c.h.b16 %v3439
    %v3700 = vunpack.c.l.b16 %v3440
    %v3701 = vunpack.c.h.b16 %v3440
    %v3702 = vunpack.c.l.b16 %v3441
    %v3703 = vunpack.c.h.b16 %v3441
    %v3704 = vunpack.c.l.b16 %v3442
    %v3705 = vunpack.c.h.b16 %v3442
    %v3706 = vunpack.c.l.b16 %v3443
    %v3707 = vunpack.c.h.b16 %v3443
    %v3708 = vunpack.c.l.b16 %v3444
    %v3709 = vunpack.c.h.b16 %v3444
    %v3710 = vunpack.c.l.b16 %v3445
    %v3711 = vunpack.c.h.b16 %v3445
    %v3712 = vunpack.c.l.b16 %v3446
    %v3713 = vunpack.c.h.b16 %v3446
    %v3714 = vunpack.c.l.b16 %v3447
    %v3715 = vunpack.c.h.b16 %v3447
    %v3716 = vunpack.c.l.b16 %v3448
    %v3717 = vunpack.c.h.b16 %v3448
    %v3718 = vunpack.c.l.b16 %v3449
    %v3719 = vunpack.c.h.b16 %v3449
    %v3720 = vunpack.c.l.b16 %v3450
    %v3721 = vunpack.c.h.b16 %v3450
    %v3722 = vunpack.c.l.b16 %v3451
    %v3723 = vunpack.c.h.b16 %v3451
    %v3724 = vunpack.c.l.b16 %v3452
    %v3725 = vunpack.c.h.b16 %v3452
    %v3726 = vunpack.c.l.b16 %v3453
    %v3727 = vunpack.c.h.b16 %v3453
    %v3728 = vunpack.c.l.b16 %v3454
    %v3729 = vunpack.c.h.b16 %v3454
    %v3730 = vunpack.c.l.b16 %v3455
    %v3731 = vunpack.c.h.b16 %v3455
    %v3732 = vunpack.c.l.b16 %v3456
    %v3733 = vunpack.c.h.b16 %v3456
    %v3734 = vunpack.c.l.b16 %v3457
    %v3735 = vunpack.c.h.b16 %v3457
    %v3736 = vunpack.c.l.b16 %v3458
    %v3737 = vunpack.c.h.b16 %v3458
    %v3738 = vunpack.c.l.b16 %v3459
    %v3739 = vunpack.c.h.b16 %v3459
    %v3740 = vunpack.c.l.b16 %v3460
    %v3741 = vunpack.c.h.b16 %v3460
    %v3742 = vunpack.c.l.b16 %v3461
    %v3743 = vunpack.c.h.b16 %v3461
    %v3744 = vunpack.c.l.b16 %v3462
    %v3745 = vunpack.c.h.b16 %v3462
    %v3746 = vunpack.c.l.b16 %v3463
    %v3747 = vunpack.c.h.b16 %v3463
    %v3748 = vunpack.c.l.b16 %v3464
    %v3749 = vunpack.c.h.b16 %v3464
    %v3750 = vunpack.c.l.b16 %v3465
    %v3751 = vunpack.c.h.b16 %v3465
    %v3752 = vunpack.c.l.b16 %v3466
    %v3753 = vunpack.c.h.b16 %v3466
    %v3754 = vunpack.c.l.b16 %v3467
    %v3755 = vunpack.c.h.b16 %v3467
    %v3756 = vunpack.c.l.b16 %v3468
    %v3757 = vunpack.c.h.b16 %v3468
    %v3758 = vunpack.c.l.b16 %v3469
    %v3759 = vunpack.c.h.b16 %v3469
    %v3760 = vunpack.c.l.b16 %v3470
    %v3761 = vunpack.c.h.b16 %v3470
    %v3762 = vunpack.c.l.b16 %v3471
    %v3763 = vunpack.c.h.b16 %v3471
    %v3764 = vunpack.c.l.b16 %v3472
    %v3765 = vunpack.c.h.b16 %v3472
    %v3766 = vunpack.c.l.b16 %v3473
    %v3767 = vunpack.c.h.b16 %v3473
    %v3768 = vunpack.c.l.b16 %v3474
    %v3769 = vunpack.c.h.b16 %v3474
    %v3770 = vunpack.c.l.b16 %v3475
    %v3771 = vunpack.c.h.b16 %v3475
    %v3772 = vunpack.c.l.b16 %v3476
    %v3773 = vunpack.c.h.b16 %v3476
    %v3774 = vunpack.c.l.b16 %v3477
    %v3775 = vunpack.c.h.b16 %v3477
    %v3776 = vunpack.c.l.b16 %v3478
    %v3777 = vunpack.c.h.b16 %v3478
    %v3778 = vunpack.c.l.b16 %v3479
    %v3779 = vunpack.c.h.b16 %v3479
    %v3780 = vunpack.c.l.b16 %v3480
    %v3781 = vunpack.c.h.b16 %v3480
    %v3782 = vunpack.c.l.b16 %v3481
    %v3783 = vunpack.c.h.b16 %v3481
    %v3784 = vunpack.c.l.b16 %v3482
    %v3785 = vunpack.c.h.b16 %v3482
    %v3786 = vunpack.c.l.b16 %v3483
    %v3787 = vunpack.c.h.b16 %v3483
    %v3788 = vunpack.c.l.b16 %v3484
    %v3789 = vunpack.c.h.b16 %v3484
    %v3790 = vunpack.c.l.b16 %v3485
    %v3791 = vunpack.c.h.b16 %v3485
    %v3792 = vunpack.c.l.b16 %v3486
    %v3793 = vunpack.c.h.b16 %v3486
    %v3794 = vunpack.c.l.b16 %v3487
    %v3795 = vunpack.c.h.b16 %v3487
    %v3796 = vunpack.c.l.b16 %v3488
    %v3797 = vunpack.c.h.b16 %v3488
    %v3798 = vunpack.c.l.b16 %v3489
    %v3799 = vunpack.c.h.b16 %v3489
    %v3800 = vunpack.c.l.b16 %v3490
    %v3801 = vunpack.c.h.b16 %v3490
    %v3802 = vunpack.c.l.b16 %v3491
    %v3803 = vunpack.c.h.b16 %v3491
    %v3804 = vunpack.c.l.b16 %v3492
    %v3805 = vunpack.c.h.b16 %v3492
    %v3806 = vunpack.c.l.b16 %v3493
    %v3807 = vunpack.c.h.b16 %v3493
    %v3808 = vunpack.c.l.b16 %v3494
    %v3809 = vunpack.c.h.b16 %v3494
    %v3810 = vunpack.c.l.b16 %v3495
    %v3811 = vunpack.c.h.b16 %v3495
    %v3812 = vunpack.c.l.b16 %v3496
    %v3813 = vunpack.c.h.b16 %v3496
    %v3814 = vunpack.c.l.b16 %v3497
    %v3815 = vunpack.c.h.b16 %v3497
    %v3816 = vunpack.c.l.b16 %v3498
    %v3817 = vunpack.c.h.b16 %v3498
    %v3818 = vunpack.c.l.b16 %v3499
    %v3819 = vunpack.c.h.b16 %v3499
    %v3820 = vunpack.c.l.b16 %v3500
    %v3821 = vunpack.c.h.b16 %v3500
    %v3822 = vunpack.c.l.b16 %v3501
    %v3823 = vunpack.c.h.b16 %v3501
    %v3824 = vunpack.c.l.b16 %v3502
    %v3825 = vunpack.c.h.b16 %v3502
    %v3826 = vunpack.c.l.b16 %v3503
    %v3827 = vunpack.c.h.b16 %v3503
    %v3828 = vunpack.c.l.b16 %v3504
    %v3829 = vunpack.c.h.b16 %v3504
    %v3830 = vunpack.c.l.b16 %v3505
    %v3831 = vunpack.c.h.b16 %v3505
    %v3832 = vunpack.c.l.b16 %v3506
    %v3833 = vunpack.c.h.b16 %v3506
    %v3834 = vunpack.c.l.b16 %v3507
    %v3835 = vunpack.c.h.b16 %v3507
    %v3836 = vunpack.c.l.b16 %v3508
    %v3837 = vunpack.c.h.b16 %v3508
    %v3838 = vunpack.c.l.b16 %v3509
    %v3839 = vunpack.c.h.b16 %v3509
    %v3840 = vunpack.c.l.b16 %v3510
    %v3841 = vunpack.c.h.b16 %v3510
    %v3842 = vunpack.c.l.b16 %v3511
    %v3843 = vunpack.c.h.b16 %v3511
    %v3844 = vunpack.c.l.b16 %v3512
    %v3845 = vunpack.c.h.b16 %v3512
    %v3846 = vunpack.c.l.b16 %v3513
    %v3847 = vunpack.c.h.b16 %v3513
    %v3848 = vunpack.c.l.b16 %v3514
    %v3849 = vunpack.c.h.b16 %v3514
    %v3850 = vunpack.c.l.b16 %v3515
    %v3851 = vunpack.c.h.b16 %v3515
    %v3852 = vunpack.c.l.b16 %v3516
    %v3853 = vunpack.c.h.b16 %v3516
    %v3854 = vunpack.c.l.b16 %v3517
    %v3855 = vunpack.c.h.b16 %v3517
    %v3856 = vunpack.c.l.b16 %v3518
    %v3857 = vunpack.c.h.b16 %v3518
    %v3858 = vunpack.c.l.b16 %v3519
    %v3859 = vunpack.c.h.b16 %v3519
    %v3860 = vunpack.c.l.b16 %v3520
    %v3861 = vunpack.c.h.b16 %v3520
    %v3862 = vunpack.c.l.b16 %v3521
    %v3863 = vunpack.c.h.b16 %v3521
    %v3864 = vunpack.c.l.b16 %v3522
    %v3865 = vunpack.c.h.b16 %v3522
    %v3866 = vunpack.c.l.b16 %v3523
    %v3867 = vunpack.c.h.b16 %v3523
    %v3868 = vunpack.c.l.b16 %v3524
    %v3869 = vunpack.c.h.b16 %v3524
    %v3870 = vunpack.c.l.b16 %v3525
    %v3871 = vunpack.c.h.b16 %v3525
    %v3872 = vunpack.c.l.b16 %v3526
    %v3873 = vunpack.c.h.b16 %v3526
    %v3874 = vunpack.c.l.b16 %v3527
    %v3875 = vunpack.c.h.b16 %v3527
    %v3876 = vunpack.c.l.b16 %v3528
    %v3877 = vunpack.c.h.b16 %v3528
    %v3878 = vunpack.c.l.b16 %v3529
    %v3879 = vunpack.c.h.b16 %v3529
    %v3880 = vunpack.c.l.b16 %v3530
    %v3881 = vunpack.c.h.b16 %v3530
    %v3882 = vunpack.c.l.b16 %v3531
    %v3883 = vunpack.c.h.b16 %v3531
    %v3884 = vunpack.c.l.b16 %v3532
    %v3885 = vunpack.c.h.b16 %v3532
    %v3886 = vunpack.c.l.b16 %v3533
    %v3887 = vunpack.c.h.b16 %v3533
    %v3888 = vunpack.c.l.b16 %v3534
    %v3889 = vunpack.c.h.b16 %v3534
    %v3890 = vunpack.c.l.b16 %v3535
    %v3891 = vunpack.c.h.b16 %v3535
    %v3892 = vunpack.c.l.b16 %v3536
    %v3893 = vunpack.c.h.b16 %v3536
    %v3894 = vunpack.c.l.b16 %v3537
    %v3895 = vunpack.c.h.b16 %v3537
    %v3896 = vunpack.c.l.b16 %v3538
    %v3897 = vunpack.c.h.b16 %v3538
    %v3898 = vunpack.c.l.b16 %v3539
    %v3899 = vunpack.c.h.b16 %v3539
    %v3900 = vunpack.c.l.b16 %v3540
    %v3901 = vunpack.c.h.b16 %v3540
    %v3902 = vunpack.c.l.b16 %v3541
    %v3903 = vunpack.c.h.b16 %v3541
    %v3904 = vunpack.c.l.b16 %v3542
    %v3905 = vunpack.c.h.b16 %v3542
    %v3906 = vunpack.c.l.b16 %v3543
    %v3907 = vunpack.c.h.b16 %v3543
    %v3908 = vunpack.c.l.b16 %v3544
    %v3909 = vunpack.c.h.b16 %v3544
    %v3910 = vunpack.c.l.b16 %v3545
    %v3911 = vunpack.c.h.b16 %v3545
    %v3912 = vunpack.c.l.b16 %v3546
    %v3913 = vunpack.c.h.b16 %v3546
    %v3914 = vunpack.c.l.b16 %v3547
    %v3915 = vunpack.c.h.b16 %v3547
    %v3916 = vunpack.c.l.b16 %v3548
    %v3917 = vunpack.c.h.b16 %v3548
    %v3918 = vunpack.c.l.b16 %v3549
    %v3919 = vunpack.c.h.b16 %v3549
    %v3920 = vunpack.c.l.b16 %v3550
    %v3921 = vunpack.c.h.b16 %v3550
    %v3922 = vunpack.c.l.b16 %v3551
    %v3923 = vunpack.c.h.b16 %v3551
    %v3924 = vunpack.c.l.b16 %v3552
    %v3925 = vunpack.c.h.b16 %v3552
    %v3926 = vunpack.c.l.b16 %v3553
    %v3927 = vunpack.c.h.b16 %v3553
    %v3928 = vunpack.c.l.b16 %v3554
    %v3929 = vunpack.c.h.b16 %v3554
    %v3930 = vunpack.c.l.b16 %v3555
    %v3931 = vunpack.c.h.b16 %v3555
    %v3932 = vunpack.c.l.b16 %v3556
    %v3933 = vunpack.c.h.b16 %v3556
    %v3934 = vunpack.c.l.b16 %v3557
    %v3935 = vunpack.c.h.b16 %v3557
    %v3936 = vunpack.c.l.b16 %v3558
    %v3937 = vunpack.c.h.b16 %v3558
    %v3938 = vunpack.c.l.b16 %v3559
    %v3939 = vunpack.c.h.b16 %v3559
    %v3940 = vunpack.c.l.b16 %v3560
    %v3941 = vunpack.c.h.b16 %v3560
    %v3942 = vunpack.c.l.b16 %v3561
    %v3943 = vunpack.c.h.b16 %v3561
    %v3944 = vunpack.c.l.b16 %v3562
    %v3945 = vunpack.c.h.b16 %v3562
    %v3946 = vunpack.c.l.b16 %v3563
    %v3947 = vunpack.c.h.b16 %v3563
    %v3948 = vpack.c.b16 %v3700, %v3692
    %v3949 = vpack.c.b16 %v3701, %v3693
    %v3950 = vpack.c.b16 %v3702, %v3694
    %v3951 = vpack.c.b16 %v3703, %v3695
    %v3952 = vpack.c.b16 %v3704, %v3696
    %v3953 = vpack.c.b16 %v3705, %v3697
    %v3954 = vpack.c.b16 %v3706, %v3698
    %v3955 = vpack.c.b16 %v3707, %v3699
    %v3956 = vpack.c.b16 %v3716, %v3708
    %v3957 = vpack.c.b16 %v3717, %v3709
    %v3958 = vpack.c.b16 %v3718, %v3710
    %v3959 = vpack.c.b16 %v3719, %v3711
    %v3960 = vpack.c.b16 %v3720, %v3712
    %v3961 = vpack.c.b16 %v3721, %v3713
    %v3962 = vpack.c.b16 %v3722, %v3714
    %v3963 = vpack.c.b16 %v3723, %v3715
    %v3964 = vpack.c.b16 %v3732, %v3724
    %v3965 = vpack.c.b16 %v3733, %v3725
    %v3966 = vpack.c.b16 %v3734, %v3726
    %v3967 = vpack.c.b16 %v3735, %v3727
    %v3968 = vpack.c.b16 %v3736, %v3728
    %v3969 = vpack.c.b16 %v3737, %v3729
    %v3970 = vpack.c.b16 %v3738, %v3730
    %v3971 = vpack.c.b16 %v3739, %v3731
    %v3972 = vpack.c.b16 %v3748, %v3740
    %v3973 = vpack.c.b16 %v3749, %v3741
    %v3974 = vpack.c.b16 %v3750, %v3742
    %v3975 = vpack.c.b16 %v3751, %v3743
    %v3976 = vpack.c.b16 %v3752, %v3744
    %v3977 = vpack.c.b16 %v3753, %v3745
    %v3978 = vpack.c.b16 %v3754, %v3746
    %v3979 = vpack.c.b16 %v3755, %v3747
    %v3980 = vpack.c.b16 %v3764, %v3756
    %v3981 = vpack.c.b16 %v3765, %v3757
    %v3982 = vpack.c.b16 %v3766, %v3758
    %v3983 = vpack.c.b16 %v3767, %v3759
    %v3984 = vpack.c.b16 %v3768, %v3760
    %v3985 = vpack.c.b16 %v3769, %v3761
    %v3986 = vpack.c.b16 %v3770, %v3762
    %v3987 = vpack.c.b16 %v3771, %v3763
    %v3988 = vpack.c.b16 %v3780, %v3772
    %v3989 = vpack.c.b16 %v3781, %v3773
    %v3990 = vpack.c.b16 %v3782, %v3774
    %v3991 = vpack.c.b16 %v3783, %v3775
    %v3992 = vpack.c.b16 %v3784, %v3776
    %v3993 = vpack.c.b16 %v3785, %v3777
    %v3994 = vpack.c.b16 %v3786, %v3778
    %v3995 = vpack.c.b16 %v3787, %v3779
    %v3996 = vpack.c.b16 %v3796, %v3788
    %v3997 = vpack.c.b16 %v3797, %v3789
    %v3998 = vpack.c.b16 %v3798, %v3790
    %v3999 = vpack.c.b16 %v3799, %v3791
    %v4000 = vpack.c.b16 %v3800, %v3792
    %v4001 = vpack.c.b16 %v3801, %v3793
    %v4002 = vpack.c.b16 %v3802, %v3794
    %v4003 = vpack.c.b16 %v3803, %v3795
    %v4004 = vpack.c.b16 %v3812, %v3804
    %v4005 = vpack.c.b16 %v3813, %v3805
    %v4006 = vpack.c.b16 %v3814, %v3806
    %v4007 = vpack.c.b16 %v3815, %v3807
    %v4008 = vpack.c.b16 %v3816, %v3808
    %v4009 = vpack.c.b16 %v3817, %v3809
    %v4010 = vpack.c.b16 %v3818, %v3810
    %v4011 = vpack.c.b16 %v3819, %v3811
    %v4012 = vpack.c.b16 %v3828, %v3820
    %v4013 = vpack.c.b16 %v3829, %v3821
    %v4014 = vpack.c.b16 %v3830, %v3822
    %v4015 = vpack.c.b16 %v3831, %v3823
    %v4016 = vpack.c.b16 %v3832, %v3824
    %v4017 = vpack.c.b16 %v3833, %v3825
    %v4018 = vpack.c.b16 %v3834, %v3826
    %v4019 = vpack.c.b16 %v3835, %v3827
    %v4020 = vpack.c.b16 %v3844, %v3836
    %v4021 = vpack.c.b16 %v3845, %v3837
    %v4022 = vpack.c.b16 %v3846, %v3838
    %v4023 = vpack.c.b16 %v3847, %v3839
    %v4024 = vpack.c.b16 %v3848, %v3840
    %v4025 = vpack.c.b16 %v3849, %v3841
    %v4026 = vpack.c.b16 %v3850, %v3842
    %v4027 = vpack.c.b16 %v3851, %v3843
    %v4028 = vpack.c.b16 %v3860, %v3852
    %v4029 = vpack.c.b16 %v3861, %v3853
    %v4030 = vpack.c.b16 %v3862, %v3854
    %v4031 = vpack.c.b16 %v3863, %v3855
    %v4032 = vpack.c.b16 %v3864, %v3856
    %v4033 = vpack.c.b16 %v3865, %v3857
    %v4034 = vpack.c.b16 %v3866, %v3858
    %v4035 = vpack.c.b16 %v3867, %v3859
    %v4036 = vpack.c.b16 %v3876, %v3868
    %v4037 = vpack.c.b16 %v3877, %v3869
    %v4038 = vpack.c.b16 %v3878, %v3870
    %v4039 = vpack.c.b16 %v3879, %v3871
    %v4040 = vpack.c.b16 %v3880, %v3872
    %v4041 = vpack.c.b16 %v3881, %v3873
    %v4042 = vpack.c.b16 %v3882, %v3874
    %v4043 = vpack.c.b16 %v3883, %v3875
    %v4044 = vpack.c.b16 %v3892, %v3884
    %v4045 = vpack.c.b16 %v3893, %v3885
    %v4046 = vpack.c.b16 %v3894, %v3886
    %v4047 = vpack.c.b16 %v3895, %v3887
    %v4048 = vpack.c.b16 %v3896, %v3888
    %v4049 = vpack.c.b16 %v3897, %v3889
    %v4050 = vpack.c.b16 %v3898, %v3890
    %v4051 = vpack.c.b16 %v3899, %v3891
    %v4052 = vpack.c.b16 %v3908, %v3900
    %v4053 = vpack.c.b16 %v3909, %v3901
    %v4054 = vpack.c.b16 %v3910, %v3902
    %v4055 = vpack.c.b16 %v3911, %v3903
    %v4056 = vpack.c.b16 %v3912, %v3904
    %v4057 = vpack.c.b16 %v3913, %v3905
    %v4058 = vpack.c.b16 %v3914, %v3906
    %v4059 = vpack.c.b16 %v3915, %v3907
    %v4060 = vpack.c.b16 %v3924, %v3916
    %v4061 = vpack.c.b16 %v3925, %v3917
    %v4062 = vpack.c.b16 %v3926, %v3918
    %v4063 = vpack.c.b16 %v3927, %v3919
    %v4064 = vpack.c.b16 %v3928, %v3920
    %v4065 = vpack.c.b16 %v3929, %v3921
    %v4066 = vpack.c.b16 %v3930, %v3922
    %v4067 = vpack.c.b16 %v3931, %v3923
    %v4068 = vpack.c.b16 %v3940, %v3932
    %v4069 = vpack.c.b16 %v3941, %v3933
    %v4070 = vpack.c.b16 %v3942, %v3934
    %v4071 = vpack.c.b16 %v3943, %v3935
    %v4072 = vpack.c.b16 %v3944, %v3936
    %v4073 = vpack.c.b16 %v3945, %v3937
    %v4074 = vpack.c.b16 %v3946, %v3938
    %v4075 = vpack.c.b16 %v3947, %v3939
    %4204 = vmatprep.subr.bf16.mxu0 %v3949
    %4205 = vmatpush1.bf16.msra.mxu0 %v3948
    %4206 = vmatprep.subr.bf16.mxu0 %v3957
    %4207 = vmatpush1.bf16.msra.mxu0 %v3956
    %4208 = vmatprep.subr.bf16.mxu0 %v3965
    %4209 = vmatpush1.bf16.msra.mxu0 %v3964
    %4210 = vmatprep.subr.bf16.mxu0 %v3973
    %4211 = vmatpush1.bf16.msra.mxu0 %v3972
    %4212 = vmatprep.subr.bf16.mxu0 %v3981
    %4213 = vmatpush1.bf16.msra.mxu0 %v3980
    %4214 = vmatprep.subr.bf16.mxu0 %v3989
    %4215 = vmatpush1.bf16.msra.mxu0 %v3988
    %4216 = vmatprep.subr.bf16.mxu0 %v3997
    %4217 = vmatpush1.bf16.msra.mxu0 %v3996
    %4218 = vmatprep.subr.bf16.mxu0 %v4005
    %4219 = vmatpush1.bf16.msra.mxu0 %v4004
    %4220 = vmatprep.subr.bf16.mxu0 %v4013
    %4221 = vmatpush1.bf16.msra.mxu0 %v4012
    %4222 = vmatprep.subr.bf16.mxu0 %v4021
    %4223 = vmatpush1.bf16.msra.mxu0 %v4020
    %4224 = vmatprep.subr.bf16.mxu0 %v4029
    %4225 = vmatpush1.bf16.msra.mxu0 %v4028
    %4226 = vmatprep.subr.bf16.mxu0 %v4037
    %4227 = vmatpush1.bf16.msra.mxu0 %v4036
    %4228 = vmatprep.subr.bf16.mxu0 %v4045
    %4229 = vmatpush1.bf16.msra.mxu0 %v4044
    %4230 = vmatprep.subr.bf16.mxu0 %v4053
    %4231 = vmatpush1.bf16.msra.mxu0 %v4052
    %4232 = vmatprep.subr.bf16.mxu0 %v4061
    %4233 = vmatpush1.bf16.msra.mxu0 %v4060
    %4234 = vmatprep.subr.bf16.mxu0 %v4069
    %4235 = vmatpush1.bf16.msra.mxu0 %v4068
    %4236 = vmatprep.mubr.bf16.mxu0 %v3435
    %4237 = vmatmul.mubr.bf16.gmra.mrb[0].mxu0 %v3434
    %v4238 = vpop.f32.mrb[0].mxu0
    %v4239 = vadd.f32 0.0, %v4238
    %v4240 = vpop.f32.mrb[0].mxu0
    %v4241 = vadd.f32 0.0, %v4240
    %v4242 = vpop.f32.mrb[0].mxu0
    %v4243 = vpop.f32.mrb[0].mxu0
    %4244 = vdwg.mxu0
    %4245 = vmatprep.subr.bf16.mxu0 %v3951
    %4246 = vmatpush1.bf16.msra.mxu0 %v3950
    %4247 = vmatprep.subr.bf16.mxu0 %v3959
    %4248 = vmatpush1.bf16.msra.mxu0 %v3958
    %4249 = vmatprep.subr.bf16.mxu0 %v3967
    %4250 = vmatpush1.bf16.msra.mxu0 %v3966
    %4251 = vmatprep.subr.bf16.mxu0 %v3975
    %4252 = vmatpush1.bf16.msra.mxu0 %v3974
    %4253 = vmatprep.subr.bf16.mxu0 %v3983
    %4254 = vmatpush1.bf16.msra.mxu0 %v3982
    %4255 = vmatprep.subr.bf16.mxu0 %v3991
    %4256 = vmatpush1.bf16.msra.mxu0 %v3990
    %4257 = vmatprep.subr.bf16.mxu0 %v3999
    %4258 = vmatpush1.bf16.msra.mxu0 %v3998
    %4259 = vmatprep.subr.bf16.mxu0 %v4007
    %4260 = vmatpush1.bf16.msra.mxu0 %v4006
    %4261 = vmatprep.subr.bf16.mxu0 %v4015
    %4262 = vmatpush1.bf16.msra.mxu0 %v4014
    %4263 = vmatprep.subr.bf16.mxu0 %v4023
    %4264 = vmatpush1.bf16.msra.mxu0 %v4022
    %4265 = vmatprep.subr.bf16.mxu0 %v4031
    %4266 = vmatpush1.bf16.msra.mxu0 %v4030
    %4267 = vmatprep.subr.bf16.mxu0 %v4039
    %4268 = vmatpush1.bf16.msra.mxu0 %v4038
    %4269 = vmatprep.subr.bf16.mxu0 %v4047
    %4270 = vmatpush1.bf16.msra.mxu0 %v4046
    %4271 = vmatprep.subr.bf16.mxu0 %v4055
    %4272 = vmatpush1.bf16.msra.mxu0 %v4054
    %4273 = vmatprep.subr.bf16.mxu0 %v4063
    %4274 = vmatpush1.bf16.msra.mxu0 %v4062
    %4275 = vmatprep.subr.bf16.mxu0 %v4071
    %4276 = vmatpush1.bf16.msra.mxu0 %v4070
    %4277 = vmatprep.mubr.bf16.mxu0 %v3435
    %4278 = vmatmul.mubr.bf16.gmra.mrb[0].mxu0 %v3434
    %v4279 = vpop.f32.mrb[0].mxu0
    %v4280 = vadd.f32 0.0, %v4279
    %v4281 = vpop.f32.mrb[0].mxu0
    %v4282 = vadd.f32 0.0, %v4281
    %v4283 = vpop.f32.mrb[0].mxu0
    %v4284 = vpop.f32.mrb[0].mxu0
    %4285 = vdwg.mxu0
    %4286 = vmatprep.subr.bf16.mxu0 %v3953
    %4287 = vmatpush1.bf16.msra.mxu0 %v3952
    %4288 = vmatprep.subr.bf16.mxu0 %v3961
    %4289 = vmatpush1.bf16.msra.mxu0 %v3960
    %4290 = vmatprep.subr.bf16.mxu0 %v3969
    %4291 = vmatpush1.bf16.msra.mxu0 %v3968
    %4292 = vmatprep.subr.bf16.mxu0 %v3977
    %4293 = vmatpush1.bf16.msra.mxu0 %v3976
    %4294 = vmatprep.subr.bf16.mxu0 %v3985
    %4295 = vmatpush1.bf16.msra.mxu0 %v3984
    %4296 = vmatprep.subr.bf16.mxu0 %v3993
    %4297 = vmatpush1.bf16.msra.mxu0 %v3992
    %4298 = vmatprep.subr.bf16.mxu0 %v4001
    %4299 = vmatpush1.bf16.msra.mxu0 %v4000
    %4300 = vmatprep.subr.bf16.mxu0 %v4009
    %4301 = vmatpush1.bf16.msra.mxu0 %v4008
    %4302 = vmatprep.subr.bf16.mxu0 %v4017
    %4303 = vmatpush1.bf16.msra.mxu0 %v4016
    %4304 = vmatprep.subr.bf16.mxu0 %v4025
    %4305 = vmatpush1.bf16.msra.mxu0 %v4024
    %4306 = vmatprep.subr.bf16.mxu0 %v4033
    %4307 = vmatpush1.bf16.msra.mxu0 %v4032
    %4308 = vmatprep.subr.bf16.mxu0 %v4041
    %4309 = vmatpush1.bf16.msra.mxu0 %v4040
    %4310 = vmatprep.subr.bf16.mxu0 %v4049
    %4311 = vmatpush1.bf16.msra.mxu0 %v4048
    %4312 = vmatprep.subr.bf16.mxu0 %v4057
    %4313 = vmatpush1.bf16.msra.mxu0 %v4056
    %4314 = vmatprep.subr.bf16.mxu0 %v4065
    %4315 = vmatpush1.bf16.msra.mxu0 %v4064
    %4316 = vmatprep.subr.bf16.mxu0 %v4073
    %4317 = vmatpush1.bf16.msra.mxu0 %v4072
    %4318 = vmatprep.mubr.bf16.mxu0 %v3435
    %4319 = vmatmul.mubr.bf16.gmra.mrb[0].mxu0 %v3434
    %v4320 = vpop.f32.mrb[0].mxu0
    %v4321 = vadd.f32 0.0, %v4320
    %v4322 = vpop.f32.mrb[0].mxu0
    %v4323 = vadd.f32 0.0, %v4322
    %v4324 = vpop.f32.mrb[0].mxu0
    %v4325 = vpop.f32.mrb[0].mxu0
    %4326 = vdwg.mxu0
    %4327 = vmatprep.subr.bf16.mxu0 %v3955
    %4328 = vmatpush1.bf16.msra.mxu0 %v3954
    %4329 = vmatprep.subr.bf16.mxu0 %v3963
    %4330 = vmatpush1.bf16.msra.mxu0 %v3962
    %4331 = vmatprep.subr.bf16.mxu0 %v3971
    %4332 = vmatpush1.bf16.msra.mxu0 %v3970
    %4333 = vmatprep.subr.bf16.mxu0 %v3979
    %4334 = vmatpush1.bf16.msra.mxu0 %v3978
    %4335 = vmatprep.subr.bf16.mxu0 %v3987
    %4336 = vmatpush1.bf16.msra.mxu0 %v3986
    %4337 = vmatprep.subr.bf16.mxu0 %v3995
    %4338 = vmatpush1.bf16.msra.mxu0 %v3994
    %4339 = vmatprep.subr.bf16.mxu0 %v4003
    %4340 = vmatpush1.bf16.msra.mxu0 %v4002
    %4341 = vmatprep.subr.bf16.mxu0 %v4011
    %4342 = vmatpush1.bf16.msra.mxu0 %v4010
    %4343 = vmatprep.subr.bf16.mxu0 %v4019
    %4344 = vmatpush1.bf16.msra.mxu0 %v4018
    %4345 = vmatprep.subr.bf16.mxu0 %v4027
    %4346 = vmatpush1.bf16.msra.mxu0 %v4026
    %4347 = vmatprep.subr.bf16.mxu0 %v4035
    %4348 = vmatpush1.bf16.msra.mxu0 %v4034
    %4349 = vmatprep.subr.bf16.mxu0 %v4043
    %4350 = vmatpush1.bf16.msra.mxu0 %v4042
    %4351 = vmatprep.subr.bf16.mxu0 %v4051
    %4352 = vmatpush1.bf16.msra.mxu0 %v4050
    %4353 = vmatprep.subr.bf16.mxu0 %v4059
    %4354 = vmatpush1.bf16.msra.mxu0 %v4058
    %4355 = vmatprep.subr.bf16.mxu0 %v4067
    %4356 = vmatpush1.bf16.msra.mxu0 %v4066
    %4357 = vmatprep.subr.bf16.mxu0 %v4075
    %4358 = vmatpush1.bf16.msra.mxu0 %v4074
    %4359 = vmatprep.mubr.bf16.mxu0 %v3435
    %4360 = vmatmul.mubr.bf16.gmra.mrb[0].mxu0 %v3434
    %v4361 = vpop.f32.mrb[0].mxu0
    %v4362 = vadd.f32 0.0, %v4361
    %v4363 = vpop.f32.mrb[0].mxu0
    %v4364 = vadd.f32 0.0, %v4363
    %v4365 = vpop.f32.mrb[0].mxu0
    %v4366 = vpop.f32.mrb[0].mxu0
    %4367 = vdwg.mxu0
    %v4376 = vrot.slane %v4239, 4
    %v4377 = vrot.slane %v4241, 4
    %v4378 = vrot.slane %v4280, 4
    %v4379 = vrot.slane %v4282, 4
    %v4380 = vrot.slane %v4321, 4
    %v4381 = vrot.slane %v4323, 4
    %v4382 = vrot.slane %v4362, 4
    %v4383 = vrot.slane %v4364, 4
    %v4392 = vadd.f32 %v260, %v4376
    %v4393 = vadd.f32 %v262, %v4377
    %v4394 = vadd.f32 %v313, %v4378
    %v4395 = vadd.f32 %v315, %v4379
    %v4396 = vadd.f32 %v366, %v4380
    %v4397 = vadd.f32 %v368, %v4381
    %v4398 = vadd.f32 %v419, %v4382
    %v4399 = vadd.f32 %v421, %v4383
    %v4400 = vmul.f32 %v4392, 0.5
    %v4401 = vmul.f32 %v4393, 0.5
    %v4402 = vtanh.pop %v4400
    %v4403 = vtanh.pop %v4401
    %v4404 = vadd.f32 %v4402, 1.0
    %v4405 = vadd.f32 %v4403, 1.0
    %v4406 = vmul.f32 %v4404, 0.5
    %v4407 = vmul.f32 %v4405, 0.5
    %v4408 = vmul.f32 %v4394, 0.5
    %v4409 = vmul.f32 %v4395, 0.5
    %v4410 = vtanh.pop %v4408
    %v4411 = vtanh.pop %v4409
    %v4412 = vadd.f32 %v4410, 1.0
    %v4413 = vadd.f32 %v4411, 1.0
    %v4414 = vmul.f32 %v4412, 0.5
    %v4415 = vmul.f32 %v4413, 0.5
    %v4416 = vtanh.pop %v4396
    %v4417 = vtanh.pop %v4397
    %v4418 = vmul.f32 %v4398, 0.5
    %v4419 = vmul.f32 %v4399, 0.5
    %v4420 = vtanh.pop %v4418
    %v4421 = vtanh.pop %v4419
    %v4422 = vadd.f32 %v4420, 1.0
    %v4423 = vadd.f32 %v4421, 1.0
    %v4424 = vmul.f32 %v4422, 0.5
    %v4425 = vmul.f32 %v4423, 0.5
    %v4428 = vrot.slane %v3422, 4
    %v4429 = vrot.slane %v3423, 4
    %v4432 = vmul.f32 %v4414, %v4428
    %v4433 = vmul.f32 %v4415, %v4429
    %v4434 = vmul.f32 %v4406, %v4416
    %v4435 = vmul.f32 %v4407, %v4417
    %v4436 = vadd.f32 %v4432, %v4434
    %v4437 = vadd.f32 %v4433, %v4435
    %v4438 = vtanh.pop %v4436
    %v4439 = vtanh.pop %v4437
    %v4440 = vmul.f32 %v4424, %v4438
    %v4441 = vmul.f32 %v4425, %v4439
    %v4444 = vcombine.high %v4440, %v4441
    %s4446 = scalar_lea.vmem [#allocation10], 24
    %4447 = vst [vmem:[%s4446] sm:$0xff] %v4444
    %v4448 = vpack.c.bf16 %v4440, %v4440
    %v4449 = vpack.c.bf16 %v4441, %v4441
    %v4450 = vld [vmem:[#allocation9] sm:$0xff]
    %v4451 = vld [vmem:[#allocation9 + $0x8] sm:$0xff]
    %v4452 = vld [vmem:[#allocation9 + $0x10] sm:$0xff]
    %v4453 = vld [vmem:[#allocation9 + $0x18] sm:$0xff]
    %v4454 = vld [vmem:[#allocation9 + $0x20] sm:$0xff]
    %v4455 = vld [vmem:[#allocation9 + $0x28] sm:$0xff]
    %v4456 = vld [vmem:[#allocation9 + $0x30] sm:$0xff]
    %v4457 = vld [vmem:[#allocation9 + $0x38] sm:$0xff]
    %v4458 = vld [vmem:[#allocation9 + $0x40] sm:$0xff]
    %v4459 = vld [vmem:[#allocation9 + $0x48] sm:$0xff]
    %v4460 = vld [vmem:[#allocation9 + $0x50] sm:$0xff]
    %v4461 = vld [vmem:[#allocation9 + $0x58] sm:$0xff]
    %v4462 = vld [vmem:[#allocation9 + $0x60] sm:$0xff]
    %v4463 = vld [vmem:[#allocation9 + $0x68] sm:$0xff]
    %v4464 = vld [vmem:[#allocation9 + $0x70] sm:$0xff]
    %v4465 = vld [vmem:[#allocation9 + $0x78] sm:$0xff]
    %v4466 = vld [vmem:[#allocation9 + $0x80] sm:$0xff]
    %v4467 = vld [vmem:[#allocation9 + $0x88] sm:$0xff]
    %v4468 = vld [vmem:[#allocation9 + $0x90] sm:$0xff]
    %v4469 = vld [vmem:[#allocation9 + $0x98] sm:$0xff]
    %v4470 = vld [vmem:[#allocation9 + $0xa0] sm:$0xff]
    %v4471 = vld [vmem:[#allocation9 + $0xa8] sm:$0xff]
    %v4472 = vld [vmem:[#allocation9 + $0xb0] sm:$0xff]
    %v4473 = vld [vmem:[#allocation9 + $0xb8] sm:$0xff]
    %v4474 = vld [vmem:[#allocation9 + $0xc0] sm:$0xff]
    %v4475 = vld [vmem:[#allocation9 + $0xc8] sm:$0xff]
    %v4476 = vld [vmem:[#allocation9 + $0xd0] sm:$0xff]
    %v4477 = vld [vmem:[#allocation9 + $0xd8] sm:$0xff]
    %v4478 = vld [vmem:[#allocation9 + $0xe0] sm:$0xff]
    %v4479 = vld [vmem:[#allocation9 + $0xe8] sm:$0xff]
    %v4480 = vld [vmem:[#allocation9 + $0xf0] sm:$0xff]
    %v4481 = vld [vmem:[#allocation9 + $0xf8] sm:$0xff]
    %v4482 = vld [vmem:[#allocation9 + $0x100] sm:$0xff]
    %v4483 = vld [vmem:[#allocation9 + $0x108] sm:$0xff]
    %v4484 = vld [vmem:[#allocation9 + $0x110] sm:$0xff]
    %v4485 = vld [vmem:[#allocation9 + $0x118] sm:$0xff]
    %v4486 = vld [vmem:[#allocation9 + $0x120] sm:$0xff]
    %v4487 = vld [vmem:[#allocation9 + $0x128] sm:$0xff]
    %v4488 = vld [vmem:[#allocation9 + $0x130] sm:$0xff]
    %v4489 = vld [vmem:[#allocation9 + $0x138] sm:$0xff]
    %v4490 = vld [vmem:[#allocation9 + $0x140] sm:$0xff]
    %v4491 = vld [vmem:[#allocation9 + $0x148] sm:$0xff]
    %v4492 = vld [vmem:[#allocation9 + $0x150] sm:$0xff]
    %v4493 = vld [vmem:[#allocation9 + $0x158] sm:$0xff]
    %v4494 = vld [vmem:[#allocation9 + $0x160] sm:$0xff]
    %v4495 = vld [vmem:[#allocation9 + $0x168] sm:$0xff]
    %v4496 = vld [vmem:[#allocation9 + $0x170] sm:$0xff]
    %v4497 = vld [vmem:[#allocation9 + $0x178] sm:$0xff]
    %v4498 = vld [vmem:[#allocation9 + $0x180] sm:$0xff]
    %v4499 = vld [vmem:[#allocation9 + $0x188] sm:$0xff]
    %v4500 = vld [vmem:[#allocation9 + $0x190] sm:$0xff]
    %v4501 = vld [vmem:[#allocation9 + $0x198] sm:$0xff]
    %v4502 = vld [vmem:[#allocation9 + $0x1a0] sm:$0xff]
    %v4503 = vld [vmem:[#allocation9 + $0x1a8] sm:$0xff]
    %v4504 = vld [vmem:[#allocation9 + $0x1b0] sm:$0xff]
    %v4505 = vld [vmem:[#allocation9 + $0x1b8] sm:$0xff]
    %v4506 = vld [vmem:[#allocation9 + $0x1c0] sm:$0xff]
    %v4507 = vld [vmem:[#allocation9 + $0x1c8] sm:$0xff]
    %v4508 = vld [vmem:[#allocation9 + $0x1d0] sm:$0xff]
    %v4509 = vld [vmem:[#allocation9 + $0x1d8] sm:$0xff]
    %v4510 = vld [vmem:[#allocation9 + $0x1e0] sm:$0xff]
    %v4511 = vld [vmem:[#allocation9 + $0x1e8] sm:$0xff]
    %v4512 = vld [vmem:[#allocation9 + $0x1f0] sm:$0xff]
    %v4513 = vld [vmem:[#allocation9 + $0x1f8] sm:$0xff]
    %v4514 = vld [vmem:[#allocation9 + $0x200] sm:$0xff]
    %v4515 = vld [vmem:[#allocation9 + $0x208] sm:$0xff]
    %v4516 = vld [vmem:[#allocation9 + $0x210] sm:$0xff]
    %v4517 = vld [vmem:[#allocation9 + $0x218] sm:$0xff]
    %v4518 = vld [vmem:[#allocation9 + $0x220] sm:$0xff]
    %v4519 = vld [vmem:[#allocation9 + $0x228] sm:$0xff]
    %v4520 = vld [vmem:[#allocation9 + $0x230] sm:$0xff]
    %v4521 = vld [vmem:[#allocation9 + $0x238] sm:$0xff]
    %v4522 = vld [vmem:[#allocation9 + $0x240] sm:$0xff]
    %v4523 = vld [vmem:[#allocation9 + $0x248] sm:$0xff]
    %v4524 = vld [vmem:[#allocation9 + $0x250] sm:$0xff]
    %v4525 = vld [vmem:[#allocation9 + $0x258] sm:$0xff]
    %v4526 = vld [vmem:[#allocation9 + $0x260] sm:$0xff]
    %v4527 = vld [vmem:[#allocation9 + $0x268] sm:$0xff]
    %v4528 = vld [vmem:[#allocation9 + $0x270] sm:$0xff]
    %v4529 = vld [vmem:[#allocation9 + $0x278] sm:$0xff]
    %v4530 = vld [vmem:[#allocation9 + $0x280] sm:$0xff]
    %v4531 = vld [vmem:[#allocation9 + $0x288] sm:$0xff]
    %v4532 = vld [vmem:[#allocation9 + $0x290] sm:$0xff]
    %v4533 = vld [vmem:[#allocation9 + $0x298] sm:$0xff]
    %v4534 = vld [vmem:[#allocation9 + $0x2a0] sm:$0xff]
    %v4535 = vld [vmem:[#allocation9 + $0x2a8] sm:$0xff]
    %v4536 = vld [vmem:[#allocation9 + $0x2b0] sm:$0xff]
    %v4537 = vld [vmem:[#allocation9 + $0x2b8] sm:$0xff]
    %v4538 = vld [vmem:[#allocation9 + $0x2c0] sm:$0xff]
    %v4539 = vld [vmem:[#allocation9 + $0x2c8] sm:$0xff]
    %v4540 = vld [vmem:[#allocation9 + $0x2d0] sm:$0xff]
    %v4541 = vld [vmem:[#allocation9 + $0x2d8] sm:$0xff]
    %v4542 = vld [vmem:[#allocation9 + $0x2e0] sm:$0xff]
    %v4543 = vld [vmem:[#allocation9 + $0x2e8] sm:$0xff]
    %v4544 = vld [vmem:[#allocation9 + $0x2f0] sm:$0xff]
    %v4545 = vld [vmem:[#allocation9 + $0x2f8] sm:$0xff]
    %v4546 = vld [vmem:[#allocation9 + $0x300] sm:$0xff]
    %v4547 = vld [vmem:[#allocation9 + $0x308] sm:$0xff]
    %v4548 = vld [vmem:[#allocation9 + $0x310] sm:$0xff]
    %v4549 = vld [vmem:[#allocation9 + $0x318] sm:$0xff]
    %v4550 = vld [vmem:[#allocation9 + $0x320] sm:$0xff]
    %v4551 = vld [vmem:[#allocation9 + $0x328] sm:$0xff]
    %v4552 = vld [vmem:[#allocation9 + $0x330] sm:$0xff]
    %v4553 = vld [vmem:[#allocation9 + $0x338] sm:$0xff]
    %v4554 = vld [vmem:[#allocation9 + $0x340] sm:$0xff]
    %v4555 = vld [vmem:[#allocation9 + $0x348] sm:$0xff]
    %v4556 = vld [vmem:[#allocation9 + $0x350] sm:$0xff]
    %v4557 = vld [vmem:[#allocation9 + $0x358] sm:$0xff]
    %v4558 = vld [vmem:[#allocation9 + $0x360] sm:$0xff]
    %v4559 = vld [vmem:[#allocation9 + $0x368] sm:$0xff]
    %v4560 = vld [vmem:[#allocation9 + $0x370] sm:$0xff]
    %v4561 = vld [vmem:[#allocation9 + $0x378] sm:$0xff]
    %v4562 = vld [vmem:[#allocation9 + $0x380] sm:$0xff]
    %v4563 = vld [vmem:[#allocation9 + $0x388] sm:$0xff]
    %v4564 = vld [vmem:[#allocation9 + $0x390] sm:$0xff]
    %v4565 = vld [vmem:[#allocation9 + $0x398] sm:$0xff]
    %v4566 = vld [vmem:[#allocation9 + $0x3a0] sm:$0xff]
    %v4567 = vld [vmem:[#allocation9 + $0x3a8] sm:$0xff]
    %v4568 = vld [vmem:[#allocation9 + $0x3b0] sm:$0xff]
    %v4569 = vld [vmem:[#allocation9 + $0x3b8] sm:$0xff]
    %v4570 = vld [vmem:[#allocation9 + $0x3c0] sm:$0xff]
    %v4571 = vld [vmem:[#allocation9 + $0x3c8] sm:$0xff]
    %v4572 = vld [vmem:[#allocation9 + $0x3d0] sm:$0xff]
    %v4573 = vld [vmem:[#allocation9 + $0x3d8] sm:$0xff]
    %v4574 = vld [vmem:[#allocation9 + $0x3e0] sm:$0xff]
    %v4575 = vld [vmem:[#allocation9 + $0x3e8] sm:$0xff]
    %v4576 = vld [vmem:[#allocation9 + $0x3f0] sm:$0xff]
    %v4577 = vld [vmem:[#allocation9 + $0x3f8] sm:$0xff]
    %v4580 = vrot.slane %v4448, 2
    %v4581 = vrot.slane %v4449, 2
    %v4712 = vunpack.c.l.b16 %v4450
    %v4713 = vunpack.c.h.b16 %v4450
    %v4714 = vunpack.c.l.b16 %v4451
    %v4715 = vunpack.c.h.b16 %v4451
    %v4716 = vunpack.c.l.b16 %v4452
    %v4717 = vunpack.c.h.b16 %v4452
    %v4718 = vunpack.c.l.b16 %v4453
    %v4719 = vunpack.c.h.b16 %v4453
    %v4720 = vunpack.c.l.b16 %v4454
    %v4721 = vunpack.c.h.b16 %v4454
    %v4722 = vunpack.c.l.b16 %v4455
    %v4723 = vunpack.c.h.b16 %v4455
    %v4724 = vunpack.c.l.b16 %v4456
    %v4725 = vunpack.c.h.b16 %v4456
    %v4726 = vunpack.c.l.b16 %v4457
    %v4727 = vunpack.c.h.b16 %v4457
    %v4728 = vunpack.c.l.b16 %v4458
    %v4729 = vunpack.c.h.b16 %v4458
    %v4730 = vunpack.c.l.b16 %v4459
    %v4731 = vunpack.c.h.b16 %v4459
    %v4732 = vunpack.c.l.b16 %v4460
    %v4733 = vunpack.c.h.b16 %v4460
    %v4734 = vunpack.c.l.b16 %v4461
    %v4735 = vunpack.c.h.b16 %v4461
    %v4736 = vunpack.c.l.b16 %v4462
    %v4737 = vunpack.c.h.b16 %v4462
    %v4738 = vunpack.c.l.b16 %v4463
    %v4739 = vunpack.c.h.b16 %v4463
    %v4740 = vunpack.c.l.b16 %v4464
    %v4741 = vunpack.c.h.b16 %v4464
    %v4742 = vunpack.c.l.b16 %v4465
    %v4743 = vunpack.c.h.b16 %v4465
    %v4744 = vunpack.c.l.b16 %v4466
    %v4745 = vunpack.c.h.b16 %v4466
    %v4746 = vunpack.c.l.b16 %v4467
    %v4747 = vunpack.c.h.b16 %v4467
    %v4748 = vunpack.c.l.b16 %v4468
    %v4749 = vunpack.c.h.b16 %v4468
    %v4750 = vunpack.c.l.b16 %v4469
    %v4751 = vunpack.c.h.b16 %v4469
    %v4752 = vunpack.c.l.b16 %v4470
    %v4753 = vunpack.c.h.b16 %v4470
    %v4754 = vunpack.c.l.b16 %v4471
    %v4755 = vunpack.c.h.b16 %v4471
    %v4756 = vunpack.c.l.b16 %v4472
    %v4757 = vunpack.c.h.b16 %v4472
    %v4758 = vunpack.c.l.b16 %v4473
    %v4759 = vunpack.c.h.b16 %v4473
    %v4760 = vunpack.c.l.b16 %v4474
    %v4761 = vunpack.c.h.b16 %v4474
    %v4762 = vunpack.c.l.b16 %v4475
    %v4763 = vunpack.c.h.b16 %v4475
    %v4764 = vunpack.c.l.b16 %v4476
    %v4765 = vunpack.c.h.b16 %v4476
    %v4766 = vunpack.c.l.b16 %v4477
    %v4767 = vunpack.c.h.b16 %v4477
    %v4768 = vunpack.c.l.b16 %v4478
    %v4769 = vunpack.c.h.b16 %v4478
    %v4770 = vunpack.c.l.b16 %v4479
    %v4771 = vunpack.c.h.b16 %v4479
    %v4772 = vunpack.c.l.b16 %v4480
    %v4773 = vunpack.c.h.b16 %v4480
    %v4774 = vunpack.c.l.b16 %v4481
    %v4775 = vunpack.c.h.b16 %v4481
    %v4776 = vunpack.c.l.b16 %v4482
    %v4777 = vunpack.c.h.b16 %v4482
    %v4778 = vunpack.c.l.b16 %v4483
    %v4779 = vunpack.c.h.b16 %v4483
    %v4780 = vunpack.c.l.b16 %v4484
    %v4781 = vunpack.c.h.b16 %v4484
    %v4782 = vunpack.c.l.b16 %v4485
    %v4783 = vunpack.c.h.b16 %v4485
    %v4784 = vunpack.c.l.b16 %v4486
    %v4785 = vunpack.c.h.b16 %v4486
    %v4786 = vunpack.c.l.b16 %v4487
    %v4787 = vunpack.c.h.b16 %v4487
    %v4788 = vunpack.c.l.b16 %v4488
    %v4789 = vunpack.c.h.b16 %v4488
    %v4790 = vunpack.c.l.b16 %v4489
    %v4791 = vunpack.c.h.b16 %v4489
    %v4792 = vunpack.c.l.b16 %v4490
    %v4793 = vunpack.c.h.b16 %v4490
    %v4794 = vunpack.c.l.b16 %v4491
    %v4795 = vunpack.c.h.b16 %v4491
    %v4796 = vunpack.c.l.b16 %v4492
    %v4797 = vunpack.c.h.b16 %v4492
    %v4798 = vunpack.c.l.b16 %v4493
    %v4799 = vunpack.c.h.b16 %v4493
    %v4800 = vunpack.c.l.b16 %v4494
    %v4801 = vunpack.c.h.b16 %v4494
    %v4802 = vunpack.c.l.b16 %v4495
    %v4803 = vunpack.c.h.b16 %v4495
    %v4804 = vunpack.c.l.b16 %v4496
    %v4805 = vunpack.c.h.b16 %v4496
    %v4806 = vunpack.c.l.b16 %v4497
    %v4807 = vunpack.c.h.b16 %v4497
    %v4808 = vunpack.c.l.b16 %v4498
    %v4809 = vunpack.c.h.b16 %v4498
    %v4810 = vunpack.c.l.b16 %v4499
    %v4811 = vunpack.c.h.b16 %v4499
    %v4812 = vunpack.c.l.b16 %v4500
    %v4813 = vunpack.c.h.b16 %v4500
    %v4814 = vunpack.c.l.b16 %v4501
    %v4815 = vunpack.c.h.b16 %v4501
    %v4816 = vunpack.c.l.b16 %v4502
    %v4817 = vunpack.c.h.b16 %v4502
    %v4818 = vunpack.c.l.b16 %v4503
    %v4819 = vunpack.c.h.b16 %v4503
    %v4820 = vunpack.c.l.b16 %v4504
    %v4821 = vunpack.c.h.b16 %v4504
    %v4822 = vunpack.c.l.b16 %v4505
    %v4823 = vunpack.c.h.b16 %v4505
    %v4824 = vunpack.c.l.b16 %v4506
    %v4825 = vunpack.c.h.b16 %v4506
    %v4826 = vunpack.c.l.b16 %v4507
    %v4827 = vunpack.c.h.b16 %v4507
    %v4828 = vunpack.c.l.b16 %v4508
    %v4829 = vunpack.c.h.b16 %v4508
    %v4830 = vunpack.c.l.b16 %v4509
    %v4831 = vunpack.c.h.b16 %v4509
    %v4832 = vunpack.c.l.b16 %v4510
    %v4833 = vunpack.c.h.b16 %v4510
    %v4834 = vunpack.c.l.b16 %v4511
    %v4835 = vunpack.c.h.b16 %v4511
    %v4836 = vunpack.c.l.b16 %v4512
    %v4837 = vunpack.c.h.b16 %v4512
    %v4838 = vunpack.c.l.b16 %v4513
    %v4839 = vunpack.c.h.b16 %v4513
    %v4840 = vunpack.c.l.b16 %v4514
    %v4841 = vunpack.c.h.b16 %v4514
    %v4842 = vunpack.c.l.b16 %v4515
    %v4843 = vunpack.c.h.b16 %v4515
    %v4844 = vunpack.c.l.b16 %v4516
    %v4845 = vunpack.c.h.b16 %v4516
    %v4846 = vunpack.c.l.b16 %v4517
    %v4847 = vunpack.c.h.b16 %v4517
    %v4848 = vunpack.c.l.b16 %v4518
    %v4849 = vunpack.c.h.b16 %v4518
    %v4850 = vunpack.c.l.b16 %v4519
    %v4851 = vunpack.c.h.b16 %v4519
    %v4852 = vunpack.c.l.b16 %v4520
    %v4853 = vunpack.c.h.b16 %v4520
    %v4854 = vunpack.c.l.b16 %v4521
    %v4855 = vunpack.c.h.b16 %v4521
    %v4856 = vunpack.c.l.b16 %v4522
    %v4857 = vunpack.c.h.b16 %v4522
    %v4858 = vunpack.c.l.b16 %v4523
    %v4859 = vunpack.c.h.b16 %v4523
    %v4860 = vunpack.c.l.b16 %v4524
    %v4861 = vunpack.c.h.b16 %v4524
    %v4862 = vunpack.c.l.b16 %v4525
    %v4863 = vunpack.c.h.b16 %v4525
    %v4864 = vunpack.c.l.b16 %v4526
    %v4865 = vunpack.c.h.b16 %v4526
    %v4866 = vunpack.c.l.b16 %v4527
    %v4867 = vunpack.c.h.b16 %v4527
    %v4868 = vunpack.c.l.b16 %v4528
    %v4869 = vunpack.c.h.b16 %v4528
    %v4870 = vunpack.c.l.b16 %v4529
    %v4871 = vunpack.c.h.b16 %v4529
    %v4872 = vunpack.c.l.b16 %v4530
    %v4873 = vunpack.c.h.b16 %v4530
    %v4874 = vunpack.c.l.b16 %v4531
    %v4875 = vunpack.c.h.b16 %v4531
    %v4876 = vunpack.c.l.b16 %v4532
    %v4877 = vunpack.c.h.b16 %v4532
    %v4878 = vunpack.c.l.b16 %v4533
    %v4879 = vunpack.c.h.b16 %v4533
    %v4880 = vunpack.c.l.b16 %v4534
    %v4881 = vunpack.c.h.b16 %v4534
    %v4882 = vunpack.c.l.b16 %v4535
    %v4883 = vunpack.c.h.b16 %v4535
    %v4884 = vunpack.c.l.b16 %v4536
    %v4885 = vunpack.c.h.b16 %v4536
    %v4886 = vunpack.c.l.b16 %v4537
    %v4887 = vunpack.c.h.b16 %v4537
    %v4888 = vunpack.c.l.b16 %v4538
    %v4889 = vunpack.c.h.b16 %v4538
    %v4890 = vunpack.c.l.b16 %v4539
    %v4891 = vunpack.c.h.b16 %v4539
    %v4892 = vunpack.c.l.b16 %v4540
    %v4893 = vunpack.c.h.b16 %v4540
    %v4894 = vunpack.c.l.b16 %v4541
    %v4895 = vunpack.c.h.b16 %v4541
    %v4896 = vunpack.c.l.b16 %v4542
    %v4897 = vunpack.c.h.b16 %v4542
    %v4898 = vunpack.c.l.b16 %v4543
    %v4899 = vunpack.c.h.b16 %v4543
    %v4900 = vunpack.c.l.b16 %v4544
    %v4901 = vunpack.c.h.b16 %v4544
    %v4902 = vunpack.c.l.b16 %v4545
    %v4903 = vunpack.c.h.b16 %v4545
    %v4904 = vunpack.c.l.b16 %v4546
    %v4905 = vunpack.c.h.b16 %v4546
    %v4906 = vunpack.c.l.b16 %v4547
    %v4907 = vunpack.c.h.b16 %v4547
    %v4908 = vunpack.c.l.b16 %v4548
    %v4909 = vunpack.c.h.b16 %v4548
    %v4910 = vunpack.c.l.b16 %v4549
    %v4911 = vunpack.c.h.b16 %v4549
    %v4912 = vunpack.c.l.b16 %v4550
    %v4913 = vunpack.c.h.b16 %v4550
    %v4914 = vunpack.c.l.b16 %v4551
    %v4915 = vunpack.c.h.b16 %v4551
    %v4916 = vunpack.c.l.b16 %v4552
    %v4917 = vunpack.c.h.b16 %v4552
    %v4918 = vunpack.c.l.b16 %v4553
    %v4919 = vunpack.c.h.b16 %v4553
    %v4920 = vunpack.c.l.b16 %v4554
    %v4921 = vunpack.c.h.b16 %v4554
    %v4922 = vunpack.c.l.b16 %v4555
    %v4923 = vunpack.c.h.b16 %v4555
    %v4924 = vunpack.c.l.b16 %v4556
    %v4925 = vunpack.c.h.b16 %v4556
    %v4926 = vunpack.c.l.b16 %v4557
    %v4927 = vunpack.c.h.b16 %v4557
    %v4928 = vunpack.c.l.b16 %v4558
    %v4929 = vunpack.c.h.b16 %v4558
    %v4930 = vunpack.c.l.b16 %v4559
    %v4931 = vunpack.c.h.b16 %v4559
    %v4932 = vunpack.c.l.b16 %v4560
    %v4933 = vunpack.c.h.b16 %v4560
    %v4934 = vunpack.c.l.b16 %v4561
    %v4935 = vunpack.c.h.b16 %v4561
    %v4936 = vunpack.c.l.b16 %v4562
    %v4937 = vunpack.c.h.b16 %v4562
    %v4938 = vunpack.c.l.b16 %v4563
    %v4939 = vunpack.c.h.b16 %v4563
    %v4940 = vunpack.c.l.b16 %v4564
    %v4941 = vunpack.c.h.b16 %v4564
    %v4942 = vunpack.c.l.b16 %v4565
    %v4943 = vunpack.c.h.b16 %v4565
    %v4944 = vunpack.c.l.b16 %v4566
    %v4945 = vunpack.c.h.b16 %v4566
    %v4946 = vunpack.c.l.b16 %v4567
    %v4947 = vunpack.c.h.b16 %v4567
    %v4948 = vunpack.c.l.b16 %v4568
    %v4949 = vunpack.c.h.b16 %v4568
    %v4950 = vunpack.c.l.b16 %v4569
    %v4951 = vunpack.c.h.b16 %v4569
    %v4952 = vunpack.c.l.b16 %v4570
    %v4953 = vunpack.c.h.b16 %v4570
    %v4954 = vunpack.c.l.b16 %v4571
    %v4955 = vunpack.c.h.b16 %v4571
    %v4956 = vunpack.c.l.b16 %v4572
    %v4957 = vunpack.c.h.b16 %v4572
    %v4958 = vunpack.c.l.b16 %v4573
    %v4959 = vunpack.c.h.b16 %v4573
    %v4960 = vunpack.c.l.b16 %v4574
    %v4961 = vunpack.c.h.b16 %v4574
    %v4962 = vunpack.c.l.b16 %v4575
    %v4963 = vunpack.c.h.b16 %v4575
    %v4964 = vunpack.c.l.b16 %v4576
    %v4965 = vunpack.c.h.b16 %v4576
    %v4966 = vunpack.c.l.b16 %v4577
    %v4967 = vunpack.c.h.b16 %v4577
    %v4968 = vpack.c.b16 %v4720, %v4712
    %v4969 = vpack.c.b16 %v4721, %v4713
    %v4970 = vpack.c.b16 %v4722, %v4714
    %v4971 = vpack.c.b16 %v4723, %v4715
    %v4972 = vpack.c.b16 %v4724, %v4716
    %v4973 = vpack.c.b16 %v4725, %v4717
    %v4974 = vpack.c.b16 %v4726, %v4718
    %v4975 = vpack.c.b16 %v4727, %v4719
    %v4976 = vpack.c.b16 %v4736, %v4728
    %v4977 = vpack.c.b16 %v4737, %v4729
    %v4978 = vpack.c.b16 %v4738, %v4730
    %v4979 = vpack.c.b16 %v4739, %v4731
    %v4980 = vpack.c.b16 %v4740, %v4732
    %v4981 = vpack.c.b16 %v4741, %v4733
    %v4982 = vpack.c.b16 %v4742, %v4734
    %v4983 = vpack.c.b16 %v4743, %v4735
    %v4984 = vpack.c.b16 %v4752, %v4744
    %v4985 = vpack.c.b16 %v4753, %v4745
    %v4986 = vpack.c.b16 %v4754, %v4746
    %v4987 = vpack.c.b16 %v4755, %v4747
    %v4988 = vpack.c.b16 %v4756, %v4748
    %v4989 = vpack.c.b16 %v4757, %v4749
    %v4990 = vpack.c.b16 %v4758, %v4750
    %v4991 = vpack.c.b16 %v4759, %v4751
    %v4992 = vpack.c.b16 %v4768, %v4760
    %v4993 = vpack.c.b16 %v4769, %v4761
    %v4994 = vpack.c.b16 %v4770, %v4762
    %v4995 = vpack.c.b16 %v4771, %v4763
    %v4996 = vpack.c.b16 %v4772, %v4764
    %v4997 = vpack.c.b16 %v4773, %v4765
    %v4998 = vpack.c.b16 %v4774, %v4766
    %v4999 = vpack.c.b16 %v4775, %v4767
    %v5000 = vpack.c.b16 %v4784, %v4776
    %v5001 = vpack.c.b16 %v4785, %v4777
    %v5002 = vpack.c.b16 %v4786, %v4778
    %v5003 = vpack.c.b16 %v4787, %v4779
    %v5004 = vpack.c.b16 %v4788, %v4780
    %v5005 = vpack.c.b16 %v4789, %v4781
    %v5006 = vpack.c.b16 %v4790, %v4782
    %v5007 = vpack.c.b16 %v4791, %v4783
    %v5008 = vpack.c.b16 %v4800, %v4792
    %v5009 = vpack.c.b16 %v4801, %v4793
    %v5010 = vpack.c.b16 %v4802, %v4794
    %v5011 = vpack.c.b16 %v4803, %v4795
    %v5012 = vpack.c.b16 %v4804, %v4796
    %v5013 = vpack.c.b16 %v4805, %v4797
    %v5014 = vpack.c.b16 %v4806, %v4798
    %v5015 = vpack.c.b16 %v4807, %v4799
    %v5016 = vpack.c.b16 %v4816, %v4808
    %v5017 = vpack.c.b16 %v4817, %v4809
    %v5018 = vpack.c.b16 %v4818, %v4810
    %v5019 = vpack.c.b16 %v4819, %v4811
    %v5020 = vpack.c.b16 %v4820, %v4812
    %v5021 = vpack.c.b16 %v4821, %v4813
    %v5022 = vpack.c.b16 %v4822, %v4814
    %v5023 = vpack.c.b16 %v4823, %v4815
    %v5024 = vpack.c.b16 %v4832, %v4824
    %v5025 = vpack.c.b16 %v4833, %v4825
    %v5026 = vpack.c.b16 %v4834, %v4826
    %v5027 = vpack.c.b16 %v4835, %v4827
    %v5028 = vpack.c.b16 %v4836, %v4828
    %v5029 = vpack.c.b16 %v4837, %v4829
    %v5030 = vpack.c.b16 %v4838, %v4830
    %v5031 = vpack.c.b16 %v4839, %v4831
    %v5032 = vpack.c.b16 %v4848, %v4840
    %v5033 = vpack.c.b16 %v4849, %v4841
    %v5034 = vpack.c.b16 %v4850, %v4842
    %v5035 = vpack.c.b16 %v4851, %v4843
    %v5036 = vpack.c.b16 %v4852, %v4844
    %v5037 = vpack.c.b16 %v4853, %v4845
    %v5038 = vpack.c.b16 %v4854, %v4846
    %v5039 = vpack.c.b16 %v4855, %v4847
    %v5040 = vpack.c.b16 %v4864, %v4856
    %v5041 = vpack.c.b16 %v4865, %v4857
    %v5042 = vpack.c.b16 %v4866, %v4858
    %v5043 = vpack.c.b16 %v4867, %v4859
    %v5044 = vpack.c.b16 %v4868, %v4860
    %v5045 = vpack.c.b16 %v4869, %v4861
    %v5046 = vpack.c.b16 %v4870, %v4862
    %v5047 = vpack.c.b16 %v4871, %v4863
    %v5048 = vpack.c.b16 %v4880, %v4872
    %v5049 = vpack.c.b16 %v4881, %v4873
    %v5050 = vpack.c.b16 %v4882, %v4874
    %v5051 = vpack.c.b16 %v4883, %v4875
    %v5052 = vpack.c.b16 %v4884, %v4876
    %v5053 = vpack.c.b16 %v4885, %v4877
    %v5054 = vpack.c.b16 %v4886, %v4878
    %v5055 = vpack.c.b16 %v4887, %v4879
    %v5056 = vpack.c.b16 %v4896, %v4888
    %v5057 = vpack.c.b16 %v4897, %v4889
    %v5058 = vpack.c.b16 %v4898, %v4890
    %v5059 = vpack.c.b16 %v4899, %v4891
    %v5060 = vpack.c.b16 %v4900, %v4892
    %v5061 = vpack.c.b16 %v4901, %v4893
    %v5062 = vpack.c.b16 %v4902, %v4894
    %v5063 = vpack.c.b16 %v4903, %v4895
    %v5064 = vpack.c.b16 %v4912, %v4904
    %v5065 = vpack.c.b16 %v4913, %v4905
    %v5066 = vpack.c.b16 %v4914, %v4906
    %v5067 = vpack.c.b16 %v4915, %v4907
    %v5068 = vpack.c.b16 %v4916, %v4908
    %v5069 = vpack.c.b16 %v4917, %v4909
    %v5070 = vpack.c.b16 %v4918, %v4910
    %v5071 = vpack.c.b16 %v4919, %v4911
    %v5072 = vpack.c.b16 %v4928, %v4920
    %v5073 = vpack.c.b16 %v4929, %v4921
    %v5074 = vpack.c.b16 %v4930, %v4922
    %v5075 = vpack.c.b16 %v4931, %v4923
    %v5076 = vpack.c.b16 %v4932, %v4924
    %v5077 = vpack.c.b16 %v4933, %v4925
    %v5078 = vpack.c.b16 %v4934, %v4926
    %v5079 = vpack.c.b16 %v4935, %v4927
    %v5080 = vpack.c.b16 %v4944, %v4936
    %v5081 = vpack.c.b16 %v4945, %v4937
    %v5082 = vpack.c.b16 %v4946, %v4938
    %v5083 = vpack.c.b16 %v4947, %v4939
    %v5084 = vpack.c.b16 %v4948, %v4940
    %v5085 = vpack.c.b16 %v4949, %v4941
    %v5086 = vpack.c.b16 %v4950, %v4942
    %v5087 = vpack.c.b16 %v4951, %v4943
    %v5088 = vpack.c.b16 %v4960, %v4952
    %v5089 = vpack.c.b16 %v4961, %v4953
    %v5090 = vpack.c.b16 %v4962, %v4954
    %v5091 = vpack.c.b16 %v4963, %v4955
    %v5092 = vpack.c.b16 %v4964, %v4956
    %v5093 = vpack.c.b16 %v4965, %v4957
    %v5094 = vpack.c.b16 %v4966, %v4958
    %v5095 = vpack.c.b16 %v4967, %v4959
    %5224 = vmatprep.subr.bf16.mxu0 %v4969
    %5225 = vmatpush1.bf16.msra.mxu0 %v4968
    %5226 = vmatprep.subr.bf16.mxu0 %v4977
    %5227 = vmatpush1.bf16.msra.mxu0 %v4976
    %5228 = vmatprep.subr.bf16.mxu0 %v4985
    %5229 = vmatpush1.bf16.msra.mxu0 %v4984
    %5230 = vmatprep.subr.bf16.mxu0 %v4993
    %5231 = vmatpush1.bf16.msra.mxu0 %v4992
    %5232 = vmatprep.subr.bf16.mxu0 %v5001
    %5233 = vmatpush1.bf16.msra.mxu0 %v5000
    %5234 = vmatprep.subr.bf16.mxu0 %v5009
    %5235 = vmatpush1.bf16.msra.mxu0 %v5008
    %5236 = vmatprep.subr.bf16.mxu0 %v5017
    %5237 = vmatpush1.bf16.msra.mxu0 %v5016
    %5238 = vmatprep.subr.bf16.mxu0 %v5025
    %5239 = vmatpush1.bf16.msra.mxu0 %v5024
    %5240 = vmatprep.subr.bf16.mxu0 %v5033
    %5241 = vmatpush1.bf16.msra.mxu0 %v5032
    %5242 = vmatprep.subr.bf16.mxu0 %v5041
    %5243 = vmatpush1.bf16.msra.mxu0 %v5040
    %5244 = vmatprep.subr.bf16.mxu0 %v5049
    %5245 = vmatpush1.bf16.msra.mxu0 %v5048
    %5246 = vmatprep.subr.bf16.mxu0 %v5057
    %5247 = vmatpush1.bf16.msra.mxu0 %v5056
    %5248 = vmatprep.subr.bf16.mxu0 %v5065
    %5249 = vmatpush1.bf16.msra.mxu0 %v5064
    %5250 = vmatprep.subr.bf16.mxu0 %v5073
    %5251 = vmatpush1.bf16.msra.mxu0 %v5072
    %5252 = vmatprep.subr.bf16.mxu0 %v5081
    %5253 = vmatpush1.bf16.msra.mxu0 %v5080
    %5254 = vmatprep.subr.bf16.mxu0 %v5089
    %5255 = vmatpush1.bf16.msra.mxu0 %v5088
    %5256 = vmatprep.mubr.bf16.mxu0 %v4581
    %5257 = vmatmul.mubr.bf16.gmra.mrb[0].mxu0 %v4580
    %v5258 = vpop.f32.mrb[0].mxu0
    %v5259 = vadd.f32 0.0, %v5258
    %v5260 = vpop.f32.mrb[0].mxu0
    %v5261 = vadd.f32 0.0, %v5260
    %v5262 = vpop.f32.mrb[0].mxu0
    %v5263 = vpop.f32.mrb[0].mxu0
    %5264 = vdwg.mxu0
    %5265 = vmatprep.subr.bf16.mxu0 %v4971
    %5266 = vmatpush1.bf16.msra.mxu0 %v4970
    %5267 = vmatprep.subr.bf16.mxu0 %v4979
    %5268 = vmatpush1.bf16.msra.mxu0 %v4978
    %5269 = vmatprep.subr.bf16.mxu0 %v4987
    %5270 = vmatpush1.bf16.msra.mxu0 %v4986
    %5271 = vmatprep.subr.bf16.mxu0 %v4995
    %5272 = vmatpush1.bf16.msra.mxu0 %v4994
    %5273 = vmatprep.subr.bf16.mxu0 %v5003
    %5274 = vmatpush1.bf16.msra.mxu0 %v5002
    %5275 = vmatprep.subr.bf16.mxu0 %v5011
    %5276 = vmatpush1.bf16.msra.mxu0 %v5010
    %5277 = vmatprep.subr.bf16.mxu0 %v5019
    %5278 = vmatpush1.bf16.msra.mxu0 %v5018
    %5279 = vmatprep.subr.bf16.mxu0 %v5027
    %5280 = vmatpush1.bf16.msra.mxu0 %v5026
    %5281 = vmatprep.subr.bf16.mxu0 %v5035
    %5282 = vmatpush1.bf16.msra.mxu0 %v5034
    %5283 = vmatprep.subr.bf16.mxu0 %v5043
    %5284 = vmatpush1.bf16.msra.mxu0 %v5042
    %5285 = vmatprep.subr.bf16.mxu0 %v5051
    %5286 = vmatpush1.bf16.msra.mxu0 %v5050
    %5287 = vmatprep.subr.bf16.mxu0 %v5059
    %5288 = vmatpush1.bf16.msra.mxu0 %v5058
    %5289 = vmatprep.subr.bf16.mxu0 %v5067
    %5290 = vmatpush1.bf16.msra.mxu0 %v5066
    %5291 = vmatprep.subr.bf16.mxu0 %v5075
    %5292 = vmatpush1.bf16.msra.mxu0 %v5074
    %5293 = vmatprep.subr.bf16.mxu0 %v5083
    %5294 = vmatpush1.bf16.msra.mxu0 %v5082
    %5295 = vmatprep.subr.bf16.mxu0 %v5091
    %5296 = vmatpush1.bf16.msra.mxu0 %v5090
    %5297 = vmatprep.mubr.bf16.mxu0 %v4581
    %5298 = vmatmul.mubr.bf16.gmra.mrb[0].mxu0 %v4580
    %v5299 = vpop.f32.mrb[0].mxu0
    %v5300 = vadd.f32 0.0, %v5299
    %v5301 = vpop.f32.mrb[0].mxu0
    %v5302 = vadd.f32 0.0, %v5301
    %v5303 = vpop.f32.mrb[0].mxu0
    %v5304 = vpop.f32.mrb[0].mxu0
    %5305 = vdwg.mxu0
    %5306 = vmatprep.subr.bf16.mxu0 %v4973
    %5307 = vmatpush1.bf16.msra.mxu0 %v4972
    %5308 = vmatprep.subr.bf16.mxu0 %v4981
    %5309 = vmatpush1.bf16.msra.mxu0 %v4980
    %5310 = vmatprep.subr.bf16.mxu0 %v4989
    %5311 = vmatpush1.bf16.msra.mxu0 %v4988
    %5312 = vmatprep.subr.bf16.mxu0 %v4997
    %5313 = vmatpush1.bf16.msra.mxu0 %v4996
    %5314 = vmatprep.subr.bf16.mxu0 %v5005
    %5315 = vmatpush1.bf16.msra.mxu0 %v5004
    %5316 = vmatprep.subr.bf16.mxu0 %v5013
    %5317 = vmatpush1.bf16.msra.mxu0 %v5012
    %5318 = vmatprep.subr.bf16.mxu0 %v5021
    %5319 = vmatpush1.bf16.msra.mxu0 %v5020
    %5320 = vmatprep.subr.bf16.mxu0 %v5029
    %5321 = vmatpush1.bf16.msra.mxu0 %v5028
    %5322 = vmatprep.subr.bf16.mxu0 %v5037
    %5323 = vmatpush1.bf16.msra.mxu0 %v5036
    %5324 = vmatprep.subr.bf16.mxu0 %v5045
    %5325 = vmatpush1.bf16.msra.mxu0 %v5044
    %5326 = vmatprep.subr.bf16.mxu0 %v5053
    %5327 = vmatpush1.bf16.msra.mxu0 %v5052
    %5328 = vmatprep.subr.bf16.mxu0 %v5061
    %5329 = vmatpush1.bf16.msra.mxu0 %v5060
    %5330 = vmatprep.subr.bf16.mxu0 %v5069
    %5331 = vmatpush1.bf16.msra.mxu0 %v5068
    %5332 = vmatprep.subr.bf16.mxu0 %v5077
    %5333 = vmatpush1.bf16.msra.mxu0 %v5076
    %5334 = vmatprep.subr.bf16.mxu0 %v5085
    %5335 = vmatpush1.bf16.msra.mxu0 %v5084
    %5336 = vmatprep.subr.bf16.mxu0 %v5093
    %5337 = vmatpush1.bf16.msra.mxu0 %v5092
    %5338 = vmatprep.mubr.bf16.mxu0 %v4581
    %5339 = vmatmul.mubr.bf16.gmra.mrb[0].mxu0 %v4580
    %v5340 = vpop.f32.mrb[0].mxu0
    %v5341 = vadd.f32 0.0, %v5340
    %v5342 = vpop.f32.mrb[0].mxu0
    %v5343 = vadd.f32 0.0, %v5342
    %v5344 = vpop.f32.mrb[0].mxu0
    %v5345 = vpop.f32.mrb[0].mxu0
    %5346 = vdwg.mxu0
    %5347 = vmatprep.subr.bf16.mxu0 %v4975
    %5348 = vmatpush1.bf16.msra.mxu0 %v4974
    %5349 = vmatprep.subr.bf16.mxu0 %v4983
    %5350 = vmatpush1.bf16.msra.mxu0 %v4982
    %5351 = vmatprep.subr.bf16.mxu0 %v4991
    %5352 = vmatpush1.bf16.msra.mxu0 %v4990
    %5353 = vmatprep.subr.bf16.mxu0 %v4999
    %5354 = vmatpush1.bf16.msra.mxu0 %v4998
    %5355 = vmatprep.subr.bf16.mxu0 %v5007
    %5356 = vmatpush1.bf16.msra.mxu0 %v5006
    %5357 = vmatprep.subr.bf16.mxu0 %v5015
    %5358 = vmatpush1.bf16.msra.mxu0 %v5014
    %5359 = vmatprep.subr.bf16.mxu0 %v5023
    %5360 = vmatpush1.bf16.msra.mxu0 %v5022
    %5361 = vmatprep.subr.bf16.mxu0 %v5031
    %5362 = vmatpush1.bf16.msra.mxu0 %v5030
    %5363 = vmatprep.subr.bf16.mxu0 %v5039
    %5364 = vmatpush1.bf16.msra.mxu0 %v5038
    %5365 = vmatprep.subr.bf16.mxu0 %v5047
    %5366 = vmatpush1.bf16.msra.mxu0 %v5046
    %5367 = vmatprep.subr.bf16.mxu0 %v5055
    %5368 = vmatpush1.bf16.msra.mxu0 %v5054
    %5369 = vmatprep.subr.bf16.mxu0 %v5063
    %5370 = vmatpush1.bf16.msra.mxu0 %v5062
    %5371 = vmatprep.subr.bf16.mxu0 %v5071
    %5372 = vmatpush1.bf16.msra.mxu0 %v5070
    %5373 = vmatprep.subr.bf16.mxu0 %v5079
    %5374 = vmatpush1.bf16.msra.mxu0 %v5078
    %5375 = vmatprep.subr.bf16.mxu0 %v5087
    %5376 = vmatpush1.bf16.msra.mxu0 %v5086
    %5377 = vmatprep.subr.bf16.mxu0 %v5095
    %5378 = vmatpush1.bf16.msra.mxu0 %v5094
    %5379 = vmatprep.mubr.bf16.mxu0 %v4581
    %5380 = vmatmul.mubr.bf16.gmra.mrb[0].mxu0 %v4580
    %v5381 = vpop.f32.mrb[0].mxu0
    %v5382 = vadd.f32 0.0, %v5381
    %v5383 = vpop.f32.mrb[0].mxu0
    %v5384 = vadd.f32 0.0, %v5383
    %v5385 = vpop.f32.mrb[0].mxu0
    %v5386 = vpop.f32.mrb[0].mxu0
    %5387 = vdwg.mxu0
    %v5388 = vadd.f32 %v266, %v5259
    %v5389 = vadd.f32 %v268, %v5261
    %v5390 = vadd.f32 %v319, %v5300
    %v5391 = vadd.f32 %v321, %v5302
    %v5392 = vadd.f32 %v372, %v5341
    %v5393 = vadd.f32 %v374, %v5343
    %v5394 = vadd.f32 %v425, %v5382
    %v5395 = vadd.f32 %v427, %v5384
    %v5396 = vmul.f32 %v5388, 0.5
    %v5397 = vmul.f32 %v5389, 0.5
    %v5398 = vtanh.pop %v5396
    %v5399 = vtanh.pop %v5397
    %v5400 = vadd.f32 %v5398, 1.0
    %v5401 = vadd.f32 %v5399, 1.0
    %v5402 = vmul.f32 %v5400, 0.5
    %v5403 = vmul.f32 %v5401, 0.5
    %v5404 = vmul.f32 %v5390, 0.5
    %v5405 = vmul.f32 %v5391, 0.5
    %v5406 = vtanh.pop %v5404
    %v5407 = vtanh.pop %v5405
    %v5408 = vadd.f32 %v5406, 1.0
    %v5409 = vadd.f32 %v5407, 1.0
    %v5410 = vmul.f32 %v5408, 0.5
    %v5411 = vmul.f32 %v5409, 0.5
    %v5412 = vtanh.pop %v5392
    %v5413 = vtanh.pop %v5393
    %v5414 = vmul.f32 %v5394, 0.5
    %v5415 = vmul.f32 %v5395, 0.5
    %v5416 = vtanh.pop %v5414
    %v5417 = vtanh.pop %v5415
    %v5418 = vadd.f32 %v5416, 1.0
    %v5419 = vadd.f32 %v5417, 1.0
    %v5420 = vmul.f32 %v5418, 0.5
    %v5421 = vmul.f32 %v5419, 0.5
    %v5424 = vrot.slane %v4436, 4
    %v5425 = vrot.slane %v4437, 4
    %v5428 = vmul.f32 %v5410, %v5424
    %v5429 = vmul.f32 %v5411, %v5425
    %v5430 = vmul.f32 %v5402, %v5412
    %v5431 = vmul.f32 %v5403, %v5413
    %v5432 = vadd.f32 %v5428, %v5430
    %v5433 = vadd.f32 %v5429, %v5431
    %v5434 = vtanh.pop %v5432
    %v5435 = vtanh.pop %v5433
    %v5436 = vmul.f32 %v5420, %v5434
    %v5437 = vmul.f32 %v5421, %v5435
    %v5440 = vcombine.low %v5436, %v5437
    %s5442 = scalar_lea.vmem [#allocation10], 32
    %5443 = vst [vmem:[%s5442] sm:$0xff] %v5440
    %v5444 = vpack.c.bf16 %v5436, %v5436
    %v5445 = vpack.c.bf16 %v5437, %v5437
    %v5446 = vld [vmem:[#allocation9] sm:$0xff]
    %v5447 = vld [vmem:[#allocation9 + $0x8] sm:$0xff]
    %v5448 = vld [vmem:[#allocation9 + $0x10] sm:$0xff]
    %v5449 = vld [vmem:[#allocation9 + $0x18] sm:$0xff]
    %v5450 = vld [vmem:[#allocation9 + $0x20] sm:$0xff]
    %v5451 = vld [vmem:[#allocation9 + $0x28] sm:$0xff]
    %v5452 = vld [vmem:[#allocation9 + $0x30] sm:$0xff]
    %v5453 = vld [vmem:[#allocation9 + $0x38] sm:$0xff]
    %v5454 = vld [vmem:[#allocation9 + $0x40] sm:$0xff]
    %v5455 = vld [vmem:[#allocation9 + $0x48] sm:$0xff]
    %v5456 = vld [vmem:[#allocation9 + $0x50] sm:$0xff]
    %v5457 = vld [vmem:[#allocation9 + $0x58] sm:$0xff]
    %v5458 = vld [vmem:[#allocation9 + $0x60] sm:$0xff]
    %v5459 = vld [vmem:[#allocation9 + $0x68] sm:$0xff]
    %v5460 = vld [vmem:[#allocation9 + $0x70] sm:$0xff]
    %v5461 = vld [vmem:[#allocation9 + $0x78] sm:$0xff]
    %v5462 = vld [vmem:[#allocation9 + $0x80] sm:$0xff]
    %v5463 = vld [vmem:[#allocation9 + $0x88] sm:$0xff]
    %v5464 = vld [vmem:[#allocation9 + $0x90] sm:$0xff]
    %v5465 = vld [vmem:[#allocation9 + $0x98] sm:$0xff]
    %v5466 = vld [vmem:[#allocation9 + $0xa0] sm:$0xff]
    %v5467 = vld [vmem:[#allocation9 + $0xa8] sm:$0xff]
    %v5468 = vld [vmem:[#allocation9 + $0xb0] sm:$0xff]
    %v5469 = vld [vmem:[#allocation9 + $0xb8] sm:$0xff]
    %v5470 = vld [vmem:[#allocation9 + $0xc0] sm:$0xff]
    %v5471 = vld [vmem:[#allocation9 + $0xc8] sm:$0xff]
    %v5472 = vld [vmem:[#allocation9 + $0xd0] sm:$0xff]
    %v5473 = vld [vmem:[#allocation9 + $0xd8] sm:$0xff]
    %v5474 = vld [vmem:[#allocation9 + $0xe0] sm:$0xff]
    %v5475 = vld [vmem:[#allocation9 + $0xe8] sm:$0xff]
    %v5476 = vld [vmem:[#allocation9 + $0xf0] sm:$0xff]
    %v5477 = vld [vmem:[#allocation9 + $0xf8] sm:$0xff]
    %v5478 = vld [vmem:[#allocation9 + $0x100] sm:$0xff]
    %v5479 = vld [vmem:[#allocation9 + $0x108] sm:$0xff]
    %v5480 = vld [vmem:[#allocation9 + $0x110] sm:$0xff]
    %v5481 = vld [vmem:[#allocation9 + $0x118] sm:$0xff]
    %v5482 = vld [vmem:[#allocation9 + $0x120] sm:$0xff]
    %v5483 = vld [vmem:[#allocation9 + $0x128] sm:$0xff]
    %v5484 = vld [vmem:[#allocation9 + $0x130] sm:$0xff]
    %v5485 = vld [vmem:[#allocation9 + $0x138] sm:$0xff]
    %v5486 = vld [vmem:[#allocation9 + $0x140] sm:$0xff]
    %v5487 = vld [vmem:[#allocation9 + $0x148] sm:$0xff]
    %v5488 = vld [vmem:[#allocation9 + $0x150] sm:$0xff]
    %v5489 = vld [vmem:[#allocation9 + $0x158] sm:$0xff]
    %v5490 = vld [vmem:[#allocation9 + $0x160] sm:$0xff]
    %v5491 = vld [vmem:[#allocation9 + $0x168] sm:$0xff]
    %v5492 = vld [vmem:[#allocation9 + $0x170] sm:$0xff]
    %v5493 = vld [vmem:[#allocation9 + $0x178] sm:$0xff]
    %v5494 = vld [vmem:[#allocation9 + $0x180] sm:$0xff]
    %v5495 = vld [vmem:[#allocation9 + $0x188] sm:$0xff]
    %v5496 = vld [vmem:[#allocation9 + $0x190] sm:$0xff]
    %v5497 = vld [vmem:[#allocation9 + $0x198] sm:$0xff]
    %v5498 = vld [vmem:[#allocation9 + $0x1a0] sm:$0xff]
    %v5499 = vld [vmem:[#allocation9 + $0x1a8] sm:$0xff]
    %v5500 = vld [vmem:[#allocation9 + $0x1b0] sm:$0xff]
    %v5501 = vld [vmem:[#allocation9 + $0x1b8] sm:$0xff]
    %v5502 = vld [vmem:[#allocation9 + $0x1c0] sm:$0xff]
    %v5503 = vld [vmem:[#allocation9 + $0x1c8] sm:$0xff]
    %v5504 = vld [vmem:[#allocation9 + $0x1d0] sm:$0xff]
    %v5505 = vld [vmem:[#allocation9 + $0x1d8] sm:$0xff]
    %v5506 = vld [vmem:[#allocation9 + $0x1e0] sm:$0xff]
    %v5507 = vld [vmem:[#allocation9 + $0x1e8] sm:$0xff]
    %v5508 = vld [vmem:[#allocation9 + $0x1f0] sm:$0xff]
    %v5509 = vld [vmem:[#allocation9 + $0x1f8] sm:$0xff]
    %v5510 = vld [vmem:[#allocation9 + $0x200] sm:$0xff]
    %v5511 = vld [vmem:[#allocation9 + $0x208] sm:$0xff]
    %v5512 = vld [vmem:[#allocation9 + $0x210] sm:$0xff]
    %v5513 = vld [vmem:[#allocation9 + $0x218] sm:$0xff]
    %v5514 = vld [vmem:[#allocation9 + $0x220] sm:$0xff]
    %v5515 = vld [vmem:[#allocation9 + $0x228] sm:$0xff]
    %v5516 = vld [vmem:[#allocation9 + $0x230] sm:$0xff]
    %v5517 = vld [vmem:[#allocation9 + $0x238] sm:$0xff]
    %v5518 = vld [vmem:[#allocation9 + $0x240] sm:$0xff]
    %v5519 = vld [vmem:[#allocation9 + $0x248] sm:$0xff]
    %v5520 = vld [vmem:[#allocation9 + $0x250] sm:$0xff]
    %v5521 = vld [vmem:[#allocation9 + $0x258] sm:$0xff]
    %v5522 = vld [vmem:[#allocation9 + $0x260] sm:$0xff]
    %v5523 = vld [vmem:[#allocation9 + $0x268] sm:$0xff]
    %v5524 = vld [vmem:[#allocation9 + $0x270] sm:$0xff]
    %v5525 = vld [vmem:[#allocation9 + $0x278] sm:$0xff]
    %v5526 = vld [vmem:[#allocation9 + $0x280] sm:$0xff]
    %v5527 = vld [vmem:[#allocation9 + $0x288] sm:$0xff]
    %v5528 = vld [vmem:[#allocation9 + $0x290] sm:$0xff]
    %v5529 = vld [vmem:[#allocation9 + $0x298] sm:$0xff]
    %v5530 = vld [vmem:[#allocation9 + $0x2a0] sm:$0xff]
    %v5531 = vld [vmem:[#allocation9 + $0x2a8] sm:$0xff]
    %v5532 = vld [vmem:[#allocation9 + $0x2b0] sm:$0xff]
    %v5533 = vld [vmem:[#allocation9 + $0x2b8] sm:$0xff]
    %v5534 = vld [vmem:[#allocation9 + $0x2c0] sm:$0xff]
    %v5535 = vld [vmem:[#allocation9 + $0x2c8] sm:$0xff]
    %v5536 = vld [vmem:[#allocation9 + $0x2d0] sm:$0xff]
    %v5537 = vld [vmem:[#allocation9 + $0x2d8] sm:$0xff]
    %v5538 = vld [vmem:[#allocation9 + $0x2e0] sm:$0xff]
    %v5539 = vld [vmem:[#allocation9 + $0x2e8] sm:$0xff]
    %v5540 = vld [vmem:[#allocation9 + $0x2f0] sm:$0xff]
    %v5541 = vld [vmem:[#allocation9 + $0x2f8] sm:$0xff]
    %v5542 = vld [vmem:[#allocation9 + $0x300] sm:$0xff]
    %v5543 = vld [vmem:[#allocation9 + $0x308] sm:$0xff]
    %v5544 = vld [vmem:[#allocation9 + $0x310] sm:$0xff]
    %v5545 = vld [vmem:[#allocation9 + $0x318] sm:$0xff]
    %v5546 = vld [vmem:[#allocation9 + $0x320] sm:$0xff]
    %v5547 = vld [vmem:[#allocation9 + $0x328] sm:$0xff]
    %v5548 = vld [vmem:[#allocation9 + $0x330] sm:$0xff]
    %v5549 = vld [vmem:[#allocation9 + $0x338] sm:$0xff]
    %v5550 = vld [vmem:[#allocation9 + $0x340] sm:$0xff]
    %v5551 = vld [vmem:[#allocation9 + $0x348] sm:$0xff]
    %v5552 = vld [vmem:[#allocation9 + $0x350] sm:$0xff]
    %v5553 = vld [vmem:[#allocation9 + $0x358] sm:$0xff]
    %v5554 = vld [vmem:[#allocation9 + $0x360] sm:$0xff]
    %v5555 = vld [vmem:[#allocation9 + $0x368] sm:$0xff]
    %v5556 = vld [vmem:[#allocation9 + $0x370] sm:$0xff]
    %v5557 = vld [vmem:[#allocation9 + $0x378] sm:$0xff]
    %v5558 = vld [vmem:[#allocation9 + $0x380] sm:$0xff]
    %v5559 = vld [vmem:[#allocation9 + $0x388] sm:$0xff]
    %v5560 = vld [vmem:[#allocation9 + $0x390] sm:$0xff]
    %v5561 = vld [vmem:[#allocation9 + $0x398] sm:$0xff]
    %v5562 = vld [vmem:[#allocation9 + $0x3a0] sm:$0xff]
    %v5563 = vld [vmem:[#allocation9 + $0x3a8] sm:$0xff]
    %v5564 = vld [vmem:[#allocation9 + $0x3b0] sm:$0xff]
    %v5565 = vld [vmem:[#allocation9 + $0x3b8] sm:$0xff]
    %v5566 = vld [vmem:[#allocation9 + $0x3c0] sm:$0xff]
    %v5567 = vld [vmem:[#allocation9 + $0x3c8] sm:$0xff]
    %v5568 = vld [vmem:[#allocation9 + $0x3d0] sm:$0xff]
    %v5569 = vld [vmem:[#allocation9 + $0x3d8] sm:$0xff]
    %v5570 = vld [vmem:[#allocation9 + $0x3e0] sm:$0xff]
    %v5571 = vld [vmem:[#allocation9 + $0x3e8] sm:$0xff]
    %v5572 = vld [vmem:[#allocation9 + $0x3f0] sm:$0xff]
    %v5573 = vld [vmem:[#allocation9 + $0x3f8] sm:$0xff]
    %v5702 = vunpack.c.l.b16 %v5446
    %v5703 = vunpack.c.h.b16 %v5446
    %v5704 = vunpack.c.l.b16 %v5447
    %v5705 = vunpack.c.h.b16 %v5447
    %v5706 = vunpack.c.l.b16 %v5448
    %v5707 = vunpack.c.h.b16 %v5448
    %v5708 = vunpack.c.l.b16 %v5449
    %v5709 = vunpack.c.h.b16 %v5449
    %v5710 = vunpack.c.l.b16 %v5450
    %v5711 = vunpack.c.h.b16 %v5450
    %v5712 = vunpack.c.l.b16 %v5451
    %v5713 = vunpack.c.h.b16 %v5451
    %v5714 = vunpack.c.l.b16 %v5452
    %v5715 = vunpack.c.h.b16 %v5452
    %v5716 = vunpack.c.l.b16 %v5453
    %v5717 = vunpack.c.h.b16 %v5453
    %v5718 = vunpack.c.l.b16 %v5454
    %v5719 = vunpack.c.h.b16 %v5454
    %v5720 = vunpack.c.l.b16 %v5455
    %v5721 = vunpack.c.h.b16 %v5455
    %v5722 = vunpack.c.l.b16 %v5456
    %v5723 = vunpack.c.h.b16 %v5456
    %v5724 = vunpack.c.l.b16 %v5457
    %v5725 = vunpack.c.h.b16 %v5457
    %v5726 = vunpack.c.l.b16 %v5458
    %v5727 = vunpack.c.h.b16 %v5458
    %v5728 = vunpack.c.l.b16 %v5459
    %v5729 = vunpack.c.h.b16 %v5459
    %v5730 = vunpack.c.l.b16 %v5460
    %v5731 = vunpack.c.h.b16 %v5460
    %v5732 = vunpack.c.l.b16 %v5461
    %v5733 = vunpack.c.h.b16 %v5461
    %v5734 = vunpack.c.l.b16 %v5462
    %v5735 = vunpack.c.h.b16 %v5462
    %v5736 = vunpack.c.l.b16 %v5463
    %v5737 = vunpack.c.h.b16 %v5463
    %v5738 = vunpack.c.l.b16 %v5464
    %v5739 = vunpack.c.h.b16 %v5464
    %v5740 = vunpack.c.l.b16 %v5465
    %v5741 = vunpack.c.h.b16 %v5465
    %v5742 = vunpack.c.l.b16 %v5466
    %v5743 = vunpack.c.h.b16 %v5466
    %v5744 = vunpack.c.l.b16 %v5467
    %v5745 = vunpack.c.h.b16 %v5467
    %v5746 = vunpack.c.l.b16 %v5468
    %v5747 = vunpack.c.h.b16 %v5468
    %v5748 = vunpack.c.l.b16 %v5469
    %v5749 = vunpack.c.h.b16 %v5469
    %v5750 = vunpack.c.l.b16 %v5470
    %v5751 = vunpack.c.h.b16 %v5470
    %v5752 = vunpack.c.l.b16 %v5471
    %v5753 = vunpack.c.h.b16 %v5471
    %v5754 = vunpack.c.l.b16 %v5472
    %v5755 = vunpack.c.h.b16 %v5472
    %v5756 = vunpack.c.l.b16 %v5473
    %v5757 = vunpack.c.h.b16 %v5473
    %v5758 = vunpack.c.l.b16 %v5474
    %v5759 = vunpack.c.h.b16 %v5474
    %v5760 = vunpack.c.l.b16 %v5475
    %v5761 = vunpack.c.h.b16 %v5475
    %v5762 = vunpack.c.l.b16 %v5476
    %v5763 = vunpack.c.h.b16 %v5476
    %v5764 = vunpack.c.l.b16 %v5477
    %v5765 = vunpack.c.h.b16 %v5477
    %v5766 = vunpack.c.l.b16 %v5478
    %v5767 = vunpack.c.h.b16 %v5478
    %v5768 = vunpack.c.l.b16 %v5479
    %v5769 = vunpack.c.h.b16 %v5479
    %v5770 = vunpack.c.l.b16 %v5480
    %v5771 = vunpack.c.h.b16 %v5480
    %v5772 = vunpack.c.l.b16 %v5481
    %v5773 = vunpack.c.h.b16 %v5481
    %v5774 = vunpack.c.l.b16 %v5482
    %v5775 = vunpack.c.h.b16 %v5482
    %v5776 = vunpack.c.l.b16 %v5483
    %v5777 = vunpack.c.h.b16 %v5483
    %v5778 = vunpack.c.l.b16 %v5484
    %v5779 = vunpack.c.h.b16 %v5484
    %v5780 = vunpack.c.l.b16 %v5485
    %v5781 = vunpack.c.h.b16 %v5485
    %v5782 = vunpack.c.l.b16 %v5486
    %v5783 = vunpack.c.h.b16 %v5486
    %v5784 = vunpack.c.l.b16 %v5487
    %v5785 = vunpack.c.h.b16 %v5487
    %v5786 = vunpack.c.l.b16 %v5488
    %v5787 = vunpack.c.h.b16 %v5488
    %v5788 = vunpack.c.l.b16 %v5489
    %v5789 = vunpack.c.h.b16 %v5489
    %v5790 = vunpack.c.l.b16 %v5490
    %v5791 = vunpack.c.h.b16 %v5490
    %v5792 = vunpack.c.l.b16 %v5491
    %v5793 = vunpack.c.h.b16 %v5491
    %v5794 = vunpack.c.l.b16 %v5492
    %v5795 = vunpack.c.h.b16 %v5492
    %v5796 = vunpack.c.l.b16 %v5493
    %v5797 = vunpack.c.h.b16 %v5493
    %v5798 = vunpack.c.l.b16 %v5494
    %v5799 = vunpack.c.h.b16 %v5494
    %v5800 = vunpack.c.l.b16 %v5495
    %v5801 = vunpack.c.h.b16 %v5495
    %v5802 = vunpack.c.l.b16 %v5496
    %v5803 = vunpack.c.h.b16 %v5496
    %v5804 = vunpack.c.l.b16 %v5497
    %v5805 = vunpack.c.h.b16 %v5497
    %v5806 = vunpack.c.l.b16 %v5498
    %v5807 = vunpack.c.h.b16 %v5498
    %v5808 = vunpack.c.l.b16 %v5499
    %v5809 = vunpack.c.h.b16 %v5499
    %v5810 = vunpack.c.l.b16 %v5500
    %v5811 = vunpack.c.h.b16 %v5500
    %v5812 = vunpack.c.l.b16 %v5501
    %v5813 = vunpack.c.h.b16 %v5501
    %v5814 = vunpack.c.l.b16 %v5502
    %v5815 = vunpack.c.h.b16 %v5502
    %v5816 = vunpack.c.l.b16 %v5503
    %v5817 = vunpack.c.h.b16 %v5503
    %v5818 = vunpack.c.l.b16 %v5504
    %v5819 = vunpack.c.h.b16 %v5504
    %v5820 = vunpack.c.l.b16 %v5505
    %v5821 = vunpack.c.h.b16 %v5505
    %v5822 = vunpack.c.l.b16 %v5506
    %v5823 = vunpack.c.h.b16 %v5506
    %v5824 = vunpack.c.l.b16 %v5507
    %v5825 = vunpack.c.h.b16 %v5507
    %v5826 = vunpack.c.l.b16 %v5508
    %v5827 = vunpack.c.h.b16 %v5508
    %v5828 = vunpack.c.l.b16 %v5509
    %v5829 = vunpack.c.h.b16 %v5509
    %v5830 = vunpack.c.l.b16 %v5510
    %v5831 = vunpack.c.h.b16 %v5510
    %v5832 = vunpack.c.l.b16 %v5511
    %v5833 = vunpack.c.h.b16 %v5511
    %v5834 = vunpack.c.l.b16 %v5512
    %v5835 = vunpack.c.h.b16 %v5512
    %v5836 = vunpack.c.l.b16 %v5513
    %v5837 = vunpack.c.h.b16 %v5513
    %v5838 = vunpack.c.l.b16 %v5514
    %v5839 = vunpack.c.h.b16 %v5514
    %v5840 = vunpack.c.l.b16 %v5515
    %v5841 = vunpack.c.h.b16 %v5515
    %v5842 = vunpack.c.l.b16 %v5516
    %v5843 = vunpack.c.h.b16 %v5516
    %v5844 = vunpack.c.l.b16 %v5517
    %v5845 = vunpack.c.h.b16 %v5517
    %v5846 = vunpack.c.l.b16 %v5518
    %v5847 = vunpack.c.h.b16 %v5518
    %v5848 = vunpack.c.l.b16 %v5519
    %v5849 = vunpack.c.h.b16 %v5519
    %v5850 = vunpack.c.l.b16 %v5520
    %v5851 = vunpack.c.h.b16 %v5520
    %v5852 = vunpack.c.l.b16 %v5521
    %v5853 = vunpack.c.h.b16 %v5521
    %v5854 = vunpack.c.l.b16 %v5522
    %v5855 = vunpack.c.h.b16 %v5522
    %v5856 = vunpack.c.l.b16 %v5523
    %v5857 = vunpack.c.h.b16 %v5523
    %v5858 = vunpack.c.l.b16 %v5524
    %v5859 = vunpack.c.h.b16 %v5524
    %v5860 = vunpack.c.l.b16 %v5525
    %v5861 = vunpack.c.h.b16 %v5525
    %v5862 = vunpack.c.l.b16 %v5526
    %v5863 = vunpack.c.h.b16 %v5526
    %v5864 = vunpack.c.l.b16 %v5527
    %v5865 = vunpack.c.h.b16 %v5527
    %v5866 = vunpack.c.l.b16 %v5528
    %v5867 = vunpack.c.h.b16 %v5528
    %v5868 = vunpack.c.l.b16 %v5529
    %v5869 = vunpack.c.h.b16 %v5529
    %v5870 = vunpack.c.l.b16 %v5530
    %v5871 = vunpack.c.h.b16 %v5530
    %v5872 = vunpack.c.l.b16 %v5531
    %v5873 = vunpack.c.h.b16 %v5531
    %v5874 = vunpack.c.l.b16 %v5532
    %v5875 = vunpack.c.h.b16 %v5532
    %v5876 = vunpack.c.l.b16 %v5533
    %v5877 = vunpack.c.h.b16 %v5533
    %v5878 = vunpack.c.l.b16 %v5534
    %v5879 = vunpack.c.h.b16 %v5534
    %v5880 = vunpack.c.l.b16 %v5535
    %v5881 = vunpack.c.h.b16 %v5535
    %v5882 = vunpack.c.l.b16 %v5536
    %v5883 = vunpack.c.h.b16 %v5536
    %v5884 = vunpack.c.l.b16 %v5537
    %v5885 = vunpack.c.h.b16 %v5537
    %v5886 = vunpack.c.l.b16 %v5538
    %v5887 = vunpack.c.h.b16 %v5538
    %v5888 = vunpack.c.l.b16 %v5539
    %v5889 = vunpack.c.h.b16 %v5539
    %v5890 = vunpack.c.l.b16 %v5540
    %v5891 = vunpack.c.h.b16 %v5540
    %v5892 = vunpack.c.l.b16 %v5541
    %v5893 = vunpack.c.h.b16 %v5541
    %v5894 = vunpack.c.l.b16 %v5542
    %v5895 = vunpack.c.h.b16 %v5542
    %v5896 = vunpack.c.l.b16 %v5543
    %v5897 = vunpack.c.h.b16 %v5543
    %v5898 = vunpack.c.l.b16 %v5544
    %v5899 = vunpack.c.h.b16 %v5544
    %v5900 = vunpack.c.l.b16 %v5545
    %v5901 = vunpack.c.h.b16 %v5545
    %v5902 = vunpack.c.l.b16 %v5546
    %v5903 = vunpack.c.h.b16 %v5546
    %v5904 = vunpack.c.l.b16 %v5547
    %v5905 = vunpack.c.h.b16 %v5547
    %v5906 = vunpack.c.l.b16 %v5548
    %v5907 = vunpack.c.h.b16 %v5548
    %v5908 = vunpack.c.l.b16 %v5549
    %v5909 = vunpack.c.h.b16 %v5549
    %v5910 = vunpack.c.l.b16 %v5550
    %v5911 = vunpack.c.h.b16 %v5550
    %v5912 = vunpack.c.l.b16 %v5551
    %v5913 = vunpack.c.h.b16 %v5551
    %v5914 = vunpack.c.l.b16 %v5552
    %v5915 = vunpack.c.h.b16 %v5552
    %v5916 = vunpack.c.l.b16 %v5553
    %v5917 = vunpack.c.h.b16 %v5553
    %v5918 = vunpack.c.l.b16 %v5554
    %v5919 = vunpack.c.h.b16 %v5554
    %v5920 = vunpack.c.l.b16 %v5555
    %v5921 = vunpack.c.h.b16 %v5555
    %v5922 = vunpack.c.l.b16 %v5556
    %v5923 = vunpack.c.h.b16 %v5556
    %v5924 = vunpack.c.l.b16 %v5557
    %v5925 = vunpack.c.h.b16 %v5557
    %v5926 = vunpack.c.l.b16 %v5558
    %v5927 = vunpack.c.h.b16 %v5558
    %v5928 = vunpack.c.l.b16 %v5559
    %v5929 = vunpack.c.h.b16 %v5559
    %v5930 = vunpack.c.l.b16 %v5560
    %v5931 = vunpack.c.h.b16 %v5560
    %v5932 = vunpack.c.l.b16 %v5561
    %v5933 = vunpack.c.h.b16 %v5561
    %v5934 = vunpack.c.l.b16 %v5562
    %v5935 = vunpack.c.h.b16 %v5562
    %v5936 = vunpack.c.l.b16 %v5563
    %v5937 = vunpack.c.h.b16 %v5563
    %v5938 = vunpack.c.l.b16 %v5564
    %v5939 = vunpack.c.h.b16 %v5564
    %v5940 = vunpack.c.l.b16 %v5565
    %v5941 = vunpack.c.h.b16 %v5565
    %v5942 = vunpack.c.l.b16 %v5566
    %v5943 = vunpack.c.h.b16 %v5566
    %v5944 = vunpack.c.l.b16 %v5567
    %v5945 = vunpack.c.h.b16 %v5567
    %v5946 = vunpack.c.l.b16 %v5568
    %v5947 = vunpack.c.h.b16 %v5568
    %v5948 = vunpack.c.l.b16 %v5569
    %v5949 = vunpack.c.h.b16 %v5569
    %v5950 = vunpack.c.l.b16 %v5570
    %v5951 = vunpack.c.h.b16 %v5570
    %v5952 = vunpack.c.l.b16 %v5571
    %v5953 = vunpack.c.h.b16 %v5571
    %v5954 = vunpack.c.l.b16 %v5572
    %v5955 = vunpack.c.h.b16 %v5572
    %v5956 = vunpack.c.l.b16 %v5573
    %v5957 = vunpack.c.h.b16 %v5573
    %v5958 = vpack.c.b16 %v5710, %v5702
    %v5959 = vpack.c.b16 %v5711, %v5703
    %v5960 = vpack.c.b16 %v5712, %v5704
    %v5961 = vpack.c.b16 %v5713, %v5705
    %v5962 = vpack.c.b16 %v5714, %v5706
    %v5963 = vpack.c.b16 %v5715, %v5707
    %v5964 = vpack.c.b16 %v5716, %v5708
    %v5965 = vpack.c.b16 %v5717, %v5709
    %v5966 = vpack.c.b16 %v5726, %v5718
    %v5967 = vpack.c.b16 %v5727, %v5719
    %v5968 = vpack.c.b16 %v5728, %v5720
    %v5969 = vpack.c.b16 %v5729, %v5721
    %v5970 = vpack.c.b16 %v5730, %v5722
    %v5971 = vpack.c.b16 %v5731, %v5723
    %v5972 = vpack.c.b16 %v5732, %v5724
    %v5973 = vpack.c.b16 %v5733, %v5725
    %v5974 = vpack.c.b16 %v5742, %v5734
    %v5975 = vpack.c.b16 %v5743, %v5735
    %v5976 = vpack.c.b16 %v5744, %v5736
    %v5977 = vpack.c.b16 %v5745, %v5737
    %v5978 = vpack.c.b16 %v5746, %v5738
    %v5979 = vpack.c.b16 %v5747, %v5739
    %v5980 = vpack.c.b16 %v5748, %v5740
    %v5981 = vpack.c.b16 %v5749, %v5741
    %v5982 = vpack.c.b16 %v5758, %v5750
    %v5983 = vpack.c.b16 %v5759, %v5751
    %v5984 = vpack.c.b16 %v5760, %v5752
    %v5985 = vpack.c.b16 %v5761, %v5753
    %v5986 = vpack.c.b16 %v5762, %v5754
    %v5987 = vpack.c.b16 %v5763, %v5755
    %v5988 = vpack.c.b16 %v5764, %v5756
    %v5989 = vpack.c.b16 %v5765, %v5757
    %v5990 = vpack.c.b16 %v5774, %v5766
    %v5991 = vpack.c.b16 %v5775, %v5767
    %v5992 = vpack.c.b16 %v5776, %v5768
    %v5993 = vpack.c.b16 %v5777, %v5769
    %v5994 = vpack.c.b16 %v5778, %v5770
    %v5995 = vpack.c.b16 %v5779, %v5771
    %v5996 = vpack.c.b16 %v5780, %v5772
    %v5997 = vpack.c.b16 %v5781, %v5773
    %v5998 = vpack.c.b16 %v5790, %v5782
    %v5999 = vpack.c.b16 %v5791, %v5783
    %v6000 = vpack.c.b16 %v5792, %v5784
    %v6001 = vpack.c.b16 %v5793, %v5785
    %v6002 = vpack.c.b16 %v5794, %v5786
    %v6003 = vpack.c.b16 %v5795, %v5787
    %v6004 = vpack.c.b16 %v5796, %v5788
    %v6005 = vpack.c.b16 %v5797, %v5789
    %v6006 = vpack.c.b16 %v5806, %v5798
    %v6007 = vpack.c.b16 %v5807, %v5799
    %v6008 = vpack.c.b16 %v5808, %v5800
    %v6009 = vpack.c.b16 %v5809, %v5801
    %v6010 = vpack.c.b16 %v5810, %v5802
    %v6011 = vpack.c.b16 %v5811, %v5803
    %v6012 = vpack.c.b16 %v5812, %v5804
    %v6013 = vpack.c.b16 %v5813, %v5805
    %v6014 = vpack.c.b16 %v5822, %v5814
    %v6015 = vpack.c.b16 %v5823, %v5815
    %v6016 = vpack.c.b16 %v5824, %v5816
    %v6017 = vpack.c.b16 %v5825, %v5817
    %v6018 = vpack.c.b16 %v5826, %v5818
    %v6019 = vpack.c.b16 %v5827, %v5819
    %v6020 = vpack.c.b16 %v5828, %v5820
    %v6021 = vpack.c.b16 %v5829, %v5821
    %v6022 = vpack.c.b16 %v5838, %v5830
    %v6023 = vpack.c.b16 %v5839, %v5831
    %v6024 = vpack.c.b16 %v5840, %v5832
    %v6025 = vpack.c.b16 %v5841, %v5833
    %v6026 = vpack.c.b16 %v5842, %v5834
    %v6027 = vpack.c.b16 %v5843, %v5835
    %v6028 = vpack.c.b16 %v5844, %v5836
    %v6029 = vpack.c.b16 %v5845, %v5837
    %v6030 = vpack.c.b16 %v5854, %v5846
    %v6031 = vpack.c.b16 %v5855, %v5847
    %v6032 = vpack.c.b16 %v5856, %v5848
    %v6033 = vpack.c.b16 %v5857, %v5849
    %v6034 = vpack.c.b16 %v5858, %v5850
    %v6035 = vpack.c.b16 %v5859, %v5851
    %v6036 = vpack.c.b16 %v5860, %v5852
    %v6037 = vpack.c.b16 %v5861, %v5853
    %v6038 = vpack.c.b16 %v5870, %v5862
    %v6039 = vpack.c.b16 %v5871, %v5863
    %v6040 = vpack.c.b16 %v5872, %v5864
    %v6041 = vpack.c.b16 %v5873, %v5865
    %v6042 = vpack.c.b16 %v5874, %v5866
    %v6043 = vpack.c.b16 %v5875, %v5867
    %v6044 = vpack.c.b16 %v5876, %v5868
    %v6045 = vpack.c.b16 %v5877, %v5869
    %v6046 = vpack.c.b16 %v5886, %v5878
    %v6047 = vpack.c.b16 %v5887, %v5879
    %v6048 = vpack.c.b16 %v5888, %v5880
    %v6049 = vpack.c.b16 %v5889, %v5881
    %v6050 = vpack.c.b16 %v5890, %v5882
    %v6051 = vpack.c.b16 %v5891, %v5883
    %v6052 = vpack.c.b16 %v5892, %v5884
    %v6053 = vpack.c.b16 %v5893, %v5885
    %v6054 = vpack.c.b16 %v5902, %v5894
    %v6055 = vpack.c.b16 %v5903, %v5895
    %v6056 = vpack.c.b16 %v5904, %v5896
    %v6057 = vpack.c.b16 %v5905, %v5897
    %v6058 = vpack.c.b16 %v5906, %v5898
    %v6059 = vpack.c.b16 %v5907, %v5899
    %v6060 = vpack.c.b16 %v5908, %v5900
    %v6061 = vpack.c.b16 %v5909, %v5901
    %v6062 = vpack.c.b16 %v5918, %v5910
    %v6063 = vpack.c.b16 %v5919, %v5911
    %v6064 = vpack.c.b16 %v5920, %v5912
    %v6065 = vpack.c.b16 %v5921, %v5913
    %v6066 = vpack.c.b16 %v5922, %v5914
    %v6067 = vpack.c.b16 %v5923, %v5915
    %v6068 = vpack.c.b16 %v5924, %v5916
    %v6069 = vpack.c.b16 %v5925, %v5917
    %v6070 = vpack.c.b16 %v5934, %v5926
    %v6071 = vpack.c.b16 %v5935, %v5927
    %v6072 = vpack.c.b16 %v5936, %v5928
    %v6073 = vpack.c.b16 %v5937, %v5929
    %v6074 = vpack.c.b16 %v5938, %v5930
    %v6075 = vpack.c.b16 %v5939, %v5931
    %v6076 = vpack.c.b16 %v5940, %v5932
    %v6077 = vpack.c.b16 %v5941, %v5933
    %v6078 = vpack.c.b16 %v5950, %v5942
    %v6079 = vpack.c.b16 %v5951, %v5943
    %v6080 = vpack.c.b16 %v5952, %v5944
    %v6081 = vpack.c.b16 %v5953, %v5945
    %v6082 = vpack.c.b16 %v5954, %v5946
    %v6083 = vpack.c.b16 %v5955, %v5947
    %v6084 = vpack.c.b16 %v5956, %v5948
    %v6085 = vpack.c.b16 %v5957, %v5949
    %6214 = vmatprep.subr.bf16.mxu0 %v5959
    %6215 = vmatpush1.bf16.msra.mxu0 %v5958
    %6216 = vmatprep.subr.bf16.mxu0 %v5967
    %6217 = vmatpush1.bf16.msra.mxu0 %v5966
    %6218 = vmatprep.subr.bf16.mxu0 %v5975
    %6219 = vmatpush1.bf16.msra.mxu0 %v5974
    %6220 = vmatprep.subr.bf16.mxu0 %v5983
    %6221 = vmatpush1.bf16.msra.mxu0 %v5982
    %6222 = vmatprep.subr.bf16.mxu0 %v5991
    %6223 = vmatpush1.bf16.msra.mxu0 %v5990
    %6224 = vmatprep.subr.bf16.mxu0 %v5999
    %6225 = vmatpush1.bf16.msra.mxu0 %v5998
    %6226 = vmatprep.subr.bf16.mxu0 %v6007
    %6227 = vmatpush1.bf16.msra.mxu0 %v6006
    %6228 = vmatprep.subr.bf16.mxu0 %v6015
    %6229 = vmatpush1.bf16.msra.mxu0 %v6014
    %6230 = vmatprep.subr.bf16.mxu0 %v6023
    %6231 = vmatpush1.bf16.msra.mxu0 %v6022
    %6232 = vmatprep.subr.bf16.mxu0 %v6031
    %6233 = vmatpush1.bf16.msra.mxu0 %v6030
    %6234 = vmatprep.subr.bf16.mxu0 %v6039
    %6235 = vmatpush1.bf16.msra.mxu0 %v6038
    %6236 = vmatprep.subr.bf16.mxu0 %v6047
    %6237 = vmatpush1.bf16.msra.mxu0 %v6046
    %6238 = vmatprep.subr.bf16.mxu0 %v6055
    %6239 = vmatpush1.bf16.msra.mxu0 %v6054
    %6240 = vmatprep.subr.bf16.mxu0 %v6063
    %6241 = vmatpush1.bf16.msra.mxu0 %v6062
    %6242 = vmatprep.subr.bf16.mxu0 %v6071
    %6243 = vmatpush1.bf16.msra.mxu0 %v6070
    %6244 = vmatprep.subr.bf16.mxu0 %v6079
    %6245 = vmatpush1.bf16.msra.mxu0 %v6078
    %6246 = vmatprep.mubr.bf16.mxu0 %v5445
    %6247 = vmatmul.mubr.bf16.gmra.mrb[0].mxu0 %v5444
    %v6248 = vpop.f32.mrb[0].mxu0
    %v6249 = vadd.f32 0.0, %v6248
    %v6250 = vpop.f32.mrb[0].mxu0
    %v6251 = vadd.f32 0.0, %v6250
    %v6252 = vpop.f32.mrb[0].mxu0
    %v6253 = vpop.f32.mrb[0].mxu0
    %6254 = vdwg.mxu0
    %6255 = vmatprep.subr.bf16.mxu0 %v5961
    %6256 = vmatpush1.bf16.msra.mxu0 %v5960
    %6257 = vmatprep.subr.bf16.mxu0 %v5969
    %6258 = vmatpush1.bf16.msra.mxu0 %v5968
    %6259 = vmatprep.subr.bf16.mxu0 %v5977
    %6260 = vmatpush1.bf16.msra.mxu0 %v5976
    %6261 = vmatprep.subr.bf16.mxu0 %v5985
    %6262 = vmatpush1.bf16.msra.mxu0 %v5984
    %6263 = vmatprep.subr.bf16.mxu0 %v5993
    %6264 = vmatpush1.bf16.msra.mxu0 %v5992
    %6265 = vmatprep.subr.bf16.mxu0 %v6001
    %6266 = vmatpush1.bf16.msra.mxu0 %v6000
    %6267 = vmatprep.subr.bf16.mxu0 %v6009
    %6268 = vmatpush1.bf16.msra.mxu0 %v6008
    %6269 = vmatprep.subr.bf16.mxu0 %v6017
    %6270 = vmatpush1.bf16.msra.mxu0 %v6016
    %6271 = vmatprep.subr.bf16.mxu0 %v6025
    %6272 = vmatpush1.bf16.msra.mxu0 %v6024
    %6273 = vmatprep.subr.bf16.mxu0 %v6033
    %6274 = vmatpush1.bf16.msra.mxu0 %v6032
    %6275 = vmatprep.subr.bf16.mxu0 %v6041
    %6276 = vmatpush1.bf16.msra.mxu0 %v6040
    %6277 = vmatprep.subr.bf16.mxu0 %v6049
    %6278 = vmatpush1.bf16.msra.mxu0 %v6048
    %6279 = vmatprep.subr.bf16.mxu0 %v6057
    %6280 = vmatpush1.bf16.msra.mxu0 %v6056
    %6281 = vmatprep.subr.bf16.mxu0 %v6065
    %6282 = vmatpush1.bf16.msra.mxu0 %v6064
    %6283 = vmatprep.subr.bf16.mxu0 %v6073
    %6284 = vmatpush1.bf16.msra.mxu0 %v6072
    %6285 = vmatprep.subr.bf16.mxu0 %v6081
    %6286 = vmatpush1.bf16.msra.mxu0 %v6080
    %6287 = vmatprep.mubr.bf16.mxu0 %v5445
    %6288 = vmatmul.mubr.bf16.gmra.mrb[0].mxu0 %v5444
    %v6289 = vpop.f32.mrb[0].mxu0
    %v6290 = vadd.f32 0.0, %v6289
    %v6291 = vpop.f32.mrb[0].mxu0
    %v6292 = vadd.f32 0.0, %v6291
    %v6293 = vpop.f32.mrb[0].mxu0
    %v6294 = vpop.f32.mrb[0].mxu0
    %6295 = vdwg.mxu0
    %6296 = vmatprep.subr.bf16.mxu0 %v5963
    %6297 = vmatpush1.bf16.msra.mxu0 %v5962
    %6298 = vmatprep.subr.bf16.mxu0 %v5971
    %6299 = vmatpush1.bf16.msra.mxu0 %v5970
    %6300 = vmatprep.subr.bf16.mxu0 %v5979
    %6301 = vmatpush1.bf16.msra.mxu0 %v5978
    %6302 = vmatprep.subr.bf16.mxu0 %v5987
    %6303 = vmatpush1.bf16.msra.mxu0 %v5986
    %6304 = vmatprep.subr.bf16.mxu0 %v5995
    %6305 = vmatpush1.bf16.msra.mxu0 %v5994
    %6306 = vmatprep.subr.bf16.mxu0 %v6003
    %6307 = vmatpush1.bf16.msra.mxu0 %v6002
    %6308 = vmatprep.subr.bf16.mxu0 %v6011
    %6309 = vmatpush1.bf16.msra.mxu0 %v6010
    %6310 = vmatprep.subr.bf16.mxu0 %v6019
    %6311 = vmatpush1.bf16.msra.mxu0 %v6018
    %6312 = vmatprep.subr.bf16.mxu0 %v6027
    %6313 = vmatpush1.bf16.msra.mxu0 %v6026
    %6314 = vmatprep.subr.bf16.mxu0 %v6035
    %6315 = vmatpush1.bf16.msra.mxu0 %v6034
    %6316 = vmatprep.subr.bf16.mxu0 %v6043
    %6317 = vmatpush1.bf16.msra.mxu0 %v6042
    %6318 = vmatprep.subr.bf16.mxu0 %v6051
    %6319 = vmatpush1.bf16.msra.mxu0 %v6050
    %6320 = vmatprep.subr.bf16.mxu0 %v6059
    %6321 = vmatpush1.bf16.msra.mxu0 %v6058
    %6322 = vmatprep.subr.bf16.mxu0 %v6067
    %6323 = vmatpush1.bf16.msra.mxu0 %v6066
    %6324 = vmatprep.subr.bf16.mxu0 %v6075
    %6325 = vmatpush1.bf16.msra.mxu0 %v6074
    %6326 = vmatprep.subr.bf16.mxu0 %v6083
    %6327 = vmatpush1.bf16.msra.mxu0 %v6082
    %6328 = vmatprep.mubr.bf16.mxu0 %v5445
    %6329 = vmatmul.mubr.bf16.gmra.mrb[0].mxu0 %v5444
    %v6330 = vpop.f32.mrb[0].mxu0
    %v6331 = vadd.f32 0.0, %v6330
    %v6332 = vpop.f32.mrb[0].mxu0
    %v6333 = vadd.f32 0.0, %v6332
    %v6334 = vpop.f32.mrb[0].mxu0
    %v6335 = vpop.f32.mrb[0].mxu0
    %6336 = vdwg.mxu0
    %6337 = vmatprep.subr.bf16.mxu0 %v5965
    %6338 = vmatpush1.bf16.msra.mxu0 %v5964
    %6339 = vmatprep.subr.bf16.mxu0 %v5973
    %6340 = vmatpush1.bf16.msra.mxu0 %v5972
    %6341 = vmatprep.subr.bf16.mxu0 %v5981
    %6342 = vmatpush1.bf16.msra.mxu0 %v5980
    %6343 = vmatprep.subr.bf16.mxu0 %v5989
    %6344 = vmatpush1.bf16.msra.mxu0 %v5988
    %6345 = vmatprep.subr.bf16.mxu0 %v5997
    %6346 = vmatpush1.bf16.msra.mxu0 %v5996
    %6347 = vmatprep.subr.bf16.mxu0 %v6005
    %6348 = vmatpush1.bf16.msra.mxu0 %v6004
    %6349 = vmatprep.subr.bf16.mxu0 %v6013
    %6350 = vmatpush1.bf16.msra.mxu0 %v6012
    %6351 = vmatprep.subr.bf16.mxu0 %v6021
    %6352 = vmatpush1.bf16.msra.mxu0 %v6020
    %6353 = vmatprep.subr.bf16.mxu0 %v6029
    %6354 = vmatpush1.bf16.msra.mxu0 %v6028
    %6355 = vmatprep.subr.bf16.mxu0 %v6037
    %6356 = vmatpush1.bf16.msra.mxu0 %v6036
    %6357 = vmatprep.subr.bf16.mxu0 %v6045
    %6358 = vmatpush1.bf16.msra.mxu0 %v6044
    %6359 = vmatprep.subr.bf16.mxu0 %v6053
    %6360 = vmatpush1.bf16.msra.mxu0 %v6052
    %6361 = vmatprep.subr.bf16.mxu0 %v6061
    %6362 = vmatpush1.bf16.msra.mxu0 %v6060
    %6363 = vmatprep.subr.bf16.mxu0 %v6069
    %6364 = vmatpush1.bf16.msra.mxu0 %v6068
    %6365 = vmatprep.subr.bf16.mxu0 %v6077
    %6366 = vmatpush1.bf16.msra.mxu0 %v6076
    %6367 = vmatprep.subr.bf16.mxu0 %v6085
    %6368 = vmatpush1.bf16.msra.mxu0 %v6084
    %6369 = vmatprep.mubr.bf16.mxu0 %v5445
    %6370 = vmatmul.mubr.bf16.gmra.mrb[0].mxu0 %v5444
    %v6371 = vpop.f32.mrb[0].mxu0
    %v6372 = vadd.f32 0.0, %v6371
    %v6373 = vpop.f32.mrb[0].mxu0
    %v6374 = vadd.f32 0.0, %v6373
    %v6375 = vpop.f32.mrb[0].mxu0
    %v6376 = vpop.f32.mrb[0].mxu0
    %6377 = vdwg.mxu0
    %v6386 = vrot.slane %v6249, 4
    %v6387 = vrot.slane %v6251, 4
    %v6388 = vrot.slane %v6290, 4
    %v6389 = vrot.slane %v6292, 4
    %v6390 = vrot.slane %v6331, 4
    %v6391 = vrot.slane %v6333, 4
    %v6392 = vrot.slane %v6372, 4
    %v6393 = vrot.slane %v6374, 4
    %v6402 = vadd.f32 %v266, %v6386
    %v6403 = vadd.f32 %v268, %v6387
    %v6404 = vadd.f32 %v319, %v6388
    %v6405 = vadd.f32 %v321, %v6389
    %v6406 = vadd.f32 %v372, %v6390
    %v6407 = vadd.f32 %v374, %v6391
    %v6408 = vadd.f32 %v425, %v6392
    %v6409 = vadd.f32 %v427, %v6393
    %v6410 = vmul.f32 %v6402, 0.5
    %v6411 = vmul.f32 %v6403, 0.5
    %v6412 = vtanh.pop %v6410
    %v6413 = vtanh.pop %v6411
    %v6414 = vadd.f32 %v6412, 1.0
    %v6415 = vadd.f32 %v6413, 1.0
    %v6416 = vmul.f32 %v6414, 0.5
    %v6417 = vmul.f32 %v6415, 0.5
    %v6418 = vmul.f32 %v6404, 0.5
    %v6419 = vmul.f32 %v6405, 0.5
    %v6420 = vtanh.pop %v6418
    %v6421 = vtanh.pop %v6419
    %v6422 = vadd.f32 %v6420, 1.0
    %v6423 = vadd.f32 %v6421, 1.0
    %v6424 = vmul.f32 %v6422, 0.5
    %v6425 = vmul.f32 %v6423, 0.5
    %v6426 = vtanh.pop %v6406
    %v6427 = vtanh.pop %v6407
    %v6428 = vmul.f32 %v6408, 0.5
    %v6429 = vmul.f32 %v6409, 0.5
    %v6430 = vtanh.pop %v6428
    %v6431 = vtanh.pop %v6429
    %v6432 = vadd.f32 %v6430, 1.0
    %v6433 = vadd.f32 %v6431, 1.0
    %v6434 = vmul.f32 %v6432, 0.5
    %v6435 = vmul.f32 %v6433, 0.5
    %v6438 = vrot.slane %v5432, 4
    %v6439 = vrot.slane %v5433, 4
    %v6442 = vmul.f32 %v6424, %v6438
    %v6443 = vmul.f32 %v6425, %v6439
    %v6444 = vmul.f32 %v6416, %v6426
    %v6445 = vmul.f32 %v6417, %v6427
    %v6446 = vadd.f32 %v6442, %v6444
    %v6447 = vadd.f32 %v6443, %v6445
    %v6448 = vtanh.pop %v6446
    %v6449 = vtanh.pop %v6447
    %v6450 = vmul.f32 %v6434, %v6448
    %v6451 = vmul.f32 %v6435, %v6449
    %v6454 = vcombine.high %v6450, %v6451
    %s6456 = scalar_lea.vmem [#allocation10], 40
    %6457 = vst [vmem:[%s6456] sm:$0xff] %v6454
    %v6458 = vpack.c.bf16 %v6450, %v6450
    %v6459 = vpack.c.bf16 %v6451, %v6451
    %v6460 = vld [vmem:[#allocation9] sm:$0xff]
    %v6461 = vld [vmem:[#allocation9 + $0x8] sm:$0xff]
    %v6462 = vld [vmem:[#allocation9 + $0x10] sm:$0xff]
    %v6463 = vld [vmem:[#allocation9 + $0x18] sm:$0xff]
    %v6464 = vld [vmem:[#allocation9 + $0x20] sm:$0xff]
    %v6465 = vld [vmem:[#allocation9 + $0x28] sm:$0xff]
    %v6466 = vld [vmem:[#allocation9 + $0x30] sm:$0xff]
    %v6467 = vld [vmem:[#allocation9 + $0x38] sm:$0xff]
    %v6468 = vld [vmem:[#allocation9 + $0x40] sm:$0xff]
    %v6469 = vld [vmem:[#allocation9 + $0x48] sm:$0xff]
    %v6470 = vld [vmem:[#allocation9 + $0x50] sm:$0xff]
    %v6471 = vld [vmem:[#allocation9 + $0x58] sm:$0xff]
    %v6472 = vld [vmem:[#allocation9 + $0x60] sm:$0xff]
    %v6473 = vld [vmem:[#allocation9 + $0x68] sm:$0xff]
    %v6474 = vld [vmem:[#allocation9 + $0x70] sm:$0xff]
    %v6475 = vld [vmem:[#allocation9 + $0x78] sm:$0xff]
    %v6476 = vld [vmem:[#allocation9 + $0x80] sm:$0xff]
    %v6477 = vld [vmem:[#allocation9 + $0x88] sm:$0xff]
    %v6478 = vld [vmem:[#allocation9 + $0x90] sm:$0xff]
    %v6479 = vld [vmem:[#allocation9 + $0x98] sm:$0xff]
    %v6480 = vld [vmem:[#allocation9 + $0xa0] sm:$0xff]
    %v6481 = vld [vmem:[#allocation9 + $0xa8] sm:$0xff]
    %v6482 = vld [vmem:[#allocation9 + $0xb0] sm:$0xff]
    %v6483 = vld [vmem:[#allocation9 + $0xb8] sm:$0xff]
    %v6484 = vld [vmem:[#allocation9 + $0xc0] sm:$0xff]
    %v6485 = vld [vmem:[#allocation9 + $0xc8] sm:$0xff]
    %v6486 = vld [vmem:[#allocation9 + $0xd0] sm:$0xff]
    %v6487 = vld [vmem:[#allocation9 + $0xd8] sm:$0xff]
    %v6488 = vld [vmem:[#allocation9 + $0xe0] sm:$0xff]
    %v6489 = vld [vmem:[#allocation9 + $0xe8] sm:$0xff]
    %v6490 = vld [vmem:[#allocation9 + $0xf0] sm:$0xff]
    %v6491 = vld [vmem:[#allocation9 + $0xf8] sm:$0xff]
    %v6492 = vld [vmem:[#allocation9 + $0x100] sm:$0xff]
    %v6493 = vld [vmem:[#allocation9 + $0x108] sm:$0xff]
    %v6494 = vld [vmem:[#allocation9 + $0x110] sm:$0xff]
    %v6495 = vld [vmem:[#allocation9 + $0x118] sm:$0xff]
    %v6496 = vld [vmem:[#allocation9 + $0x120] sm:$0xff]
    %v6497 = vld [vmem:[#allocation9 + $0x128] sm:$0xff]
    %v6498 = vld [vmem:[#allocation9 + $0x130] sm:$0xff]
    %v6499 = vld [vmem:[#allocation9 + $0x138] sm:$0xff]
    %v6500 = vld [vmem:[#allocation9 + $0x140] sm:$0xff]
    %v6501 = vld [vmem:[#allocation9 + $0x148] sm:$0xff]
    %v6502 = vld [vmem:[#allocation9 + $0x150] sm:$0xff]
    %v6503 = vld [vmem:[#allocation9 + $0x158] sm:$0xff]
    %v6504 = vld [vmem:[#allocation9 + $0x160] sm:$0xff]
    %v6505 = vld [vmem:[#allocation9 + $0x168] sm:$0xff]
    %v6506 = vld [vmem:[#allocation9 + $0x170] sm:$0xff]
    %v6507 = vld [vmem:[#allocation9 + $0x178] sm:$0xff]
    %v6508 = vld [vmem:[#allocation9 + $0x180] sm:$0xff]
    %v6509 = vld [vmem:[#allocation9 + $0x188] sm:$0xff]
    %v6510 = vld [vmem:[#allocation9 + $0x190] sm:$0xff]
    %v6511 = vld [vmem:[#allocation9 + $0x198] sm:$0xff]
    %v6512 = vld [vmem:[#allocation9 + $0x1a0] sm:$0xff]
    %v6513 = vld [vmem:[#allocation9 + $0x1a8] sm:$0xff]
    %v6514 = vld [vmem:[#allocation9 + $0x1b0] sm:$0xff]
    %v6515 = vld [vmem:[#allocation9 + $0x1b8] sm:$0xff]
    %v6516 = vld [vmem:[#allocation9 + $0x1c0] sm:$0xff]
    %v6517 = vld [vmem:[#allocation9 + $0x1c8] sm:$0xff]
    %v6518 = vld [vmem:[#allocation9 + $0x1d0] sm:$0xff]
    %v6519 = vld [vmem:[#allocation9 + $0x1d8] sm:$0xff]
    %v6520 = vld [vmem:[#allocation9 + $0x1e0] sm:$0xff]
    %v6521 = vld [vmem:[#allocation9 + $0x1e8] sm:$0xff]
    %v6522 = vld [vmem:[#allocation9 + $0x1f0] sm:$0xff]
    %v6523 = vld [vmem:[#allocation9 + $0x1f8] sm:$0xff]
    %v6524 = vld [vmem:[#allocation9 + $0x200] sm:$0xff]
    %v6525 = vld [vmem:[#allocation9 + $0x208] sm:$0xff]
    %v6526 = vld [vmem:[#allocation9 + $0x210] sm:$0xff]
    %v6527 = vld [vmem:[#allocation9 + $0x218] sm:$0xff]
    %v6528 = vld [vmem:[#allocation9 + $0x220] sm:$0xff]
    %v6529 = vld [vmem:[#allocation9 + $0x228] sm:$0xff]
    %v6530 = vld [vmem:[#allocation9 + $0x230] sm:$0xff]
    %v6531 = vld [vmem:[#allocation9 + $0x238] sm:$0xff]
    %v6532 = vld [vmem:[#allocation9 + $0x240] sm:$0xff]
    %v6533 = vld [vmem:[#allocation9 + $0x248] sm:$0xff]
    %v6534 = vld [vmem:[#allocation9 + $0x250] sm:$0xff]
    %v6535 = vld [vmem:[#allocation9 + $0x258] sm:$0xff]
    %v6536 = vld [vmem:[#allocation9 + $0x260] sm:$0xff]
    %v6537 = vld [vmem:[#allocation9 + $0x268] sm:$0xff]
    %v6538 = vld [vmem:[#allocation9 + $0x270] sm:$0xff]
    %v6539 = vld [vmem:[#allocation9 + $0x278] sm:$0xff]
    %v6540 = vld [vmem:[#allocation9 + $0x280] sm:$0xff]
    %v6541 = vld [vmem:[#allocation9 + $0x288] sm:$0xff]
    %v6542 = vld [vmem:[#allocation9 + $0x290] sm:$0xff]
    %v6543 = vld [vmem:[#allocation9 + $0x298] sm:$0xff]
    %v6544 = vld [vmem:[#allocation9 + $0x2a0] sm:$0xff]
    %v6545 = vld [vmem:[#allocation9 + $0x2a8] sm:$0xff]
    %v6546 = vld [vmem:[#allocation9 + $0x2b0] sm:$0xff]
    %v6547 = vld [vmem:[#allocation9 + $0x2b8] sm:$0xff]
    %v6548 = vld [vmem:[#allocation9 + $0x2c0] sm:$0xff]
    %v6549 = vld [vmem:[#allocation9 + $0x2c8] sm:$0xff]
    %v6550 = vld [vmem:[#allocation9 + $0x2d0] sm:$0xff]
    %v6551 = vld [vmem:[#allocation9 + $0x2d8] sm:$0xff]
    %v6552 = vld [vmem:[#allocation9 + $0x2e0] sm:$0xff]
    %v6553 = vld [vmem:[#allocation9 + $0x2e8] sm:$0xff]
    %v6554 = vld [vmem:[#allocation9 + $0x2f0] sm:$0xff]
    %v6555 = vld [vmem:[#allocation9 + $0x2f8] sm:$0xff]
    %v6556 = vld [vmem:[#allocation9 + $0x300] sm:$0xff]
    %v6557 = vld [vmem:[#allocation9 + $0x308] sm:$0xff]
    %v6558 = vld [vmem:[#allocation9 + $0x310] sm:$0xff]
    %v6559 = vld [vmem:[#allocation9 + $0x318] sm:$0xff]
    %v6560 = vld [vmem:[#allocation9 + $0x320] sm:$0xff]
    %v6561 = vld [vmem:[#allocation9 + $0x328] sm:$0xff]
    %v6562 = vld [vmem:[#allocation9 + $0x330] sm:$0xff]
    %v6563 = vld [vmem:[#allocation9 + $0x338] sm:$0xff]
    %v6564 = vld [vmem:[#allocation9 + $0x340] sm:$0xff]
    %v6565 = vld [vmem:[#allocation9 + $0x348] sm:$0xff]
    %v6566 = vld [vmem:[#allocation9 + $0x350] sm:$0xff]
    %v6567 = vld [vmem:[#allocation9 + $0x358] sm:$0xff]
    %v6568 = vld [vmem:[#allocation9 + $0x360] sm:$0xff]
    %v6569 = vld [vmem:[#allocation9 + $0x368] sm:$0xff]
    %v6570 = vld [vmem:[#allocation9 + $0x370] sm:$0xff]
    %v6571 = vld [vmem:[#allocation9 + $0x378] sm:$0xff]
    %v6572 = vld [vmem:[#allocation9 + $0x380] sm:$0xff]
    %v6573 = vld [vmem:[#allocation9 + $0x388] sm:$0xff]
    %v6574 = vld [vmem:[#allocation9 + $0x390] sm:$0xff]
    %v6575 = vld [vmem:[#allocation9 + $0x398] sm:$0xff]
    %v6576 = vld [vmem:[#allocation9 + $0x3a0] sm:$0xff]
    %v6577 = vld [vmem:[#allocation9 + $0x3a8] sm:$0xff]
    %v6578 = vld [vmem:[#allocation9 + $0x3b0] sm:$0xff]
    %v6579 = vld [vmem:[#allocation9 + $0x3b8] sm:$0xff]
    %v6580 = vld [vmem:[#allocation9 + $0x3c0] sm:$0xff]
    %v6581 = vld [vmem:[#allocation9 + $0x3c8] sm:$0xff]
    %v6582 = vld [vmem:[#allocation9 + $0x3d0] sm:$0xff]
    %v6583 = vld [vmem:[#allocation9 + $0x3d8] sm:$0xff]
    %v6584 = vld [vmem:[#allocation9 + $0x3e0] sm:$0xff]
    %v6585 = vld [vmem:[#allocation9 + $0x3e8] sm:$0xff]
    %v6586 = vld [vmem:[#allocation9 + $0x3f0] sm:$0xff]
    %v6587 = vld [vmem:[#allocation9 + $0x3f8] sm:$0xff]
    %v6590 = vrot.slane %v6458, 2
    %v6591 = vrot.slane %v6459, 2
    %v6722 = vunpack.c.l.b16 %v6460
    %v6723 = vunpack.c.h.b16 %v6460
    %v6724 = vunpack.c.l.b16 %v6461
    %v6725 = vunpack.c.h.b16 %v6461
    %v6726 = vunpack.c.l.b16 %v6462
    %v6727 = vunpack.c.h.b16 %v6462
    %v6728 = vunpack.c.l.b16 %v6463
    %v6729 = vunpack.c.h.b16 %v6463
    %v6730 = vunpack.c.l.b16 %v6464
    %v6731 = vunpack.c.h.b16 %v6464
    %v6732 = vunpack.c.l.b16 %v6465
    %v6733 = vunpack.c.h.b16 %v6465
    %v6734 = vunpack.c.l.b16 %v6466
    %v6735 = vunpack.c.h.b16 %v6466
    %v6736 = vunpack.c.l.b16 %v6467
    %v6737 = vunpack.c.h.b16 %v6467
    %v6738 = vunpack.c.l.b16 %v6468
    %v6739 = vunpack.c.h.b16 %v6468
    %v6740 = vunpack.c.l.b16 %v6469
    %v6741 = vunpack.c.h.b16 %v6469
    %v6742 = vunpack.c.l.b16 %v6470
    %v6743 = vunpack.c.h.b16 %v6470
    %v6744 = vunpack.c.l.b16 %v6471
    %v6745 = vunpack.c.h.b16 %v6471
    %v6746 = vunpack.c.l.b16 %v6472
    %v6747 = vunpack.c.h.b16 %v6472
    %v6748 = vunpack.c.l.b16 %v6473
    %v6749 = vunpack.c.h.b16 %v6473
    %v6750 = vunpack.c.l.b16 %v6474
    %v6751 = vunpack.c.h.b16 %v6474
    %v6752 = vunpack.c.l.b16 %v6475
    %v6753 = vunpack.c.h.b16 %v6475
    %v6754 = vunpack.c.l.b16 %v6476
    %v6755 = vunpack.c.h.b16 %v6476
    %v6756 = vunpack.c.l.b16 %v6477
    %v6757 = vunpack.c.h.b16 %v6477
    %v6758 = vunpack.c.l.b16 %v6478
    %v6759 = vunpack.c.h.b16 %v6478
    %v6760 = vunpack.c.l.b16 %v6479
    %v6761 = vunpack.c.h.b16 %v6479
    %v6762 = vunpack.c.l.b16 %v6480
    %v6763 = vunpack.c.h.b16 %v6480
    %v6764 = vunpack.c.l.b16 %v6481
    %v6765 = vunpack.c.h.b16 %v6481
    %v6766 = vunpack.c.l.b16 %v6482
    %v6767 = vunpack.c.h.b16 %v6482
    %v6768 = vunpack.c.l.b16 %v6483
    %v6769 = vunpack.c.h.b16 %v6483
    %v6770 = vunpack.c.l.b16 %v6484
    %v6771 = vunpack.c.h.b16 %v6484
    %v6772 = vunpack.c.l.b16 %v6485
    %v6773 = vunpack.c.h.b16 %v6485
    %v6774 = vunpack.c.l.b16 %v6486
    %v6775 = vunpack.c.h.b16 %v6486
    %v6776 = vunpack.c.l.b16 %v6487
    %v6777 = vunpack.c.h.b16 %v6487
    %v6778 = vunpack.c.l.b16 %v6488
    %v6779 = vunpack.c.h.b16 %v6488
    %v6780 = vunpack.c.l.b16 %v6489
    %v6781 = vunpack.c.h.b16 %v6489
    %v6782 = vunpack.c.l.b16 %v6490
    %v6783 = vunpack.c.h.b16 %v6490
    %v6784 = vunpack.c.l.b16 %v6491
    %v6785 = vunpack.c.h.b16 %v6491
    %v6786 = vunpack.c.l.b16 %v6492
    %v6787 = vunpack.c.h.b16 %v6492
    %v6788 = vunpack.c.l.b16 %v6493
    %v6789 = vunpack.c.h.b16 %v6493
    %v6790 = vunpack.c.l.b16 %v6494
    %v6791 = vunpack.c.h.b16 %v6494
    %v6792 = vunpack.c.l.b16 %v6495
    %v6793 = vunpack.c.h.b16 %v6495
    %v6794 = vunpack.c.l.b16 %v6496
    %v6795 = vunpack.c.h.b16 %v6496
    %v6796 = vunpack.c.l.b16 %v6497
    %v6797 = vunpack.c.h.b16 %v6497
    %v6798 = vunpack.c.l.b16 %v6498
    %v6799 = vunpack.c.h.b16 %v6498
    %v6800 = vunpack.c.l.b16 %v6499
    %v6801 = vunpack.c.h.b16 %v6499
    %v6802 = vunpack.c.l.b16 %v6500
    %v6803 = vunpack.c.h.b16 %v6500
    %v6804 = vunpack.c.l.b16 %v6501
    %v6805 = vunpack.c.h.b16 %v6501
    %v6806 = vunpack.c.l.b16 %v6502
    %v6807 = vunpack.c.h.b16 %v6502
    %v6808 = vunpack.c.l.b16 %v6503
    %v6809 = vunpack.c.h.b16 %v6503
    %v6810 = vunpack.c.l.b16 %v6504
    %v6811 = vunpack.c.h.b16 %v6504
    %v6812 = vunpack.c.l.b16 %v6505
    %v6813 = vunpack.c.h.b16 %v6505
    %v6814 = vunpack.c.l.b16 %v6506
    %v6815 = vunpack.c.h.b16 %v6506
    %v6816 = vunpack.c.l.b16 %v6507
    %v6817 = vunpack.c.h.b16 %v6507
    %v6818 = vunpack.c.l.b16 %v6508
    %v6819 = vunpack.c.h.b16 %v6508
    %v6820 = vunpack.c.l.b16 %v6509
    %v6821 = vunpack.c.h.b16 %v6509
    %v6822 = vunpack.c.l.b16 %v6510
    %v6823 = vunpack.c.h.b16 %v6510
    %v6824 = vunpack.c.l.b16 %v6511
    %v6825 = vunpack.c.h.b16 %v6511
    %v6826 = vunpack.c.l.b16 %v6512
    %v6827 = vunpack.c.h.b16 %v6512
    %v6828 = vunpack.c.l.b16 %v6513
    %v6829 = vunpack.c.h.b16 %v6513
    %v6830 = vunpack.c.l.b16 %v6514
    %v6831 = vunpack.c.h.b16 %v6514
    %v6832 = vunpack.c.l.b16 %v6515
    %v6833 = vunpack.c.h.b16 %v6515
    %v6834 = vunpack.c.l.b16 %v6516
    %v6835 = vunpack.c.h.b16 %v6516
    %v6836 = vunpack.c.l.b16 %v6517
    %v6837 = vunpack.c.h.b16 %v6517
    %v6838 = vunpack.c.l.b16 %v6518
    %v6839 = vunpack.c.h.b16 %v6518
    %v6840 = vunpack.c.l.b16 %v6519
    %v6841 = vunpack.c.h.b16 %v6519
    %v6842 = vunpack.c.l.b16 %v6520
    %v6843 = vunpack.c.h.b16 %v6520
    %v6844 = vunpack.c.l.b16 %v6521
    %v6845 = vunpack.c.h.b16 %v6521
    %v6846 = vunpack.c.l.b16 %v6522
    %v6847 = vunpack.c.h.b16 %v6522
    %v6848 = vunpack.c.l.b16 %v6523
    %v6849 = vunpack.c.h.b16 %v6523
    %v6850 = vunpack.c.l.b16 %v6524
    %v6851 = vunpack.c.h.b16 %v6524
    %v6852 = vunpack.c.l.b16 %v6525
    %v6853 = vunpack.c.h.b16 %v6525
    %v6854 = vunpack.c.l.b16 %v6526
    %v6855 = vunpack.c.h.b16 %v6526
    %v6856 = vunpack.c.l.b16 %v6527
    %v6857 = vunpack.c.h.b16 %v6527
    %v6858 = vunpack.c.l.b16 %v6528
    %v6859 = vunpack.c.h.b16 %v6528
    %v6860 = vunpack.c.l.b16 %v6529
    %v6861 = vunpack.c.h.b16 %v6529
    %v6862 = vunpack.c.l.b16 %v6530
    %v6863 = vunpack.c.h.b16 %v6530
    %v6864 = vunpack.c.l.b16 %v6531
    %v6865 = vunpack.c.h.b16 %v6531
    %v6866 = vunpack.c.l.b16 %v6532
    %v6867 = vunpack.c.h.b16 %v6532
    %v6868 = vunpack.c.l.b16 %v6533
    %v6869 = vunpack.c.h.b16 %v6533
    %v6870 = vunpack.c.l.b16 %v6534
    %v6871 = vunpack.c.h.b16 %v6534
    %v6872 = vunpack.c.l.b16 %v6535
    %v6873 = vunpack.c.h.b16 %v6535
    %v6874 = vunpack.c.l.b16 %v6536
    %v6875 = vunpack.c.h.b16 %v6536
    %v6876 = vunpack.c.l.b16 %v6537
    %v6877 = vunpack.c.h.b16 %v6537
    %v6878 = vunpack.c.l.b16 %v6538
    %v6879 = vunpack.c.h.b16 %v6538
    %v6880 = vunpack.c.l.b16 %v6539
    %v6881 = vunpack.c.h.b16 %v6539
    %v6882 = vunpack.c.l.b16 %v6540
    %v6883 = vunpack.c.h.b16 %v6540
    %v6884 = vunpack.c.l.b16 %v6541
    %v6885 = vunpack.c.h.b16 %v6541
    %v6886 = vunpack.c.l.b16 %v6542
    %v6887 = vunpack.c.h.b16 %v6542
    %v6888 = vunpack.c.l.b16 %v6543
    %v6889 = vunpack.c.h.b16 %v6543
    %v6890 = vunpack.c.l.b16 %v6544
    %v6891 = vunpack.c.h.b16 %v6544
    %v6892 = vunpack.c.l.b16 %v6545
    %v6893 = vunpack.c.h.b16 %v6545
    %v6894 = vunpack.c.l.b16 %v6546
    %v6895 = vunpack.c.h.b16 %v6546
    %v6896 = vunpack.c.l.b16 %v6547
    %v6897 = vunpack.c.h.b16 %v6547
    %v6898 = vunpack.c.l.b16 %v6548
    %v6899 = vunpack.c.h.b16 %v6548
    %v6900 = vunpack.c.l.b16 %v6549
    %v6901 = vunpack.c.h.b16 %v6549
    %v6902 = vunpack.c.l.b16 %v6550
    %v6903 = vunpack.c.h.b16 %v6550
    %v6904 = vunpack.c.l.b16 %v6551
    %v6905 = vunpack.c.h.b16 %v6551
    %v6906 = vunpack.c.l.b16 %v6552
    %v6907 = vunpack.c.h.b16 %v6552
    %v6908 = vunpack.c.l.b16 %v6553
    %v6909 = vunpack.c.h.b16 %v6553
    %v6910 = vunpack.c.l.b16 %v6554
    %v6911 = vunpack.c.h.b16 %v6554
    %v6912 = vunpack.c.l.b16 %v6555
    %v6913 = vunpack.c.h.b16 %v6555
    %v6914 = vunpack.c.l.b16 %v6556
    %v6915 = vunpack.c.h.b16 %v6556
    %v6916 = vunpack.c.l.b16 %v6557
    %v6917 = vunpack.c.h.b16 %v6557
    %v6918 = vunpack.c.l.b16 %v6558
    %v6919 = vunpack.c.h.b16 %v6558
    %v6920 = vunpack.c.l.b16 %v6559
    %v6921 = vunpack.c.h.b16 %v6559
    %v6922 = vunpack.c.l.b16 %v6560
    %v6923 = vunpack.c.h.b16 %v6560
    %v6924 = vunpack.c.l.b16 %v6561
    %v6925 = vunpack.c.h.b16 %v6561
    %v6926 = vunpack.c.l.b16 %v6562
    %v6927 = vunpack.c.h.b16 %v6562
    %v6928 = vunpack.c.l.b16 %v6563
    %v6929 = vunpack.c.h.b16 %v6563
    %v6930 = vunpack.c.l.b16 %v6564
    %v6931 = vunpack.c.h.b16 %v6564
    %v6932 = vunpack.c.l.b16 %v6565
    %v6933 = vunpack.c.h.b16 %v6565
    %v6934 = vunpack.c.l.b16 %v6566
    %v6935 = vunpack.c.h.b16 %v6566
    %v6936 = vunpack.c.l.b16 %v6567
    %v6937 = vunpack.c.h.b16 %v6567
    %v6938 = vunpack.c.l.b16 %v6568
    %v6939 = vunpack.c.h.b16 %v6568
    %v6940 = vunpack.c.l.b16 %v6569
    %v6941 = vunpack.c.h.b16 %v6569
    %v6942 = vunpack.c.l.b16 %v6570
    %v6943 = vunpack.c.h.b16 %v6570
    %v6944 = vunpack.c.l.b16 %v6571
    %v6945 = vunpack.c.h.b16 %v6571
    %v6946 = vunpack.c.l.b16 %v6572
    %v6947 = vunpack.c.h.b16 %v6572
    %v6948 = vunpack.c.l.b16 %v6573
    %v6949 = vunpack.c.h.b16 %v6573
    %v6950 = vunpack.c.l.b16 %v6574
    %v6951 = vunpack.c.h.b16 %v6574
    %v6952 = vunpack.c.l.b16 %v6575
    %v6953 = vunpack.c.h.b16 %v6575
    %v6954 = vunpack.c.l.b16 %v6576
    %v6955 = vunpack.c.h.b16 %v6576
    %v6956 = vunpack.c.l.b16 %v6577
    %v6957 = vunpack.c.h.b16 %v6577
    %v6958 = vunpack.c.l.b16 %v6578
    %v6959 = vunpack.c.h.b16 %v6578
    %v6960 = vunpack.c.l.b16 %v6579
    %v6961 = vunpack.c.h.b16 %v6579
    %v6962 = vunpack.c.l.b16 %v6580
    %v6963 = vunpack.c.h.b16 %v6580
    %v6964 = vunpack.c.l.b16 %v6581
    %v6965 = vunpack.c.h.b16 %v6581
    %v6966 = vunpack.c.l.b16 %v6582
    %v6967 = vunpack.c.h.b16 %v6582
    %v6968 = vunpack.c.l.b16 %v6583
    %v6969 = vunpack.c.h.b16 %v6583
    %v6970 = vunpack.c.l.b16 %v6584
    %v6971 = vunpack.c.h.b16 %v6584
    %v6972 = vunpack.c.l.b16 %v6585
    %v6973 = vunpack.c.h.b16 %v6585
    %v6974 = vunpack.c.l.b16 %v6586
    %v6975 = vunpack.c.h.b16 %v6586
    %v6976 = vunpack.c.l.b16 %v6587
    %v6977 = vunpack.c.h.b16 %v6587
    %v6978 = vpack.c.b16 %v6730, %v6722
    %v6979 = vpack.c.b16 %v6731, %v6723
    %v6980 = vpack.c.b16 %v6732, %v6724
    %v6981 = vpack.c.b16 %v6733, %v6725
    %v6982 = vpack.c.b16 %v6734, %v6726
    %v6983 = vpack.c.b16 %v6735, %v6727
    %v6984 = vpack.c.b16 %v6736, %v6728
    %v6985 = vpack.c.b16 %v6737, %v6729
    %v6986 = vpack.c.b16 %v6746, %v6738
    %v6987 = vpack.c.b16 %v6747, %v6739
    %v6988 = vpack.c.b16 %v6748, %v6740
    %v6989 = vpack.c.b16 %v6749, %v6741
    %v6990 = vpack.c.b16 %v6750, %v6742
    %v6991 = vpack.c.b16 %v6751, %v6743
    %v6992 = vpack.c.b16 %v6752, %v6744
    %v6993 = vpack.c.b16 %v6753, %v6745
    %v6994 = vpack.c.b16 %v6762, %v6754
    %v6995 = vpack.c.b16 %v6763, %v6755
    %v6996 = vpack.c.b16 %v6764, %v6756
    %v6997 = vpack.c.b16 %v6765, %v6757
    %v6998 = vpack.c.b16 %v6766, %v6758
    %v6999 = vpack.c.b16 %v6767, %v6759
    %v7000 = vpack.c.b16 %v6768, %v6760
    %v7001 = vpack.c.b16 %v6769, %v6761
    %v7002 = vpack.c.b16 %v6778, %v6770
    %v7003 = vpack.c.b16 %v6779, %v6771
    %v7004 = vpack.c.b16 %v6780, %v6772
    %v7005 = vpack.c.b16 %v6781, %v6773
    %v7006 = vpack.c.b16 %v6782, %v6774
    %v7007 = vpack.c.b16 %v6783, %v6775
    %v7008 = vpack.c.b16 %v6784, %v6776
    %v7009 = vpack.c.b16 %v6785, %v6777
    %v7010 = vpack.c.b16 %v6794, %v6786
    %v7011 = vpack.c.b16 %v6795, %v6787
    %v7012 = vpack.c.b16 %v6796, %v6788
    %v7013 = vpack.c.b16 %v6797, %v6789
    %v7014 = vpack.c.b16 %v6798, %v6790
    %v7015 = vpack.c.b16 %v6799, %v6791
    %v7016 = vpack.c.b16 %v6800, %v6792
    %v7017 = vpack.c.b16 %v6801, %v6793
    %v7018 = vpack.c.b16 %v6810, %v6802
    %v7019 = vpack.c.b16 %v6811, %v6803
    %v7020 = vpack.c.b16 %v6812, %v6804
    %v7021 = vpack.c.b16 %v6813, %v6805
    %v7022 = vpack.c.b16 %v6814, %v6806
    %v7023 = vpack.c.b16 %v6815, %v6807
    %v7024 = vpack.c.b16 %v6816, %v6808
    %v7025 = vpack.c.b16 %v6817, %v6809
    %v7026 = vpack.c.b16 %v6826, %v6818
    %v7027 = vpack.c.b16 %v6827, %v6819
    %v7028 = vpack.c.b16 %v6828, %v6820
    %v7029 = vpack.c.b16 %v6829, %v6821
    %v7030 = vpack.c.b16 %v6830, %v6822
    %v7031 = vpack.c.b16 %v6831, %v6823
    %v7032 = vpack.c.b16 %v6832, %v6824
    %v7033 = vpack.c.b16 %v6833, %v6825
    %v7034 = vpack.c.b16 %v6842, %v6834
    %v7035 = vpack.c.b16 %v6843, %v6835
    %v7036 = vpack.c.b16 %v6844, %v6836
    %v7037 = vpack.c.b16 %v6845, %v6837
    %v7038 = vpack.c.b16 %v6846, %v6838
    %v7039 = vpack.c.b16 %v6847, %v6839
    %v7040 = vpack.c.b16 %v6848, %v6840
    %v7041 = vpack.c.b16 %v6849, %v6841
    %v7042 = vpack.c.b16 %v6858, %v6850
    %v7043 = vpack.c.b16 %v6859, %v6851
    %v7044 = vpack.c.b16 %v6860, %v6852
    %v7045 = vpack.c.b16 %v6861, %v6853
    %v7046 = vpack.c.b16 %v6862, %v6854
    %v7047 = vpack.c.b16 %v6863, %v6855
    %v7048 = vpack.c.b16 %v6864, %v6856
    %v7049 = vpack.c.b16 %v6865, %v6857
    %v7050 = vpack.c.b16 %v6874, %v6866
    %v7051 = vpack.c.b16 %v6875, %v6867
    %v7052 = vpack.c.b16 %v6876, %v6868
    %v7053 = vpack.c.b16 %v6877, %v6869
    %v7054 = vpack.c.b16 %v6878, %v6870
    %v7055 = vpack.c.b16 %v6879, %v6871
    %v7056 = vpack.c.b16 %v6880, %v6872
    %v7057 = vpack.c.b16 %v6881, %v6873
    %v7058 = vpack.c.b16 %v6890, %v6882
    %v7059 = vpack.c.b16 %v6891, %v6883
    %v7060 = vpack.c.b16 %v6892, %v6884
    %v7061 = vpack.c.b16 %v6893, %v6885
    %v7062 = vpack.c.b16 %v6894, %v6886
    %v7063 = vpack.c.b16 %v6895, %v6887
    %v7064 = vpack.c.b16 %v6896, %v6888
    %v7065 = vpack.c.b16 %v6897, %v6889
    %v7066 = vpack.c.b16 %v6906, %v6898
    %v7067 = vpack.c.b16 %v6907, %v6899
    %v7068 = vpack.c.b16 %v6908, %v6900
    %v7069 = vpack.c.b16 %v6909, %v6901
    %v7070 = vpack.c.b16 %v6910, %v6902
    %v7071 = vpack.c.b16 %v6911, %v6903
    %v7072 = vpack.c.b16 %v6912, %v6904
    %v7073 = vpack.c.b16 %v6913, %v6905
    %v7074 = vpack.c.b16 %v6922, %v6914
    %v7075 = vpack.c.b16 %v6923, %v6915
    %v7076 = vpack.c.b16 %v6924, %v6916
    %v7077 = vpack.c.b16 %v6925, %v6917
    %v7078 = vpack.c.b16 %v6926, %v6918
    %v7079 = vpack.c.b16 %v6927, %v6919
    %v7080 = vpack.c.b16 %v6928, %v6920
    %v7081 = vpack.c.b16 %v6929, %v6921
    %v7082 = vpack.c.b16 %v6938, %v6930
    %v7083 = vpack.c.b16 %v6939, %v6931
    %v7084 = vpack.c.b16 %v6940, %v6932
    %v7085 = vpack.c.b16 %v6941, %v6933
    %v7086 = vpack.c.b16 %v6942, %v6934
    %v7087 = vpack.c.b16 %v6943, %v6935
    %v7088 = vpack.c.b16 %v6944, %v6936
    %v7089 = vpack.c.b16 %v6945, %v6937
    %v7090 = vpack.c.b16 %v6954, %v6946
    %v7091 = vpack.c.b16 %v6955, %v6947
    %v7092 = vpack.c.b16 %v6956, %v6948
    %v7093 = vpack.c.b16 %v6957, %v6949
    %v7094 = vpack.c.b16 %v6958, %v6950
    %v7095 = vpack.c.b16 %v6959, %v6951
    %v7096 = vpack.c.b16 %v6960, %v6952
    %v7097 = vpack.c.b16 %v6961, %v6953
    %v7098 = vpack.c.b16 %v6970, %v6962
    %v7099 = vpack.c.b16 %v6971, %v6963
    %v7100 = vpack.c.b16 %v6972, %v6964
    %v7101 = vpack.c.b16 %v6973, %v6965
    %v7102 = vpack.c.b16 %v6974, %v6966
    %v7103 = vpack.c.b16 %v6975, %v6967
    %v7104 = vpack.c.b16 %v6976, %v6968
    %v7105 = vpack.c.b16 %v6977, %v6969
    %7234 = vmatprep.subr.bf16.mxu0 %v6979
    %7235 = vmatpush1.bf16.msra.mxu0 %v6978
    %7236 = vmatprep.subr.bf16.mxu0 %v6987
    %7237 = vmatpush1.bf16.msra.mxu0 %v6986
    %7238 = vmatprep.subr.bf16.mxu0 %v6995
    %7239 = vmatpush1.bf16.msra.mxu0 %v6994
    %7240 = vmatprep.subr.bf16.mxu0 %v7003
    %7241 = vmatpush1.bf16.msra.mxu0 %v7002
    %7242 = vmatprep.subr.bf16.mxu0 %v7011
    %7243 = vmatpush1.bf16.msra.mxu0 %v7010
    %7244 = vmatprep.subr.bf16.mxu0 %v7019
    %7245 = vmatpush1.bf16.msra.mxu0 %v7018
    %7246 = vmatprep.subr.bf16.mxu0 %v7027
    %7247 = vmatpush1.bf16.msra.mxu0 %v7026
    %7248 = vmatprep.subr.bf16.mxu0 %v7035
    %7249 = vmatpush1.bf16.msra.mxu0 %v7034
    %7250 = vmatprep.subr.bf16.mxu0 %v7043
    %7251 = vmatpush1.bf16.msra.mxu0 %v7042
    %7252 = vmatprep.subr.bf16.mxu0 %v7051
    %7253 = vmatpush1.bf16.msra.mxu0 %v7050
    %7254 = vmatprep.subr.bf16.mxu0 %v7059
    %7255 = vmatpush1.bf16.msra.mxu0 %v7058
    %7256 = vmatprep.subr.bf16.mxu0 %v7067
    %7257 = vmatpush1.bf16.msra.mxu0 %v7066
    %7258 = vmatprep.subr.bf16.mxu0 %v7075
    %7259 = vmatpush1.bf16.msra.mxu0 %v7074
    %7260 = vmatprep.subr.bf16.mxu0 %v7083
    %7261 = vmatpush1.bf16.msra.mxu0 %v7082
    %7262 = vmatprep.subr.bf16.mxu0 %v7091
    %7263 = vmatpush1.bf16.msra.mxu0 %v7090
    %7264 = vmatprep.subr.bf16.mxu0 %v7099
    %7265 = vmatpush1.bf16.msra.mxu0 %v7098
    %7266 = vmatprep.mubr.bf16.mxu0 %v6591
    %7267 = vmatmul.mubr.bf16.gmra.mrb[0].mxu0 %v6590
    %v7268 = vpop.f32.mrb[0].mxu0
    %v7269 = vadd.f32 0.0, %v7268
    %v7270 = vpop.f32.mrb[0].mxu0
    %v7271 = vadd.f32 0.0, %v7270
    %v7272 = vpop.f32.mrb[0].mxu0
    %v7273 = vpop.f32.mrb[0].mxu0
    %7274 = vdwg.mxu0
    %7275 = vmatprep.subr.bf16.mxu0 %v6981
    %7276 = vmatpush1.bf16.msra.mxu0 %v6980
    %7277 = vmatprep.subr.bf16.mxu0 %v6989
    %7278 = vmatpush1.bf16.msra.mxu0 %v6988
    %7279 = vmatprep.subr.bf16.mxu0 %v6997
    %7280 = vmatpush1.bf16.msra.mxu0 %v6996
    %7281 = vmatprep.subr.bf16.mxu0 %v7005
    %7282 = vmatpush1.bf16.msra.mxu0 %v7004
    %7283 = vmatprep.subr.bf16.mxu0 %v7013
    %7284 = vmatpush1.bf16.msra.mxu0 %v7012
    %7285 = vmatprep.subr.bf16.mxu0 %v7021
    %7286 = vmatpush1.bf16.msra.mxu0 %v7020
    %7287 = vmatprep.subr.bf16.mxu0 %v7029
    %7288 = vmatpush1.bf16.msra.mxu0 %v7028
    %7289 = vmatprep.subr.bf16.mxu0 %v7037
    %7290 = vmatpush1.bf16.msra.mxu0 %v7036
    %7291 = vmatprep.subr.bf16.mxu0 %v7045
    %7292 = vmatpush1.bf16.msra.mxu0 %v7044
    %7293 = vmatprep.subr.bf16.mxu0 %v7053
    %7294 = vmatpush1.bf16.msra.mxu0 %v7052
    %7295 = vmatprep.subr.bf16.mxu0 %v7061
    %7296 = vmatpush1.bf16.msra.mxu0 %v7060
    %7297 = vmatprep.subr.bf16.mxu0 %v7069
    %7298 = vmatpush1.bf16.msra.mxu0 %v7068
    %7299 = vmatprep.subr.bf16.mxu0 %v7077
    %7300 = vmatpush1.bf16.msra.mxu0 %v7076
    %7301 = vmatprep.subr.bf16.mxu0 %v7085
    %7302 = vmatpush1.bf16.msra.mxu0 %v7084
    %7303 = vmatprep.subr.bf16.mxu0 %v7093
    %7304 = vmatpush1.bf16.msra.mxu0 %v7092
    %7305 = vmatprep.subr.bf16.mxu0 %v7101
    %7306 = vmatpush1.bf16.msra.mxu0 %v7100
    %7307 = vmatprep.mubr.bf16.mxu0 %v6591
    %7308 = vmatmul.mubr.bf16.gmra.mrb[0].mxu0 %v6590
    %v7309 = vpop.f32.mrb[0].mxu0
    %v7310 = vadd.f32 0.0, %v7309
    %v7311 = vpop.f32.mrb[0].mxu0
    %v7312 = vadd.f32 0.0, %v7311
    %v7313 = vpop.f32.mrb[0].mxu0
    %v7314 = vpop.f32.mrb[0].mxu0
    %7315 = vdwg.mxu0
    %7316 = vmatprep.subr.bf16.mxu0 %v6983
    %7317 = vmatpush1.bf16.msra.mxu0 %v6982
    %7318 = vmatprep.subr.bf16.mxu0 %v6991
    %7319 = vmatpush1.bf16.msra.mxu0 %v6990
    %7320 = vmatprep.subr.bf16.mxu0 %v6999
    %7321 = vmatpush1.bf16.msra.mxu0 %v6998
    %7322 = vmatprep.subr.bf16.mxu0 %v7007
    %7323 = vmatpush1.bf16.msra.mxu0 %v7006
    %7324 = vmatprep.subr.bf16.mxu0 %v7015
    %7325 = vmatpush1.bf16.msra.mxu0 %v7014
    %7326 = vmatprep.subr.bf16.mxu0 %v7023
    %7327 = vmatpush1.bf16.msra.mxu0 %v7022
    %7328 = vmatprep.subr.bf16.mxu0 %v7031
    %7329 = vmatpush1.bf16.msra.mxu0 %v7030
    %7330 = vmatprep.subr.bf16.mxu0 %v7039
    %7331 = vmatpush1.bf16.msra.mxu0 %v7038
    %7332 = vmatprep.subr.bf16.mxu0 %v7047
    %7333 = vmatpush1.bf16.msra.mxu0 %v7046
    %7334 = vmatprep.subr.bf16.mxu0 %v7055
    %7335 = vmatpush1.bf16.msra.mxu0 %v7054
    %7336 = vmatprep.subr.bf16.mxu0 %v7063
    %7337 = vmatpush1.bf16.msra.mxu0 %v7062
    %7338 = vmatprep.subr.bf16.mxu0 %v7071
    %7339 = vmatpush1.bf16.msra.mxu0 %v7070
    %7340 = vmatprep.subr.bf16.mxu0 %v7079
    %7341 = vmatpush1.bf16.msra.mxu0 %v7078
    %7342 = vmatprep.subr.bf16.mxu0 %v7087
    %7343 = vmatpush1.bf16.msra.mxu0 %v7086
    %7344 = vmatprep.subr.bf16.mxu0 %v7095
    %7345 = vmatpush1.bf16.msra.mxu0 %v7094
    %7346 = vmatprep.subr.bf16.mxu0 %v7103
    %7347 = vmatpush1.bf16.msra.mxu0 %v7102
    %7348 = vmatprep.mubr.bf16.mxu0 %v6591
    %7349 = vmatmul.mubr.bf16.gmra.mrb[0].mxu0 %v6590
    %v7350 = vpop.f32.mrb[0].mxu0
    %v7351 = vadd.f32 0.0, %v7350
    %v7352 = vpop.f32.mrb[0].mxu0
    %v7353 = vadd.f32 0.0, %v7352
    %v7354 = vpop.f32.mrb[0].mxu0
    %v7355 = vpop.f32.mrb[0].mxu0
    %7356 = vdwg.mxu0
    %7357 = vmatprep.subr.bf16.mxu0 %v6985
    %7358 = vmatpush1.bf16.msra.mxu0 %v6984
    %7359 = vmatprep.subr.bf16.mxu0 %v6993
    %7360 = vmatpush1.bf16.msra.mxu0 %v6992
    %7361 = vmatprep.subr.bf16.mxu0 %v7001
    %7362 = vmatpush1.bf16.msra.mxu0 %v7000
    %7363 = vmatprep.subr.bf16.mxu0 %v7009
    %7364 = vmatpush1.bf16.msra.mxu0 %v7008
    %7365 = vmatprep.subr.bf16.mxu0 %v7017
    %7366 = vmatpush1.bf16.msra.mxu0 %v7016
    %7367 = vmatprep.subr.bf16.mxu0 %v7025
    %7368 = vmatpush1.bf16.msra.mxu0 %v7024
    %7369 = vmatprep.subr.bf16.mxu0 %v7033
    %7370 = vmatpush1.bf16.msra.mxu0 %v7032
    %7371 = vmatprep.subr.bf16.mxu0 %v7041
    %7372 = vmatpush1.bf16.msra.mxu0 %v7040
    %7373 = vmatprep.subr.bf16.mxu0 %v7049
    %7374 = vmatpush1.bf16.msra.mxu0 %v7048
    %7375 = vmatprep.subr.bf16.mxu0 %v7057
    %7376 = vmatpush1.bf16.msra.mxu0 %v7056
    %7377 = vmatprep.subr.bf16.mxu0 %v7065
    %7378 = vmatpush1.bf16.msra.mxu0 %v7064
    %7379 = vmatprep.subr.bf16.mxu0 %v7073
    %7380 = vmatpush1.bf16.msra.mxu0 %v7072
    %7381 = vmatprep.subr.bf16.mxu0 %v7081
    %7382 = vmatpush1.bf16.msra.mxu0 %v7080
    %7383 = vmatprep.subr.bf16.mxu0 %v7089
    %7384 = vmatpush1.bf16.msra.mxu0 %v7088
    %7385 = vmatprep.subr.bf16.mxu0 %v7097
    %7386 = vmatpush1.bf16.msra.mxu0 %v7096
    %7387 = vmatprep.subr.bf16.mxu0 %v7105
    %7388 = vmatpush1.bf16.msra.mxu0 %v7104
    %7389 = vmatprep.mubr.bf16.mxu0 %v6591
    %7390 = vmatmul.mubr.bf16.gmra.mrb[0].mxu0 %v6590
    %v7391 = vpop.f32.mrb[0].mxu0
    %v7392 = vadd.f32 0.0, %v7391
    %v7393 = vpop.f32.mrb[0].mxu0
    %v7394 = vadd.f32 0.0, %v7393
    %v7395 = vpop.f32.mrb[0].mxu0
    %v7396 = vpop.f32.mrb[0].mxu0
    %7397 = vdwg.mxu0
    %v7398 = vadd.f32 %v270, %v7269
    %v7399 = vadd.f32 %v272, %v7271
    %v7400 = vadd.f32 %v323, %v7310
    %v7401 = vadd.f32 %v325, %v7312
    %v7402 = vadd.f32 %v376, %v7351
    %v7403 = vadd.f32 %v378, %v7353
    %v7404 = vadd.f32 %v429, %v7392
    %v7405 = vadd.f32 %v431, %v7394
    %v7406 = vmul.f32 %v7398, 0.5
    %v7407 = vmul.f32 %v7399, 0.5
    %v7408 = vtanh.pop %v7406
    %v7409 = vtanh.pop %v7407
    %v7410 = vadd.f32 %v7408, 1.0
    %v7411 = vadd.f32 %v7409, 1.0
    %v7412 = vmul.f32 %v7410, 0.5
    %v7413 = vmul.f32 %v7411, 0.5
    %v7414 = vmul.f32 %v7400, 0.5
    %v7415 = vmul.f32 %v7401, 0.5
    %v7416 = vtanh.pop %v7414
    %v7417 = vtanh.pop %v7415
    %v7418 = vadd.f32 %v7416, 1.0
    %v7419 = vadd.f32 %v7417, 1.0
    %v7420 = vmul.f32 %v7418, 0.5
    %v7421 = vmul.f32 %v7419, 0.5
    %v7422 = vtanh.pop %v7402
    %v7423 = vtanh.pop %v7403
    %v7424 = vmul.f32 %v7404, 0.5
    %v7425 = vmul.f32 %v7405, 0.5
    %v7426 = vtanh.pop %v7424
    %v7427 = vtanh.pop %v7425
    %v7428 = vadd.f32 %v7426, 1.0
    %v7429 = vadd.f32 %v7427, 1.0
    %v7430 = vmul.f32 %v7428, 0.5
    %v7431 = vmul.f32 %v7429, 0.5
    %v7434 = vrot.slane %v6446, 4
    %v7435 = vrot.slane %v6447, 4
    %v7438 = vmul.f32 %v7420, %v7434
    %v7439 = vmul.f32 %v7421, %v7435
    %v7440 = vmul.f32 %v7412, %v7422
    %v7441 = vmul.f32 %v7413, %v7423
    %v7442 = vadd.f32 %v7438, %v7440
    %v7443 = vadd.f32 %v7439, %v7441
    %v7444 = vtanh.pop %v7442
    %v7445 = vtanh.pop %v7443
    %v7446 = vmul.f32 %v7430, %v7444
    %v7447 = vmul.f32 %v7431, %v7445
    %v7450 = vcombine.low %v7446, %v7447
    %s7452 = scalar_lea.vmem [#allocation10], 48
    %7453 = vst [vmem:[%s7452] sm:$0xff] %v7450
    %v7454 = vpack.c.bf16 %v7446, %v7446
    %v7455 = vpack.c.bf16 %v7447, %v7447
    %v7456 = vld [vmem:[#allocation9] sm:$0xff]
    %v7457 = vld [vmem:[#allocation9 + $0x8] sm:$0xff]
    %v7458 = vld [vmem:[#allocation9 + $0x10] sm:$0xff]
    %v7459 = vld [vmem:[#allocation9 + $0x18] sm:$0xff]
    %v7460 = vld [vmem:[#allocation9 + $0x20] sm:$0xff]
    %v7461 = vld [vmem:[#allocation9 + $0x28] sm:$0xff]
    %v7462 = vld [vmem:[#allocation9 + $0x30] sm:$0xff]
    %v7463 = vld [vmem:[#allocation9 + $0x38] sm:$0xff]
    %v7464 = vld [vmem:[#allocation9 + $0x40] sm:$0xff]
    %v7465 = vld [vmem:[#allocation9 + $0x48] sm:$0xff]
    %v7466 = vld [vmem:[#allocation9 + $0x50] sm:$0xff]
    %v7467 = vld [vmem:[#allocation9 + $0x58] sm:$0xff]
    %v7468 = vld [vmem:[#allocation9 + $0x60] sm:$0xff]
    %v7469 = vld [vmem:[#allocation9 + $0x68] sm:$0xff]
    %v7470 = vld [vmem:[#allocation9 + $0x70] sm:$0xff]
    %v7471 = vld [vmem:[#allocation9 + $0x78] sm:$0xff]
    %v7472 = vld [vmem:[#allocation9 + $0x80] sm:$0xff]
    %v7473 = vld [vmem:[#allocation9 + $0x88] sm:$0xff]
    %v7474 = vld [vmem:[#allocation9 + $0x90] sm:$0xff]
    %v7475 = vld [vmem:[#allocation9 + $0x98] sm:$0xff]
    %v7476 = vld [vmem:[#allocation9 + $0xa0] sm:$0xff]
    %v7477 = vld [vmem:[#allocation9 + $0xa8] sm:$0xff]
    %v7478 = vld [vmem:[#allocation9 + $0xb0] sm:$0xff]
    %v7479 = vld [vmem:[#allocation9 + $0xb8] sm:$0xff]
    %v7480 = vld [vmem:[#allocation9 + $0xc0] sm:$0xff]
    %v7481 = vld [vmem:[#allocation9 + $0xc8] sm:$0xff]
    %v7482 = vld [vmem:[#allocation9 + $0xd0] sm:$0xff]
    %v7483 = vld [vmem:[#allocation9 + $0xd8] sm:$0xff]
    %v7484 = vld [vmem:[#allocation9 + $0xe0] sm:$0xff]
    %v7485 = vld [vmem:[#allocation9 + $0xe8] sm:$0xff]
    %v7486 = vld [vmem:[#allocation9 + $0xf0] sm:$0xff]
    %v7487 = vld [vmem:[#allocation9 + $0xf8] sm:$0xff]
    %v7488 = vld [vmem:[#allocation9 + $0x100] sm:$0xff]
    %v7489 = vld [vmem:[#allocation9 + $0x108] sm:$0xff]
    %v7490 = vld [vmem:[#allocation9 + $0x110] sm:$0xff]
    %v7491 = vld [vmem:[#allocation9 + $0x118] sm:$0xff]
    %v7492 = vld [vmem:[#allocation9 + $0x120] sm:$0xff]
    %v7493 = vld [vmem:[#allocation9 + $0x128] sm:$0xff]
    %v7494 = vld [vmem:[#allocation9 + $0x130] sm:$0xff]
    %v7495 = vld [vmem:[#allocation9 + $0x138] sm:$0xff]
    %v7496 = vld [vmem:[#allocation9 + $0x140] sm:$0xff]
    %v7497 = vld [vmem:[#allocation9 + $0x148] sm:$0xff]
    %v7498 = vld [vmem:[#allocation9 + $0x150] sm:$0xff]
    %v7499 = vld [vmem:[#allocation9 + $0x158] sm:$0xff]
    %v7500 = vld [vmem:[#allocation9 + $0x160] sm:$0xff]
    %v7501 = vld [vmem:[#allocation9 + $0x168] sm:$0xff]
    %v7502 = vld [vmem:[#allocation9 + $0x170] sm:$0xff]
    %v7503 = vld [vmem:[#allocation9 + $0x178] sm:$0xff]
    %v7504 = vld [vmem:[#allocation9 + $0x180] sm:$0xff]
    %v7505 = vld [vmem:[#allocation9 + $0x188] sm:$0xff]
    %v7506 = vld [vmem:[#allocation9 + $0x190] sm:$0xff]
    %v7507 = vld [vmem:[#allocation9 + $0x198] sm:$0xff]
    %v7508 = vld [vmem:[#allocation9 + $0x1a0] sm:$0xff]
    %v7509 = vld [vmem:[#allocation9 + $0x1a8] sm:$0xff]
    %v7510 = vld [vmem:[#allocation9 + $0x1b0] sm:$0xff]
    %v7511 = vld [vmem:[#allocation9 + $0x1b8] sm:$0xff]
    %v7512 = vld [vmem:[#allocation9 + $0x1c0] sm:$0xff]
    %v7513 = vld [vmem:[#allocation9 + $0x1c8] sm:$0xff]
    %v7514 = vld [vmem:[#allocation9 + $0x1d0] sm:$0xff]
    %v7515 = vld [vmem:[#allocation9 + $0x1d8] sm:$0xff]
    %v7516 = vld [vmem:[#allocation9 + $0x1e0] sm:$0xff]
    %v7517 = vld [vmem:[#allocation9 + $0x1e8] sm:$0xff]
    %v7518 = vld [vmem:[#allocation9 + $0x1f0] sm:$0xff]
    %v7519 = vld [vmem:[#allocation9 + $0x1f8] sm:$0xff]
    %v7520 = vld [vmem:[#allocation9 + $0x200] sm:$0xff]
    %v7521 = vld [vmem:[#allocation9 + $0x208] sm:$0xff]
    %v7522 = vld [vmem:[#allocation9 + $0x210] sm:$0xff]
    %v7523 = vld [vmem:[#allocation9 + $0x218] sm:$0xff]
    %v7524 = vld [vmem:[#allocation9 + $0x220] sm:$0xff]
    %v7525 = vld [vmem:[#allocation9 + $0x228] sm:$0xff]
    %v7526 = vld [vmem:[#allocation9 + $0x230] sm:$0xff]
    %v7527 = vld [vmem:[#allocation9 + $0x238] sm:$0xff]
    %v7528 = vld [vmem:[#allocation9 + $0x240] sm:$0xff]
    %v7529 = vld [vmem:[#allocation9 + $0x248] sm:$0xff]
    %v7530 = vld [vmem:[#allocation9 + $0x250] sm:$0xff]
    %v7531 = vld [vmem:[#allocation9 + $0x258] sm:$0xff]
    %v7532 = vld [vmem:[#allocation9 + $0x260] sm:$0xff]
    %v7533 = vld [vmem:[#allocation9 + $0x268] sm:$0xff]
    %v7534 = vld [vmem:[#allocation9 + $0x270] sm:$0xff]
    %v7535 = vld [vmem:[#allocation9 + $0x278] sm:$0xff]
    %v7536 = vld [vmem:[#allocation9 + $0x280] sm:$0xff]
    %v7537 = vld [vmem:[#allocation9 + $0x288] sm:$0xff]
    %v7538 = vld [vmem:[#allocation9 + $0x290] sm:$0xff]
    %v7539 = vld [vmem:[#allocation9 + $0x298] sm:$0xff]
    %v7540 = vld [vmem:[#allocation9 + $0x2a0] sm:$0xff]
    %v7541 = vld [vmem:[#allocation9 + $0x2a8] sm:$0xff]
    %v7542 = vld [vmem:[#allocation9 + $0x2b0] sm:$0xff]
    %v7543 = vld [vmem:[#allocation9 + $0x2b8] sm:$0xff]
    %v7544 = vld [vmem:[#allocation9 + $0x2c0] sm:$0xff]
    %v7545 = vld [vmem:[#allocation9 + $0x2c8] sm:$0xff]
    %v7546 = vld [vmem:[#allocation9 + $0x2d0] sm:$0xff]
    %v7547 = vld [vmem:[#allocation9 + $0x2d8] sm:$0xff]
    %v7548 = vld [vmem:[#allocation9 + $0x2e0] sm:$0xff]
    %v7549 = vld [vmem:[#allocation9 + $0x2e8] sm:$0xff]
    %v7550 = vld [vmem:[#allocation9 + $0x2f0] sm:$0xff]
    %v7551 = vld [vmem:[#allocation9 + $0x2f8] sm:$0xff]
    %v7552 = vld [vmem:[#allocation9 + $0x300] sm:$0xff]
    %v7553 = vld [vmem:[#allocation9 + $0x308] sm:$0xff]
    %v7554 = vld [vmem:[#allocation9 + $0x310] sm:$0xff]
    %v7555 = vld [vmem:[#allocation9 + $0x318] sm:$0xff]
    %v7556 = vld [vmem:[#allocation9 + $0x320] sm:$0xff]
    %v7557 = vld [vmem:[#allocation9 + $0x328] sm:$0xff]
    %v7558 = vld [vmem:[#allocation9 + $0x330] sm:$0xff]
    %v7559 = vld [vmem:[#allocation9 + $0x338] sm:$0xff]
    %v7560 = vld [vmem:[#allocation9 + $0x340] sm:$0xff]
    %v7561 = vld [vmem:[#allocation9 + $0x348] sm:$0xff]
    %v7562 = vld [vmem:[#allocation9 + $0x350] sm:$0xff]
    %v7563 = vld [vmem:[#allocation9 + $0x358] sm:$0xff]
    %v7564 = vld [vmem:[#allocation9 + $0x360] sm:$0xff]
    %v7565 = vld [vmem:[#allocation9 + $0x368] sm:$0xff]
    %v7566 = vld [vmem:[#allocation9 + $0x370] sm:$0xff]
    %v7567 = vld [vmem:[#allocation9 + $0x378] sm:$0xff]
    %v7568 = vld [vmem:[#allocation9 + $0x380] sm:$0xff]
    %v7569 = vld [vmem:[#allocation9 + $0x388] sm:$0xff]
    %v7570 = vld [vmem:[#allocation9 + $0x390] sm:$0xff]
    %v7571 = vld [vmem:[#allocation9 + $0x398] sm:$0xff]
    %v7572 = vld [vmem:[#allocation9 + $0x3a0] sm:$0xff]
    %v7573 = vld [vmem:[#allocation9 + $0x3a8] sm:$0xff]
    %v7574 = vld [vmem:[#allocation9 + $0x3b0] sm:$0xff]
    %v7575 = vld [vmem:[#allocation9 + $0x3b8] sm:$0xff]
    %v7576 = vld [vmem:[#allocation9 + $0x3c0] sm:$0xff]
    %v7577 = vld [vmem:[#allocation9 + $0x3c8] sm:$0xff]
    %v7578 = vld [vmem:[#allocation9 + $0x3d0] sm:$0xff]
    %v7579 = vld [vmem:[#allocation9 + $0x3d8] sm:$0xff]
    %v7580 = vld [vmem:[#allocation9 + $0x3e0] sm:$0xff]
    %v7581 = vld [vmem:[#allocation9 + $0x3e8] sm:$0xff]
    %v7582 = vld [vmem:[#allocation9 + $0x3f0] sm:$0xff]
    %v7583 = vld [vmem:[#allocation9 + $0x3f8] sm:$0xff]
    %v7712 = vunpack.c.l.b16 %v7456
    %v7713 = vunpack.c.h.b16 %v7456
    %v7714 = vunpack.c.l.b16 %v7457
    %v7715 = vunpack.c.h.b16 %v7457
    %v7716 = vunpack.c.l.b16 %v7458
    %v7717 = vunpack.c.h.b16 %v7458
    %v7718 = vunpack.c.l.b16 %v7459
    %v7719 = vunpack.c.h.b16 %v7459
    %v7720 = vunpack.c.l.b16 %v7460
    %v7721 = vunpack.c.h.b16 %v7460
    %v7722 = vunpack.c.l.b16 %v7461
    %v7723 = vunpack.c.h.b16 %v7461
    %v7724 = vunpack.c.l.b16 %v7462
    %v7725 = vunpack.c.h.b16 %v7462
    %v7726 = vunpack.c.l.b16 %v7463
    %v7727 = vunpack.c.h.b16 %v7463
    %v7728 = vunpack.c.l.b16 %v7464
    %v7729 = vunpack.c.h.b16 %v7464
    %v7730 = vunpack.c.l.b16 %v7465
    %v7731 = vunpack.c.h.b16 %v7465
    %v7732 = vunpack.c.l.b16 %v7466
    %v7733 = vunpack.c.h.b16 %v7466
    %v7734 = vunpack.c.l.b16 %v7467
    %v7735 = vunpack.c.h.b16 %v7467
    %v7736 = vunpack.c.l.b16 %v7468
    %v7737 = vunpack.c.h.b16 %v7468
    %v7738 = vunpack.c.l.b16 %v7469
    %v7739 = vunpack.c.h.b16 %v7469
    %v7740 = vunpack.c.l.b16 %v7470
    %v7741 = vunpack.c.h.b16 %v7470
    %v7742 = vunpack.c.l.b16 %v7471
    %v7743 = vunpack.c.h.b16 %v7471
    %v7744 = vunpack.c.l.b16 %v7472
    %v7745 = vunpack.c.h.b16 %v7472
    %v7746 = vunpack.c.l.b16 %v7473
    %v7747 = vunpack.c.h.b16 %v7473
    %v7748 = vunpack.c.l.b16 %v7474
    %v7749 = vunpack.c.h.b16 %v7474
    %v7750 = vunpack.c.l.b16 %v7475
    %v7751 = vunpack.c.h.b16 %v7475
    %v7752 = vunpack.c.l.b16 %v7476
    %v7753 = vunpack.c.h.b16 %v7476
    %v7754 = vunpack.c.l.b16 %v7477
    %v7755 = vunpack.c.h.b16 %v7477
    %v7756 = vunpack.c.l.b16 %v7478
    %v7757 = vunpack.c.h.b16 %v7478
    %v7758 = vunpack.c.l.b16 %v7479
    %v7759 = vunpack.c.h.b16 %v7479
    %v7760 = vunpack.c.l.b16 %v7480
    %v7761 = vunpack.c.h.b16 %v7480
    %v7762 = vunpack.c.l.b16 %v7481
    %v7763 = vunpack.c.h.b16 %v7481
    %v7764 = vunpack.c.l.b16 %v7482
    %v7765 = vunpack.c.h.b16 %v7482
    %v7766 = vunpack.c.l.b16 %v7483
    %v7767 = vunpack.c.h.b16 %v7483
    %v7768 = vunpack.c.l.b16 %v7484
    %v7769 = vunpack.c.h.b16 %v7484
    %v7770 = vunpack.c.l.b16 %v7485
    %v7771 = vunpack.c.h.b16 %v7485
    %v7772 = vunpack.c.l.b16 %v7486
    %v7773 = vunpack.c.h.b16 %v7486
    %v7774 = vunpack.c.l.b16 %v7487
    %v7775 = vunpack.c.h.b16 %v7487
    %v7776 = vunpack.c.l.b16 %v7488
    %v7777 = vunpack.c.h.b16 %v7488
    %v7778 = vunpack.c.l.b16 %v7489
    %v7779 = vunpack.c.h.b16 %v7489
    %v7780 = vunpack.c.l.b16 %v7490
    %v7781 = vunpack.c.h.b16 %v7490
    %v7782 = vunpack.c.l.b16 %v7491
    %v7783 = vunpack.c.h.b16 %v7491
    %v7784 = vunpack.c.l.b16 %v7492
    %v7785 = vunpack.c.h.b16 %v7492
    %v7786 = vunpack.c.l.b16 %v7493
    %v7787 = vunpack.c.h.b16 %v7493
    %v7788 = vunpack.c.l.b16 %v7494
    %v7789 = vunpack.c.h.b16 %v7494
    %v7790 = vunpack.c.l.b16 %v7495
    %v7791 = vunpack.c.h.b16 %v7495
    %v7792 = vunpack.c.l.b16 %v7496
    %v7793 = vunpack.c.h.b16 %v7496
    %v7794 = vunpack.c.l.b16 %v7497
    %v7795 = vunpack.c.h.b16 %v7497
    %v7796 = vunpack.c.l.b16 %v7498
    %v7797 = vunpack.c.h.b16 %v7498
    %v7798 = vunpack.c.l.b16 %v7499
    %v7799 = vunpack.c.h.b16 %v7499
    %v7800 = vunpack.c.l.b16 %v7500
    %v7801 = vunpack.c.h.b16 %v7500
    %v7802 = vunpack.c.l.b16 %v7501
    %v7803 = vunpack.c.h.b16 %v7501
    %v7804 = vunpack.c.l.b16 %v7502
    %v7805 = vunpack.c.h.b16 %v7502
    %v7806 = vunpack.c.l.b16 %v7503
    %v7807 = vunpack.c.h.b16 %v7503
    %v7808 = vunpack.c.l.b16 %v7504
    %v7809 = vunpack.c.h.b16 %v7504
    %v7810 = vunpack.c.l.b16 %v7505
    %v7811 = vunpack.c.h.b16 %v7505
    %v7812 = vunpack.c.l.b16 %v7506
    %v7813 = vunpack.c.h.b16 %v7506
    %v7814 = vunpack.c.l.b16 %v7507
    %v7815 = vunpack.c.h.b16 %v7507
    %v7816 = vunpack.c.l.b16 %v7508
    %v7817 = vunpack.c.h.b16 %v7508
    %v7818 = vunpack.c.l.b16 %v7509
    %v7819 = vunpack.c.h.b16 %v7509
    %v7820 = vunpack.c.l.b16 %v7510
    %v7821 = vunpack.c.h.b16 %v7510
    %v7822 = vunpack.c.l.b16 %v7511
    %v7823 = vunpack.c.h.b16 %v7511
    %v7824 = vunpack.c.l.b16 %v7512
    %v7825 = vunpack.c.h.b16 %v7512
    %v7826 = vunpack.c.l.b16 %v7513
    %v7827 = vunpack.c.h.b16 %v7513
    %v7828 = vunpack.c.l.b16 %v7514
    %v7829 = vunpack.c.h.b16 %v7514
    %v7830 = vunpack.c.l.b16 %v7515
    %v7831 = vunpack.c.h.b16 %v7515
    %v7832 = vunpack.c.l.b16 %v7516
    %v7833 = vunpack.c.h.b16 %v7516
    %v7834 = vunpack.c.l.b16 %v7517
    %v7835 = vunpack.c.h.b16 %v7517
    %v7836 = vunpack.c.l.b16 %v7518
    %v7837 = vunpack.c.h.b16 %v7518
    %v7838 = vunpack.c.l.b16 %v7519
    %v7839 = vunpack.c.h.b16 %v7519
    %v7840 = vunpack.c.l.b16 %v7520
    %v7841 = vunpack.c.h.b16 %v7520
    %v7842 = vunpack.c.l.b16 %v7521
    %v7843 = vunpack.c.h.b16 %v7521
    %v7844 = vunpack.c.l.b16 %v7522
    %v7845 = vunpack.c.h.b16 %v7522
    %v7846 = vunpack.c.l.b16 %v7523
    %v7847 = vunpack.c.h.b16 %v7523
    %v7848 = vunpack.c.l.b16 %v7524
    %v7849 = vunpack.c.h.b16 %v7524
    %v7850 = vunpack.c.l.b16 %v7525
    %v7851 = vunpack.c.h.b16 %v7525
    %v7852 = vunpack.c.l.b16 %v7526
    %v7853 = vunpack.c.h.b16 %v7526
    %v7854 = vunpack.c.l.b16 %v7527
    %v7855 = vunpack.c.h.b16 %v7527
    %v7856 = vunpack.c.l.b16 %v7528
    %v7857 = vunpack.c.h.b16 %v7528
    %v7858 = vunpack.c.l.b16 %v7529
    %v7859 = vunpack.c.h.b16 %v7529
    %v7860 = vunpack.c.l.b16 %v7530
    %v7861 = vunpack.c.h.b16 %v7530
    %v7862 = vunpack.c.l.b16 %v7531
    %v7863 = vunpack.c.h.b16 %v7531
    %v7864 = vunpack.c.l.b16 %v7532
    %v7865 = vunpack.c.h.b16 %v7532
    %v7866 = vunpack.c.l.b16 %v7533
    %v7867 = vunpack.c.h.b16 %v7533
    %v7868 = vunpack.c.l.b16 %v7534
    %v7869 = vunpack.c.h.b16 %v7534
    %v7870 = vunpack.c.l.b16 %v7535
    %v7871 = vunpack.c.h.b16 %v7535
    %v7872 = vunpack.c.l.b16 %v7536
    %v7873 = vunpack.c.h.b16 %v7536
    %v7874 = vunpack.c.l.b16 %v7537
    %v7875 = vunpack.c.h.b16 %v7537
    %v7876 = vunpack.c.l.b16 %v7538
    %v7877 = vunpack.c.h.b16 %v7538
    %v7878 = vunpack.c.l.b16 %v7539
    %v7879 = vunpack.c.h.b16 %v7539
    %v7880 = vunpack.c.l.b16 %v7540
    %v7881 = vunpack.c.h.b16 %v7540
    %v7882 = vunpack.c.l.b16 %v7541
    %v7883 = vunpack.c.h.b16 %v7541
    %v7884 = vunpack.c.l.b16 %v7542
    %v7885 = vunpack.c.h.b16 %v7542
    %v7886 = vunpack.c.l.b16 %v7543
    %v7887 = vunpack.c.h.b16 %v7543
    %v7888 = vunpack.c.l.b16 %v7544
    %v7889 = vunpack.c.h.b16 %v7544
    %v7890 = vunpack.c.l.b16 %v7545
    %v7891 = vunpack.c.h.b16 %v7545
    %v7892 = vunpack.c.l.b16 %v7546
    %v7893 = vunpack.c.h.b16 %v7546
    %v7894 = vunpack.c.l.b16 %v7547
    %v7895 = vunpack.c.h.b16 %v7547
    %v7896 = vunpack.c.l.b16 %v7548
    %v7897 = vunpack.c.h.b16 %v7548
    %v7898 = vunpack.c.l.b16 %v7549
    %v7899 = vunpack.c.h.b16 %v7549
    %v7900 = vunpack.c.l.b16 %v7550
    %v7901 = vunpack.c.h.b16 %v7550
    %v7902 = vunpack.c.l.b16 %v7551
    %v7903 = vunpack.c.h.b16 %v7551
    %v7904 = vunpack.c.l.b16 %v7552
    %v7905 = vunpack.c.h.b16 %v7552
    %v7906 = vunpack.c.l.b16 %v7553
    %v7907 = vunpack.c.h.b16 %v7553
    %v7908 = vunpack.c.l.b16 %v7554
    %v7909 = vunpack.c.h.b16 %v7554
    %v7910 = vunpack.c.l.b16 %v7555
    %v7911 = vunpack.c.h.b16 %v7555
    %v7912 = vunpack.c.l.b16 %v7556
    %v7913 = vunpack.c.h.b16 %v7556
    %v7914 = vunpack.c.l.b16 %v7557
    %v7915 = vunpack.c.h.b16 %v7557
    %v7916 = vunpack.c.l.b16 %v7558
    %v7917 = vunpack.c.h.b16 %v7558
    %v7918 = vunpack.c.l.b16 %v7559
    %v7919 = vunpack.c.h.b16 %v7559
    %v7920 = vunpack.c.l.b16 %v7560
    %v7921 = vunpack.c.h.b16 %v7560
    %v7922 = vunpack.c.l.b16 %v7561
    %v7923 = vunpack.c.h.b16 %v7561
    %v7924 = vunpack.c.l.b16 %v7562
    %v7925 = vunpack.c.h.b16 %v7562
    %v7926 = vunpack.c.l.b16 %v7563
    %v7927 = vunpack.c.h.b16 %v7563
    %v7928 = vunpack.c.l.b16 %v7564
    %v7929 = vunpack.c.h.b16 %v7564
    %v7930 = vunpack.c.l.b16 %v7565
    %v7931 = vunpack.c.h.b16 %v7565
    %v7932 = vunpack.c.l.b16 %v7566
    %v7933 = vunpack.c.h.b16 %v7566
    %v7934 = vunpack.c.l.b16 %v7567
    %v7935 = vunpack.c.h.b16 %v7567
    %v7936 = vunpack.c.l.b16 %v7568
    %v7937 = vunpack.c.h.b16 %v7568
    %v7938 = vunpack.c.l.b16 %v7569
    %v7939 = vunpack.c.h.b16 %v7569
    %v7940 = vunpack.c.l.b16 %v7570
    %v7941 = vunpack.c.h.b16 %v7570
    %v7942 = vunpack.c.l.b16 %v7571
    %v7943 = vunpack.c.h.b16 %v7571
    %v7944 = vunpack.c.l.b16 %v7572
    %v7945 = vunpack.c.h.b16 %v7572
    %v7946 = vunpack.c.l.b16 %v7573
    %v7947 = vunpack.c.h.b16 %v7573
    %v7948 = vunpack.c.l.b16 %v7574
    %v7949 = vunpack.c.h.b16 %v7574
    %v7950 = vunpack.c.l.b16 %v7575
    %v7951 = vunpack.c.h.b16 %v7575
    %v7952 = vunpack.c.l.b16 %v7576
    %v7953 = vunpack.c.h.b16 %v7576
    %v7954 = vunpack.c.l.b16 %v7577
    %v7955 = vunpack.c.h.b16 %v7577
    %v7956 = vunpack.c.l.b16 %v7578
    %v7957 = vunpack.c.h.b16 %v7578
    %v7958 = vunpack.c.l.b16 %v7579
    %v7959 = vunpack.c.h.b16 %v7579
    %v7960 = vunpack.c.l.b16 %v7580
    %v7961 = vunpack.c.h.b16 %v7580
    %v7962 = vunpack.c.l.b16 %v7581
    %v7963 = vunpack.c.h.b16 %v7581
    %v7964 = vunpack.c.l.b16 %v7582
    %v7965 = vunpack.c.h.b16 %v7582
    %v7966 = vunpack.c.l.b16 %v7583
    %v7967 = vunpack.c.h.b16 %v7583
    %v7968 = vpack.c.b16 %v7720, %v7712
    %v7969 = vpack.c.b16 %v7721, %v7713
    %v7970 = vpack.c.b16 %v7722, %v7714
    %v7971 = vpack.c.b16 %v7723, %v7715
    %v7972 = vpack.c.b16 %v7724, %v7716
    %v7973 = vpack.c.b16 %v7725, %v7717
    %v7974 = vpack.c.b16 %v7726, %v7718
    %v7975 = vpack.c.b16 %v7727, %v7719
    %v7976 = vpack.c.b16 %v7736, %v7728
    %v7977 = vpack.c.b16 %v7737, %v7729
    %v7978 = vpack.c.b16 %v7738, %v7730
    %v7979 = vpack.c.b16 %v7739, %v7731
    %v7980 = vpack.c.b16 %v7740, %v7732
    %v7981 = vpack.c.b16 %v7741, %v7733
    %v7982 = vpack.c.b16 %v7742, %v7734
    %v7983 = vpack.c.b16 %v7743, %v7735
    %v7984 = vpack.c.b16 %v7752, %v7744
    %v7985 = vpack.c.b16 %v7753, %v7745
    %v7986 = vpack.c.b16 %v7754, %v7746
    %v7987 = vpack.c.b16 %v7755, %v7747
    %v7988 = vpack.c.b16 %v7756, %v7748
    %v7989 = vpack.c.b16 %v7757, %v7749
    %v7990 = vpack.c.b16 %v7758, %v7750
    %v7991 = vpack.c.b16 %v7759, %v7751
    %v7992 = vpack.c.b16 %v7768, %v7760
    %v7993 = vpack.c.b16 %v7769, %v7761
    %v7994 = vpack.c.b16 %v7770, %v7762
    %v7995 = vpack.c.b16 %v7771, %v7763
    %v7996 = vpack.c.b16 %v7772, %v7764
    %v7997 = vpack.c.b16 %v7773, %v7765
    %v7998 = vpack.c.b16 %v7774, %v7766
    %v7999 = vpack.c.b16 %v7775, %v7767
    %v8000 = vpack.c.b16 %v7784, %v7776
    %v8001 = vpack.c.b16 %v7785, %v7777
    %v8002 = vpack.c.b16 %v7786, %v7778
    %v8003 = vpack.c.b16 %v7787, %v7779
    %v8004 = vpack.c.b16 %v7788, %v7780
    %v8005 = vpack.c.b16 %v7789, %v7781
    %v8006 = vpack.c.b16 %v7790, %v7782
    %v8007 = vpack.c.b16 %v7791, %v7783
    %v8008 = vpack.c.b16 %v7800, %v7792
    %v8009 = vpack.c.b16 %v7801, %v7793
    %v8010 = vpack.c.b16 %v7802, %v7794
    %v8011 = vpack.c.b16 %v7803, %v7795
    %v8012 = vpack.c.b16 %v7804, %v7796
    %v8013 = vpack.c.b16 %v7805, %v7797
    %v8014 = vpack.c.b16 %v7806, %v7798
    %v8015 = vpack.c.b16 %v7807, %v7799
    %v8016 = vpack.c.b16 %v7816, %v7808
    %v8017 = vpack.c.b16 %v7817, %v7809
    %v8018 = vpack.c.b16 %v7818, %v7810
    %v8019 = vpack.c.b16 %v7819, %v7811
    %v8020 = vpack.c.b16 %v7820, %v7812
    %v8021 = vpack.c.b16 %v7821, %v7813
    %v8022 = vpack.c.b16 %v7822, %v7814
    %v8023 = vpack.c.b16 %v7823, %v7815
    %v8024 = vpack.c.b16 %v7832, %v7824
    %v8025 = vpack.c.b16 %v7833, %v7825
    %v8026 = vpack.c.b16 %v7834, %v7826
    %v8027 = vpack.c.b16 %v7835, %v7827
    %v8028 = vpack.c.b16 %v7836, %v7828
    %v8029 = vpack.c.b16 %v7837, %v7829
    %v8030 = vpack.c.b16 %v7838, %v7830
    %v8031 = vpack.c.b16 %v7839, %v7831
    %v8032 = vpack.c.b16 %v7848, %v7840
    %v8033 = vpack.c.b16 %v7849, %v7841
    %v8034 = vpack.c.b16 %v7850, %v7842
    %v8035 = vpack.c.b16 %v7851, %v7843
    %v8036 = vpack.c.b16 %v7852, %v7844
    %v8037 = vpack.c.b16 %v7853, %v7845
    %v8038 = vpack.c.b16 %v7854, %v7846
    %v8039 = vpack.c.b16 %v7855, %v7847
    %v8040 = vpack.c.b16 %v7864, %v7856
    %v8041 = vpack.c.b16 %v7865, %v7857
    %v8042 = vpack.c.b16 %v7866, %v7858
    %v8043 = vpack.c.b16 %v7867, %v7859
    %v8044 = vpack.c.b16 %v7868, %v7860
    %v8045 = vpack.c.b16 %v7869, %v7861
    %v8046 = vpack.c.b16 %v7870, %v7862
    %v8047 = vpack.c.b16 %v7871, %v7863
    %v8048 = vpack.c.b16 %v7880, %v7872
    %v8049 = vpack.c.b16 %v7881, %v7873
    %v8050 = vpack.c.b16 %v7882, %v7874
    %v8051 = vpack.c.b16 %v7883, %v7875
    %v8052 = vpack.c.b16 %v7884, %v7876
    %v8053 = vpack.c.b16 %v7885, %v7877
    %v8054 = vpack.c.b16 %v7886, %v7878
    %v8055 = vpack.c.b16 %v7887, %v7879
    %v8056 = vpack.c.b16 %v7896, %v7888
    %v8057 = vpack.c.b16 %v7897, %v7889
    %v8058 = vpack.c.b16 %v7898, %v7890
    %v8059 = vpack.c.b16 %v7899, %v7891
    %v8060 = vpack.c.b16 %v7900, %v7892
    %v8061 = vpack.c.b16 %v7901, %v7893
    %v8062 = vpack.c.b16 %v7902, %v7894
    %v8063 = vpack.c.b16 %v7903, %v7895
    %v8064 = vpack.c.b16 %v7912, %v7904
    %v8065 = vpack.c.b16 %v7913, %v7905
    %v8066 = vpack.c.b16 %v7914, %v7906
    %v8067 = vpack.c.b16 %v7915, %v7907
    %v8068 = vpack.c.b16 %v7916, %v7908
    %v8069 = vpack.c.b16 %v7917, %v7909
    %v8070 = vpack.c.b16 %v7918, %v7910
    %v8071 = vpack.c.b16 %v7919, %v7911
    %v8072 = vpack.c.b16 %v7928, %v7920
    %v8073 = vpack.c.b16 %v7929, %v7921
    %v8074 = vpack.c.b16 %v7930, %v7922
    %v8075 = vpack.c.b16 %v7931, %v7923
    %v8076 = vpack.c.b16 %v7932, %v7924
    %v8077 = vpack.c.b16 %v7933, %v7925
    %v8078 = vpack.c.b16 %v7934, %v7926
    %v8079 = vpack.c.b16 %v7935, %v7927
    %v8080 = vpack.c.b16 %v7944, %v7936
    %v8081 = vpack.c.b16 %v7945, %v7937
    %v8082 = vpack.c.b16 %v7946, %v7938
    %v8083 = vpack.c.b16 %v7947, %v7939
    %v8084 = vpack.c.b16 %v7948, %v7940
    %v8085 = vpack.c.b16 %v7949, %v7941
    %v8086 = vpack.c.b16 %v7950, %v7942
    %v8087 = vpack.c.b16 %v7951, %v7943
    %v8088 = vpack.c.b16 %v7960, %v7952
    %v8089 = vpack.c.b16 %v7961, %v7953
    %v8090 = vpack.c.b16 %v7962, %v7954
    %v8091 = vpack.c.b16 %v7963, %v7955
    %v8092 = vpack.c.b16 %v7964, %v7956
    %v8093 = vpack.c.b16 %v7965, %v7957
    %v8094 = vpack.c.b16 %v7966, %v7958
    %v8095 = vpack.c.b16 %v7967, %v7959
    %8224 = vmatprep.subr.bf16.mxu0 %v7969
    %8225 = vmatpush1.bf16.msra.mxu0 %v7968
    %8226 = vmatprep.subr.bf16.mxu0 %v7977
    %8227 = vmatpush1.bf16.msra.mxu0 %v7976
    %8228 = vmatprep.subr.bf16.mxu0 %v7985
    %8229 = vmatpush1.bf16.msra.mxu0 %v7984
    %8230 = vmatprep.subr.bf16.mxu0 %v7993
    %8231 = vmatpush1.bf16.msra.mxu0 %v7992
    %8232 = vmatprep.subr.bf16.mxu0 %v8001
    %8233 = vmatpush1.bf16.msra.mxu0 %v8000
    %8234 = vmatprep.subr.bf16.mxu0 %v8009
    %8235 = vmatpush1.bf16.msra.mxu0 %v8008
    %8236 = vmatprep.subr.bf16.mxu0 %v8017
    %8237 = vmatpush1.bf16.msra.mxu0 %v8016
    %8238 = vmatprep.subr.bf16.mxu0 %v8025
    %8239 = vmatpush1.bf16.msra.mxu0 %v8024
    %8240 = vmatprep.subr.bf16.mxu0 %v8033
    %8241 = vmatpush1.bf16.msra.mxu0 %v8032
    %8242 = vmatprep.subr.bf16.mxu0 %v8041
    %8243 = vmatpush1.bf16.msra.mxu0 %v8040
    %8244 = vmatprep.subr.bf16.mxu0 %v8049
    %8245 = vmatpush1.bf16.msra.mxu0 %v8048
    %8246 = vmatprep.subr.bf16.mxu0 %v8057
    %8247 = vmatpush1.bf16.msra.mxu0 %v8056
    %8248 = vmatprep.subr.bf16.mxu0 %v8065
    %8249 = vmatpush1.bf16.msra.mxu0 %v8064
    %8250 = vmatprep.subr.bf16.mxu0 %v8073
    %8251 = vmatpush1.bf16.msra.mxu0 %v8072
    %8252 = vmatprep.subr.bf16.mxu0 %v8081
    %8253 = vmatpush1.bf16.msra.mxu0 %v8080
    %8254 = vmatprep.subr.bf16.mxu0 %v8089
    %8255 = vmatpush1.bf16.msra.mxu0 %v8088
    %8256 = vmatprep.mubr.bf16.mxu0 %v7455
    %8257 = vmatmul.mubr.bf16.gmra.mrb[0].mxu0 %v7454
    %v8258 = vpop.f32.mrb[0].mxu0
    %v8259 = vadd.f32 0.0, %v8258
    %v8260 = vpop.f32.mrb[0].mxu0
    %v8261 = vadd.f32 0.0, %v8260
    %v8262 = vpop.f32.mrb[0].mxu0
    %v8263 = vpop.f32.mrb[0].mxu0
    %8264 = vdwg.mxu0
    %8265 = vmatprep.subr.bf16.mxu0 %v7971
    %8266 = vmatpush1.bf16.msra.mxu0 %v7970
    %8267 = vmatprep.subr.bf16.mxu0 %v7979
    %8268 = vmatpush1.bf16.msra.mxu0 %v7978
    %8269 = vmatprep.subr.bf16.mxu0 %v7987
    %8270 = vmatpush1.bf16.msra.mxu0 %v7986
    %8271 = vmatprep.subr.bf16.mxu0 %v7995
    %8272 = vmatpush1.bf16.msra.mxu0 %v7994
    %8273 = vmatprep.subr.bf16.mxu0 %v8003
    %8274 = vmatpush1.bf16.msra.mxu0 %v8002
    %8275 = vmatprep.subr.bf16.mxu0 %v8011
    %8276 = vmatpush1.bf16.msra.mxu0 %v8010
    %8277 = vmatprep.subr.bf16.mxu0 %v8019
    %8278 = vmatpush1.bf16.msra.mxu0 %v8018
    %8279 = vmatprep.subr.bf16.mxu0 %v8027
    %8280 = vmatpush1.bf16.msra.mxu0 %v8026
    %8281 = vmatprep.subr.bf16.mxu0 %v8035
    %8282 = vmatpush1.bf16.msra.mxu0 %v8034
    %8283 = vmatprep.subr.bf16.mxu0 %v8043
    %8284 = vmatpush1.bf16.msra.mxu0 %v8042
    %8285 = vmatprep.subr.bf16.mxu0 %v8051
    %8286 = vmatpush1.bf16.msra.mxu0 %v8050
    %8287 = vmatprep.subr.bf16.mxu0 %v8059
    %8288 = vmatpush1.bf16.msra.mxu0 %v8058
    %8289 = vmatprep.subr.bf16.mxu0 %v8067
    %8290 = vmatpush1.bf16.msra.mxu0 %v8066
    %8291 = vmatprep.subr.bf16.mxu0 %v8075
    %8292 = vmatpush1.bf16.msra.mxu0 %v8074
    %8293 = vmatprep.subr.bf16.mxu0 %v8083
    %8294 = vmatpush1.bf16.msra.mxu0 %v8082
    %8295 = vmatprep.subr.bf16.mxu0 %v8091
    %8296 = vmatpush1.bf16.msra.mxu0 %v8090
    %8297 = vmatprep.mubr.bf16.mxu0 %v7455
    %8298 = vmatmul.mubr.bf16.gmra.mrb[0].mxu0 %v7454
    %v8299 = vpop.f32.mrb[0].mxu0
    %v8300 = vadd.f32 0.0, %v8299
    %v8301 = vpop.f32.mrb[0].mxu0
    %v8302 = vadd.f32 0.0, %v8301
    %v8303 = vpop.f32.mrb[0].mxu0
    %v8304 = vpop.f32.mrb[0].mxu0
    %8305 = vdwg.mxu0
    %8306 = vmatprep.subr.bf16.mxu0 %v7973
    %8307 = vmatpush1.bf16.msra.mxu0 %v7972
    %8308 = vmatprep.subr.bf16.mxu0 %v7981
    %8309 = vmatpush1.bf16.msra.mxu0 %v7980
    %8310 = vmatprep.subr.bf16.mxu0 %v7989
    %8311 = vmatpush1.bf16.msra.mxu0 %v7988
    %8312 = vmatprep.subr.bf16.mxu0 %v7997
    %8313 = vmatpush1.bf16.msra.mxu0 %v7996
    %8314 = vmatprep.subr.bf16.mxu0 %v8005
    %8315 = vmatpush1.bf16.msra.mxu0 %v8004
    %8316 = vmatprep.subr.bf16.mxu0 %v8013
    %8317 = vmatpush1.bf16.msra.mxu0 %v8012
    %8318 = vmatprep.subr.bf16.mxu0 %v8021
    %8319 = vmatpush1.bf16.msra.mxu0 %v8020
    %8320 = vmatprep.subr.bf16.mxu0 %v8029
    %8321 = vmatpush1.bf16.msra.mxu0 %v8028
    %8322 = vmatprep.subr.bf16.mxu0 %v8037
    %8323 = vmatpush1.bf16.msra.mxu0 %v8036
    %8324 = vmatprep.subr.bf16.mxu0 %v8045
    %8325 = vmatpush1.bf16.msra.mxu0 %v8044
    %8326 = vmatprep.subr.bf16.mxu0 %v8053
    %8327 = vmatpush1.bf16.msra.mxu0 %v8052
    %8328 = vmatprep.subr.bf16.mxu0 %v8061
    %8329 = vmatpush1.bf16.msra.mxu0 %v8060
    %8330 = vmatprep.subr.bf16.mxu0 %v8069
    %8331 = vmatpush1.bf16.msra.mxu0 %v8068
    %8332 = vmatprep.subr.bf16.mxu0 %v8077
    %8333 = vmatpush1.bf16.msra.mxu0 %v8076
    %8334 = vmatprep.subr.bf16.mxu0 %v8085
    %8335 = vmatpush1.bf16.msra.mxu0 %v8084
    %8336 = vmatprep.subr.bf16.mxu0 %v8093
    %8337 = vmatpush1.bf16.msra.mxu0 %v8092
    %8338 = vmatprep.mubr.bf16.mxu0 %v7455
    %8339 = vmatmul.mubr.bf16.gmra.mrb[0].mxu0 %v7454
    %v8340 = vpop.f32.mrb[0].mxu0
    %v8341 = vadd.f32 0.0, %v8340
    %v8342 = vpop.f32.mrb[0].mxu0
    %v8343 = vadd.f32 0.0, %v8342
    %v8344 = vpop.f32.mrb[0].mxu0
    %v8345 = vpop.f32.mrb[0].mxu0
    %8346 = vdwg.mxu0
    %8347 = vmatprep.subr.bf16.mxu0 %v7975
    %8348 = vmatpush1.bf16.msra.mxu0 %v7974
    %8349 = vmatprep.subr.bf16.mxu0 %v7983
    %8350 = vmatpush1.bf16.msra.mxu0 %v7982
    %8351 = vmatprep.subr.bf16.mxu0 %v7991
    %8352 = vmatpush1.bf16.msra.mxu0 %v7990
    %8353 = vmatprep.subr.bf16.mxu0 %v7999
    %8354 = vmatpush1.bf16.msra.mxu0 %v7998
    %8355 = vmatprep.subr.bf16.mxu0 %v8007
    %8356 = vmatpush1.bf16.msra.mxu0 %v8006
    %8357 = vmatprep.subr.bf16.mxu0 %v8015
    %8358 = vmatpush1.bf16.msra.mxu0 %v8014
    %8359 = vmatprep.subr.bf16.mxu0 %v8023
    %8360 = vmatpush1.bf16.msra.mxu0 %v8022
    %8361 = vmatprep.subr.bf16.mxu0 %v8031
    %8362 = vmatpush1.bf16.msra.mxu0 %v8030
    %8363 = vmatprep.subr.bf16.mxu0 %v8039
    %8364 = vmatpush1.bf16.msra.mxu0 %v8038
    %8365 = vmatprep.subr.bf16.mxu0 %v8047
    %8366 = vmatpush1.bf16.msra.mxu0 %v8046
    %8367 = vmatprep.subr.bf16.mxu0 %v8055
    %8368 = vmatpush1.bf16.msra.mxu0 %v8054
    %8369 = vmatprep.subr.bf16.mxu0 %v8063
    %8370 = vmatpush1.bf16.msra.mxu0 %v8062
    %8371 = vmatprep.subr.bf16.mxu0 %v8071
    %8372 = vmatpush1.bf16.msra.mxu0 %v8070
    %8373 = vmatprep.subr.bf16.mxu0 %v8079
    %8374 = vmatpush1.bf16.msra.mxu0 %v8078
    %8375 = vmatprep.subr.bf16.mxu0 %v8087
    %8376 = vmatpush1.bf16.msra.mxu0 %v8086
    %8377 = vmatprep.subr.bf16.mxu0 %v8095
    %8378 = vmatpush1.bf16.msra.mxu0 %v8094
    %8379 = vmatprep.mubr.bf16.mxu0 %v7455
    %8380 = vmatmul.mubr.bf16.gmra.mrb[0].mxu0 %v7454
    %v8381 = vpop.f32.mrb[0].mxu0
    %v8382 = vadd.f32 0.0, %v8381
    %v8383 = vpop.f32.mrb[0].mxu0
    %v8384 = vadd.f32 0.0, %v8383
    %v8385 = vpop.f32.mrb[0].mxu0
    %v8386 = vpop.f32.mrb[0].mxu0
    %8387 = vdwg.mxu0
    %v8396 = vrot.slane %v8259, 4
    %v8397 = vrot.slane %v8261, 4
    %v8398 = vrot.slane %v8300, 4
    %v8399 = vrot.slane %v8302, 4
    %v8400 = vrot.slane %v8341, 4
    %v8401 = vrot.slane %v8343, 4
    %v8402 = vrot.slane %v8382, 4
    %v8403 = vrot.slane %v8384, 4
    %v8412 = vadd.f32 %v270, %v8396
    %v8413 = vadd.f32 %v272, %v8397
    %v8414 = vadd.f32 %v323, %v8398
    %v8415 = vadd.f32 %v325, %v8399
    %v8416 = vadd.f32 %v376, %v8400
    %v8417 = vadd.f32 %v378, %v8401
    %v8418 = vadd.f32 %v429, %v8402
    %v8419 = vadd.f32 %v431, %v8403
    %v8420 = vmul.f32 %v8412, 0.5
    %v8421 = vmul.f32 %v8413, 0.5
    %v8422 = vtanh.pop %v8420
    %v8423 = vtanh.pop %v8421
    %v8424 = vadd.f32 %v8422, 1.0
    %v8425 = vadd.f32 %v8423, 1.0
    %v8426 = vmul.f32 %v8424, 0.5
    %v8427 = vmul.f32 %v8425, 0.5
    %v8428 = vmul.f32 %v8414, 0.5
    %v8429 = vmul.f32 %v8415, 0.5
    %v8430 = vtanh.pop %v8428
    %v8431 = vtanh.pop %v8429
    %v8432 = vadd.f32 %v8430, 1.0
    %v8433 = vadd.f32 %v8431, 1.0
    %v8434 = vmul.f32 %v8432, 0.5
    %v8435 = vmul.f32 %v8433, 0.5
    %v8436 = vtanh.pop %v8416
    %v8437 = vtanh.pop %v8417
    %v8438 = vmul.f32 %v8418, 0.5
    %v8439 = vmul.f32 %v8419, 0.5
    %v8440 = vtanh.pop %v8438
    %v8441 = vtanh.pop %v8439
    %v8442 = vadd.f32 %v8440, 1.0
    %v8443 = vadd.f32 %v8441, 1.0
    %v8444 = vmul.f32 %v8442, 0.5
    %v8445 = vmul.f32 %v8443, 0.5
    %v8448 = vrot.slane %v7442, 4
    %v8449 = vrot.slane %v7443, 4
    %v8452 = vmul.f32 %v8434, %v8448
    %v8453 = vmul.f32 %v8435, %v8449
    %v8454 = vmul.f32 %v8426, %v8436
    %v8455 = vmul.f32 %v8427, %v8437
    %v8456 = vadd.f32 %v8452, %v8454
    %v8457 = vadd.f32 %v8453, %v8455
    %v8458 = vtanh.pop %v8456
    %v8459 = vtanh.pop %v8457
    %v8460 = vmul.f32 %v8444, %v8458
    %v8461 = vmul.f32 %v8445, %v8459
    %v8464 = vcombine.high %v8460, %v8461
    %s8466 = scalar_lea.vmem [#allocation10], 56
    %8467 = vst [vmem:[%s8466] sm:$0xff] %v8464
    %8468 = vst [vmem:[#allocation2] sm:$0xff] %v8464
    %v8471 = vcombine.high %v8456, %v8457
    %8473 = vst [vmem:[#allocation3] sm:$0xff] %v8471
    // Predicated region
    $region34: #{tpu_custom_call.1} parent=1 // pred_check
      _
    $region35: #{tpu_custom_call.1} parent=1 // pred_check_branch
      %8475 = sbr.rel (0) target = $region37
    $region36: #{tpu_custom_call.1} parent=1 // pred_region
      %s8477 = ssub.s32 1024, 1024
      %8478 = vsyncadd [#allocation6], %s8477
      %s8479 = sshll.u32 [#allocation10], 4
      %s8480 = int_to_ptr.vmem [resolvable:$true] %s8479
      %8485 = dma.vmem_to_hbm [thread:$0]  %s8480, 1024, %s4, [#allocation6], 128, 128, 8
    $region37: #{tpu_custom_call.1} parent=1 // pred_fallthru
      _
    // Predicated region
    $region38: #{tpu_custom_call.1} parent=1 // pred_check
      _
    $region39: #{tpu_custom_call.1} parent=1 // pred_check_branch
      %8487 = sbr.rel (0) target = $region41
    $region40: #{tpu_custom_call.1} parent=1 // pred_region
      %8488 = dma.done [#allocation6], 1024
    $region41: #{tpu_custom_call.1} parent=1 // pred_fallthru
      _
    %8489 = vsyncpa [#allocation5], 1
    %8490 = vsyncpa [#allocation8], 1
    %8491 = vsyncpa [#allocation6], 1

</llo_original>
